<compile_context>
chip_gen: v7x
topology: tpu7x:2x2x1
jax: 0.10.0
libtpu: 0.0.40
codegen_flags: <defaults>
</compile_context>

<pallas_src>
import functools

import jax
import jax.numpy as jnp
from jax.experimental import pallas as pl
from jax.experimental.pallas import tpu as pltpu

LANE = 128
EPS = 1e-5
ACT_DTYPE = jnp.bfloat16                 # activation / weight storage dtype
VMEM_LIMIT = 48 * 1024 * 1024            # < 64 MiB (v7x physical), fine on v5e/v6e


# -----------------------------------------------------------------------------
# small helpers
# -----------------------------------------------------------------------------
def _round_up(n, m):
    return ((n + m - 1) // m) * m


def _pad_axis(x, axis, new_size):
    pad = new_size - x.shape[axis]
    if pad == 0:
        return x
    cfg = [(0, 0)] * x.ndim
    cfg[axis] = (0, pad)
    return jnp.pad(x, cfg)


def _pick_row_tile(m):
    # biggest power-of-two row tile (<= 2048) that divides M: keeps the
    # pipeline busy while amortizing the ~0.35us per-grid-step overhead.
    for c in (2048, 1024, 512, 256, 128, 64, 32, 16, 8):
        if c <= m and m % c == 0:
            return c
    return m


def _pick_k_tile(k):
    # K tiles stay multiples of 128 (lane-aligned contraction blocks).
    for c in (512, 256, 128):
        if c <= k and k % c == 0:
            return c
    return k


def _cparams(semantics):
    return pltpu.CompilerParams(dimension_semantics=semantics,
                                vmem_limit_bytes=VMEM_LIMIT)


def _write_stats(sum_ref, sq_ref, y, mask=None):
    """Per-tile channel partial sums for the two-phase BatchNorm reduction."""
    ym = y if mask is None else y * mask
    sum_ref[0] = jnp.sum(ym, axis=0, keepdims=True)
    sq_ref[0] = jnp.sum(ym * y, axis=0, keepdims=True)


def _bn_fold(s_sum, s_sq, gamma, beta, count, eps=EPS):
    """Fold batch stats into a single per-channel scale/shift (f32, tiny)."""
    mean = jnp.sum(s_sum, axis=(0, 1)) / count
    ex2 = jnp.sum(s_sq, axis=(0, 1)) / count
    var = jnp.maximum(ex2 - mean * mean, 0.0)
    scale = gamma * jax.lax.rsqrt(var + eps)
    shift = beta - mean * scale
    return scale.reshape(1, -1), shift.reshape(1, -1)


# -----------------------------------------------------------------------------
# K1: tiled matmul (grid over M rows and K) + per-row-tile BN partial stats
# -----------------------------------------------------------------------------
def _mm_stats_kernel(x_ref, w_ref, y_ref, sum_ref, sq_ref, acc_ref):
    k = pl.program_id(1)

    @pl.when(k == 0)
    def _init():
        acc_ref[...] = jnp.zeros_like(acc_ref)

    acc_ref[...] += jnp.dot(x_ref[...], w_ref[...],
                            preferred_element_type=jnp.float32)

    @pl.when(k == pl.num_programs(1) - 1)
    def _finalize():
        y = acc_ref[...]
        y_ref[...] = y.astype(y_ref.dtype)
        _write_stats(sum_ref, sq_ref, y)


def matmul_stats(x2d, w2d):
    """(M, K) @ (K, C) -> bf16 y (M, C), f32 partial stats (nm, 1, C) x2."""
    M, K = x2d.shape
    C = w2d.shape[1]
    tm, tk = _pick_row_tile(M), _pick_k_tile(K)
    nm, nk = M // tm, K // tk
    return pl.pallas_call(
        _mm_stats_kernel,
        grid_spec=pltpu.PrefetchScalarGridSpec(
            num_scalar_prefetch=0,
            grid=(nm, nk),
            in_specs=[pl.BlockSpec((tm, tk), lambda i, k: (i, k)),
                      pl.BlockSpec((tk, C), lambda i, k: (k, 0))],
            out_specs=[pl.BlockSpec((tm, C), lambda i, k: (i, 0)),
                       pl.BlockSpec((1, 1, C), lambda i, k: (i, 0, 0)),
                       pl.BlockSpec((1, 1, C), lambda i, k: (i, 0, 0))],
            scratch_shapes=[pltpu.VMEM((tm, C), jnp.float32)]),
        out_shape=(jax.ShapeDtypeStruct((M, C), ACT_DTYPE),
                   jax.ShapeDtypeStruct((nm, 1, C), jnp.float32),
                   jax.ShapeDtypeStruct((nm, 1, C), jnp.float32)),
        compiler_params=_cparams(("parallel", "arbitrary")),
    )(x2d, w2d)


# -----------------------------------------------------------------------------
# K2: folded BN (scale/shift) + relu, tiled over M rows
# -----------------------------------------------------------------------------
def _bn_act_kernel(y_ref, sc_ref, sh_ref, o_ref):
    y = y_ref[...].astype(jnp.float32)
    o_ref[...] = jnp.maximum(y * sc_ref[...] + sh_ref[...], 0.0).astype(o_ref.dtype)


def bn_relu(y, scale, shift):
    M, C = y.shape
    tm = _pick_row_tile(M)
    return pl.pallas_call(
        _bn_act_kernel,
        grid_spec=pltpu.PrefetchScalarGridSpec(
            num_scalar_prefetch=0,
            grid=(M // tm,),
            in_specs=[pl.BlockSpec((tm, C), lambda i: (i, 0)),
                      pl.BlockSpec((1, C), lambda i: (0, 0)),
                      pl.BlockSpec((1, C), lambda i: (0, 0))],
            out_specs=pl.BlockSpec((tm, C), lambda i: (i, 0))),
        out_shape=jax.ShapeDtypeStruct((M, C), ACT_DTYPE),
        compiler_params=_cparams(("parallel",)),
    )(y, scale, shift)


# -----------------------------------------------------------------------------
# K3: 3x3 conv.  The activation is spatially padded and phase-split (for
# stride>1) in JAX so that every (kh, kw) tap is a *contiguous* row window of
# the flattened per-image tensor; the 9-tap im2col happens in VMEM (9 shifted
# matmuls) — no 9x im2col materialization in HBM.  Output rows live on a
# (Ho, Wq) grid where the last Wq-Wo "wrap" columns are garbage and are
# excluded from the BN stats via a mask (and sliced off at the very end).
# -----------------------------------------------------------------------------
def _conv3x3_kernel(stride, Wq, Lo, x_ref, w_ref, msk_ref, y_ref, sum_ref, sq_ref):
    acc = None
    for kh in range(3):
        for kw in range(3):
            phase = (kh % stride) * stride + (kw % stride)
            off = (kh // stride) * Wq + (kw // stride)
            patch = x_ref[phase, pl.ds(off, Lo), :]               # (Lo, Cin)
            d = jnp.dot(patch, w_ref[kh, kw],
                        preferred_element_type=jnp.float32)
            acc = d if acc is None else acc + d
    y_ref[0] = acc.astype(y_ref.dtype)
    _write_stats(sum_ref, sq_ref, acc, msk_ref[...])


def conv3x3_stats(phases, w2, valid, *, stride, Wq, Lo, N):
    ss = phases.shape[0] // N
    Lq, C = phases.shape[1], phases.shape[2]
    Co = w2.shape[-1]
    return pl.pallas_call(
        functools.partial(_conv3x3_kernel, stride, Wq, Lo),
        grid_spec=pltpu.PrefetchScalarGridSpec(
            num_scalar_prefetch=0,
            grid=(N,),
            in_specs=[pl.BlockSpec((ss, Lq, C), lambda n: (n, 0, 0)),
                      pl.BlockSpec((3, 3, C, Co), lambda n: (0, 0, 0, 0)),
                      pl.BlockSpec((Lo, 1), lambda n: (0, 0))],
            out_specs=[pl.BlockSpec((1, Lo, Co), lambda n: (n, 0, 0)),
                       pl.BlockSpec((1, 1, Co), lambda n: (n, 0, 0)),
                       pl.BlockSpec((1, 1, Co), lambda n: (n, 0, 0))]),
        out_shape=(jax.ShapeDtypeStruct((N, Lo, Co), ACT_DTYPE),
                   jax.ShapeDtypeStruct((N, 1, Co), jnp.float32),
                   jax.ShapeDtypeStruct((N, 1, Co), jnp.float32)),
        compiler_params=_cparams(("parallel",)),
    )(phases, w2, valid)


def _phase_pack(h_nhwc, stride):
    """pad=1 spatial padding + phase split so every 3x3 tap at the given
    stride is a contiguous row window of the flattened result."""
    N, H, W, C = h_nhwc.shape
    s = stride
    Ho = (H - 1) // s + 1
    Wo = (W - 1) // s + 1
    Hp = _round_up(H + 2, s)
    Wp = _round_up(W + 2, s)
    xp = jnp.pad(h_nhwc, ((0, 0), (1, Hp - H - 1), (1, Wp - W - 1), (0, 0)))
    Hq, Wq = Hp // s, Wp // s
    dmax = 2 // s
    Hq_alloc = max(Hq, Ho + dmax + 1)          # headroom for wrap-column reads
    ph = xp.reshape(N, Hq, s, Wq, s, C).transpose(0, 2, 4, 1, 3, 5)
    ph = _pad_axis(ph, 3, Hq_alloc)
    phases = ph.reshape(N * s * s, Hq_alloc * Wq, C)
    return phases, Ho, Wo, Wq, Ho * Wq


# -----------------------------------------------------------------------------
# K4: bn2+relu fused into the conv3 matmul (+ the shortcut 1x1 conv in the
#     same grid sweep), emitting partial BN stats for both branches.
# -----------------------------------------------------------------------------
def _mid_kernel(has_sc, y2_ref, sc2_ref, sh2_ref, w3_ref, msk_ref, *rest):
    if has_sc:
        (xs_ref, ws_ref,
         y3_ref, sum3_ref, sq3_ref, ysc_ref, sums_ref, sqs_ref) = rest
    else:
        y3_ref, sum3_ref, sq3_ref = rest
    m = msk_ref[...]
    h2 = jnp.maximum(
        y2_ref[0].astype(jnp.float32) * sc2_ref[...] + sh2_ref[...], 0.0)
    y3 = jnp.dot(h2.astype(ACT_DTYPE), w3_ref[...],
                 preferred_element_type=jnp.float32)
    y3_ref[0] = y3.astype(y3_ref.dtype)
    _write_stats(sum3_ref, sq3_ref, y3, m)
    if has_sc:
        ysc = jnp.dot(xs_ref[0], ws_ref[...], preferred_element_type=jnp.float32)
        ysc_ref[0] = ysc.astype(ysc_ref.dtype)
        _write_stats(sums_ref, sqs_ref, ysc, m)


def mid_fused(y2, scale2, shift2, w3, valid, xs=None, ws=None):
    N, Lo, Cp = y2.shape
    C3 = w3.shape[-1]
    has_sc = xs is not None
    in_specs = [pl.BlockSpec((1, Lo, Cp), lambda n: (n, 0, 0)),
                pl.BlockSpec((1, Cp), lambda n: (0, 0)),
                pl.BlockSpec((1, Cp), lambda n: (0, 0)),
                pl.BlockSpec((Cp, C3), lambda n: (0, 0)),
                pl.BlockSpec((Lo, 1), lambda n: (0, 0))]
    out_specs = [pl.BlockSpec((1, Lo, C3), lambda n: (n, 0, 0)),
                 pl.BlockSpec((1, 1, C3), lambda n: (n, 0, 0)),
                 pl.BlockSpec((1, 1, C3), lambda n: (n, 0, 0))]
    out_shape = [jax.ShapeDtypeStruct((N, Lo, C3), ACT_DTYPE),
                 jax.ShapeDtypeStruct((N, 1, C3), jnp.float32),
                 jax.ShapeDtypeStruct((N, 1, C3), jnp.float32)]
    args = [y2, scale2, shift2, w3, valid]
    if has_sc:
        Ci = xs.shape[-1]
        in_specs += [pl.BlockSpec((1, Lo, Ci), lambda n: (n, 0, 0)),
                     pl.BlockSpec((Ci, C3), lambda n: (0, 0))]
        out_specs += [pl.BlockSpec((1, Lo, C3), lambda n: (n, 0, 0)),
                      pl.BlockSpec((1, 1, C3), lambda n: (n, 0, 0)),
                      pl.BlockSpec((1, 1, C3), lambda n: (n, 0, 0))]
        out_shape += [jax.ShapeDtypeStruct((N, Lo, C3), ACT_DTYPE),
                      jax.ShapeDtypeStruct((N, 1, C3), jnp.float32),
                      jax.ShapeDtypeStruct((N, 1, C3), jnp.float32)]
        args += [xs, ws]
    return pl.pallas_call(
        functools.partial(_mid_kernel, has_sc),
        grid_spec=pltpu.PrefetchScalarGridSpec(
            num_scalar_prefetch=0, grid=(N,),
            in_specs=in_specs, out_specs=out_specs),
        out_shape=tuple(out_shape),
        compiler_params=_cparams(("parallel",)),
    )(*args)


# -----------------------------------------------------------------------------
# K5: bn3 (+ shortcut bn) + residual add + relu, fused finalize
# -----------------------------------------------------------------------------
def _final_kernel(has_sc, y3_ref, sc3_ref, sh3_ref, *rest):
    if has_sc:
        ysc_ref, scs_ref, shs_ref, o_ref = rest
        res = ysc_ref[0].astype(jnp.float32) * scs_ref[...] + shs_ref[...]
    else:
        res_ref, o_ref = rest
        res = res_ref[0].astype(jnp.float32)
    out = y3_ref[0].astype(jnp.float32) * sc3_ref[...] + sh3_ref[...] + res
    o_ref[0] = jnp.maximum(out, 0.0).astype(o_ref.dtype)


def final_fused(y3, scale3, shift3, res, scale_s=None, shift_s=None):
    N, Lo, C3 = y3.shape
    has_sc = scale_s is not None
    in_specs = [pl.BlockSpec((1, Lo, C3), lambda n: (n, 0, 0)),
                pl.BlockSpec((1, C3), lambda n: (0, 0)),
                pl.BlockSpec((1, C3), lambda n: (0, 0))]
    args = [y3, scale3, shift3]
    if has_sc:
        in_specs += [pl.BlockSpec((1, Lo, C3), lambda n: (n, 0, 0)),
                     pl.BlockSpec((1, C3), lambda n: (0, 0)),
                     pl.BlockSpec((1, C3), lambda n: (0, 0))]
        args += [res, scale_s, shift_s]
    else:
        in_specs += [pl.BlockSpec((1, Lo, C3), lambda n: (n, 0, 0))]
        args += [res]
    return pl.pallas_call(
        functools.partial(_final_kernel, has_sc),
        grid_spec=pltpu.PrefetchScalarGridSpec(
            num_scalar_prefetch=0, grid=(N,),
            in_specs=in_specs,
            out_specs=pl.BlockSpec((1, Lo, C3), lambda n: (n, 0, 0))),
        out_shape=jax.ShapeDtypeStruct((N, Lo, C3), ACT_DTYPE),
        compiler_params=_cparams(("parallel",)),
    )(*args)


# -----------------------------------------------------------------------------
# weight / param packing (lane-dense: channels zero-padded to multiples of 128)
# -----------------------------------------------------------------------------
def _pad_w_1x1(w_oihw, k_pad, c_pad):
    w = jnp.transpose(w_oihw[:, :, 0, 0], (1, 0))            # (I, O)
    return _pad_axis(_pad_axis(w, 0, k_pad), 1, c_pad).astype(ACT_DTYPE)


def _pad_w_3x3(w_oihw, k_pad, c_pad):
    w = jnp.transpose(w_oihw, (2, 3, 1, 0))                   # (3, 3, I, O)
    return _pad_axis(_pad_axis(w, 2, k_pad), 3, c_pad).astype(ACT_DTYPE)


def _pad_vec(v, c_pad):
    return _pad_axis(v.astype(jnp.float32), 0, c_pad)


# -----------------------------------------------------------------------------
# Bottleneck forward (NCHW in / NCHW out, like the PyTorch module)
# -----------------------------------------------------------------------------
def bottleneck_forward(x_nchw, params, stride):
    expansion = 4
    planes = params['w1_oihw'].shape[0]
    in_planes = params['w1_oihw'].shape[1]
    N, _, H, W = x_nchw.shape

    ci = _round_up(in_planes, LANE)
    cp = _round_up(planes, LANE)
    c3 = _round_up(expansion * planes, LANE)

    # NHWC, bf16, lane-padded channels
    x = jnp.transpose(x_nchw, (0, 2, 3, 1)).astype(ACT_DTYPE)
    x = _pad_axis(x, 3, ci)

    w1 = _pad_w_1x1(params['w1_oihw'], ci, cp)
    w2 = _pad_w_3x3(params['w2_oihw'], cp, cp)
    w3 = _pad_w_1x1(params['w3_oihw'], cp, c3)
    g1, b1 = _pad_vec(params['g1'], cp), _pad_vec(params['b1'], cp)
    g2, b2 = _pad_vec(params['g2'], cp), _pad_vec(params['b2'], cp)
    g3, b3 = _pad_vec(params['g3'], c3), _pad_vec(params['b3'], c3)

    # ---- conv1 (1x1): tiled matmul + partial BN stats ----------------------
    M0 = N * H * W
    y1, s1, q1 = matmul_stats(x.reshape(M0, ci), w1)
    sc1, sh1 = _bn_fold(s1, q1, g1, b1, M0)

    # ---- bn1 + relu ---------------------------------------------------------
    h1 = bn_relu(y1, sc1, sh1).reshape(N, H, W, cp)

    # ---- conv2 (3x3, stride, pad=1): in-VMEM im2col + partial BN stats ------
    phases, Ho, Wo, Wq, Lo = _phase_pack(h1, stride)
    valid = (jnp.arange(Lo, dtype=jnp.int32) % Wq < Wo).astype(
        jnp.float32).reshape(Lo, 1)
    y2, s2, q2 = conv3x3_stats(phases, w2, valid, stride=stride, Wq=Wq, Lo=Lo, N=N)
    n_valid = N * Ho * Wo
    sc2, sh2 = _bn_fold(s2, q2, g2, b2, n_valid)

    # ---- shortcut branch inputs ---------------------------------------------
    has_sc = 'ws_oihw' in params
    if has_sc:
        ws = _pad_w_1x1(params['ws_oihw'], ci, c3)
        gs, bs = _pad_vec(params['gs'], c3), _pad_vec(params['bs'], c3)
        # TODO(synk): fold this strided spatial subsample into the kernel's
        # BlockSpec / DMA instead of an XLA slice+pad.
        xs = x[:, ::stride, ::stride, :]
        xs = _pad_axis(xs, 2, Wq).reshape(N, Lo, ci)
    else:
        xs = None

    # ---- bn2+relu -> conv3 (+ shortcut conv), fused, + partial BN stats -----
    if has_sc:
        y3, s3, q3, ysc, ss_, qs_ = mid_fused(y2, sc2, sh2, w3, valid, xs, ws)
        sc3, sh3 = _bn_fold(s3, q3, g3, b3, n_valid)
        scs, shs = _bn_fold(ss_, qs_, gs, bs, n_valid)
        out = final_fused(y3, sc3, sh3, ysc, scs, shs)
    else:
        y3, s3, q3 = mid_fused(y2, sc2, sh2, w3, valid)
        sc3, sh3 = _bn_fold(s3, q3, g3, b3, n_valid)
        res = _pad_axis(x, 2, Wq).reshape(N, Lo, x.shape[-1])   # identity path
        out = final_fused(y3, sc3, sh3, res)

    out = out.reshape(N, Ho, Wq, c3)[:, :, :Wo, :expansion * planes]
    return jnp.transpose(out, (0, 3, 1, 2)).astype(jnp.float32)


# -----------------------------------------------------------------------------
# Pure-JAX f32 reference (training-mode BN), used only to validate the kernels
# -----------------------------------------------------------------------------
def _ref_forward(x_nchw, p, stride, eps=EPS):
    def bn(y, g, b):
        mean = jnp.mean(y, axis=(0, 1, 2), keepdims=True)
        var = jnp.mean((y - mean) ** 2, axis=(0, 1, 2), keepdims=True)
        return (y - mean) * jax.lax.rsqrt(var + eps) * g + b

    def conv(y, w_oihw, s, pad):
        w = jnp.transpose(w_oihw, (2, 3, 1, 0))
        return jax.lax.conv_general_dilated(
            y, w, (s, s), [(pad, pad), (pad, pad)],
            dimension_numbers=('NHWC', 'HWIO', 'NHWC'))

    x = jnp.transpose(x_nchw, (0, 2, 3, 1)).astype(jnp.float32)
    out = jax.nn.relu(bn(conv(x, p['w1_oihw'], 1, 0), p['g1'], p['b1']))
    out = jax.nn.relu(bn(conv(out, p['w2_oihw'], stride, 1), p['g2'], p['b2']))
    out = bn(conv(out, p['w3_oihw'], 1, 0), p['g3'], p['b3'])
    if 'ws_oihw' in p:
        sc = bn(conv(x, p['ws_oihw'], stride, 0), p['gs'], p['bs'])
    else:
        sc = x
    out = jax.nn.relu(out + sc)
    return jnp.transpose(out, (0, 3, 1, 2))


# -----------------------------------------------------------------------------
# Deterministic parameter construction (shapes from Bottleneck.__init__)
# -----------------------------------------------------------------------------
def make_params(key, in_planes, planes, stride):
    expansion = 4
    ks = jax.random.split(key, 10)
    p = {
        'w1_oihw': jax.random.normal(ks[0], (planes, in_planes, 1, 1)) * 0.1,
        'g1': 1.0 + 0.1 * jax.random.normal(ks[1], (planes,)),
        'b1': 0.1 * jax.random.normal(ks[2], (planes,)),
        'w2_oihw': jax.random.normal(ks[3], (planes, planes, 3, 3)) * 0.1,
        'g2': 1.0 + 0.1 * jax.random.normal(ks[4], (planes,)),
        'b2': 0.1 * jax.random.normal(ks[5], (planes,)),
        'w3_oihw': jax.random.normal(ks[6], (expansion * planes, planes, 1, 1)) * 0.1,
        'g3': 1.0 + 0.1 * jax.random.normal(ks[7], (expansion * planes,)),
        'b3': 0.1 * jax.random.normal(ks[8], (expansion * planes,)),
    }
    if stride != 1 or in_planes != expansion * planes:
        ks2 = jax.random.split(ks[9], 3)
        p['ws_oihw'] = jax.random.normal(
            ks2[0], (expansion * planes, in_planes, 1, 1)) * 0.1
        p['gs'] = 1.0 + 0.1 * jax.random.normal(ks2[1], (expansion * planes,))
        p['bs'] = 0.1 * jax.random.normal(ks2[2], (expansion * planes,))
    return p


def _run_case(key, N, in_planes, planes, stride, H, W):
    kx, kp = jax.random.split(key)
    x = jax.random.normal(kx, (N, in_planes, H, W), dtype=jnp.float32)
    params = make_params(kp, in_planes, planes, stride)

    fwd = jax.jit(functools.partial(bottleneck_forward, stride=stride))
    out = jax.block_until_ready(fwd(x, params))

    ref = jax.block_until_ready(_ref_forward(x, params, stride))
    Ho = (H - 1) // stride + 1
    assert out.shape == ref.shape == (N, 4 * planes, Ho, Ho), (out.shape, ref.shape)

    # bf16 storage / bf16 MXU inputs => compare against the f32 reference with
    # a scale-relative bound; genuine bugs show up as O(1) relative error.
    err = float(jnp.max(jnp.abs(out - ref)))
    scale = float(jnp.max(jnp.abs(ref))) + 1e-6
    assert err / scale < 0.05, f"relative max err {err / scale}"


if __name__ == "__main__":
    key = jax.random.PRNGKey(0)
    k_a, k_b = jax.random.split(key)

    # downsampling block (stride=2, projection shortcut)
    _run_case(k_a, N=2, in_planes=8, planes=4, stride=2, H=16, W=16)
    # identity block (stride=1, in_planes == expansion*planes, identity shortcut)
    _run_case(k_b, N=2, in_planes=16, planes=4, stride=1, H=16, W=16)

    print("KERNEL_OK")
</pallas_src>

<mosaic_0001>
module attributes {stable_mosaic.version = 11 : i64} {
  func.func @_mm_stats_kernel(%arg0: i32, %arg1: i32, %arg2: memref<512x128xbf16, #tpu.memory_space<vmem>>, %arg3: memref<128x128xbf16, #tpu.memory_space<vmem>>, %arg4: memref<512x128xbf16, #tpu.memory_space<vmem>>, %arg5: memref<1x1x128xf32, #tpu.memory_space<vmem>>, %arg6: memref<1x1x128xf32, #tpu.memory_space<vmem>>, %arg7: memref<512x128xf32, #tpu.memory_space<vmem>>) attributes {dimension_semantics = [#tpu.dimension_semantics<parallel>, #tpu.dimension_semantics<arbitrary>], iteration_bounds = array<i64: 1, 1>, scalar_prefetch = 0 : i64, scratch_operands = 1 : i64, tpu.core_type = #tpu.core_type<tc>, window_params = [{transform_indices = @transform_0, window_bounds = array<i64: 512, 128>}, {transform_indices = @transform_1, window_bounds = array<i64: 128, 128>}, {transform_indices = @transform_2, window_bounds = array<i64: 512, 128>}, {transform_indices = @transform_3, window_bounds = array<i64: 1, 1, 128>}, {transform_indices = @transform_4, window_bounds = array<i64: 1, 1, 128>}]} {
    %c0_i32 = arith.constant 0 : i32
    %0 = arith.cmpi eq, %arg1, %c0_i32 : i32
    %1 = arith.extui %0 : i1 to i32
    %c0_i32_0 = arith.constant 0 : i32
    %2 = arith.cmpi ne, %1, %c0_i32_0 : i32
    scf.if %2 {
      %cst_10 = arith.constant 0.000000e+00 : f32
      %12 = vector.broadcast %cst_10 : f32 to vector<512x128xf32>
      %c0_11 = arith.constant 0 : index
      %c0_12 = arith.constant 0 : index
      %13 = vector.load %arg7[%c0_11, %c0_12] : memref<512x128xf32, #tpu.memory_space<vmem>>, vector<512x128xf32>
      tpu.vector_store %arg7[%c0_11, %c0_12], %12 {strides = array<i32>} : memref<512x128xf32, #tpu.memory_space<vmem>>, vector<512x128xf32>,
    } else {
    }
    %c0 = arith.constant 0 : index
    %c0_1 = arith.constant 0 : index
    %3 = vector.load %arg7[%c0, %c0_1] : memref<512x128xf32, #tpu.memory_space<vmem>>, vector<512x128xf32>
    %c0_2 = arith.constant 0 : index
    %c0_3 = arith.constant 0 : index
    %4 = vector.load %arg2[%c0_2, %c0_3] : memref<512x128xbf16, #tpu.memory_space<vmem>>, vector<512x128xbf16>
    %c0_4 = arith.constant 0 : index
    %c0_5 = arith.constant 0 : index
    %5 = vector.load %arg3[%c0_4, %c0_5] : memref<128x128xbf16, #tpu.memory_space<vmem>>, vector<128x128xbf16>
    %cst = arith.constant dense<0.000000e+00> : vector<512x128xf32>
    %6 = tpu.matmul %4, %5, %cst {dimension_numbers = #tpu.dot_dimension_numbers<[1], [0], [0], [1], [0, 0, 1, 1], [], []>} : vector<512x128xbf16>, vector<128x128xbf16>, vector<512x128xf32> -> vector<512x128xf32>
    %7 = arith.addf %3, %6 : vector<512x128xf32>
    %c0_6 = arith.constant 0 : index
    %c0_7 = arith.constant 0 : index
    %8 = vector.load %arg7[%c0_6, %c0_7] : memref<512x128xf32, #tpu.memory_space<vmem>>, vector<512x128xf32>
    tpu.vector_store %arg7[%c0_6, %c0_7], %7 {strides = array<i32>} : memref<512x128xf32, #tpu.memory_space<vmem>>, vector<512x128xf32>,
    %c0_i32_8 = arith.constant 0 : i32
    %9 = arith.cmpi eq, %arg1, %c0_i32_8 : i32
    %10 = arith.extui %9 : i1 to i32
    %c0_i32_9 = arith.constant 0 : i32
    %11 = arith.cmpi ne, %10, %c0_i32_9 : i32
    scf.if %11 {
      %c0_10 = arith.constant 0 : index
      %c0_11 = arith.constant 0 : index
      %12 = vector.load %arg7[%c0_10, %c0_11] : memref<512x128xf32, #tpu.memory_space<vmem>>, vector<512x128xf32>
      %13 = arith.truncf %12 : vector<512x128xf32> to vector<512x128xbf16>
      %c0_12 = arith.constant 0 : index
      %c0_13 = arith.constant 0 : index
      %14 = vector.load %arg4[%c0_12, %c0_13] : memref<512x128xbf16, #tpu.memory_space<vmem>>, vector<512x128xbf16>
      tpu.vector_store %arg4[%c0_12, %c0_13], %13 {strides = array<i32>} : memref<512x128xbf16, #tpu.memory_space<vmem>>, vector<512x128xbf16>,
      %cst_14 = arith.constant dense<0.000000e+00> : vector<128xf32>
      %15 = vector.multi_reduction <add>, %12, %cst_14 [0] : vector<512x128xf32> to vector<128xf32>
      %16 = vector.shape_cast %15 : vector<128xf32> to vector<1x128xf32>
      %c0_15 = arith.constant 0 : index
      %c0_16 = arith.constant 0 : index
      %c0_17 = arith.constant 0 : index
      %17 = vector.load %arg5[%c0_15, %c0_16, %c0_17] : memref<1x1x128xf32, #tpu.memory_space<vmem>>, vector<1x1x128xf32>
      %18 = vector.shape_cast %17 : vector<1x1x128xf32> to vector<1x128xf32>
      %19 = vector.shape_cast %16 : vector<1x128xf32> to vector<1x1x128xf32>
      tpu.vector_store %arg5[%c0_15, %c0_16, %c0_17], %19 {strides = array<i32>} : memref<1x1x128xf32, #tpu.memory_space<vmem>>, vector<1x1x128xf32>,
      %20 = arith.mulf %12, %12 : vector<512x128xf32>
      %cst_18 = arith.constant dense<0.000000e+00> : vector<128xf32>
      %21 = vector.multi_reduction <add>, %20, %cst_18 [0] : vector<512x128xf32> to vector<128xf32>
      %22 = vector.shape_cast %21 : vector<128xf32> to vector<1x128xf32>
      %c0_19 = arith.constant 0 : index
      %c0_20 = arith.constant 0 : index
      %c0_21 = arith.constant 0 : index
      %23 = vector.load %arg6[%c0_19, %c0_20, %c0_21] : memref<1x1x128xf32, #tpu.memory_space<vmem>>, vector<1x1x128xf32>
      %24 = vector.shape_cast %23 : vector<1x1x128xf32> to vector<1x128xf32>
      %25 = vector.shape_cast %22 : vector<1x128xf32> to vector<1x1x128xf32>
      tpu.vector_store %arg6[%c0_19, %c0_20, %c0_21], %25 {strides = array<i32>} : memref<1x1x128xf32, #tpu.memory_space<vmem>>, vector<1x1x128xf32>,
    } else {
    }
    return
  }
  func.func @transform_0(%arg0: i32, %arg1: i32) -> (i32, i32) {
    %c0_i32 = arith.constant 0 : i32
    return %arg0, %arg1 : i32, i32
  }
  func.func @transform_1(%arg0: i32, %arg1: i32) -> (i32, i32) {
    %c0_i32 = arith.constant 0 : i32
    %c0_i32_0 = arith.constant 0 : i32
    return %arg1, %c0_i32 : i32, i32
  }
  func.func @transform_2(%arg0: i32, %arg1: i32) -> (i32, i32) {
    %c0_i32 = arith.constant 0 : i32
    %c0_i32_0 = arith.constant 0 : i32
    return %arg0, %c0_i32 : i32, i32
  }
  func.func @transform_3(%arg0: i32, %arg1: i32) -> (i32, i32, i32) {
    %c0_i32 = arith.constant 0 : i32
    %c0_i32_0 = arith.constant 0 : i32
    %c0_i32_1 = arith.constant 0 : i32
    return %arg0, %c0_i32, %c0_i32_0 : i32, i32, i32
  }
  func.func @transform_4(%arg0: i32, %arg1: i32) -> (i32, i32, i32) {
    %c0_i32 = arith.constant 0 : i32
    %c0_i32_0 = arith.constant 0 : i32
    %c0_i32_1 = arith.constant 0 : i32
    return %arg0, %c0_i32, %c0_i32_0 : i32, i32, i32
  }
}

module attributes {stable_mosaic.version = 11 : i64} {
  func.func @_bn_act_kernel(%arg0: i32, %arg1: memref<512x128xbf16, #tpu.memory_space<vmem>>, %arg2: memref<1x128xf32, #tpu.memory_space<vmem>>, %arg3: memref<1x128xf32, #tpu.memory_space<vmem>>, %arg4: memref<512x128xbf16, #tpu.memory_space<vmem>>) attributes {dimension_semantics = [#tpu.dimension_semantics<parallel>], iteration_bounds = array<i64: 1>, scalar_prefetch = 0 : i64, scratch_operands = 0 : i64, tpu.core_type = #tpu.core_type<tc>, window_params = [{transform_indices = @transform_0, window_bounds = array<i64: 512, 128>}, {pipeline_mode = #tpu.pipeline_mode<synchronous>, transform_indices = @transform_1, window_bounds = array<i64: 1, 128>}, {pipeline_mode = #tpu.pipeline_mode<synchronous>, transform_indices = @transform_2, window_bounds = array<i64: 1, 128>}, {transform_indices = @transform_3, window_bounds = array<i64: 512, 128>}]} {
    %c0 = arith.constant 0 : index
    %c0_0 = arith.constant 0 : index
    %0 = vector.load %arg1[%c0, %c0_0] : memref<512x128xbf16, #tpu.memory_space<vmem>>, vector<512x128xbf16>
    %1 = arith.extf %0 : vector<512x128xbf16> to vector<512x128xf32>
    %c0_1 = arith.constant 0 : index
    %c0_2 = arith.constant 0 : index
    %2 = vector.load %arg2[%c0_1, %c0_2] : memref<1x128xf32, #tpu.memory_space<vmem>>, vector<1x128xf32>
    %3 = vector.broadcast %2 : vector<1x128xf32> to vector<512x128xf32>
    %4 = arith.mulf %1, %3 : vector<512x128xf32>
    %c0_3 = arith.constant 0 : index
    %c0_4 = arith.constant 0 : index
    %5 = vector.load %arg3[%c0_3, %c0_4] : memref<1x128xf32, #tpu.memory_space<vmem>>, vector<1x128xf32>
    %6 = vector.broadcast %5 : vector<1x128xf32> to vector<512x128xf32>
    %7 = arith.addf %4, %6 : vector<512x128xf32>
    %cst = arith.constant 0.000000e+00 : f32
    %8 = vector.broadcast %cst : f32 to vector<512x128xf32>
    %9 = arith.maximumf %7, %8 : vector<512x128xf32>
    %10 = arith.truncf %9 : vector<512x128xf32> to vector<512x128xbf16>
    %c0_5 = arith.constant 0 : index
    %c0_6 = arith.constant 0 : index
    %11 = vector.load %arg4[%c0_5, %c0_6] : memref<512x128xbf16, #tpu.memory_space<vmem>>, vector<512x128xbf16>
    tpu.vector_store %arg4[%c0_5, %c0_6], %10 {strides = array<i32>} : memref<512x128xbf16, #tpu.memory_space<vmem>>, vector<512x128xbf16>,
    return
  }
  func.func @transform_0(%arg0: i32) -> (i32, i32) {
    %c0_i32 = arith.constant 0 : i32
    %c0_i32_0 = arith.constant 0 : i32
    return %arg0, %c0_i32 : i32, i32
  }
  func.func @transform_1(%arg0: i32) -> (i32, i32) {
    %c0_i32 = arith.constant 0 : i32
    %c0_i32_0 = arith.constant 0 : i32
    %c0_i32_1 = arith.constant 0 : i32
    return %c0_i32, %c0_i32_0 : i32, i32
  }
  func.func @transform_2(%arg0: i32) -> (i32, i32) {
    %c0_i32 = arith.constant 0 : i32
    %c0_i32_0 = arith.constant 0 : i32
    %c0_i32_1 = arith.constant 0 : i32
    return %c0_i32, %c0_i32_0 : i32, i32
  }
  func.func @transform_3(%arg0: i32) -> (i32, i32) {
    %c0_i32 = arith.constant 0 : i32
    %c0_i32_0 = arith.constant 0 : i32
    return %arg0, %c0_i32 : i32, i32
  }
}

module attributes {stable_mosaic.version = 11 : i64} {
  func.func @_conv3x3_kernel(%arg0: i32, %arg1: memref<4x90x128xbf16, #tpu.memory_space<vmem>>, %arg2: memref<3x3x128x128xbf16, #tpu.memory_space<vmem>>, %arg3: memref<72x1xf32, #tpu.memory_space<vmem>>, %arg4: memref<1x72x128xbf16, #tpu.memory_space<vmem>>, %arg5: memref<1x1x128xf32, #tpu.memory_space<vmem>>, %arg6: memref<1x1x128xf32, #tpu.memory_space<vmem>>) attributes {dimension_semantics = [#tpu.dimension_semantics<parallel>], iteration_bounds = array<i64: 2>, scalar_prefetch = 0 : i64, scratch_operands = 0 : i64, tpu.core_type = #tpu.core_type<tc>, window_params = [{transform_indices = @transform_0, window_bounds = array<i64: 4, 90, 128>}, {pipeline_mode = #tpu.pipeline_mode<synchronous>, transform_indices = @transform_1, window_bounds = array<i64: 3, 3, 128, 128>}, {pipeline_mode = #tpu.pipeline_mode<synchronous>, transform_indices = @transform_2, window_bounds = array<i64: 72, 1>}, {transform_indices = @transform_3, window_bounds = array<i64: 1, 72, 128>}, {transform_indices = @transform_4, window_bounds = array<i64: 1, 1, 128>}, {transform_indices = @transform_5, window_bounds = array<i64: 1, 1, 128>}]} {
    %c0 = arith.constant 0 : index
    %c0_0 = arith.constant 0 : index
    %c0_1 = arith.constant 0 : index
    %0 = vector.load %arg1[%c0, %c0_0, %c0_1] : memref<4x90x128xbf16, #tpu.memory_space<vmem>>, vector<1x72x128xbf16>
    %1 = vector.shape_cast %0 : vector<1x72x128xbf16> to vector<72x128xbf16>
    %c0_2 = arith.constant 0 : index
    %c0_3 = arith.constant 0 : index
    %c0_4 = arith.constant 0 : index
    %c0_5 = arith.constant 0 : index
    %2 = vector.load %arg2[%c0_2, %c0_3, %c0_4, %c0_5] : memref<3x3x128x128xbf16, #tpu.memory_space<vmem>>, vector<1x1x128x128xbf16>
    %3 = vector.shape_cast %2 : vector<1x1x128x128xbf16> to vector<128x128xbf16>
    %cst = arith.constant dense<0.000000e+00> : vector<72x128xf32>
    %4 = tpu.matmul %1, %3, %cst {dimension_numbers = #tpu.dot_dimension_numbers<[1], [0], [0], [1], [0, 0, 1, 1], [], []>} : vector<72x128xbf16>, vector<128x128xbf16>, vector<72x128xf32> -> vector<72x128xf32>
    %c1 = arith.constant 1 : index
    %c0_6 = arith.constant 0 : index
    %c0_7 = arith.constant 0 : index
    %5 = vector.load %arg1[%c1, %c0_6, %c0_7] : memref<4x90x128xbf16, #tpu.memory_space<vmem>>, vector<1x72x128xbf16>
    %6 = vector.shape_cast %5 : vector<1x72x128xbf16> to vector<72x128xbf16>
    %c0_8 = arith.constant 0 : index
    %c1_9 = arith.constant 1 : index
    %c0_10 = arith.constant 0 : index
    %c0_11 = arith.constant 0 : index
    %7 = vector.load %arg2[%c0_8, %c1_9, %c0_10, %c0_11] : memref<3x3x128x128xbf16, #tpu.memory_space<vmem>>, vector<1x1x128x128xbf16>
    %8 = vector.shape_cast %7 : vector<1x1x128x128xbf16> to vector<128x128xbf16>
    %cst_12 = arith.constant dense<0.000000e+00> : vector<72x128xf32>
    %9 = tpu.matmul %6, %8, %cst_12 {dimension_numbers = #tpu.dot_dimension_numbers<[1], [0], [0], [1], [0, 0, 1, 1], [], []>} : vector<72x128xbf16>, vector<128x128xbf16>, vector<72x128xf32> -> vector<72x128xf32>
    %10 = arith.addf %4, %9 : vector<72x128xf32>
    %c0_13 = arith.constant 0 : index
    %c1_14 = arith.constant 1 : index
    %c0_15 = arith.constant 0 : index
    %11 = vector.load %arg1[%c0_13, %c1_14, %c0_15] : memref<4x90x128xbf16, #tpu.memory_space<vmem>>, vector<1x72x128xbf16>
    %12 = vector.shape_cast %11 : vector<1x72x128xbf16> to vector<72x128xbf16>
    %c0_16 = arith.constant 0 : index
    %c2 = arith.constant 2 : index
    %c0_17 = arith.constant 0 : index
    %c0_18 = arith.constant 0 : index
    %13 = vector.load %arg2[%c0_16, %c2, %c0_17, %c0_18] : memref<3x3x128x128xbf16, #tpu.memory_space<vmem>>, vector<1x1x128x128xbf16>
    %14 = vector.shape_cast %13 : vector<1x1x128x128xbf16> to vector<128x128xbf16>
    %cst_19 = arith.constant dense<0.000000e+00> : vector<72x128xf32>
    %15 = tpu.matmul %12, %14, %cst_19 {dimension_numbers = #tpu.dot_dimension_numbers<[1], [0], [0], [1], [0, 0, 1, 1], [], []>} : vector<72x128xbf16>, vector<128x128xbf16>, vector<72x128xf32> -> vector<72x128xf32>
    %16 = arith.addf %10, %15 : vector<72x128xf32>
    %c2_20 = arith.constant 2 : index
    %c0_21 = arith.constant 0 : index
    %c0_22 = arith.constant 0 : index
    %17 = vector.load %arg1[%c2_20, %c0_21, %c0_22] : memref<4x90x128xbf16, #tpu.memory_space<vmem>>, vector<1x72x128xbf16>
    %18 = vector.shape_cast %17 : vector<1x72x128xbf16> to vector<72x128xbf16>
    %c1_23 = arith.constant 1 : index
    %c0_24 = arith.constant 0 : index
    %c0_25 = arith.constant 0 : index
    %c0_26 = arith.constant 0 : index
    %19 = vector.load %arg2[%c1_23, %c0_24, %c0_25, %c0_26] : memref<3x3x128x128xbf16, #tpu.memory_space<vmem>>, vector<1x1x128x128xbf16>
    %20 = vector.shape_cast %19 : vector<1x1x128x128xbf16> to vector<128x128xbf16>
    %cst_27 = arith.constant dense<0.000000e+00> : vector<72x128xf32>
    %21 = tpu.matmul %18, %20, %cst_27 {dimension_numbers = #tpu.dot_dimension_numbers<[1], [0], [0], [1], [0, 0, 1, 1], [], []>} : vector<72x128xbf16>, vector<128x128xbf16>, vector<72x128xf32> -> vector<72x128xf32>
    %22 = arith.addf %16, %21 : vector<72x128xf32>
    %c3 = arith.constant 3 : index
    %c0_28 = arith.constant 0 : index
    %c0_29 = arith.constant 0 : index
    %23 = vector.load %arg1[%c3, %c0_28, %c0_29] : memref<4x90x128xbf16, #tpu.memory_space<vmem>>, vector<1x72x128xbf16>
    %24 = vector.shape_cast %23 : vector<1x72x128xbf16> to vector<72x128xbf16>
    %c1_30 = arith.constant 1 : index
    %c1_31 = arith.constant 1 : index
    %c0_32 = arith.constant 0 : index
    %c0_33 = arith.constant 0 : index
    %25 = vector.load %arg2[%c1_30, %c1_31, %c0_32, %c0_33] : memref<3x3x128x128xbf16, #tpu.memory_space<vmem>>, vector<1x1x128x128xbf16>
    %26 = vector.shape_cast %25 : vector<1x1x128x128xbf16> to vector<128x128xbf16>
    %cst_34 = arith.constant dense<0.000000e+00> : vector<72x128xf32>
    %27 = tpu.matmul %24, %26, %cst_34 {dimension_numbers = #tpu.dot_dimension_numbers<[1], [0], [0], [1], [0, 0, 1, 1], [], []>} : vector<72x128xbf16>, vector<128x128xbf16>, vector<72x128xf32> -> vector<72x128xf32>
    %28 = arith.addf %22, %27 : vector<72x128xf32>
    %c2_35 = arith.constant 2 : index
    %c1_36 = arith.constant 1 : index
    %c0_37 = arith.constant 0 : index
    %29 = vector.load %arg1[%c2_35, %c1_36, %c0_37] : memref<4x90x128xbf16, #tpu.memory_space<vmem>>, vector<1x72x128xbf16>
    %30 = vector.shape_cast %29 : vector<1x72x128xbf16> to vector<72x128xbf16>
    %c1_38 = arith.constant 1 : index
    %c2_39 = arith.constant 2 : index
    %c0_40 = arith.constant 0 : index
    %c0_41 = arith.constant 0 : index
    %31 = vector.load %arg2[%c1_38, %c2_39, %c0_40, %c0_41] : memref<3x3x128x128xbf16, #tpu.memory_space<vmem>>, vector<1x1x128x128xbf16>
    %32 = vector.shape_cast %31 : vector<1x1x128x128xbf16> to vector<128x128xbf16>
    %cst_42 = arith.constant dense<0.000000e+00> : vector<72x128xf32>
    %33 = tpu.matmul %30, %32, %cst_42 {dimension_numbers = #tpu.dot_dimension_numbers<[1], [0], [0], [1], [0, 0, 1, 1], [], []>} : vector<72x128xbf16>, vector<128x128xbf16>, vector<72x128xf32> -> vector<72x128xf32>
    %34 = arith.addf %28, %33 : vector<72x128xf32>
    %c0_43 = arith.constant 0 : index
    %c9 = arith.constant 9 : index
    %c0_44 = arith.constant 0 : index
    %35 = vector.load %arg1[%c0_43, %c9, %c0_44] : memref<4x90x128xbf16, #tpu.memory_space<vmem>>, vector<1x72x128xbf16>
    %36 = vector.shape_cast %35 : vector<1x72x128xbf16> to vector<72x128xbf16>
    %c2_45 = arith.constant 2 : index
    %c0_46 = arith.constant 0 : index
    %c0_47 = arith.constant 0 : index
    %c0_48 = arith.constant 0 : index
    %37 = vector.load %arg2[%c2_45, %c0_46, %c0_47, %c0_48] : memref<3x3x128x128xbf16, #tpu.memory_space<vmem>>, vector<1x1x128x128xbf16>
    %38 = vector.shape_cast %37 : vector<1x1x128x128xbf16> to vector<128x128xbf16>
    %cst_49 = arith.constant dense<0.000000e+00> : vector<72x128xf32>
    %39 = tpu.matmul %36, %38, %cst_49 {dimension_numbers = #tpu.dot_dimension_numbers<[1], [0], [0], [1], [0, 0, 1, 1], [], []>} : vector<72x128xbf16>, vector<128x128xbf16>, vector<72x128xf32> -> vector<72x128xf32>
    %40 = arith.addf %34, %39 : vector<72x128xf32>
    %c1_50 = arith.constant 1 : index
    %c9_51 = arith.constant 9 : index
    %c0_52 = arith.constant 0 : index
    %41 = vector.load %arg1[%c1_50, %c9_51, %c0_52] : memref<4x90x128xbf16, #tpu.memory_space<vmem>>, vector<1x72x128xbf16>
    %42 = vector.shape_cast %41 : vector<1x72x128xbf16> to vector<72x128xbf16>
    %c2_53 = arith.constant 2 : index
    %c1_54 = arith.constant 1 : index
    %c0_55 = arith.constant 0 : index
    %c0_56 = arith.constant 0 : index
    %43 = vector.load %arg2[%c2_53, %c1_54, %c0_55, %c0_56] : memref<3x3x128x128xbf16, #tpu.memory_space<vmem>>, vector<1x1x128x128xbf16>
    %44 = vector.shape_cast %43 : vector<1x1x128x128xbf16> to vector<128x128xbf16>
    %cst_57 = arith.constant dense<0.000000e+00> : vector<72x128xf32>
    %45 = tpu.matmul %42, %44, %cst_57 {dimension_numbers = #tpu.dot_dimension_numbers<[1], [0], [0], [1], [0, 0, 1, 1], [], []>} : vector<72x128xbf16>, vector<128x128xbf16>, vector<72x128xf32> -> vector<72x128xf32>
    %46 = arith.addf %40, %45 : vector<72x128xf32>
    %c0_58 = arith.constant 0 : index
    %c10 = arith.constant 10 : index
    %c0_59 = arith.constant 0 : index
    %47 = vector.load %arg1[%c0_58, %c10, %c0_59] : memref<4x90x128xbf16, #tpu.memory_space<vmem>>, vector<1x72x128xbf16>
    %48 = vector.shape_cast %47 : vector<1x72x128xbf16> to vector<72x128xbf16>
    %c2_60 = arith.constant 2 : index
    %c2_61 = arith.constant 2 : index
    %c0_62 = arith.constant 0 : index
    %c0_63 = arith.constant 0 : index
    %49 = vector.load %arg2[%c2_60, %c2_61, %c0_62, %c0_63] : memref<3x3x128x128xbf16, #tpu.memory_space<vmem>>, vector<1x1x128x128xbf16>
    %50 = vector.shape_cast %49 : vector<1x1x128x128xbf16> to vector<128x128xbf16>
    %cst_64 = arith.constant dense<0.000000e+00> : vector<72x128xf32>
    %51 = tpu.matmul %48, %50, %cst_64 {dimension_numbers = #tpu.dot_dimension_numbers<[1], [0], [0], [1], [0, 0, 1, 1], [], []>} : vector<72x128xbf16>, vector<128x128xbf16>, vector<72x128xf32> -> vector<72x128xf32>
    %52 = arith.addf %46, %51 : vector<72x128xf32>
    %53 = arith.truncf %52 : vector<72x128xf32> to vector<72x128xbf16>
    %c0_65 = arith.constant 0 : index
    %c0_66 = arith.constant 0 : index
    %c0_67 = arith.constant 0 : index
    %54 = vector.load %arg4[%c0_65, %c0_66, %c0_67] : memref<1x72x128xbf16, #tpu.memory_space<vmem>>, vector<1x72x128xbf16>
    %55 = vector.shape_cast %54 : vector<1x72x128xbf16> to vector<72x128xbf16>
    %56 = vector.shape_cast %53 : vector<72x128xbf16> to vector<1x72x128xbf16>
    tpu.vector_store %arg4[%c0_65, %c0_66, %c0_67], %56 {strides = array<i32>} : memref<1x72x128xbf16, #tpu.memory_space<vmem>>, vector<1x72x128xbf16>,
    %c0_68 = arith.constant 0 : index
    %c0_69 = arith.constant 0 : index
    %57 = vector.load %arg3[%c0_68, %c0_69] : memref<72x1xf32, #tpu.memory_space<vmem>>, vector<72x1xf32>
    %58 = vector.broadcast %57 : vector<72x1xf32> to vector<72x128xf32>
    %59 = arith.mulf %52, %58 : vector<72x128xf32>
    %cst_70 = arith.constant dense<0.000000e+00> : vector<128xf32>
    %60 = vector.multi_reduction <add>, %59, %cst_70 [0] : vector<72x128xf32> to vector<128xf32>
    %61 = vector.shape_cast %60 : vector<128xf32> to vector<1x128xf32>
    %c0_71 = arith.constant 0 : index
    %c0_72 = arith.constant 0 : index
    %c0_73 = arith.constant 0 : index
    %62 = vector.load %arg5[%c0_71, %c0_72, %c0_73] : memref<1x1x128xf32, #tpu.memory_space<vmem>>, vector<1x1x128xf32>
    %63 = vector.shape_cast %62 : vector<1x1x128xf32> to vector<1x128xf32>
    %64 = vector.shape_cast %61 : vector<1x128xf32> to vector<1x1x128xf32>
    tpu.vector_store %arg5[%c0_71, %c0_72, %c0_73], %64 {strides = array<i32>} : memref<1x1x128xf32, #tpu.memory_space<vmem>>, vector<1x1x128xf32>,
    %65 = arith.mulf %59, %52 : vector<72x128xf32>
    %cst_74 = arith.constant dense<0.000000e+00> : vector<128xf32>
    %66 = vector.multi_reduction <add>, %65, %cst_74 [0] : vector<72x128xf32> to vector<128xf32>
    %67 = vector.shape_cast %66 : vector<128xf32> to vector<1x128xf32>
    %c0_75 = arith.constant 0 : index
    %c0_76 = arith.constant 0 : index
    %c0_77 = arith.constant 0 : index
    %68 = vector.load %arg6[%c0_75, %c0_76, %c0_77] : memref<1x1x128xf32, #tpu.memory_space<vmem>>, vector<1x1x128xf32>
    %69 = vector.shape_cast %68 : vector<1x1x128xf32> to vector<1x128xf32>
    %70 = vector.shape_cast %67 : vector<1x128xf32> to vector<1x1x128xf32>
    tpu.vector_store %arg6[%c0_75, %c0_76, %c0_77], %70 {strides = array<i32>} : memref<1x1x128xf32, #tpu.memory_space<vmem>>, vector<1x1x128xf32>,
    return
  }
  func.func @transform_0(%arg0: i32) -> (i32, i32, i32) {
    %c0_i32 = arith.constant 0 : i32
    %c0_i32_0 = arith.constant 0 : i32
    %c0_i32_1 = arith.constant 0 : i32
    return %arg0, %c0_i32, %c0_i32_0 : i32, i32, i32
  }
  func.func @transform_1(%arg0: i32) -> (i32, i32, i32, i32) {
    %c0_i32 = arith.constant 0 : i32
    %c0_i32_0 = arith.constant 0 : i32
    %c0_i32_1 = arith.constant 0 : i32
    %c0_i32_2 = arith.constant 0 : i32
    %c0_i32_3 = arith.constant 0 : i32
    return %c0_i32, %c0_i32_0, %c0_i32_1, %c0_i32_2 : i32, i32, i32, i32
  }
  func.func @transform_2(%arg0: i32) -> (i32, i32) {
    %c0_i32 = arith.constant 0 : i32
    %c0_i32_0 = arith.constant 0 : i32
    %c0_i32_1 = arith.constant 0 : i32
    return %c0_i32, %c0_i32_0 : i32, i32
  }
  func.func @transform_3(%arg0: i32) -> (i32, i32, i32) {
    %c0_i32 = arith.constant 0 : i32
    %c0_i32_0 = arith.constant 0 : i32
    %c0_i32_1 = arith.constant 0 : i32
    return %arg0, %c0_i32, %c0_i32_0 : i32, i32, i32
  }
  func.func @transform_4(%arg0: i32) -> (i32, i32, i32) {
    %c0_i32 = arith.constant 0 : i32
    %c0_i32_0 = arith.constant 0 : i32
    %c0_i32_1 = arith.constant 0 : i32
    return %arg0, %c0_i32, %c0_i32_0 : i32, i32, i32
  }
  func.func @transform_5(%arg0: i32) -> (i32, i32, i32) {
    %c0_i32 = arith.constant 0 : i32
    %c0_i32_0 = arith.constant 0 : i32
    %c0_i32_1 = arith.constant 0 : i32
    return %arg0, %c0_i32, %c0_i32_0 : i32, i32, i32
  }
}

module attributes {stable_mosaic.version = 11 : i64} {
  func.func @_final_kernel(%arg0: i32, %arg1: memref<1x72x128xbf16, #tpu.memory_space<vmem>>, %arg2: memref<1x128xf32, #tpu.memory_space<vmem>>, %arg3: memref<1x128xf32, #tpu.memory_space<vmem>>, %arg4: memref<1x72x128xbf16, #tpu.memory_space<vmem>>, %arg5: memref<1x128xf32, #tpu.memory_space<vmem>>, %arg6: memref<1x128xf32, #tpu.memory_space<vmem>>, %arg7: memref<1x72x128xbf16, #tpu.memory_space<vmem>>) attributes {dimension_semantics = [#tpu.dimension_semantics<parallel>], iteration_bounds = array<i64: 2>, scalar_prefetch = 0 : i64, scratch_operands = 0 : i64, tpu.core_type = #tpu.core_type<tc>, window_params = [{transform_indices = @transform_0, window_bounds = array<i64: 1, 72, 128>}, {pipeline_mode = #tpu.pipeline_mode<synchronous>, transform_indices = @transform_1, window_bounds = array<i64: 1, 128>}, {pipeline_mode = #tpu.pipeline_mode<synchronous>, transform_indices = @transform_2, window_bounds = array<i64: 1, 128>}, {transform_indices = @transform_3, window_bounds = array<i64: 1, 72, 128>}, {pipeline_mode = #tpu.pipeline_mode<synchronous>, transform_indices = @transform_4, window_bounds = array<i64: 1, 128>}, {pipeline_mode = #tpu.pipeline_mode<synchronous>, transform_indices = @transform_5, window_bounds = array<i64: 1, 128>}, {transform_indices = @transform_6, window_bounds = array<i64: 1, 72, 128>}]} {
    %c0 = arith.constant 0 : index
    %c0_0 = arith.constant 0 : index
    %c0_1 = arith.constant 0 : index
    %0 = vector.load %arg4[%c0, %c0_0, %c0_1] : memref<1x72x128xbf16, #tpu.memory_space<vmem>>, vector<1x72x128xbf16>
    %1 = vector.shape_cast %0 : vector<1x72x128xbf16> to vector<72x128xbf16>
    %2 = arith.extf %1 : vector<72x128xbf16> to vector<72x128xf32>
    %c0_2 = arith.constant 0 : index
    %c0_3 = arith.constant 0 : index
    %3 = vector.load %arg5[%c0_2, %c0_3] : memref<1x128xf32, #tpu.memory_space<vmem>>, vector<1x128xf32>
    %4 = vector.broadcast %3 : vector<1x128xf32> to vector<72x128xf32>
    %5 = arith.mulf %2, %4 : vector<72x128xf32>
    %c0_4 = arith.constant 0 : index
    %c0_5 = arith.constant 0 : index
    %6 = vector.load %arg6[%c0_4, %c0_5] : memref<1x128xf32, #tpu.memory_space<vmem>>, vector<1x128xf32>
    %7 = vector.broadcast %6 : vector<1x128xf32> to vector<72x128xf32>
    %8 = arith.addf %5, %7 : vector<72x128xf32>
    %c0_6 = arith.constant 0 : index
    %c0_7 = arith.constant 0 : index
    %c0_8 = arith.constant 0 : index
    %9 = vector.load %arg1[%c0_6, %c0_7, %c0_8] : memref<1x72x128xbf16, #tpu.memory_space<vmem>>, vector<1x72x128xbf16>
    %10 = vector.shape_cast %9 : vector<1x72x128xbf16> to vector<72x128xbf16>
    %11 = arith.extf %10 : vector<72x128xbf16> to vector<72x128xf32>
    %c0_9 = arith.constant 0 : index
    %c0_10 = arith.constant 0 : index
    %12 = vector.load %arg2[%c0_9, %c0_10] : memref<1x128xf32, #tpu.memory_space<vmem>>, vector<1x128xf32>
    %13 = vector.broadcast %12 : vector<1x128xf32> to vector<72x128xf32>
    %14 = arith.mulf %11, %13 : vector<72x128xf32>
    %c0_11 = arith.constant 0 : index
    %c0_12 = arith.constant 0 : index
    %15 = vector.load %arg3[%c0_11, %c0_12] : memref<1x128xf32, #tpu.memory_space<vmem>>, vector<1x128xf32>
    %16 = vector.broadcast %15 : vector<1x128xf32> to vector<72x128xf32>
    %17 = arith.addf %14, %16 : vector<72x128xf32>
    %18 = arith.addf %17, %8 : vector<72x128xf32>
    %cst = arith.constant 0.000000e+00 : f32
    %19 = vector.broadcast %cst : f32 to vector<72x128xf32>
    %20 = arith.maximumf %18, %19 : vector<72x128xf32>
    %21 = arith.truncf %20 : vector<72x128xf32> to vector<72x128xbf16>
    %c0_13 = arith.constant 0 : index
    %c0_14 = arith.constant 0 : index
    %c0_15 = arith.constant 0 : index
    %22 = vector.load %arg7[%c0_13, %c0_14, %c0_15] : memref<1x72x128xbf16, #tpu.memory_space<vmem>>, vector<1x72x128xbf16>
    %23 = vector.shape_cast %22 : vector<1x72x128xbf16> to vector<72x128xbf16>
    %24 = vector.shape_cast %21 : vector<72x128xbf16> to vector<1x72x128xbf16>
    tpu.vector_store %arg7[%c0_13, %c0_14, %c0_15], %24 {strides = array<i32>} : memref<1x72x128xbf16, #tpu.memory_space<vmem>>, vector<1x72x128xbf16>,
    return
  }
  func.func @transform_0(%arg0: i32) -> (i32, i32, i32) {
    %c0_i32 = arith.constant 0 : i32
    %c0_i32_0 = arith.constant 0 : i32
    %c0_i32_1 = arith.constant 0 : i32
    return %arg0, %c0_i32, %c0_i32_0 : i32, i32, i32
  }
  func.func @transform_1(%arg0: i32) -> (i32, i32) {
    %c0_i32 = arith.constant 0 : i32
    %c0_i32_0 = arith.constant 0 : i32
    %c0_i32_1 = arith.constant 0 : i32
    return %c0_i32, %c0_i32_0 : i32, i32
  }
  func.func @transform_2(%arg0: i32) -> (i32, i32) {
    %c0_i32 = arith.constant 0 : i32
    %c0_i32_0 = arith.constant 0 : i32
    %c0_i32_1 = arith.constant 0 : i32
    return %c0_i32, %c0_i32_0 : i32, i32
  }
  func.func @transform_3(%arg0: i32) -> (i32, i32, i32) {
    %c0_i32 = arith.constant 0 : i32
    %c0_i32_0 = arith.constant 0 : i32
    %c0_i32_1 = arith.constant 0 : i32
    return %arg0, %c0_i32, %c0_i32_0 : i32, i32, i32
  }
  func.func @transform_4(%arg0: i32) -> (i32, i32) {
    %c0_i32 = arith.constant 0 : i32
    %c0_i32_0 = arith.constant 0 : i32
    %c0_i32_1 = arith.constant 0 : i32
    return %c0_i32, %c0_i32_0 : i32, i32
  }
  func.func @transform_5(%arg0: i32) -> (i32, i32) {
    %c0_i32 = arith.constant 0 : i32
    %c0_i32_0 = arith.constant 0 : i32
    %c0_i32_1 = arith.constant 0 : i32
    return %c0_i32, %c0_i32_0 : i32, i32
  }
  func.func @transform_6(%arg0: i32) -> (i32, i32, i32) {
    %c0_i32 = arith.constant 0 : i32
    %c0_i32_0 = arith.constant 0 : i32
    %c0_i32_1 = arith.constant 0 : i32
    return %arg0, %c0_i32, %c0_i32_0 : i32, i32, i32
  }
}

module attributes {stable_mosaic.version = 11 : i64} {
  func.func @_mid_kernel(%arg0: i32, %arg1: memref<1x72x128xbf16, #tpu.memory_space<vmem>>, %arg2: memref<1x128xf32, #tpu.memory_space<vmem>>, %arg3: memref<1x128xf32, #tpu.memory_space<vmem>>, %arg4: memref<128x128xbf16, #tpu.memory_space<vmem>>, %arg5: memref<72x1xf32, #tpu.memory_space<vmem>>, %arg6: memref<1x72x128xbf16, #tpu.memory_space<vmem>>, %arg7: memref<128x128xbf16, #tpu.memory_space<vmem>>, %arg8: memref<1x72x128xbf16, #tpu.memory_space<vmem>>, %arg9: memref<1x1x128xf32, #tpu.memory_space<vmem>>, %arg10: memref<1x1x128xf32, #tpu.memory_space<vmem>>, %arg11: memref<1x72x128xbf16, #tpu.memory_space<vmem>>, %arg12: memref<1x1x128xf32, #tpu.memory_space<vmem>>, %arg13: memref<1x1x128xf32, #tpu.memory_space<vmem>>) attributes {dimension_semantics = [#tpu.dimension_semantics<parallel>], iteration_bounds = array<i64: 2>, scalar_prefetch = 0 : i64, scratch_operands = 0 : i64, tpu.core_type = #tpu.core_type<tc>, window_params = [{transform_indices = @transform_0, window_bounds = array<i64: 1, 72, 128>}, {pipeline_mode = #tpu.pipeline_mode<synchronous>, transform_indices = @transform_1, window_bounds = array<i64: 1, 128>}, {pipeline_mode = #tpu.pipeline_mode<synchronous>, transform_indices = @transform_2, window_bounds = array<i64: 1, 128>}, {pipeline_mode = #tpu.pipeline_mode<synchronous>, transform_indices = @transform_3, window_bounds = array<i64: 128, 128>}, {pipeline_mode = #tpu.pipeline_mode<synchronous>, transform_indices = @transform_4, window_bounds = array<i64: 72, 1>}, {transform_indices = @transform_5, window_bounds = array<i64: 1, 72, 128>}, {pipeline_mode = #tpu.pipeline_mode<synchronous>, transform_indices = @transform_6, window_bounds = array<i64: 128, 128>}, {transform_indices = @transform_7, window_bounds = array<i64: 1, 72, 128>}, {transform_indices = @transform_8, window_bounds = array<i64: 1, 1, 128>}, {transform_indices = @transform_9, window_bounds = array<i64: 1, 1, 128>}, {transform_indices = @transform_10, window_bounds = array<i64: 1, 72, 128>}, {transform_indices = @transform_11, window_bounds = array<i64: 1, 1, 128>}, {transform_indices = @transform_12, window_bounds = array<i64: 1, 1, 128>}]} {
    %c0 = arith.constant 0 : index
    %c0_0 = arith.constant 0 : index
    %0 = vector.load %arg5[%c0, %c0_0] : memref<72x1xf32, #tpu.memory_space<vmem>>, vector<72x1xf32>
    %c0_1 = arith.constant 0 : index
    %c0_2 = arith.constant 0 : index
    %c0_3 = arith.constant 0 : index
    %1 = vector.load %arg1[%c0_1, %c0_2, %c0_3] : memref<1x72x128xbf16, #tpu.memory_space<vmem>>, vector<1x72x128xbf16>
    %2 = vector.shape_cast %1 : vector<1x72x128xbf16> to vector<72x128xbf16>
    %3 = arith.extf %2 : vector<72x128xbf16> to vector<72x128xf32>
    %c0_4 = arith.constant 0 : index
    %c0_5 = arith.constant 0 : index
    %4 = vector.load %arg2[%c0_4, %c0_5] : memref<1x128xf32, #tpu.memory_space<vmem>>, vector<1x128xf32>
    %5 = vector.broadcast %4 : vector<1x128xf32> to vector<72x128xf32>
    %6 = arith.mulf %3, %5 : vector<72x128xf32>
    %c0_6 = arith.constant 0 : index
    %c0_7 = arith.constant 0 : index
    %7 = vector.load %arg3[%c0_6, %c0_7] : memref<1x128xf32, #tpu.memory_space<vmem>>, vector<1x128xf32>
    %8 = vector.broadcast %7 : vector<1x128xf32> to vector<72x128xf32>
    %9 = arith.addf %6, %8 : vector<72x128xf32>
    %cst = arith.constant 0.000000e+00 : f32
    %10 = vector.broadcast %cst : f32 to vector<72x128xf32>
    %11 = arith.maximumf %9, %10 : vector<72x128xf32>
    %12 = arith.truncf %11 : vector<72x128xf32> to vector<72x128xbf16>
    %c0_8 = arith.constant 0 : index
    %c0_9 = arith.constant 0 : index
    %13 = vector.load %arg4[%c0_8, %c0_9] : memref<128x128xbf16, #tpu.memory_space<vmem>>, vector<128x128xbf16>
    %cst_10 = arith.constant dense<0.000000e+00> : vector<72x128xf32>
    %14 = tpu.matmul %12, %13, %cst_10 {dimension_numbers = #tpu.dot_dimension_numbers<[1], [0], [0], [1], [0, 0, 1, 1], [], []>} : vector<72x128xbf16>, vector<128x128xbf16>, vector<72x128xf32> -> vector<72x128xf32>
    %15 = arith.truncf %14 : vector<72x128xf32> to vector<72x128xbf16>
    %c0_11 = arith.constant 0 : index
    %c0_12 = arith.constant 0 : index
    %c0_13 = arith.constant 0 : index
    %16 = vector.load %arg8[%c0_11, %c0_12, %c0_13] : memref<1x72x128xbf16, #tpu.memory_space<vmem>>, vector<1x72x128xbf16>
    %17 = vector.shape_cast %16 : vector<1x72x128xbf16> to vector<72x128xbf16>
    %18 = vector.shape_cast %15 : vector<72x128xbf16> to vector<1x72x128xbf16>
    tpu.vector_store %arg8[%c0_11, %c0_12, %c0_13], %18 {strides = array<i32>} : memref<1x72x128xbf16, #tpu.memory_space<vmem>>, vector<1x72x128xbf16>,
    %19 = vector.broadcast %0 : vector<72x1xf32> to vector<72x128xf32>
    %20 = arith.mulf %14, %19 : vector<72x128xf32>
    %cst_14 = arith.constant dense<0.000000e+00> : vector<128xf32>
    %21 = vector.multi_reduction <add>, %20, %cst_14 [0] : vector<72x128xf32> to vector<128xf32>
    %22 = vector.shape_cast %21 : vector<128xf32> to vector<1x128xf32>
    %c0_15 = arith.constant 0 : index
    %c0_16 = arith.constant 0 : index
    %c0_17 = arith.constant 0 : index
    %23 = vector.load %arg9[%c0_15, %c0_16, %c0_17] : memref<1x1x128xf32, #tpu.memory_space<vmem>>, vector<1x1x128xf32>
    %24 = vector.shape_cast %23 : vector<1x1x128xf32> to vector<1x128xf32>
    %25 = vector.shape_cast %22 : vector<1x128xf32> to vector<1x1x128xf32>
    tpu.vector_store %arg9[%c0_15, %c0_16, %c0_17], %25 {strides = array<i32>} : memref<1x1x128xf32, #tpu.memory_space<vmem>>, vector<1x1x128xf32>,
    %26 = arith.mulf %20, %14 : vector<72x128xf32>
    %cst_18 = arith.constant dense<0.000000e+00> : vector<128xf32>
    %27 = vector.multi_reduction <add>, %26, %cst_18 [0] : vector<72x128xf32> to vector<128xf32>
    %28 = vector.shape_cast %27 : vector<128xf32> to vector<1x128xf32>
    %c0_19 = arith.constant 0 : index
    %c0_20 = arith.constant 0 : index
    %c0_21 = arith.constant 0 : index
    %29 = vector.load %arg10[%c0_19, %c0_20, %c0_21] : memref<1x1x128xf32, #tpu.memory_space<vmem>>, vector<1x1x128xf32>
    %30 = vector.shape_cast %29 : vector<1x1x128xf32> to vector<1x128xf32>
    %31 = vector.shape_cast %28 : vector<1x128xf32> to vector<1x1x128xf32>
    tpu.vector_store %arg10[%c0_19, %c0_20, %c0_21], %31 {strides = array<i32>} : memref<1x1x128xf32, #tpu.memory_space<vmem>>, vector<1x1x128xf32>,
    %c0_22 = arith.constant 0 : index
    %c0_23 = arith.constant 0 : index
    %c0_24 = arith.constant 0 : index
    %32 = vector.load %arg6[%c0_22, %c0_23, %c0_24] : memref<1x72x128xbf16, #tpu.memory_space<vmem>>, vector<1x72x128xbf16>
    %33 = vector.shape_cast %32 : vector<1x72x128xbf16> to vector<72x128xbf16>
    %c0_25 = arith.constant 0 : index
    %c0_26 = arith.constant 0 : index
    %34 = vector.load %arg7[%c0_25, %c0_26] : memref<128x128xbf16, #tpu.memory_space<vmem>>, vector<128x128xbf16>
    %cst_27 = arith.constant dense<0.000000e+00> : vector<72x128xf32>
    %35 = tpu.matmul %33, %34, %cst_27 {dimension_numbers = #tpu.dot_dimension_numbers<[1], [0], [0], [1], [0, 0, 1, 1], [], []>} : vector<72x128xbf16>, vector<128x128xbf16>, vector<72x128xf32> -> vector<72x128xf32>
    %36 = arith.truncf %35 : vector<72x128xf32> to vector<72x128xbf16>
    %c0_28 = arith.constant 0 : index
    %c0_29 = arith.constant 0 : index
    %c0_30 = arith.constant 0 : index
    %37 = vector.load %arg11[%c0_28, %c0_29, %c0_30] : memref<1x72x128xbf16, #tpu.memory_space<vmem>>, vector<1x72x128xbf16>
    %38 = vector.shape_cast %37 : vector<1x72x128xbf16> to vector<72x128xbf16>
    %39 = vector.shape_cast %36 : vector<72x128xbf16> to vector<1x72x128xbf16>
    tpu.vector_store %arg11[%c0_28, %c0_29, %c0_30], %39 {strides = array<i32>} : memref<1x72x128xbf16, #tpu.memory_space<vmem>>, vector<1x72x128xbf16>,
    %40 = vector.broadcast %0 : vector<72x1xf32> to vector<72x128xf32>
    %41 = arith.mulf %35, %40 : vector<72x128xf32>
    %cst_31 = arith.constant dense<0.000000e+00> : vector<128xf32>
    %42 = vector.multi_reduction <add>, %41, %cst_31 [0] : vector<72x128xf32> to vector<128xf32>
    %43 = vector.shape_cast %42 : vector<128xf32> to vector<1x128xf32>
    %c0_32 = arith.constant 0 : index
    %c0_33 = arith.constant 0 : index
    %c0_34 = arith.constant 0 : index
    %44 = vector.load %arg12[%c0_32, %c0_33, %c0_34] : memref<1x1x128xf32, #tpu.memory_space<vmem>>, vector<1x1x128xf32>
    %45 = vector.shape_cast %44 : vector<1x1x128xf32> to vector<1x128xf32>
    %46 = vector.shape_cast %43 : vector<1x128xf32> to vector<1x1x128xf32>
    tpu.vector_store %arg12[%c0_32, %c0_33, %c0_34], %46 {strides = array<i32>} : memref<1x1x128xf32, #tpu.memory_space<vmem>>, vector<1x1x128xf32>,
    %47 = arith.mulf %41, %35 : vector<72x128xf32>
    %cst_35 = arith.constant dense<0.000000e+00> : vector<128xf32>
    %48 = vector.multi_reduction <add>, %47, %cst_35 [0] : vector<72x128xf32> to vector<128xf32>
    %49 = vector.shape_cast %48 : vector<128xf32> to vector<1x128xf32>
    %c0_36 = arith.constant 0 : index
    %c0_37 = arith.constant 0 : index
    %c0_38 = arith.constant 0 : index
    %50 = vector.load %arg13[%c0_36, %c0_37, %c0_38] : memref<1x1x128xf32, #tpu.memory_space<vmem>>, vector<1x1x128xf32>
    %51 = vector.shape_cast %50 : vector<1x1x128xf32> to vector<1x128xf32>
    %52 = vector.shape_cast %49 : vector<1x128xf32> to vector<1x1x128xf32>
    tpu.vector_store %arg13[%c0_36, %c0_37, %c0_38], %52 {strides = array<i32>} : memref<1x1x128xf32, #tpu.memory_space<vmem>>, vector<1x1x128xf32>,
    return
  }
  func.func @transform_0(%arg0: i32) -> (i32, i32, i32) {
    %c0_i32 = arith.constant 0 : i32
    %c0_i32_0 = arith.constant 0 : i32
    %c0_i32_1 = arith.constant 0 : i32
    return %arg0, %c0_i32, %c0_i32_0 : i32, i32, i32
  }
  func.func @transform_1(%arg0: i32) -> (i32, i32) {
    %c0_i32 = arith.constant 0 : i32
    %c0_i32_0 = arith.constant 0 : i32
    %c0_i32_1 = arith.constant 0 : i32
    return %c0_i32, %c0_i32_0 : i32, i32
  }
  func.func @transform_2(%arg0: i32) -> (i32, i32) {
    %c0_i32 = arith.constant 0 : i32
    %c0_i32_0 = arith.constant 0 : i32
    %c0_i32_1 = arith.constant 0 : i32
    return %c0_i32, %c0_i32_0 : i32, i32
  }
  func.func @transform_3(%arg0: i32) -> (i32, i32) {
    %c0_i32 = arith.constant 0 : i32
    %c0_i32_0 = arith.constant 0 : i32
    %c0_i32_1 = arith.constant 0 : i32
    return %c0_i32, %c0_i32_0 : i32, i32
  }
  func.func @transform_4(%arg0: i32) -> (i32, i32) {
    %c0_i32 = arith.constant 0 : i32
    %c0_i32_0 = arith.constant 0 : i32
    %c0_i32_1 = arith.constant 0 : i32
    return %c0_i32, %c0_i32_0 : i32, i32
  }
  func.func @transform_5(%arg0: i32) -> (i32, i32, i32) {
    %c0_i32 = arith.constant 0 : i32
    %c0_i32_0 = arith.constant 0 : i32
    %c0_i32_1 = arith.constant 0 : i32
    return %arg0, %c0_i32, %c0_i32_0 : i32, i32, i32
  }
  func.func @transform_6(%arg0: i32) -> (i32, i32) {
    %c0_i32 = arith.constant 0 : i32
    %c0_i32_0 = arith.constant 0 : i32
    %c0_i32_1 = arith.constant 0 : i32
    return %c0_i32, %c0_i32_0 : i32, i32
  }
  func.func @transform_7(%arg0: i32) -> (i32, i32, i32) {
    %c0_i32 = arith.constant 0 : i32
    %c0_i32_0 = arith.constant 0 : i32
    %c0_i32_1 = arith.constant 0 : i32
    return %arg0, %c0_i32, %c0_i32_0 : i32, i32, i32
  }
  func.func @transform_8(%arg0: i32) -> (i32, i32, i32) {
    %c0_i32 = arith.constant 0 : i32
    %c0_i32_0 = arith.constant 0 : i32
    %c0_i32_1 = arith.constant 0 : i32
    return %arg0, %c0_i32, %c0_i32_0 : i32, i32, i32
  }
  func.func @transform_9(%arg0: i32) -> (i32, i32, i32) {
    %c0_i32 = arith.constant 0 : i32
    %c0_i32_0 = arith.constant 0 : i32
    %c0_i32_1 = arith.constant 0 : i32
    return %arg0, %c0_i32, %c0_i32_0 : i32, i32, i32
  }
  func.func @transform_10(%arg0: i32) -> (i32, i32, i32) {
    %c0_i32 = arith.constant 0 : i32
    %c0_i32_0 = arith.constant 0 : i32
    %c0_i32_1 = arith.constant 0 : i32
    return %arg0, %c0_i32, %c0_i32_0 : i32, i32, i32
  }
  func.func @transform_11(%arg0: i32) -> (i32, i32, i32) {
    %c0_i32 = arith.constant 0 : i32
    %c0_i32_0 = arith.constant 0 : i32
    %c0_i32_1 = arith.constant 0 : i32
    return %arg0, %c0_i32, %c0_i32_0 : i32, i32, i32
  }
  func.func @transform_12(%arg0: i32) -> (i32, i32, i32) {
    %c0_i32 = arith.constant 0 : i32
    %c0_i32_0 = arith.constant 0 : i32
    %c0_i32_1 = arith.constant 0 : i32
    return %arg0, %c0_i32, %c0_i32_0 : i32, i32, i32
  }
}

</mosaic_0001>

<llo_original>
// kernel: bottleneck_forward.6
$region0: #{bottleneck_forward.6}
  #allocation0 [shape = 'u32[]', space=smem, size = 0x4, offset = 0x4, fixed_abs, tag = 'smem constant byte address 0x4 - core index']
  #allocation1 [shape = 'u32[144,128]{1,0:T(1,128)}', space=vmem, size = 0x12000, scoped, tag = 'internal scratch']
  %s0 = inlined_call_operand.vmem [shape: bf16[512,128], index: 0, kind: input, shape index: {}]
  %s1 = inlined_call_operand.vmem [shape: f32[1,128], index: 1, kind: input, shape index: {}]
  %s2 = inlined_call_operand.vmem [shape: f32[1,128], index: 2, kind: input, shape index: {}]
  %s3 = inlined_call_operand.vmem [shape: bf16[512,128], index: 3, kind: output, shape index: {}]
  %s4 = sld [smem:[#allocation0]]
  $region22: #{bottleneck_forward.6} parent=0
    _
  %s6 = ssub.s32 1, %s4
  %s7 = scalar_select 0, %s6, %s4
  // Predicated region
  $region2: #{bottleneck_forward.6} parent=0 // pred_check
    _
  $region3: #{bottleneck_forward.6} parent=0 // pred_check_branch
    %9 = sbr.rel (0) target = $region5
  $region4: #{bottleneck_forward.6} parent=0 // pred_region
    _
  $region5: #{bottleneck_forward.6} parent=0 // pred_fallthru
    _
  // Predicated region
  $region6: #{bottleneck_forward.6} parent=0 // pred_check
    _
  $region7: #{bottleneck_forward.6} parent=0 // pred_check_branch
    %11 = sbr.rel (0) target = $region9
  $region8: #{bottleneck_forward.6} parent=0 // pred_region
    _
  $region9: #{bottleneck_forward.6} parent=0 // pred_fallthru
    _
  // Predicated region
  $region10: #{bottleneck_forward.6} parent=0 // pred_check
    _
  $region11: #{bottleneck_forward.6} parent=0 // pred_check_branch
    %13 = sbr.rel (0) target = $region13
  $region12: #{bottleneck_forward.6} parent=0 // pred_region
    _
  $region13: #{bottleneck_forward.6} parent=0 // pred_fallthru
    _
  %v14 = vld [vmem:[%s0] sm:$0xf]
  %v15 = vld [vmem:[%s0 + $0x4] sm:$0xf]
  %v16 = vld [vmem:[%s0 + $0x8] sm:$0xf]
  %v17 = vld [vmem:[%s0 + $0xc] sm:$0xf]
  %v18 = vld [vmem:[%s0 + $0x10] sm:$0xf]
  %v19 = vld [vmem:[%s0 + $0x14] sm:$0xf]
  %v20 = vld [vmem:[%s0 + $0x18] sm:$0xf]
  %v21 = vld [vmem:[%s0 + $0x1c] sm:$0xf]
  %v22 = vld [vmem:[%s0 + $0x20] sm:$0xf]
  %v23 = vld [vmem:[%s0 + $0x24] sm:$0xf]
  %v24 = vld [vmem:[%s0 + $0x28] sm:$0xf]
  %v25 = vld [vmem:[%s0 + $0x2c] sm:$0xf]
  %v26 = vld [vmem:[%s0 + $0x30] sm:$0xf]
  %v27 = vld [vmem:[%s0 + $0x34] sm:$0xf]
  %v28 = vld [vmem:[%s0 + $0x38] sm:$0xf]
  %v29 = vld [vmem:[%s0 + $0x3c] sm:$0xf]
  %v30 = vld [vmem:[%s0 + $0x40] sm:$0xf]
  %v31 = vld [vmem:[%s0 + $0x44] sm:$0xf]
  %v32 = vld [vmem:[%s0 + $0x48] sm:$0xf]
  %v33 = vld [vmem:[%s0 + $0x4c] sm:$0xf]
  %v34 = vld [vmem:[%s0 + $0x50] sm:$0xf]
  %v35 = vld [vmem:[%s0 + $0x54] sm:$0xf]
  %v36 = vld [vmem:[%s0 + $0x58] sm:$0xf]
  %v37 = vld [vmem:[%s0 + $0x5c] sm:$0xf]
  %v38 = vld [vmem:[%s0 + $0x60] sm:$0xf]
  %v39 = vld [vmem:[%s0 + $0x64] sm:$0xf]
  %v40 = vld [vmem:[%s0 + $0x68] sm:$0xf]
  %v41 = vld [vmem:[%s0 + $0x6c] sm:$0xf]
  %v42 = vld [vmem:[%s0 + $0x70] sm:$0xf]
  %v43 = vld [vmem:[%s0 + $0x74] sm:$0xf]
  %v44 = vld [vmem:[%s0 + $0x78] sm:$0xf]
  %v45 = vld [vmem:[%s0 + $0x7c] sm:$0xf]
  %v46 = vld [vmem:[%s0 + $0x80] sm:$0xf]
  %v47 = vld [vmem:[%s0 + $0x84] sm:$0xf]
  %v48 = vld [vmem:[%s0 + $0x88] sm:$0xf]
  %v49 = vld [vmem:[%s0 + $0x8c] sm:$0xf]
  %v50 = vld [vmem:[%s0 + $0x90] sm:$0xf]
  %v51 = vld [vmem:[%s0 + $0x94] sm:$0xf]
  %v52 = vld [vmem:[%s0 + $0x98] sm:$0xf]
  %v53 = vld [vmem:[%s0 + $0x9c] sm:$0xf]
  %v54 = vld [vmem:[%s0 + $0xa0] sm:$0xf]
  %v55 = vld [vmem:[%s0 + $0xa4] sm:$0xf]
  %v56 = vld [vmem:[%s0 + $0xa8] sm:$0xf]
  %v57 = vld [vmem:[%s0 + $0xac] sm:$0xf]
  %v58 = vld [vmem:[%s0 + $0xb0] sm:$0xf]
  %v59 = vld [vmem:[%s0 + $0xb4] sm:$0xf]
  %v60 = vld [vmem:[%s0 + $0xb8] sm:$0xf]
  %v61 = vld [vmem:[%s0 + $0xbc] sm:$0xf]
  %v62 = vld [vmem:[%s0 + $0xc0] sm:$0xf]
  %v63 = vld [vmem:[%s0 + $0xc4] sm:$0xf]
  %v64 = vld [vmem:[%s0 + $0xc8] sm:$0xf]
  %v65 = vld [vmem:[%s0 + $0xcc] sm:$0xf]
  %v66 = vld [vmem:[%s0 + $0xd0] sm:$0xf]
  %v67 = vld [vmem:[%s0 + $0xd4] sm:$0xf]
  %v68 = vld [vmem:[%s0 + $0xd8] sm:$0xf]
  %v69 = vld [vmem:[%s0 + $0xdc] sm:$0xf]
  %v70 = vld [vmem:[%s0 + $0xe0] sm:$0xf]
  %v71 = vld [vmem:[%s0 + $0xe4] sm:$0xf]
  %v72 = vld [vmem:[%s0 + $0xe8] sm:$0xf]
  %v73 = vld [vmem:[%s0 + $0xec] sm:$0xf]
  %v74 = vld [vmem:[%s0 + $0xf0] sm:$0xf]
  %v75 = vld [vmem:[%s0 + $0xf4] sm:$0xf]
  %v76 = vld [vmem:[%s0 + $0xf8] sm:$0xf]
  %v77 = vld [vmem:[%s0 + $0xfc] sm:$0xf]
  %v78 = vunpack.c.l.bf16 %v14
  %v79 = vunpack.c.l.bf16 %v15
  %v80 = vunpack.c.l.bf16 %v16
  %v81 = vunpack.c.l.bf16 %v17
  %v82 = vunpack.c.l.bf16 %v18
  %v83 = vunpack.c.l.bf16 %v19
  %v84 = vunpack.c.l.bf16 %v20
  %v85 = vunpack.c.l.bf16 %v21
  %v86 = vunpack.c.l.bf16 %v22
  %v87 = vunpack.c.l.bf16 %v23
  %v88 = vunpack.c.l.bf16 %v24
  %v89 = vunpack.c.l.bf16 %v25
  %v90 = vunpack.c.l.bf16 %v26
  %v91 = vunpack.c.l.bf16 %v27
  %v92 = vunpack.c.l.bf16 %v28
  %v93 = vunpack.c.l.bf16 %v29
  %v94 = vunpack.c.l.bf16 %v30
  %v95 = vunpack.c.l.bf16 %v31
  %v96 = vunpack.c.l.bf16 %v32
  %v97 = vunpack.c.l.bf16 %v33
  %v98 = vunpack.c.l.bf16 %v34
  %v99 = vunpack.c.l.bf16 %v35
  %v100 = vunpack.c.l.bf16 %v36
  %v101 = vunpack.c.l.bf16 %v37
  %v102 = vunpack.c.l.bf16 %v38
  %v103 = vunpack.c.l.bf16 %v39
  %v104 = vunpack.c.l.bf16 %v40
  %v105 = vunpack.c.l.bf16 %v41
  %v106 = vunpack.c.l.bf16 %v42
  %v107 = vunpack.c.l.bf16 %v43
  %v108 = vunpack.c.l.bf16 %v44
  %v109 = vunpack.c.l.bf16 %v45
  %v110 = vunpack.c.l.bf16 %v46
  %v111 = vunpack.c.l.bf16 %v47
  %v112 = vunpack.c.l.bf16 %v48
  %v113 = vunpack.c.l.bf16 %v49
  %v114 = vunpack.c.l.bf16 %v50
  %v115 = vunpack.c.l.bf16 %v51
  %v116 = vunpack.c.l.bf16 %v52
  %v117 = vunpack.c.l.bf16 %v53
  %v118 = vunpack.c.l.bf16 %v54
  %v119 = vunpack.c.l.bf16 %v55
  %v120 = vunpack.c.l.bf16 %v56
  %v121 = vunpack.c.l.bf16 %v57
  %v122 = vunpack.c.l.bf16 %v58
  %v123 = vunpack.c.l.bf16 %v59
  %v124 = vunpack.c.l.bf16 %v60
  %v125 = vunpack.c.l.bf16 %v61
  %v126 = vunpack.c.l.bf16 %v62
  %v127 = vunpack.c.l.bf16 %v63
  %v128 = vunpack.c.l.bf16 %v64
  %v129 = vunpack.c.l.bf16 %v65
  %v130 = vunpack.c.l.bf16 %v66
  %v131 = vunpack.c.l.bf16 %v67
  %v132 = vunpack.c.l.bf16 %v68
  %v133 = vunpack.c.l.bf16 %v69
  %v134 = vunpack.c.l.bf16 %v70
  %v135 = vunpack.c.l.bf16 %v71
  %v136 = vunpack.c.l.bf16 %v72
  %v137 = vunpack.c.l.bf16 %v73
  %v138 = vunpack.c.l.bf16 %v74
  %v139 = vunpack.c.l.bf16 %v75
  %v140 = vunpack.c.l.bf16 %v76
  %v141 = vunpack.c.l.bf16 %v77
  %v142 = vld [vmem:[%s1] sm:$0x1]
  %v144 = vlaneseq
  %v145 = vshrl.u32 %v144, 7
  %v146 = vsub.s32 0, %v145
  %v147 = vrot.slane %v142, %v146
  %v149 = vmul.f32 %v78, %v147
  %v150 = vmul.f32 %v79, %v147
  %v151 = vmul.f32 %v80, %v147
  %v152 = vmul.f32 %v81, %v147
  %v153 = vmul.f32 %v82, %v147
  %v154 = vmul.f32 %v83, %v147
  %v155 = vmul.f32 %v84, %v147
  %v156 = vmul.f32 %v85, %v147
  %v157 = vmul.f32 %v86, %v147
  %v158 = vmul.f32 %v87, %v147
  %v159 = vmul.f32 %v88, %v147
  %v160 = vmul.f32 %v89, %v147
  %v161 = vmul.f32 %v90, %v147
  %v162 = vmul.f32 %v91, %v147
  %v163 = vmul.f32 %v92, %v147
  %v164 = vmul.f32 %v93, %v147
  %v165 = vmul.f32 %v94, %v147
  %v166 = vmul.f32 %v95, %v147
  %v167 = vmul.f32 %v96, %v147
  %v168 = vmul.f32 %v97, %v147
  %v169 = vmul.f32 %v98, %v147
  %v170 = vmul.f32 %v99, %v147
  %v171 = vmul.f32 %v100, %v147
  %v172 = vmul.f32 %v101, %v147
  %v173 = vmul.f32 %v102, %v147
  %v174 = vmul.f32 %v103, %v147
  %v175 = vmul.f32 %v104, %v147
  %v176 = vmul.f32 %v105, %v147
  %v177 = vmul.f32 %v106, %v147
  %v178 = vmul.f32 %v107, %v147
  %v179 = vmul.f32 %v108, %v147
  %v180 = vmul.f32 %v109, %v147
  %v181 = vmul.f32 %v110, %v147
  %v182 = vmul.f32 %v111, %v147
  %v183 = vmul.f32 %v112, %v147
  %v184 = vmul.f32 %v113, %v147
  %v185 = vmul.f32 %v114, %v147
  %v186 = vmul.f32 %v115, %v147
  %v187 = vmul.f32 %v116, %v147
  %v188 = vmul.f32 %v117, %v147
  %v189 = vmul.f32 %v118, %v147
  %v190 = vmul.f32 %v119, %v147
  %v191 = vmul.f32 %v120, %v147
  %v192 = vmul.f32 %v121, %v147
  %v193 = vmul.f32 %v122, %v147
  %v194 = vmul.f32 %v123, %v147
  %v195 = vmul.f32 %v124, %v147
  %v196 = vmul.f32 %v125, %v147
  %v197 = vmul.f32 %v126, %v147
  %v198 = vmul.f32 %v127, %v147
  %v199 = vmul.f32 %v128, %v147
  %v200 = vmul.f32 %v129, %v147
  %v201 = vmul.f32 %v130, %v147
  %v202 = vmul.f32 %v131, %v147
  %v203 = vmul.f32 %v132, %v147
  %v204 = vmul.f32 %v133, %v147
  %v205 = vmul.f32 %v134, %v147
  %v206 = vmul.f32 %v135, %v147
  %v207 = vmul.f32 %v136, %v147
  %v208 = vmul.f32 %v137, %v147
  %v209 = vmul.f32 %v138, %v147
  %v210 = vmul.f32 %v139, %v147
  %v211 = vmul.f32 %v140, %v147
  %v212 = vmul.f32 %v141, %v147
  %v213 = vld [vmem:[%s2] sm:$0x1]
  %v215 = vlaneseq
  %v216 = vshrl.u32 %v215, 7
  %v217 = vsub.s32 0, %v216
  %v218 = vrot.slane %v213, %v217
  %v220 = vadd.f32 %v149, %v218
  %v221 = vadd.f32 %v150, %v218
  %v222 = vadd.f32 %v151, %v218
  %v223 = vadd.f32 %v152, %v218
  %v224 = vadd.f32 %v153, %v218
  %v225 = vadd.f32 %v154, %v218
  %v226 = vadd.f32 %v155, %v218
  %v227 = vadd.f32 %v156, %v218
  %v228 = vadd.f32 %v157, %v218
  %v229 = vadd.f32 %v158, %v218
  %v230 = vadd.f32 %v159, %v218
  %v231 = vadd.f32 %v160, %v218
  %v232 = vadd.f32 %v161, %v218
  %v233 = vadd.f32 %v162, %v218
  %v234 = vadd.f32 %v163, %v218
  %v235 = vadd.f32 %v164, %v218
  %v236 = vadd.f32 %v165, %v218
  %v237 = vadd.f32 %v166, %v218
  %v238 = vadd.f32 %v167, %v218
  %v239 = vadd.f32 %v168, %v218
  %v240 = vadd.f32 %v169, %v218
  %v241 = vadd.f32 %v170, %v218
  %v242 = vadd.f32 %v171, %v218
  %v243 = vadd.f32 %v172, %v218
  %v244 = vadd.f32 %v173, %v218
  %v245 = vadd.f32 %v174, %v218
  %v246 = vadd.f32 %v175, %v218
  %v247 = vadd.f32 %v176, %v218
  %v248 = vadd.f32 %v177, %v218
  %v249 = vadd.f32 %v178, %v218
  %v250 = vadd.f32 %v179, %v218
  %v251 = vadd.f32 %v180, %v218
  %v252 = vadd.f32 %v181, %v218
  %v253 = vadd.f32 %v182, %v218
  %v254 = vadd.f32 %v183, %v218
  %v255 = vadd.f32 %v184, %v218
  %v256 = vadd.f32 %v185, %v218
  %v257 = vadd.f32 %v186, %v218
  %v258 = vadd.f32 %v187, %v218
  %v259 = vadd.f32 %v188, %v218
  %v260 = vadd.f32 %v189, %v218
  %v261 = vadd.f32 %v190, %v218
  %v262 = vadd.f32 %v191, %v218
  %v263 = vadd.f32 %v192, %v218
  %v264 = vadd.f32 %v193, %v218
  %v265 = vadd.f32 %v194, %v218
  %v266 = vadd.f32 %v195, %v218
  %v267 = vadd.f32 %v196, %v218
  %v268 = vadd.f32 %v197, %v218
  %v269 = vadd.f32 %v198, %v218
  %v270 = vadd.f32 %v199, %v218
  %v271 = vadd.f32 %v200, %v218
  %v272 = vadd.f32 %v201, %v218
  %v273 = vadd.f32 %v202, %v218
  %v274 = vadd.f32 %v203, %v218
  %v275 = vadd.f32 %v204, %v218
  %v276 = vadd.f32 %v205, %v218
  %v277 = vadd.f32 %v206, %v218
  %v278 = vadd.f32 %v207, %v218
  %v279 = vadd.f32 %v208, %v218
  %v280 = vadd.f32 %v209, %v218
  %v281 = vadd.f32 %v210, %v218
  %v282 = vadd.f32 %v211, %v218
  %v283 = vadd.f32 %v212, %v218
  %v284 = vmax.f32 %v220, 0.0
  %v285 = vmax.f32 %v221, 0.0
  %v286 = vmax.f32 %v222, 0.0
  %v287 = vmax.f32 %v223, 0.0
  %v288 = vmax.f32 %v224, 0.0
  %v289 = vmax.f32 %v225, 0.0
  %v290 = vmax.f32 %v226, 0.0
  %v291 = vmax.f32 %v227, 0.0
  %v292 = vmax.f32 %v228, 0.0
  %v293 = vmax.f32 %v229, 0.0
  %v294 = vmax.f32 %v230, 0.0
  %v295 = vmax.f32 %v231, 0.0
  %v296 = vmax.f32 %v232, 0.0
  %v297 = vmax.f32 %v233, 0.0
  %v298 = vmax.f32 %v234, 0.0
  %v299 = vmax.f32 %v235, 0.0
  %v300 = vmax.f32 %v236, 0.0
  %v301 = vmax.f32 %v237, 0.0
  %v302 = vmax.f32 %v238, 0.0
  %v303 = vmax.f32 %v239, 0.0
  %v304 = vmax.f32 %v240, 0.0
  %v305 = vmax.f32 %v241, 0.0
  %v306 = vmax.f32 %v242, 0.0
  %v307 = vmax.f32 %v243, 0.0
  %v308 = vmax.f32 %v244, 0.0
  %v309 = vmax.f32 %v245, 0.0
  %v310 = vmax.f32 %v246, 0.0
  %v311 = vmax.f32 %v247, 0.0
  %v312 = vmax.f32 %v248, 0.0
  %v313 = vmax.f32 %v249, 0.0
  %v314 = vmax.f32 %v250, 0.0
  %v315 = vmax.f32 %v251, 0.0
  %v316 = vmax.f32 %v252, 0.0
  %v317 = vmax.f32 %v253, 0.0
  %v318 = vmax.f32 %v254, 0.0
  %v319 = vmax.f32 %v255, 0.0
  %v320 = vmax.f32 %v256, 0.0
  %v321 = vmax.f32 %v257, 0.0
  %v322 = vmax.f32 %v258, 0.0
  %v323 = vmax.f32 %v259, 0.0
  %v324 = vmax.f32 %v260, 0.0
  %v325 = vmax.f32 %v261, 0.0
  %v326 = vmax.f32 %v262, 0.0
  %v327 = vmax.f32 %v263, 0.0
  %v328 = vmax.f32 %v264, 0.0
  %v329 = vmax.f32 %v265, 0.0
  %v330 = vmax.f32 %v266, 0.0
  %v331 = vmax.f32 %v267, 0.0
  %v332 = vmax.f32 %v268, 0.0
  %v333 = vmax.f32 %v269, 0.0
  %v334 = vmax.f32 %v270, 0.0
  %v335 = vmax.f32 %v271, 0.0
  %v336 = vmax.f32 %v272, 0.0
  %v337 = vmax.f32 %v273, 0.0
  %v338 = vmax.f32 %v274, 0.0
  %v339 = vmax.f32 %v275, 0.0
  %v340 = vmax.f32 %v276, 0.0
  %v341 = vmax.f32 %v277, 0.0
  %v342 = vmax.f32 %v278, 0.0
  %v343 = vmax.f32 %v279, 0.0
  %v344 = vmax.f32 %v280, 0.0
  %v345 = vmax.f32 %v281, 0.0
  %v346 = vmax.f32 %v282, 0.0
  %v347 = vmax.f32 %v283, 0.0
  %v348 = vpack.c.bf16 %v285, %v284
  %v349 = vpack.c.bf16 %v287, %v286
  %v350 = vpack.c.bf16 %v289, %v288
  %v351 = vpack.c.bf16 %v291, %v290
  %v352 = vpack.c.bf16 %v293, %v292
  %v353 = vpack.c.bf16 %v295, %v294
  %v354 = vpack.c.bf16 %v297, %v296
  %v355 = vpack.c.bf16 %v299, %v298
  %v356 = vpack.c.bf16 %v301, %v300
  %v357 = vpack.c.bf16 %v303, %v302
  %v358 = vpack.c.bf16 %v305, %v304
  %v359 = vpack.c.bf16 %v307, %v306
  %v360 = vpack.c.bf16 %v309, %v308
  %v361 = vpack.c.bf16 %v311, %v310
  %v362 = vpack.c.bf16 %v313, %v312
  %v363 = vpack.c.bf16 %v315, %v314
  %v364 = vpack.c.bf16 %v317, %v316
  %v365 = vpack.c.bf16 %v319, %v318
  %v366 = vpack.c.bf16 %v321, %v320
  %v367 = vpack.c.bf16 %v323, %v322
  %v368 = vpack.c.bf16 %v325, %v324
  %v369 = vpack.c.bf16 %v327, %v326
  %v370 = vpack.c.bf16 %v329, %v328
  %v371 = vpack.c.bf16 %v331, %v330
  %v372 = vpack.c.bf16 %v333, %v332
  %v373 = vpack.c.bf16 %v335, %v334
  %v374 = vpack.c.bf16 %v337, %v336
  %v375 = vpack.c.bf16 %v339, %v338
  %v376 = vpack.c.bf16 %v341, %v340
  %v377 = vpack.c.bf16 %v343, %v342
  %v378 = vpack.c.bf16 %v345, %v344
  %v379 = vpack.c.bf16 %v347, %v346
  %v412 = vunpack.c.l.b16 %v348
  %v413 = vunpack.c.h.b16 %v348
  %v414 = vunpack.c.l.b16 %v349
  %v415 = vunpack.c.h.b16 %v349
  %v416 = vunpack.c.l.b16 %v350
  %v417 = vunpack.c.h.b16 %v350
  %v418 = vunpack.c.l.b16 %v351
  %v419 = vunpack.c.h.b16 %v351
  %v420 = vunpack.c.l.b16 %v352
  %v421 = vunpack.c.h.b16 %v352
  %v422 = vunpack.c.l.b16 %v353
  %v423 = vunpack.c.h.b16 %v353
  %v424 = vunpack.c.l.b16 %v354
  %v425 = vunpack.c.h.b16 %v354
  %v426 = vunpack.c.l.b16 %v355
  %v427 = vunpack.c.h.b16 %v355
  %v428 = vunpack.c.l.b16 %v356
  %v429 = vunpack.c.h.b16 %v356
  %v430 = vunpack.c.l.b16 %v357
  %v431 = vunpack.c.h.b16 %v357
  %v432 = vunpack.c.l.b16 %v358
  %v433 = vunpack.c.h.b16 %v358
  %v434 = vunpack.c.l.b16 %v359
  %v435 = vunpack.c.h.b16 %v359
  %v436 = vunpack.c.l.b16 %v360
  %v437 = vunpack.c.h.b16 %v360
  %v438 = vunpack.c.l.b16 %v361
  %v439 = vunpack.c.h.b16 %v361
  %v440 = vunpack.c.l.b16 %v362
  %v441 = vunpack.c.h.b16 %v362
  %v442 = vunpack.c.l.b16 %v363
  %v443 = vunpack.c.h.b16 %v363
  %v444 = vunpack.c.l.b16 %v364
  %v445 = vunpack.c.h.b16 %v364
  %v446 = vunpack.c.l.b16 %v365
  %v447 = vunpack.c.h.b16 %v365
  %v448 = vunpack.c.l.b16 %v366
  %v449 = vunpack.c.h.b16 %v366
  %v450 = vunpack.c.l.b16 %v367
  %v451 = vunpack.c.h.b16 %v367
  %v452 = vunpack.c.l.b16 %v368
  %v453 = vunpack.c.h.b16 %v368
  %v454 = vunpack.c.l.b16 %v369
  %v455 = vunpack.c.h.b16 %v369
  %v456 = vunpack.c.l.b16 %v370
  %v457 = vunpack.c.h.b16 %v370
  %v458 = vunpack.c.l.b16 %v371
  %v459 = vunpack.c.h.b16 %v371
  %v460 = vunpack.c.l.b16 %v372
  %v461 = vunpack.c.h.b16 %v372
  %v462 = vunpack.c.l.b16 %v373
  %v463 = vunpack.c.h.b16 %v373
  %v464 = vunpack.c.l.b16 %v374
  %v465 = vunpack.c.h.b16 %v374
  %v466 = vunpack.c.l.b16 %v375
  %v467 = vunpack.c.h.b16 %v375
  %v468 = vunpack.c.l.b16 %v376
  %v469 = vunpack.c.h.b16 %v376
  %v470 = vunpack.c.l.b16 %v377
  %v471 = vunpack.c.h.b16 %v377
  %v472 = vunpack.c.l.b16 %v378
  %v473 = vunpack.c.h.b16 %v378
  %v474 = vunpack.c.l.b16 %v379
  %v475 = vunpack.c.h.b16 %v379
  %v476 = vpack.c.b16 %v412, %v412
  %v477 = vpack.c.b16 %v413, %v413
  %v478 = vpack.c.b16 %v414, %v414
  %v479 = vpack.c.b16 %v415, %v415
  %v480 = vpack.c.b16 %v416, %v416
  %v481 = vpack.c.b16 %v417, %v417
  %v482 = vpack.c.b16 %v418, %v418
  %v483 = vpack.c.b16 %v419, %v419
  %v484 = vpack.c.b16 %v420, %v420
  %v485 = vpack.c.b16 %v421, %v421
  %v486 = vpack.c.b16 %v422, %v422
  %v487 = vpack.c.b16 %v423, %v423
  %v488 = vpack.c.b16 %v424, %v424
  %v489 = vpack.c.b16 %v425, %v425
  %v490 = vpack.c.b16 %v426, %v426
  %v491 = vpack.c.b16 %v427, %v427
  %v492 = vpack.c.b16 %v428, %v428
  %v493 = vpack.c.b16 %v429, %v429
  %v494 = vpack.c.b16 %v430, %v430
  %v495 = vpack.c.b16 %v431, %v431
  %v496 = vpack.c.b16 %v432, %v432
  %v497 = vpack.c.b16 %v433, %v433
  %v498 = vpack.c.b16 %v434, %v434
  %v499 = vpack.c.b16 %v435, %v435
  %v500 = vpack.c.b16 %v436, %v436
  %v501 = vpack.c.b16 %v437, %v437
  %v502 = vpack.c.b16 %v438, %v438
  %v503 = vpack.c.b16 %v439, %v439
  %v504 = vpack.c.b16 %v440, %v440
  %v505 = vpack.c.b16 %v441, %v441
  %v506 = vpack.c.b16 %v442, %v442
  %v507 = vpack.c.b16 %v443, %v443
  %v508 = vpack.c.b16 %v444, %v444
  %v509 = vpack.c.b16 %v445, %v445
  %v510 = vpack.c.b16 %v446, %v446
  %v511 = vpack.c.b16 %v447, %v447
  %v512 = vpack.c.b16 %v448, %v448
  %v513 = vpack.c.b16 %v449, %v449
  %v514 = vpack.c.b16 %v450, %v450
  %v515 = vpack.c.b16 %v451, %v451
  %v516 = vpack.c.b16 %v452, %v452
  %v517 = vpack.c.b16 %v453, %v453
  %v518 = vpack.c.b16 %v454, %v454
  %v519 = vpack.c.b16 %v455, %v455
  %v520 = vpack.c.b16 %v456, %v456
  %v521 = vpack.c.b16 %v457, %v457
  %v522 = vpack.c.b16 %v458, %v458
  %v523 = vpack.c.b16 %v459, %v459
  %v524 = vpack.c.b16 %v460, %v460
  %v525 = vpack.c.b16 %v461, %v461
  %v526 = vpack.c.b16 %v462, %v462
  %v527 = vpack.c.b16 %v463, %v463
  %v528 = vpack.c.b16 %v464, %v464
  %v529 = vpack.c.b16 %v465, %v465
  %v530 = vpack.c.b16 %v466, %v466
  %v531 = vpack.c.b16 %v467, %v467
  %v532 = vpack.c.b16 %v468, %v468
  %v533 = vpack.c.b16 %v469, %v469
  %v534 = vpack.c.b16 %v470, %v470
  %v535 = vpack.c.b16 %v471, %v471
  %v536 = vpack.c.b16 %v472, %v472
  %v537 = vpack.c.b16 %v473, %v473
  %v538 = vpack.c.b16 %v474, %v474
  %v539 = vpack.c.b16 %v475, %v475
  %604 = vst [vmem:[%s3] sm:$0xf] %v476
  %605 = vst [vmem:[%s3 + $0x4] sm:$0xf] %v477
  %606 = vst [vmem:[%s3 + $0x8] sm:$0xf] %v478
  %607 = vst [vmem:[%s3 + $0xc] sm:$0xf] %v479
  %608 = vst [vmem:[%s3 + $0x10] sm:$0xf] %v480
  %609 = vst [vmem:[%s3 + $0x14] sm:$0xf] %v481
  %610 = vst [vmem:[%s3 + $0x18] sm:$0xf] %v482
  %611 = vst [vmem:[%s3 + $0x1c] sm:$0xf] %v483
  %612 = vst [vmem:[%s3 + $0x20] sm:$0xf] %v484
  %613 = vst [vmem:[%s3 + $0x24] sm:$0xf] %v485
  %614 = vst [vmem:[%s3 + $0x28] sm:$0xf] %v486
  %615 = vst [vmem:[%s3 + $0x2c] sm:$0xf] %v487
  %616 = vst [vmem:[%s3 + $0x30] sm:$0xf] %v488
  %617 = vst [vmem:[%s3 + $0x34] sm:$0xf] %v489
  %618 = vst [vmem:[%s3 + $0x38] sm:$0xf] %v490
  %619 = vst [vmem:[%s3 + $0x3c] sm:$0xf] %v491
  %620 = vst [vmem:[%s3 + $0x40] sm:$0xf] %v492
  %621 = vst [vmem:[%s3 + $0x44] sm:$0xf] %v493
  %622 = vst [vmem:[%s3 + $0x48] sm:$0xf] %v494
  %623 = vst [vmem:[%s3 + $0x4c] sm:$0xf] %v495
  %624 = vst [vmem:[%s3 + $0x50] sm:$0xf] %v496
  %625 = vst [vmem:[%s3 + $0x54] sm:$0xf] %v497
  %626 = vst [vmem:[%s3 + $0x58] sm:$0xf] %v498
  %627 = vst [vmem:[%s3 + $0x5c] sm:$0xf] %v499
  %628 = vst [vmem:[%s3 + $0x60] sm:$0xf] %v500
  %629 = vst [vmem:[%s3 + $0x64] sm:$0xf] %v501
  %630 = vst [vmem:[%s3 + $0x68] sm:$0xf] %v502
  %631 = vst [vmem:[%s3 + $0x6c] sm:$0xf] %v503
  %632 = vst [vmem:[%s3 + $0x70] sm:$0xf] %v504
  %633 = vst [vmem:[%s3 + $0x74] sm:$0xf] %v505
  %634 = vst [vmem:[%s3 + $0x78] sm:$0xf] %v506
  %635 = vst [vmem:[%s3 + $0x7c] sm:$0xf] %v507
  %636 = vst [vmem:[%s3 + $0x80] sm:$0xf] %v508
  %637 = vst [vmem:[%s3 + $0x84] sm:$0xf] %v509
  %638 = vst [vmem:[%s3 + $0x88] sm:$0xf] %v510
  %639 = vst [vmem:[%s3 + $0x8c] sm:$0xf] %v511
  %640 = vst [vmem:[%s3 + $0x90] sm:$0xf] %v512
  %641 = vst [vmem:[%s3 + $0x94] sm:$0xf] %v513
  %642 = vst [vmem:[%s3 + $0x98] sm:$0xf] %v514
  %643 = vst [vmem:[%s3 + $0x9c] sm:$0xf] %v515
  %644 = vst [vmem:[%s3 + $0xa0] sm:$0xf] %v516
  %645 = vst [vmem:[%s3 + $0xa4] sm:$0xf] %v517
  %646 = vst [vmem:[%s3 + $0xa8] sm:$0xf] %v518
  %647 = vst [vmem:[%s3 + $0xac] sm:$0xf] %v519
  %648 = vst [vmem:[%s3 + $0xb0] sm:$0xf] %v520
  %649 = vst [vmem:[%s3 + $0xb4] sm:$0xf] %v521
  %650 = vst [vmem:[%s3 + $0xb8] sm:$0xf] %v522
  %651 = vst [vmem:[%s3 + $0xbc] sm:$0xf] %v523
  %652 = vst [vmem:[%s3 + $0xc0] sm:$0xf] %v524
  %653 = vst [vmem:[%s3 + $0xc4] sm:$0xf] %v525
  %654 = vst [vmem:[%s3 + $0xc8] sm:$0xf] %v526
  %655 = vst [vmem:[%s3 + $0xcc] sm:$0xf] %v527
  %656 = vst [vmem:[%s3 + $0xd0] sm:$0xf] %v528
  %657 = vst [vmem:[%s3 + $0xd4] sm:$0xf] %v529
  %658 = vst [vmem:[%s3 + $0xd8] sm:$0xf] %v530
  %659 = vst [vmem:[%s3 + $0xdc] sm:$0xf] %v531
  %660 = vst [vmem:[%s3 + $0xe0] sm:$0xf] %v532
  %661 = vst [vmem:[%s3 + $0xe4] sm:$0xf] %v533
  %662 = vst [vmem:[%s3 + $0xe8] sm:$0xf] %v534
  %663 = vst [vmem:[%s3 + $0xec] sm:$0xf] %v535
  %664 = vst [vmem:[%s3 + $0xf0] sm:$0xf] %v536
  %665 = vst [vmem:[%s3 + $0xf4] sm:$0xf] %v537
  %666 = vst [vmem:[%s3 + $0xf8] sm:$0xf] %v538
  %667 = vst [vmem:[%s3 + $0xfc] sm:$0xf] %v539
  // Predicated region
  $region14: #{bottleneck_forward.6} parent=0 // pred_check
    _
  $region15: #{bottleneck_forward.6} parent=0 // pred_check_branch
    %669 = sbr.rel (0) target = $region17
  $region16: #{bottleneck_forward.6} parent=0 // pred_region
    _
  $region17: #{bottleneck_forward.6} parent=0 // pred_fallthru
    _
  // Predicated region
  $region18: #{bottleneck_forward.6} parent=0 // pred_check
    _
  $region19: #{bottleneck_forward.6} parent=0 // pred_check_branch
    %671 = sbr.rel (0) target = $region21
  $region20: #{bottleneck_forward.6} parent=0 // pred_region
    _
  $region21: #{bottleneck_forward.6} parent=0 // pred_fallthru
    _

// kernel: bottleneck_forward.5
$region0: #{bottleneck_forward.5}
  #allocation0 [shape = 'u32[]', space=smem, size = 0x4, offset = 0x4, fixed_abs, tag = 'smem constant byte address 0x4 - core index']
  #allocation1 [shape = 'u32[144,128]{1,0:T(1,128)}', space=vmem, size = 0x12000, scoped, tag = 'internal scratch']
  #allocation2 [shape = 'f32[512,128]{1,0:T(8,128)}', space=vmem, size = 0x40000, scoped, tag = 'scratch operand']
  %s0 = inlined_call_operand.vmem [shape: bf16[512,128], index: 0, kind: input, shape index: {}]
  %s1 = inlined_call_operand.vmem [shape: bf16[128,128], index: 1, kind: input, shape index: {}]
  %s2 = inlined_call_operand.vmem [shape: bf16[512,128], index: 2, kind: output, shape index: {0}]
  %s3 = inlined_call_operand.vmem [shape: f32[1,1,128], index: 3, kind: output, shape index: {1}]
  %s4 = inlined_call_operand.vmem [shape: f32[1,1,128], index: 4, kind: output, shape index: {2}]
  %5 = xla_tuple %s2, %s3, %s4
  %s6 = sld [smem:[#allocation0]]
  $region42: #{bottleneck_forward.5} parent=0
    _
  %s8 = ssub.s32 1, %s6
  %s9 = scalar_select 0, %s8, %s6
  // Predicated region
  $region2: #{bottleneck_forward.5} parent=0 // pred_check
    _
  $region3: #{bottleneck_forward.5} parent=0 // pred_check_branch
    %11 = sbr.rel (0) target = $region5
  $region4: #{bottleneck_forward.5} parent=0 // pred_region
    _
  $region5: #{bottleneck_forward.5} parent=0 // pred_fallthru
    _
  // Predicated region
  $region6: #{bottleneck_forward.5} parent=0 // pred_check
    _
  $region7: #{bottleneck_forward.5} parent=0 // pred_check_branch
    %13 = sbr.rel (0) target = $region9
  $region8: #{bottleneck_forward.5} parent=0 // pred_region
    _
  $region9: #{bottleneck_forward.5} parent=0 // pred_fallthru
    _
  %p15 = scmp.eq.s32.totalorder 0, 0
  // Predicated region
  $region10: #{bottleneck_forward.5} parent=0 // pred_check
    %p16 = pneg %p15
  $region11: #{bottleneck_forward.5} parent=0 // pred_check_branch
    %18 = sbr.rel (%p16) target = $region13
  $region12: #{bottleneck_forward.5} parent=0 // pred_region
    %19 = vst [vmem:[#allocation2] sm:$0xff] 0.0
    %20 = vst [vmem:[#allocation2 + $0x8] sm:$0xff] 0.0
    %21 = vst [vmem:[#allocation2 + $0x10] sm:$0xff] 0.0
    %22 = vst [vmem:[#allocation2 + $0x18] sm:$0xff] 0.0
    %23 = vst [vmem:[#allocation2 + $0x20] sm:$0xff] 0.0
    %24 = vst [vmem:[#allocation2 + $0x28] sm:$0xff] 0.0
    %25 = vst [vmem:[#allocation2 + $0x30] sm:$0xff] 0.0
    %26 = vst [vmem:[#allocation2 + $0x38] sm:$0xff] 0.0
    %27 = vst [vmem:[#allocation2 + $0x40] sm:$0xff] 0.0
    %28 = vst [vmem:[#allocation2 + $0x48] sm:$0xff] 0.0
    %29 = vst [vmem:[#allocation2 + $0x50] sm:$0xff] 0.0
    %30 = vst [vmem:[#allocation2 + $0x58] sm:$0xff] 0.0
    %31 = vst [vmem:[#allocation2 + $0x60] sm:$0xff] 0.0
    %32 = vst [vmem:[#allocation2 + $0x68] sm:$0xff] 0.0
    %33 = vst [vmem:[#allocation2 + $0x70] sm:$0xff] 0.0
    %34 = vst [vmem:[#allocation2 + $0x78] sm:$0xff] 0.0
    %35 = vst [vmem:[#allocation2 + $0x80] sm:$0xff] 0.0
    %36 = vst [vmem:[#allocation2 + $0x88] sm:$0xff] 0.0
    %37 = vst [vmem:[#allocation2 + $0x90] sm:$0xff] 0.0
    %38 = vst [vmem:[#allocation2 + $0x98] sm:$0xff] 0.0
    %39 = vst [vmem:[#allocation2 + $0xa0] sm:$0xff] 0.0
    %40 = vst [vmem:[#allocation2 + $0xa8] sm:$0xff] 0.0
    %41 = vst [vmem:[#allocation2 + $0xb0] sm:$0xff] 0.0
    %42 = vst [vmem:[#allocation2 + $0xb8] sm:$0xff] 0.0
    %43 = vst [vmem:[#allocation2 + $0xc0] sm:$0xff] 0.0
    %44 = vst [vmem:[#allocation2 + $0xc8] sm:$0xff] 0.0
    %45 = vst [vmem:[#allocation2 + $0xd0] sm:$0xff] 0.0
    %46 = vst [vmem:[#allocation2 + $0xd8] sm:$0xff] 0.0
    %47 = vst [vmem:[#allocation2 + $0xe0] sm:$0xff] 0.0
    %48 = vst [vmem:[#allocation2 + $0xe8] sm:$0xff] 0.0
    %49 = vst [vmem:[#allocation2 + $0xf0] sm:$0xff] 0.0
    %50 = vst [vmem:[#allocation2 + $0xf8] sm:$0xff] 0.0
    %51 = vst [vmem:[#allocation2 + $0x100] sm:$0xff] 0.0
    %52 = vst [vmem:[#allocation2 + $0x108] sm:$0xff] 0.0
    %53 = vst [vmem:[#allocation2 + $0x110] sm:$0xff] 0.0
    %54 = vst [vmem:[#allocation2 + $0x118] sm:$0xff] 0.0
    %55 = vst [vmem:[#allocation2 + $0x120] sm:$0xff] 0.0
    %56 = vst [vmem:[#allocation2 + $0x128] sm:$0xff] 0.0
    %57 = vst [vmem:[#allocation2 + $0x130] sm:$0xff] 0.0
    %58 = vst [vmem:[#allocation2 + $0x138] sm:$0xff] 0.0
    %59 = vst [vmem:[#allocation2 + $0x140] sm:$0xff] 0.0
    %60 = vst [vmem:[#allocation2 + $0x148] sm:$0xff] 0.0
    %61 = vst [vmem:[#allocation2 + $0x150] sm:$0xff] 0.0
    %62 = vst [vmem:[#allocation2 + $0x158] sm:$0xff] 0.0
    %63 = vst [vmem:[#allocation2 + $0x160] sm:$0xff] 0.0
    %64 = vst [vmem:[#allocation2 + $0x168] sm:$0xff] 0.0
    %65 = vst [vmem:[#allocation2 + $0x170] sm:$0xff] 0.0
    %66 = vst [vmem:[#allocation2 + $0x178] sm:$0xff] 0.0
    %67 = vst [vmem:[#allocation2 + $0x180] sm:$0xff] 0.0
    %68 = vst [vmem:[#allocation2 + $0x188] sm:$0xff] 0.0
    %69 = vst [vmem:[#allocation2 + $0x190] sm:$0xff] 0.0
    %70 = vst [vmem:[#allocation2 + $0x198] sm:$0xff] 0.0
    %71 = vst [vmem:[#allocation2 + $0x1a0] sm:$0xff] 0.0
    %72 = vst [vmem:[#allocation2 + $0x1a8] sm:$0xff] 0.0
    %73 = vst [vmem:[#allocation2 + $0x1b0] sm:$0xff] 0.0
    %74 = vst [vmem:[#allocation2 + $0x1b8] sm:$0xff] 0.0
    %75 = vst [vmem:[#allocation2 + $0x1c0] sm:$0xff] 0.0
    %76 = vst [vmem:[#allocation2 + $0x1c8] sm:$0xff] 0.0
    %77 = vst [vmem:[#allocation2 + $0x1d0] sm:$0xff] 0.0
    %78 = vst [vmem:[#allocation2 + $0x1d8] sm:$0xff] 0.0
    %79 = vst [vmem:[#allocation2 + $0x1e0] sm:$0xff] 0.0
    %80 = vst [vmem:[#allocation2 + $0x1e8] sm:$0xff] 0.0
    %81 = vst [vmem:[#allocation2 + $0x1f0] sm:$0xff] 0.0
    %82 = vst [vmem:[#allocation2 + $0x1f8] sm:$0xff] 0.0
  $region13: #{bottleneck_forward.5} parent=0 // pred_fallthru
    _
  %v83 = vld [vmem:[#allocation2] sm:$0xff]
  %v84 = vld [vmem:[#allocation2 + $0x8] sm:$0xff]
  %v85 = vld [vmem:[#allocation2 + $0x10] sm:$0xff]
  %v86 = vld [vmem:[#allocation2 + $0x18] sm:$0xff]
  %v87 = vld [vmem:[#allocation2 + $0x20] sm:$0xff]
  %v88 = vld [vmem:[#allocation2 + $0x28] sm:$0xff]
  %v89 = vld [vmem:[#allocation2 + $0x30] sm:$0xff]
  %v90 = vld [vmem:[#allocation2 + $0x38] sm:$0xff]
  %v91 = vld [vmem:[#allocation2 + $0x40] sm:$0xff]
  %v92 = vld [vmem:[#allocation2 + $0x48] sm:$0xff]
  %v93 = vld [vmem:[#allocation2 + $0x50] sm:$0xff]
  %v94 = vld [vmem:[#allocation2 + $0x58] sm:$0xff]
  %v95 = vld [vmem:[#allocation2 + $0x60] sm:$0xff]
  %v96 = vld [vmem:[#allocation2 + $0x68] sm:$0xff]
  %v97 = vld [vmem:[#allocation2 + $0x70] sm:$0xff]
  %v98 = vld [vmem:[#allocation2 + $0x78] sm:$0xff]
  %v99 = vld [vmem:[#allocation2 + $0x80] sm:$0xff]
  %v100 = vld [vmem:[#allocation2 + $0x88] sm:$0xff]
  %v101 = vld [vmem:[#allocation2 + $0x90] sm:$0xff]
  %v102 = vld [vmem:[#allocation2 + $0x98] sm:$0xff]
  %v103 = vld [vmem:[#allocation2 + $0xa0] sm:$0xff]
  %v104 = vld [vmem:[#allocation2 + $0xa8] sm:$0xff]
  %v105 = vld [vmem:[#allocation2 + $0xb0] sm:$0xff]
  %v106 = vld [vmem:[#allocation2 + $0xb8] sm:$0xff]
  %v107 = vld [vmem:[#allocation2 + $0xc0] sm:$0xff]
  %v108 = vld [vmem:[#allocation2 + $0xc8] sm:$0xff]
  %v109 = vld [vmem:[#allocation2 + $0xd0] sm:$0xff]
  %v110 = vld [vmem:[#allocation2 + $0xd8] sm:$0xff]
  %v111 = vld [vmem:[#allocation2 + $0xe0] sm:$0xff]
  %v112 = vld [vmem:[#allocation2 + $0xe8] sm:$0xff]
  %v113 = vld [vmem:[#allocation2 + $0xf0] sm:$0xff]
  %v114 = vld [vmem:[#allocation2 + $0xf8] sm:$0xff]
  %v115 = vld [vmem:[#allocation2 + $0x100] sm:$0xff]
  %v116 = vld [vmem:[#allocation2 + $0x108] sm:$0xff]
  %v117 = vld [vmem:[#allocation2 + $0x110] sm:$0xff]
  %v118 = vld [vmem:[#allocation2 + $0x118] sm:$0xff]
  %v119 = vld [vmem:[#allocation2 + $0x120] sm:$0xff]
  %v120 = vld [vmem:[#allocation2 + $0x128] sm:$0xff]
  %v121 = vld [vmem:[#allocation2 + $0x130] sm:$0xff]
  %v122 = vld [vmem:[#allocation2 + $0x138] sm:$0xff]
  %v123 = vld [vmem:[#allocation2 + $0x140] sm:$0xff]
  %v124 = vld [vmem:[#allocation2 + $0x148] sm:$0xff]
  %v125 = vld [vmem:[#allocation2 + $0x150] sm:$0xff]
  %v126 = vld [vmem:[#allocation2 + $0x158] sm:$0xff]
  %v127 = vld [vmem:[#allocation2 + $0x160] sm:$0xff]
  %v128 = vld [vmem:[#allocation2 + $0x168] sm:$0xff]
  %v129 = vld [vmem:[#allocation2 + $0x170] sm:$0xff]
  %v130 = vld [vmem:[#allocation2 + $0x178] sm:$0xff]
  %v131 = vld [vmem:[#allocation2 + $0x180] sm:$0xff]
  %v132 = vld [vmem:[#allocation2 + $0x188] sm:$0xff]
  %v133 = vld [vmem:[#allocation2 + $0x190] sm:$0xff]
  %v134 = vld [vmem:[#allocation2 + $0x198] sm:$0xff]
  %v135 = vld [vmem:[#allocation2 + $0x1a0] sm:$0xff]
  %v136 = vld [vmem:[#allocation2 + $0x1a8] sm:$0xff]
  %v137 = vld [vmem:[#allocation2 + $0x1b0] sm:$0xff]
  %v138 = vld [vmem:[#allocation2 + $0x1b8] sm:$0xff]
  %v139 = vld [vmem:[#allocation2 + $0x1c0] sm:$0xff]
  %v140 = vld [vmem:[#allocation2 + $0x1c8] sm:$0xff]
  %v141 = vld [vmem:[#allocation2 + $0x1d0] sm:$0xff]
  %v142 = vld [vmem:[#allocation2 + $0x1d8] sm:$0xff]
  %v143 = vld [vmem:[#allocation2 + $0x1e0] sm:$0xff]
  %v144 = vld [vmem:[#allocation2 + $0x1e8] sm:$0xff]
  %v145 = vld [vmem:[#allocation2 + $0x1f0] sm:$0xff]
  %v146 = vld [vmem:[#allocation2 + $0x1f8] sm:$0xff]
  %v147 = vld [vmem:[%s0] sm:$0xf]
  %v148 = vld [vmem:[%s0 + $0x4] sm:$0xf]
  %v149 = vld [vmem:[%s0 + $0x8] sm:$0xf]
  %v150 = vld [vmem:[%s0 + $0xc] sm:$0xf]
  %v151 = vld [vmem:[%s0 + $0x10] sm:$0xf]
  %v152 = vld [vmem:[%s0 + $0x14] sm:$0xf]
  %v153 = vld [vmem:[%s0 + $0x18] sm:$0xf]
  %v154 = vld [vmem:[%s0 + $0x1c] sm:$0xf]
  %v155 = vld [vmem:[%s0 + $0x20] sm:$0xf]
  %v156 = vld [vmem:[%s0 + $0x24] sm:$0xf]
  %v157 = vld [vmem:[%s0 + $0x28] sm:$0xf]
  %v158 = vld [vmem:[%s0 + $0x2c] sm:$0xf]
  %v159 = vld [vmem:[%s0 + $0x30] sm:$0xf]
  %v160 = vld [vmem:[%s0 + $0x34] sm:$0xf]
  %v161 = vld [vmem:[%s0 + $0x38] sm:$0xf]
  %v162 = vld [vmem:[%s0 + $0x3c] sm:$0xf]
  %v163 = vld [vmem:[%s0 + $0x40] sm:$0xf]
  %v164 = vld [vmem:[%s0 + $0x44] sm:$0xf]
  %v165 = vld [vmem:[%s0 + $0x48] sm:$0xf]
  %v166 = vld [vmem:[%s0 + $0x4c] sm:$0xf]
  %v167 = vld [vmem:[%s0 + $0x50] sm:$0xf]
  %v168 = vld [vmem:[%s0 + $0x54] sm:$0xf]
  %v169 = vld [vmem:[%s0 + $0x58] sm:$0xf]
  %v170 = vld [vmem:[%s0 + $0x5c] sm:$0xf]
  %v171 = vld [vmem:[%s0 + $0x60] sm:$0xf]
  %v172 = vld [vmem:[%s0 + $0x64] sm:$0xf]
  %v173 = vld [vmem:[%s0 + $0x68] sm:$0xf]
  %v174 = vld [vmem:[%s0 + $0x6c] sm:$0xf]
  %v175 = vld [vmem:[%s0 + $0x70] sm:$0xf]
  %v176 = vld [vmem:[%s0 + $0x74] sm:$0xf]
  %v177 = vld [vmem:[%s0 + $0x78] sm:$0xf]
  %v178 = vld [vmem:[%s0 + $0x7c] sm:$0xf]
  %v179 = vld [vmem:[%s0 + $0x80] sm:$0xf]
  %v180 = vld [vmem:[%s0 + $0x84] sm:$0xf]
  %v181 = vld [vmem:[%s0 + $0x88] sm:$0xf]
  %v182 = vld [vmem:[%s0 + $0x8c] sm:$0xf]
  %v183 = vld [vmem:[%s0 + $0x90] sm:$0xf]
  %v184 = vld [vmem:[%s0 + $0x94] sm:$0xf]
  %v185 = vld [vmem:[%s0 + $0x98] sm:$0xf]
  %v186 = vld [vmem:[%s0 + $0x9c] sm:$0xf]
  %v187 = vld [vmem:[%s0 + $0xa0] sm:$0xf]
  %v188 = vld [vmem:[%s0 + $0xa4] sm:$0xf]
  %v189 = vld [vmem:[%s0 + $0xa8] sm:$0xf]
  %v190 = vld [vmem:[%s0 + $0xac] sm:$0xf]
  %v191 = vld [vmem:[%s0 + $0xb0] sm:$0xf]
  %v192 = vld [vmem:[%s0 + $0xb4] sm:$0xf]
  %v193 = vld [vmem:[%s0 + $0xb8] sm:$0xf]
  %v194 = vld [vmem:[%s0 + $0xbc] sm:$0xf]
  %v195 = vld [vmem:[%s0 + $0xc0] sm:$0xf]
  %v196 = vld [vmem:[%s0 + $0xc4] sm:$0xf]
  %v197 = vld [vmem:[%s0 + $0xc8] sm:$0xf]
  %v198 = vld [vmem:[%s0 + $0xcc] sm:$0xf]
  %v199 = vld [vmem:[%s0 + $0xd0] sm:$0xf]
  %v200 = vld [vmem:[%s0 + $0xd4] sm:$0xf]
  %v201 = vld [vmem:[%s0 + $0xd8] sm:$0xf]
  %v202 = vld [vmem:[%s0 + $0xdc] sm:$0xf]
  %v203 = vld [vmem:[%s0 + $0xe0] sm:$0xf]
  %v204 = vld [vmem:[%s0 + $0xe4] sm:$0xf]
  %v205 = vld [vmem:[%s0 + $0xe8] sm:$0xf]
  %v206 = vld [vmem:[%s0 + $0xec] sm:$0xf]
  %v207 = vld [vmem:[%s0 + $0xf0] sm:$0xf]
  %v208 = vld [vmem:[%s0 + $0xf4] sm:$0xf]
  %v209 = vld [vmem:[%s0 + $0xf8] sm:$0xf]
  %v210 = vld [vmem:[%s0 + $0xfc] sm:$0xf]
  %v211 = vld [vmem:[%s1] sm:$0xf]
  %v212 = vld [vmem:[%s1 + $0x4] sm:$0xf]
  %v213 = vld [vmem:[%s1 + $0x8] sm:$0xf]
  %v214 = vld [vmem:[%s1 + $0xc] sm:$0xf]
  %v215 = vld [vmem:[%s1 + $0x10] sm:$0xf]
  %v216 = vld [vmem:[%s1 + $0x14] sm:$0xf]
  %v217 = vld [vmem:[%s1 + $0x18] sm:$0xf]
  %v218 = vld [vmem:[%s1 + $0x1c] sm:$0xf]
  %v219 = vld [vmem:[%s1 + $0x20] sm:$0xf]
  %v220 = vld [vmem:[%s1 + $0x24] sm:$0xf]
  %v221 = vld [vmem:[%s1 + $0x28] sm:$0xf]
  %v222 = vld [vmem:[%s1 + $0x2c] sm:$0xf]
  %v223 = vld [vmem:[%s1 + $0x30] sm:$0xf]
  %v224 = vld [vmem:[%s1 + $0x34] sm:$0xf]
  %v225 = vld [vmem:[%s1 + $0x38] sm:$0xf]
  %v226 = vld [vmem:[%s1 + $0x3c] sm:$0xf]
  %v291 = vunpack.c.l.b16 %v147
  %v292 = vunpack.c.l.b16 %v148
  %v293 = vunpack.c.l.b16 %v149
  %v294 = vunpack.c.l.b16 %v150
  %v295 = vunpack.c.l.b16 %v151
  %v296 = vunpack.c.l.b16 %v152
  %v297 = vunpack.c.l.b16 %v153
  %v298 = vunpack.c.l.b16 %v154
  %v299 = vunpack.c.l.b16 %v155
  %v300 = vunpack.c.l.b16 %v156
  %v301 = vunpack.c.l.b16 %v157
  %v302 = vunpack.c.l.b16 %v158
  %v303 = vunpack.c.l.b16 %v159
  %v304 = vunpack.c.l.b16 %v160
  %v305 = vunpack.c.l.b16 %v161
  %v306 = vunpack.c.l.b16 %v162
  %v307 = vunpack.c.l.b16 %v163
  %v308 = vunpack.c.l.b16 %v164
  %v309 = vunpack.c.l.b16 %v165
  %v310 = vunpack.c.l.b16 %v166
  %v311 = vunpack.c.l.b16 %v167
  %v312 = vunpack.c.l.b16 %v168
  %v313 = vunpack.c.l.b16 %v169
  %v314 = vunpack.c.l.b16 %v170
  %v315 = vunpack.c.l.b16 %v171
  %v316 = vunpack.c.l.b16 %v172
  %v317 = vunpack.c.l.b16 %v173
  %v318 = vunpack.c.l.b16 %v174
  %v319 = vunpack.c.l.b16 %v175
  %v320 = vunpack.c.l.b16 %v176
  %v321 = vunpack.c.l.b16 %v177
  %v322 = vunpack.c.l.b16 %v178
  %v323 = vunpack.c.l.b16 %v179
  %v324 = vunpack.c.l.b16 %v180
  %v325 = vunpack.c.l.b16 %v181
  %v326 = vunpack.c.l.b16 %v182
  %v327 = vunpack.c.l.b16 %v183
  %v328 = vunpack.c.l.b16 %v184
  %v329 = vunpack.c.l.b16 %v185
  %v330 = vunpack.c.l.b16 %v186
  %v331 = vunpack.c.l.b16 %v187
  %v332 = vunpack.c.l.b16 %v188
  %v333 = vunpack.c.l.b16 %v189
  %v334 = vunpack.c.l.b16 %v190
  %v335 = vunpack.c.l.b16 %v191
  %v336 = vunpack.c.l.b16 %v192
  %v337 = vunpack.c.l.b16 %v193
  %v338 = vunpack.c.l.b16 %v194
  %v339 = vunpack.c.l.b16 %v195
  %v340 = vunpack.c.l.b16 %v196
  %v341 = vunpack.c.l.b16 %v197
  %v342 = vunpack.c.l.b16 %v198
  %v343 = vunpack.c.l.b16 %v199
  %v344 = vunpack.c.l.b16 %v200
  %v345 = vunpack.c.l.b16 %v201
  %v346 = vunpack.c.l.b16 %v202
  %v347 = vunpack.c.l.b16 %v203
  %v348 = vunpack.c.l.b16 %v204
  %v349 = vunpack.c.l.b16 %v205
  %v350 = vunpack.c.l.b16 %v206
  %v351 = vunpack.c.l.b16 %v207
  %v352 = vunpack.c.l.b16 %v208
  %v353 = vunpack.c.l.b16 %v209
  %v354 = vunpack.c.l.b16 %v210
  %v355 = vpack.c.b16 %v292, %v291
  %v356 = vpack.c.b16 %v294, %v293
  %v357 = vpack.c.b16 %v296, %v295
  %v358 = vpack.c.b16 %v298, %v297
  %v359 = vpack.c.b16 %v300, %v299
  %v360 = vpack.c.b16 %v302, %v301
  %v361 = vpack.c.b16 %v304, %v303
  %v362 = vpack.c.b16 %v306, %v305
  %v363 = vpack.c.b16 %v308, %v307
  %v364 = vpack.c.b16 %v310, %v309
  %v365 = vpack.c.b16 %v312, %v311
  %v366 = vpack.c.b16 %v314, %v313
  %v367 = vpack.c.b16 %v316, %v315
  %v368 = vpack.c.b16 %v318, %v317
  %v369 = vpack.c.b16 %v320, %v319
  %v370 = vpack.c.b16 %v322, %v321
  %v371 = vpack.c.b16 %v324, %v323
  %v372 = vpack.c.b16 %v326, %v325
  %v373 = vpack.c.b16 %v328, %v327
  %v374 = vpack.c.b16 %v330, %v329
  %v375 = vpack.c.b16 %v332, %v331
  %v376 = vpack.c.b16 %v334, %v333
  %v377 = vpack.c.b16 %v336, %v335
  %v378 = vpack.c.b16 %v338, %v337
  %v379 = vpack.c.b16 %v340, %v339
  %v380 = vpack.c.b16 %v342, %v341
  %v381 = vpack.c.b16 %v344, %v343
  %v382 = vpack.c.b16 %v346, %v345
  %v383 = vpack.c.b16 %v348, %v347
  %v384 = vpack.c.b16 %v350, %v349
  %v385 = vpack.c.b16 %v352, %v351
  %v386 = vpack.c.b16 %v354, %v353
  %v435 = vunpack.c.l.b16 %v211
  %v436 = vunpack.c.l.b16 %v212
  %v437 = vunpack.c.l.b16 %v213
  %v438 = vunpack.c.l.b16 %v214
  %v439 = vunpack.c.l.b16 %v215
  %v440 = vunpack.c.l.b16 %v216
  %v441 = vunpack.c.l.b16 %v217
  %v442 = vunpack.c.l.b16 %v218
  %v443 = vunpack.c.l.b16 %v219
  %v444 = vunpack.c.l.b16 %v220
  %v445 = vunpack.c.l.b16 %v221
  %v446 = vunpack.c.l.b16 %v222
  %v447 = vunpack.c.l.b16 %v223
  %v448 = vunpack.c.l.b16 %v224
  %v449 = vunpack.c.l.b16 %v225
  %v450 = vunpack.c.l.b16 %v226
  %v451 = vpack.c.b16 %v436, %v435
  %v452 = vpack.c.b16 %v438, %v437
  %v453 = vpack.c.b16 %v440, %v439
  %v454 = vpack.c.b16 %v442, %v441
  %v455 = vpack.c.b16 %v444, %v443
  %v456 = vpack.c.b16 %v446, %v445
  %v457 = vpack.c.b16 %v448, %v447
  %v458 = vpack.c.b16 %v450, %v449
  %467 = vmatprep.subr.bf16.mxu0 0
  %468 = vmatpush1.bf16.msra.mxu0 %v451
  %469 = vmatprep.subr.bf16.mxu0 0
  %470 = vmatpush1.bf16.msra.mxu0 %v452
  %471 = vmatprep.subr.bf16.mxu0 0
  %472 = vmatpush1.bf16.msra.mxu0 %v453
  %473 = vmatprep.subr.bf16.mxu0 0
  %474 = vmatpush1.bf16.msra.mxu0 %v454
  %475 = vmatprep.subr.bf16.mxu0 0
  %476 = vmatpush1.bf16.msra.mxu0 %v455
  %477 = vmatprep.subr.bf16.mxu0 0
  %478 = vmatpush1.bf16.msra.mxu0 %v456
  %479 = vmatprep.subr.bf16.mxu0 0
  %480 = vmatpush1.bf16.msra.mxu0 %v457
  %481 = vmatprep.subr.bf16.mxu0 0
  %482 = vmatpush1.bf16.msra.mxu0 %v458
  %483 = vmatprep.subr.bf16.mxu0 0
  %484 = vmatpush1.bf16.msra.mxu0 0
  %485 = vmatprep.subr.bf16.mxu0 0
  %486 = vmatpush1.bf16.msra.mxu0 0
  %487 = vmatprep.subr.bf16.mxu0 0
  %488 = vmatpush1.bf16.msra.mxu0 0
  %489 = vmatprep.subr.bf16.mxu0 0
  %490 = vmatpush1.bf16.msra.mxu0 0
  %491 = vmatprep.subr.bf16.mxu0 0
  %492 = vmatpush1.bf16.msra.mxu0 0
  %493 = vmatprep.subr.bf16.mxu0 0
  %494 = vmatpush1.bf16.msra.mxu0 0
  %495 = vmatprep.subr.bf16.mxu0 0
  %496 = vmatpush1.bf16.msra.mxu0 0
  %497 = vmatprep.subr.bf16.mxu0 0
  %498 = vmatpush1.bf16.msra.mxu0 0
  %499 = vmatprep.mubr.bf16.mxu0 0
  %500 = vmatmul.mubr.bf16.gmra.mrb[0].mxu0 %v355
  %v501 = vpop.f32.mrb[0].mxu0
  %v502 = vadd.f32 0.0, %v501
  %v503 = vpop.f32.mrb[0].mxu0
  %v504 = vpop.f32.mrb[0].mxu0
  %v505 = vadd.f32 0.0, %v504
  %v506 = vpop.f32.mrb[0].mxu0
  %507 = vmatprep.mubr.bf16.mxu0 0
  %508 = vmatmul.mubr.bf16.gmra.mrb[0].mxu0 %v356
  %v509 = vpop.f32.mrb[0].mxu0
  %v510 = vadd.f32 0.0, %v509
  %v511 = vpop.f32.mrb[0].mxu0
  %v512 = vpop.f32.mrb[0].mxu0
  %v513 = vadd.f32 0.0, %v512
  %v514 = vpop.f32.mrb[0].mxu0
  %515 = vmatprep.mubr.bf16.mxu0 0
  %516 = vmatmul.mubr.bf16.gmra.mrb[0].mxu0 %v357
  %v517 = vpop.f32.mrb[0].mxu0
  %v518 = vadd.f32 0.0, %v517
  %v519 = vpop.f32.mrb[0].mxu0
  %v520 = vpop.f32.mrb[0].mxu0
  %v521 = vadd.f32 0.0, %v520
  %v522 = vpop.f32.mrb[0].mxu0
  %523 = vmatprep.mubr.bf16.mxu0 0
  %524 = vmatmul.mubr.bf16.gmra.mrb[0].mxu0 %v358
  %v525 = vpop.f32.mrb[0].mxu0
  %v526 = vadd.f32 0.0, %v525
  %v527 = vpop.f32.mrb[0].mxu0
  %v528 = vpop.f32.mrb[0].mxu0
  %v529 = vadd.f32 0.0, %v528
  %v530 = vpop.f32.mrb[0].mxu0
  %531 = vmatprep.mubr.bf16.mxu0 0
  %532 = vmatmul.mubr.bf16.gmra.mrb[0].mxu0 %v359
  %v533 = vpop.f32.mrb[0].mxu0
  %v534 = vadd.f32 0.0, %v533
  %v535 = vpop.f32.mrb[0].mxu0
  %v536 = vpop.f32.mrb[0].mxu0
  %v537 = vadd.f32 0.0, %v536
  %v538 = vpop.f32.mrb[0].mxu0
  %539 = vmatprep.mubr.bf16.mxu0 0
  %540 = vmatmul.mubr.bf16.gmra.mrb[0].mxu0 %v360
  %v541 = vpop.f32.mrb[0].mxu0
  %v542 = vadd.f32 0.0, %v541
  %v543 = vpop.f32.mrb[0].mxu0
  %v544 = vpop.f32.mrb[0].mxu0
  %v545 = vadd.f32 0.0, %v544
  %v546 = vpop.f32.mrb[0].mxu0
  %547 = vmatprep.mubr.bf16.mxu0 0
  %548 = vmatmul.mubr.bf16.gmra.mrb[0].mxu0 %v361
  %v549 = vpop.f32.mrb[0].mxu0
  %v550 = vadd.f32 0.0, %v549
  %v551 = vpop.f32.mrb[0].mxu0
  %v552 = vpop.f32.mrb[0].mxu0
  %v553 = vadd.f32 0.0, %v552
  %v554 = vpop.f32.mrb[0].mxu0
  %555 = vmatprep.mubr.bf16.mxu0 0
  %556 = vmatmul.mubr.bf16.gmra.mrb[0].mxu0 %v362
  %v557 = vpop.f32.mrb[0].mxu0
  %v558 = vadd.f32 0.0, %v557
  %v559 = vpop.f32.mrb[0].mxu0
  %v560 = vpop.f32.mrb[0].mxu0
  %v561 = vadd.f32 0.0, %v560
  %v562 = vpop.f32.mrb[0].mxu0
  %563 = vmatprep.mubr.bf16.mxu0 0
  %564 = vmatmul.mubr.bf16.gmra.mrb[0].mxu0 %v363
  %v565 = vpop.f32.mrb[0].mxu0
  %v566 = vadd.f32 0.0, %v565
  %v567 = vpop.f32.mrb[0].mxu0
  %v568 = vpop.f32.mrb[0].mxu0
  %v569 = vadd.f32 0.0, %v568
  %v570 = vpop.f32.mrb[0].mxu0
  %571 = vmatprep.mubr.bf16.mxu0 0
  %572 = vmatmul.mubr.bf16.gmra.mrb[0].mxu0 %v364
  %v573 = vpop.f32.mrb[0].mxu0
  %v574 = vadd.f32 0.0, %v573
  %v575 = vpop.f32.mrb[0].mxu0
  %v576 = vpop.f32.mrb[0].mxu0
  %v577 = vadd.f32 0.0, %v576
  %v578 = vpop.f32.mrb[0].mxu0
  %579 = vmatprep.mubr.bf16.mxu0 0
  %580 = vmatmul.mubr.bf16.gmra.mrb[0].mxu0 %v365
  %v581 = vpop.f32.mrb[0].mxu0
  %v582 = vadd.f32 0.0, %v581
  %v583 = vpop.f32.mrb[0].mxu0
  %v584 = vpop.f32.mrb[0].mxu0
  %v585 = vadd.f32 0.0, %v584
  %v586 = vpop.f32.mrb[0].mxu0
  %587 = vmatprep.mubr.bf16.mxu0 0
  %588 = vmatmul.mubr.bf16.gmra.mrb[0].mxu0 %v366
  %v589 = vpop.f32.mrb[0].mxu0
  %v590 = vadd.f32 0.0, %v589
  %v591 = vpop.f32.mrb[0].mxu0
  %v592 = vpop.f32.mrb[0].mxu0
  %v593 = vadd.f32 0.0, %v592
  %v594 = vpop.f32.mrb[0].mxu0
  %595 = vmatprep.mubr.bf16.mxu0 0
  %596 = vmatmul.mubr.bf16.gmra.mrb[0].mxu0 %v367
  %v597 = vpop.f32.mrb[0].mxu0
  %v598 = vadd.f32 0.0, %v597
  %v599 = vpop.f32.mrb[0].mxu0
  %v600 = vpop.f32.mrb[0].mxu0
  %v601 = vadd.f32 0.0, %v600
  %v602 = vpop.f32.mrb[0].mxu0
  %603 = vmatprep.mubr.bf16.mxu0 0
  %604 = vmatmul.mubr.bf16.gmra.mrb[0].mxu0 %v368
  %v605 = vpop.f32.mrb[0].mxu0
  %v606 = vadd.f32 0.0, %v605
  %v607 = vpop.f32.mrb[0].mxu0
  %v608 = vpop.f32.mrb[0].mxu0
  %v609 = vadd.f32 0.0, %v608
  %v610 = vpop.f32.mrb[0].mxu0
  %611 = vmatprep.mubr.bf16.mxu0 0
  %612 = vmatmul.mubr.bf16.gmra.mrb[0].mxu0 %v369
  %v613 = vpop.f32.mrb[0].mxu0
  %v614 = vadd.f32 0.0, %v613
  %v615 = vpop.f32.mrb[0].mxu0
  %v616 = vpop.f32.mrb[0].mxu0
  %v617 = vadd.f32 0.0, %v616
  %v618 = vpop.f32.mrb[0].mxu0
  %619 = vmatprep.mubr.bf16.mxu0 0
  %620 = vmatmul.mubr.bf16.gmra.mrb[0].mxu0 %v370
  %v621 = vpop.f32.mrb[0].mxu0
  %v622 = vadd.f32 0.0, %v621
  %v623 = vpop.f32.mrb[0].mxu0
  %v624 = vpop.f32.mrb[0].mxu0
  %v625 = vadd.f32 0.0, %v624
  %v626 = vpop.f32.mrb[0].mxu0
  %627 = vmatprep.mubr.bf16.mxu0 0
  %628 = vmatmul.mubr.bf16.gmra.mrb[0].mxu0 %v371
  %v629 = vpop.f32.mrb[0].mxu0
  %v630 = vadd.f32 0.0, %v629
  %v631 = vpop.f32.mrb[0].mxu0
  %v632 = vpop.f32.mrb[0].mxu0
  %v633 = vadd.f32 0.0, %v632
  %v634 = vpop.f32.mrb[0].mxu0
  %635 = vmatprep.mubr.bf16.mxu0 0
  %636 = vmatmul.mubr.bf16.gmra.mrb[0].mxu0 %v372
  %v637 = vpop.f32.mrb[0].mxu0
  %v638 = vadd.f32 0.0, %v637
  %v639 = vpop.f32.mrb[0].mxu0
  %v640 = vpop.f32.mrb[0].mxu0
  %v641 = vadd.f32 0.0, %v640
  %v642 = vpop.f32.mrb[0].mxu0
  %643 = vmatprep.mubr.bf16.mxu0 0
  %644 = vmatmul.mubr.bf16.gmra.mrb[0].mxu0 %v373
  %v645 = vpop.f32.mrb[0].mxu0
  %v646 = vadd.f32 0.0, %v645
  %v647 = vpop.f32.mrb[0].mxu0
  %v648 = vpop.f32.mrb[0].mxu0
  %v649 = vadd.f32 0.0, %v648
  %v650 = vpop.f32.mrb[0].mxu0
  %651 = vmatprep.mubr.bf16.mxu0 0
  %652 = vmatmul.mubr.bf16.gmra.mrb[0].mxu0 %v374
  %v653 = vpop.f32.mrb[0].mxu0
  %v654 = vadd.f32 0.0, %v653
  %v655 = vpop.f32.mrb[0].mxu0
  %v656 = vpop.f32.mrb[0].mxu0
  %v657 = vadd.f32 0.0, %v656
  %v658 = vpop.f32.mrb[0].mxu0
  %659 = vmatprep.mubr.bf16.mxu0 0
  %660 = vmatmul.mubr.bf16.gmra.mrb[0].mxu0 %v375
  %v661 = vpop.f32.mrb[0].mxu0
  %v662 = vadd.f32 0.0, %v661
  %v663 = vpop.f32.mrb[0].mxu0
  %v664 = vpop.f32.mrb[0].mxu0
  %v665 = vadd.f32 0.0, %v664
  %v666 = vpop.f32.mrb[0].mxu0
  %667 = vmatprep.mubr.bf16.mxu0 0
  %668 = vmatmul.mubr.bf16.gmra.mrb[0].mxu0 %v376
  %v669 = vpop.f32.mrb[0].mxu0
  %v670 = vadd.f32 0.0, %v669
  %v671 = vpop.f32.mrb[0].mxu0
  %v672 = vpop.f32.mrb[0].mxu0
  %v673 = vadd.f32 0.0, %v672
  %v674 = vpop.f32.mrb[0].mxu0
  %675 = vmatprep.mubr.bf16.mxu0 0
  %676 = vmatmul.mubr.bf16.gmra.mrb[0].mxu0 %v377
  %v677 = vpop.f32.mrb[0].mxu0
  %v678 = vadd.f32 0.0, %v677
  %v679 = vpop.f32.mrb[0].mxu0
  %v680 = vpop.f32.mrb[0].mxu0
  %v681 = vadd.f32 0.0, %v680
  %v682 = vpop.f32.mrb[0].mxu0
  %683 = vmatprep.mubr.bf16.mxu0 0
  %684 = vmatmul.mubr.bf16.gmra.mrb[0].mxu0 %v378
  %v685 = vpop.f32.mrb[0].mxu0
  %v686 = vadd.f32 0.0, %v685
  %v687 = vpop.f32.mrb[0].mxu0
  %v688 = vpop.f32.mrb[0].mxu0
  %v689 = vadd.f32 0.0, %v688
  %v690 = vpop.f32.mrb[0].mxu0
  %691 = vmatprep.mubr.bf16.mxu0 0
  %692 = vmatmul.mubr.bf16.gmra.mrb[0].mxu0 %v379
  %v693 = vpop.f32.mrb[0].mxu0
  %v694 = vadd.f32 0.0, %v693
  %v695 = vpop.f32.mrb[0].mxu0
  %v696 = vpop.f32.mrb[0].mxu0
  %v697 = vadd.f32 0.0, %v696
  %v698 = vpop.f32.mrb[0].mxu0
  %699 = vmatprep.mubr.bf16.mxu0 0
  %700 = vmatmul.mubr.bf16.gmra.mrb[0].mxu0 %v380
  %v701 = vpop.f32.mrb[0].mxu0
  %v702 = vadd.f32 0.0, %v701
  %v703 = vpop.f32.mrb[0].mxu0
  %v704 = vpop.f32.mrb[0].mxu0
  %v705 = vadd.f32 0.0, %v704
  %v706 = vpop.f32.mrb[0].mxu0
  %707 = vmatprep.mubr.bf16.mxu0 0
  %708 = vmatmul.mubr.bf16.gmra.mrb[0].mxu0 %v381
  %v709 = vpop.f32.mrb[0].mxu0
  %v710 = vadd.f32 0.0, %v709
  %v711 = vpop.f32.mrb[0].mxu0
  %v712 = vpop.f32.mrb[0].mxu0
  %v713 = vadd.f32 0.0, %v712
  %v714 = vpop.f32.mrb[0].mxu0
  %715 = vmatprep.mubr.bf16.mxu0 0
  %716 = vmatmul.mubr.bf16.gmra.mrb[0].mxu0 %v382
  %v717 = vpop.f32.mrb[0].mxu0
  %v718 = vadd.f32 0.0, %v717
  %v719 = vpop.f32.mrb[0].mxu0
  %v720 = vpop.f32.mrb[0].mxu0
  %v721 = vadd.f32 0.0, %v720
  %v722 = vpop.f32.mrb[0].mxu0
  %723 = vmatprep.mubr.bf16.mxu0 0
  %724 = vmatmul.mubr.bf16.gmra.mrb[0].mxu0 %v383
  %v725 = vpop.f32.mrb[0].mxu0
  %v726 = vadd.f32 0.0, %v725
  %v727 = vpop.f32.mrb[0].mxu0
  %v728 = vpop.f32.mrb[0].mxu0
  %v729 = vadd.f32 0.0, %v728
  %v730 = vpop.f32.mrb[0].mxu0
  %731 = vmatprep.mubr.bf16.mxu0 0
  %732 = vmatmul.mubr.bf16.gmra.mrb[0].mxu0 %v384
  %v733 = vpop.f32.mrb[0].mxu0
  %v734 = vadd.f32 0.0, %v733
  %v735 = vpop.f32.mrb[0].mxu0
  %v736 = vpop.f32.mrb[0].mxu0
  %v737 = vadd.f32 0.0, %v736
  %v738 = vpop.f32.mrb[0].mxu0
  %739 = vmatprep.mubr.bf16.mxu0 0
  %740 = vmatmul.mubr.bf16.gmra.mrb[0].mxu0 %v385
  %v741 = vpop.f32.mrb[0].mxu0
  %v742 = vadd.f32 0.0, %v741
  %v743 = vpop.f32.mrb[0].mxu0
  %v744 = vpop.f32.mrb[0].mxu0
  %v745 = vadd.f32 0.0, %v744
  %v746 = vpop.f32.mrb[0].mxu0
  %747 = vmatprep.mubr.bf16.mxu0 0
  %748 = vmatmul.mubr.bf16.gmra.mrb[0].mxu0 %v386
  %v749 = vpop.f32.mrb[0].mxu0
  %v750 = vadd.f32 0.0, %v749
  %v751 = vpop.f32.mrb[0].mxu0
  %v752 = vpop.f32.mrb[0].mxu0
  %v753 = vadd.f32 0.0, %v752
  %v754 = vpop.f32.mrb[0].mxu0
  %755 = vdwg.mxu0
  %v756 = vadd.f32 %v83, %v502
  %v757 = vadd.f32 %v84, %v505
  %v758 = vadd.f32 %v85, %v510
  %v759 = vadd.f32 %v86, %v513
  %v760 = vadd.f32 %v87, %v518
  %v761 = vadd.f32 %v88, %v521
  %v762 = vadd.f32 %v89, %v526
  %v763 = vadd.f32 %v90, %v529
  %v764 = vadd.f32 %v91, %v534
  %v765 = vadd.f32 %v92, %v537
  %v766 = vadd.f32 %v93, %v542
  %v767 = vadd.f32 %v94, %v545
  %v768 = vadd.f32 %v95, %v550
  %v769 = vadd.f32 %v96, %v553
  %v770 = vadd.f32 %v97, %v558
  %v771 = vadd.f32 %v98, %v561
  %v772 = vadd.f32 %v99, %v566
  %v773 = vadd.f32 %v100, %v569
  %v774 = vadd.f32 %v101, %v574
  %v775 = vadd.f32 %v102, %v577
  %v776 = vadd.f32 %v103, %v582
  %v777 = vadd.f32 %v104, %v585
  %v778 = vadd.f32 %v105, %v590
  %v779 = vadd.f32 %v106, %v593
  %v780 = vadd.f32 %v107, %v598
  %v781 = vadd.f32 %v108, %v601
  %v782 = vadd.f32 %v109, %v606
  %v783 = vadd.f32 %v110, %v609
  %v784 = vadd.f32 %v111, %v614
  %v785 = vadd.f32 %v112, %v617
  %v786 = vadd.f32 %v113, %v622
  %v787 = vadd.f32 %v114, %v625
  %v788 = vadd.f32 %v115, %v630
  %v789 = vadd.f32 %v116, %v633
  %v790 = vadd.f32 %v117, %v638
  %v791 = vadd.f32 %v118, %v641
  %v792 = vadd.f32 %v119, %v646
  %v793 = vadd.f32 %v120, %v649
  %v794 = vadd.f32 %v121, %v654
  %v795 = vadd.f32 %v122, %v657
  %v796 = vadd.f32 %v123, %v662
  %v797 = vadd.f32 %v124, %v665
  %v798 = vadd.f32 %v125, %v670
  %v799 = vadd.f32 %v126, %v673
  %v800 = vadd.f32 %v127, %v678
  %v801 = vadd.f32 %v128, %v681
  %v802 = vadd.f32 %v129, %v686
  %v803 = vadd.f32 %v130, %v689
  %v804 = vadd.f32 %v131, %v694
  %v805 = vadd.f32 %v132, %v697
  %v806 = vadd.f32 %v133, %v702
  %v807 = vadd.f32 %v134, %v705
  %v808 = vadd.f32 %v135, %v710
  %v809 = vadd.f32 %v136, %v713
  %v810 = vadd.f32 %v137, %v718
  %v811 = vadd.f32 %v138, %v721
  %v812 = vadd.f32 %v139, %v726
  %v813 = vadd.f32 %v140, %v729
  %v814 = vadd.f32 %v141, %v734
  %v815 = vadd.f32 %v142, %v737
  %v816 = vadd.f32 %v143, %v742
  %v817 = vadd.f32 %v144, %v745
  %v818 = vadd.f32 %v145, %v750
  %v819 = vadd.f32 %v146, %v753
  %820 = vst [vmem:[#allocation2] sm:$0xff] %v756
  %821 = vst [vmem:[#allocation2 + $0x8] sm:$0xff] %v757
  %822 = vst [vmem:[#allocation2 + $0x10] sm:$0xff] %v758
  %823 = vst [vmem:[#allocation2 + $0x18] sm:$0xff] %v759
  %824 = vst [vmem:[#allocation2 + $0x20] sm:$0xff] %v760
  %825 = vst [vmem:[#allocation2 + $0x28] sm:$0xff] %v761
  %826 = vst [vmem:[#allocation2 + $0x30] sm:$0xff] %v762
  %827 = vst [vmem:[#allocation2 + $0x38] sm:$0xff] %v763
  %828 = vst [vmem:[#allocation2 + $0x40] sm:$0xff] %v764
  %829 = vst [vmem:[#allocation2 + $0x48] sm:$0xff] %v765
  %830 = vst [vmem:[#allocation2 + $0x50] sm:$0xff] %v766
  %831 = vst [vmem:[#allocation2 + $0x58] sm:$0xff] %v767
  %832 = vst [vmem:[#allocation2 + $0x60] sm:$0xff] %v768
  %833 = vst [vmem:[#allocation2 + $0x68] sm:$0xff] %v769
  %834 = vst [vmem:[#allocation2 + $0x70] sm:$0xff] %v770
  %835 = vst [vmem:[#allocation2 + $0x78] sm:$0xff] %v771
  %836 = vst [vmem:[#allocation2 + $0x80] sm:$0xff] %v772
  %837 = vst [vmem:[#allocation2 + $0x88] sm:$0xff] %v773
  %838 = vst [vmem:[#allocation2 + $0x90] sm:$0xff] %v774
  %839 = vst [vmem:[#allocation2 + $0x98] sm:$0xff] %v775
  %840 = vst [vmem:[#allocation2 + $0xa0] sm:$0xff] %v776
  %841 = vst [vmem:[#allocation2 + $0xa8] sm:$0xff] %v777
  %842 = vst [vmem:[#allocation2 + $0xb0] sm:$0xff] %v778
  %843 = vst [vmem:[#allocation2 + $0xb8] sm:$0xff] %v779
  %844 = vst [vmem:[#allocation2 + $0xc0] sm:$0xff] %v780
  %845 = vst [vmem:[#allocation2 + $0xc8] sm:$0xff] %v781
  %846 = vst [vmem:[#allocation2 + $0xd0] sm:$0xff] %v782
  %847 = vst [vmem:[#allocation2 + $0xd8] sm:$0xff] %v783
  %848 = vst [vmem:[#allocation2 + $0xe0] sm:$0xff] %v784
  %849 = vst [vmem:[#allocation2 + $0xe8] sm:$0xff] %v785
  %850 = vst [vmem:[#allocation2 + $0xf0] sm:$0xff] %v786
  %851 = vst [vmem:[#allocation2 + $0xf8] sm:$0xff] %v787
  %852 = vst [vmem:[#allocation2 + $0x100] sm:$0xff] %v788
  %853 = vst [vmem:[#allocation2 + $0x108] sm:$0xff] %v789
  %854 = vst [vmem:[#allocation2 + $0x110] sm:$0xff] %v790
  %855 = vst [vmem:[#allocation2 + $0x118] sm:$0xff] %v791
  %856 = vst [vmem:[#allocation2 + $0x120] sm:$0xff] %v792
  %857 = vst [vmem:[#allocation2 + $0x128] sm:$0xff] %v793
  %858 = vst [vmem:[#allocation2 + $0x130] sm:$0xff] %v794
  %859 = vst [vmem:[#allocation2 + $0x138] sm:$0xff] %v795
  %860 = vst [vmem:[#allocation2 + $0x140] sm:$0xff] %v796
  %861 = vst [vmem:[#allocation2 + $0x148] sm:$0xff] %v797
  %862 = vst [vmem:[#allocation2 + $0x150] sm:$0xff] %v798
  %863 = vst [vmem:[#allocation2 + $0x158] sm:$0xff] %v799
  %864 = vst [vmem:[#allocation2 + $0x160] sm:$0xff] %v800
  %865 = vst [vmem:[#allocation2 + $0x168] sm:$0xff] %v801
  %866 = vst [vmem:[#allocation2 + $0x170] sm:$0xff] %v802
  %867 = vst [vmem:[#allocation2 + $0x178] sm:$0xff] %v803
  %868 = vst [vmem:[#allocation2 + $0x180] sm:$0xff] %v804
  %869 = vst [vmem:[#allocation2 + $0x188] sm:$0xff] %v805
  %870 = vst [vmem:[#allocation2 + $0x190] sm:$0xff] %v806
  %871 = vst [vmem:[#allocation2 + $0x198] sm:$0xff] %v807
  %872 = vst [vmem:[#allocation2 + $0x1a0] sm:$0xff] %v808
  %873 = vst [vmem:[#allocation2 + $0x1a8] sm:$0xff] %v809
  %874 = vst [vmem:[#allocation2 + $0x1b0] sm:$0xff] %v810
  %875 = vst [vmem:[#allocation2 + $0x1b8] sm:$0xff] %v811
  %876 = vst [vmem:[#allocation2 + $0x1c0] sm:$0xff] %v812
  %877 = vst [vmem:[#allocation2 + $0x1c8] sm:$0xff] %v813
  %878 = vst [vmem:[#allocation2 + $0x1d0] sm:$0xff] %v814
  %879 = vst [vmem:[#allocation2 + $0x1d8] sm:$0xff] %v815
  %880 = vst [vmem:[#allocation2 + $0x1e0] sm:$0xff] %v816
  %881 = vst [vmem:[#allocation2 + $0x1e8] sm:$0xff] %v817
  %882 = vst [vmem:[#allocation2 + $0x1f0] sm:$0xff] %v818
  %883 = vst [vmem:[#allocation2 + $0x1f8] sm:$0xff] %v819
  // Predicated region
  $region14: #{bottleneck_forward.5} parent=0 // pred_check
    %p884 = pneg %p15
  $region15: #{bottleneck_forward.5} parent=0 // pred_check_branch
    %886 = sbr.rel (%p884) target = $region17
  $region16: #{bottleneck_forward.5} parent=0 // pred_region
    %v887 = vld [vmem:[#allocation2] sm:$0xff]
    %v888 = vld [vmem:[#allocation2 + $0x8] sm:$0xff]
    %v889 = vld [vmem:[#allocation2 + $0x10] sm:$0xff]
    %v890 = vld [vmem:[#allocation2 + $0x18] sm:$0xff]
    %v891 = vld [vmem:[#allocation2 + $0x20] sm:$0xff]
    %v892 = vld [vmem:[#allocation2 + $0x28] sm:$0xff]
    %v893 = vld [vmem:[#allocation2 + $0x30] sm:$0xff]
    %v894 = vld [vmem:[#allocation2 + $0x38] sm:$0xff]
    %v895 = vld [vmem:[#allocation2 + $0x40] sm:$0xff]
    %v896 = vld [vmem:[#allocation2 + $0x48] sm:$0xff]
    %v897 = vld [vmem:[#allocation2 + $0x50] sm:$0xff]
    %v898 = vld [vmem:[#allocation2 + $0x58] sm:$0xff]
    %v899 = vld [vmem:[#allocation2 + $0x60] sm:$0xff]
    %v900 = vld [vmem:[#allocation2 + $0x68] sm:$0xff]
    %v901 = vld [vmem:[#allocation2 + $0x70] sm:$0xff]
    %v902 = vld [vmem:[#allocation2 + $0x78] sm:$0xff]
    %v903 = vld [vmem:[#allocation2 + $0x80] sm:$0xff]
    %v904 = vld [vmem:[#allocation2 + $0x88] sm:$0xff]
    %v905 = vld [vmem:[#allocation2 + $0x90] sm:$0xff]
    %v906 = vld [vmem:[#allocation2 + $0x98] sm:$0xff]
    %v907 = vld [vmem:[#allocation2 + $0xa0] sm:$0xff]
    %v908 = vld [vmem:[#allocation2 + $0xa8] sm:$0xff]
    %v909 = vld [vmem:[#allocation2 + $0xb0] sm:$0xff]
    %v910 = vld [vmem:[#allocation2 + $0xb8] sm:$0xff]
    %v911 = vld [vmem:[#allocation2 + $0xc0] sm:$0xff]
    %v912 = vld [vmem:[#allocation2 + $0xc8] sm:$0xff]
    %v913 = vld [vmem:[#allocation2 + $0xd0] sm:$0xff]
    %v914 = vld [vmem:[#allocation2 + $0xd8] sm:$0xff]
    %v915 = vld [vmem:[#allocation2 + $0xe0] sm:$0xff]
    %v916 = vld [vmem:[#allocation2 + $0xe8] sm:$0xff]
    %v917 = vld [vmem:[#allocation2 + $0xf0] sm:$0xff]
    %v918 = vld [vmem:[#allocation2 + $0xf8] sm:$0xff]
    %v919 = vld [vmem:[#allocation2 + $0x100] sm:$0xff]
    %v920 = vld [vmem:[#allocation2 + $0x108] sm:$0xff]
    %v921 = vld [vmem:[#allocation2 + $0x110] sm:$0xff]
    %v922 = vld [vmem:[#allocation2 + $0x118] sm:$0xff]
    %v923 = vld [vmem:[#allocation2 + $0x120] sm:$0xff]
    %v924 = vld [vmem:[#allocation2 + $0x128] sm:$0xff]
    %v925 = vld [vmem:[#allocation2 + $0x130] sm:$0xff]
    %v926 = vld [vmem:[#allocation2 + $0x138] sm:$0xff]
    %v927 = vld [vmem:[#allocation2 + $0x140] sm:$0xff]
    %v928 = vld [vmem:[#allocation2 + $0x148] sm:$0xff]
    %v929 = vld [vmem:[#allocation2 + $0x150] sm:$0xff]
    %v930 = vld [vmem:[#allocation2 + $0x158] sm:$0xff]
    %v931 = vld [vmem:[#allocation2 + $0x160] sm:$0xff]
    %v932 = vld [vmem:[#allocation2 + $0x168] sm:$0xff]
    %v933 = vld [vmem:[#allocation2 + $0x170] sm:$0xff]
    %v934 = vld [vmem:[#allocation2 + $0x178] sm:$0xff]
    %v935 = vld [vmem:[#allocation2 + $0x180] sm:$0xff]
    %v936 = vld [vmem:[#allocation2 + $0x188] sm:$0xff]
    %v937 = vld [vmem:[#allocation2 + $0x190] sm:$0xff]
    %v938 = vld [vmem:[#allocation2 + $0x198] sm:$0xff]
    %v939 = vld [vmem:[#allocation2 + $0x1a0] sm:$0xff]
    %v940 = vld [vmem:[#allocation2 + $0x1a8] sm:$0xff]
    %v941 = vld [vmem:[#allocation2 + $0x1b0] sm:$0xff]
    %v942 = vld [vmem:[#allocation2 + $0x1b8] sm:$0xff]
    %v943 = vld [vmem:[#allocation2 + $0x1c0] sm:$0xff]
    %v944 = vld [vmem:[#allocation2 + $0x1c8] sm:$0xff]
    %v945 = vld [vmem:[#allocation2 + $0x1d0] sm:$0xff]
    %v946 = vld [vmem:[#allocation2 + $0x1d8] sm:$0xff]
    %v947 = vld [vmem:[#allocation2 + $0x1e0] sm:$0xff]
    %v948 = vld [vmem:[#allocation2 + $0x1e8] sm:$0xff]
    %v949 = vld [vmem:[#allocation2 + $0x1f0] sm:$0xff]
    %v950 = vld [vmem:[#allocation2 + $0x1f8] sm:$0xff]
    %v951 = vpack.c.bf16 %v888, %v887
    %v952 = vpack.c.bf16 %v890, %v889
    %v953 = vpack.c.bf16 %v892, %v891
    %v954 = vpack.c.bf16 %v894, %v893
    %v955 = vpack.c.bf16 %v896, %v895
    %v956 = vpack.c.bf16 %v898, %v897
    %v957 = vpack.c.bf16 %v900, %v899
    %v958 = vpack.c.bf16 %v902, %v901
    %v959 = vpack.c.bf16 %v904, %v903
    %v960 = vpack.c.bf16 %v906, %v905
    %v961 = vpack.c.bf16 %v908, %v907
    %v962 = vpack.c.bf16 %v910, %v909
    %v963 = vpack.c.bf16 %v912, %v911
    %v964 = vpack.c.bf16 %v914, %v913
    %v965 = vpack.c.bf16 %v916, %v915
    %v966 = vpack.c.bf16 %v918, %v917
    %v967 = vpack.c.bf16 %v920, %v919
    %v968 = vpack.c.bf16 %v922, %v921
    %v969 = vpack.c.bf16 %v924, %v923
    %v970 = vpack.c.bf16 %v926, %v925
    %v971 = vpack.c.bf16 %v928, %v927
    %v972 = vpack.c.bf16 %v930, %v929
    %v973 = vpack.c.bf16 %v932, %v931
    %v974 = vpack.c.bf16 %v934, %v933
    %v975 = vpack.c.bf16 %v936, %v935
    %v976 = vpack.c.bf16 %v938, %v937
    %v977 = vpack.c.bf16 %v940, %v939
    %v978 = vpack.c.bf16 %v942, %v941
    %v979 = vpack.c.bf16 %v944, %v943
    %v980 = vpack.c.bf16 %v946, %v945
    %v981 = vpack.c.bf16 %v948, %v947
    %v982 = vpack.c.bf16 %v950, %v949
    %v1015 = vunpack.c.l.b16 %v951
    %v1016 = vunpack.c.h.b16 %v951
    %v1017 = vunpack.c.l.b16 %v952
    %v1018 = vunpack.c.h.b16 %v952
    %v1019 = vunpack.c.l.b16 %v953
    %v1020 = vunpack.c.h.b16 %v953
    %v1021 = vunpack.c.l.b16 %v954
    %v1022 = vunpack.c.h.b16 %v954
    %v1023 = vunpack.c.l.b16 %v955
    %v1024 = vunpack.c.h.b16 %v955
    %v1025 = vunpack.c.l.b16 %v956
    %v1026 = vunpack.c.h.b16 %v956
    %v1027 = vunpack.c.l.b16 %v957
    %v1028 = vunpack.c.h.b16 %v957
    %v1029 = vunpack.c.l.b16 %v958
    %v1030 = vunpack.c.h.b16 %v958
    %v1031 = vunpack.c.l.b16 %v959
    %v1032 = vunpack.c.h.b16 %v959
    %v1033 = vunpack.c.l.b16 %v960
    %v1034 = vunpack.c.h.b16 %v960
    %v1035 = vunpack.c.l.b16 %v961
    %v1036 = vunpack.c.h.b16 %v961
    %v1037 = vunpack.c.l.b16 %v962
    %v1038 = vunpack.c.h.b16 %v962
    %v1039 = vunpack.c.l.b16 %v963
    %v1040 = vunpack.c.h.b16 %v963
    %v1041 = vunpack.c.l.b16 %v964
    %v1042 = vunpack.c.h.b16 %v964
    %v1043 = vunpack.c.l.b16 %v965
    %v1044 = vunpack.c.h.b16 %v965
    %v1045 = vunpack.c.l.b16 %v966
    %v1046 = vunpack.c.h.b16 %v966
    %v1047 = vunpack.c.l.b16 %v967
    %v1048 = vunpack.c.h.b16 %v967
    %v1049 = vunpack.c.l.b16 %v968
    %v1050 = vunpack.c.h.b16 %v968
    %v1051 = vunpack.c.l.b16 %v969
    %v1052 = vunpack.c.h.b16 %v969
    %v1053 = vunpack.c.l.b16 %v970
    %v1054 = vunpack.c.h.b16 %v970
    %v1055 = vunpack.c.l.b16 %v971
    %v1056 = vunpack.c.h.b16 %v971
    %v1057 = vunpack.c.l.b16 %v972
    %v1058 = vunpack.c.h.b16 %v972
    %v1059 = vunpack.c.l.b16 %v973
    %v1060 = vunpack.c.h.b16 %v973
    %v1061 = vunpack.c.l.b16 %v974
    %v1062 = vunpack.c.h.b16 %v974
    %v1063 = vunpack.c.l.b16 %v975
    %v1064 = vunpack.c.h.b16 %v975
    %v1065 = vunpack.c.l.b16 %v976
    %v1066 = vunpack.c.h.b16 %v976
    %v1067 = vunpack.c.l.b16 %v977
    %v1068 = vunpack.c.h.b16 %v977
    %v1069 = vunpack.c.l.b16 %v978
    %v1070 = vunpack.c.h.b16 %v978
    %v1071 = vunpack.c.l.b16 %v979
    %v1072 = vunpack.c.h.b16 %v979
    %v1073 = vunpack.c.l.b16 %v980
    %v1074 = vunpack.c.h.b16 %v980
    %v1075 = vunpack.c.l.b16 %v981
    %v1076 = vunpack.c.h.b16 %v981
    %v1077 = vunpack.c.l.b16 %v982
    %v1078 = vunpack.c.h.b16 %v982
    %v1079 = vpack.c.b16 %v1015, %v1015
    %v1080 = vpack.c.b16 %v1016, %v1016
    %v1081 = vpack.c.b16 %v1017, %v1017
    %v1082 = vpack.c.b16 %v1018, %v1018
    %v1083 = vpack.c.b16 %v1019, %v1019
    %v1084 = vpack.c.b16 %v1020, %v1020
    %v1085 = vpack.c.b16 %v1021, %v1021
    %v1086 = vpack.c.b16 %v1022, %v1022
    %v1087 = vpack.c.b16 %v1023, %v1023
    %v1088 = vpack.c.b16 %v1024, %v1024
    %v1089 = vpack.c.b16 %v1025, %v1025
    %v1090 = vpack.c.b16 %v1026, %v1026
    %v1091 = vpack.c.b16 %v1027, %v1027
    %v1092 = vpack.c.b16 %v1028, %v1028
    %v1093 = vpack.c.b16 %v1029, %v1029
    %v1094 = vpack.c.b16 %v1030, %v1030
    %v1095 = vpack.c.b16 %v1031, %v1031
    %v1096 = vpack.c.b16 %v1032, %v1032
    %v1097 = vpack.c.b16 %v1033, %v1033
    %v1098 = vpack.c.b16 %v1034, %v1034
    %v1099 = vpack.c.b16 %v1035, %v1035
    %v1100 = vpack.c.b16 %v1036, %v1036
    %v1101 = vpack.c.b16 %v1037, %v1037
    %v1102 = vpack.c.b16 %v1038, %v1038
    %v1103 = vpack.c.b16 %v1039, %v1039
    %v1104 = vpack.c.b16 %v1040, %v1040
    %v1105 = vpack.c.b16 %v1041, %v1041
    %v1106 = vpack.c.b16 %v1042, %v1042
    %v1107 = vpack.c.b16 %v1043, %v1043
    %v1108 = vpack.c.b16 %v1044, %v1044
    %v1109 = vpack.c.b16 %v1045, %v1045
    %v1110 = vpack.c.b16 %v1046, %v1046
    %v1111 = vpack.c.b16 %v1047, %v1047
    %v1112 = vpack.c.b16 %v1048, %v1048
    %v1113 = vpack.c.b16 %v1049, %v1049
    %v1114 = vpack.c.b16 %v1050, %v1050
    %v1115 = vpack.c.b16 %v1051, %v1051
    %v1116 = vpack.c.b16 %v1052, %v1052
    %v1117 = vpack.c.b16 %v1053, %v1053
    %v1118 = vpack.c.b16 %v1054, %v1054
    %v1119 = vpack.c.b16 %v1055, %v1055
    %v1120 = vpack.c.b16 %v1056, %v1056
    %v1121 = vpack.c.b16 %v1057, %v1057
    %v1122 = vpack.c.b16 %v1058, %v1058
    %v1123 = vpack.c.b16 %v1059, %v1059
    %v1124 = vpack.c.b16 %v1060, %v1060
    %v1125 = vpack.c.b16 %v1061, %v1061
    %v1126 = vpack.c.b16 %v1062, %v1062
    %v1127 = vpack.c.b16 %v1063, %v1063
    %v1128 = vpack.c.b16 %v1064, %v1064
    %v1129 = vpack.c.b16 %v1065, %v1065
    %v1130 = vpack.c.b16 %v1066, %v1066
    %v1131 = vpack.c.b16 %v1067, %v1067
    %v1132 = vpack.c.b16 %v1068, %v1068
    %v1133 = vpack.c.b16 %v1069, %v1069
    %v1134 = vpack.c.b16 %v1070, %v1070
    %v1135 = vpack.c.b16 %v1071, %v1071
    %v1136 = vpack.c.b16 %v1072, %v1072
    %v1137 = vpack.c.b16 %v1073, %v1073
    %v1138 = vpack.c.b16 %v1074, %v1074
    %v1139 = vpack.c.b16 %v1075, %v1075
    %v1140 = vpack.c.b16 %v1076, %v1076
    %v1141 = vpack.c.b16 %v1077, %v1077
    %v1142 = vpack.c.b16 %v1078, %v1078
    %1207 = vst [vmem:[%s2] sm:$0xf] %v1079
    %1208 = vst [vmem:[%s2 + $0x4] sm:$0xf] %v1080
    %1209 = vst [vmem:[%s2 + $0x8] sm:$0xf] %v1081
    %1210 = vst [vmem:[%s2 + $0xc] sm:$0xf] %v1082
    %1211 = vst [vmem:[%s2 + $0x10] sm:$0xf] %v1083
    %1212 = vst [vmem:[%s2 + $0x14] sm:$0xf] %v1084
    %1213 = vst [vmem:[%s2 + $0x18] sm:$0xf] %v1085
    %1214 = vst [vmem:[%s2 + $0x1c] sm:$0xf] %v1086
    %1215 = vst [vmem:[%s2 + $0x20] sm:$0xf] %v1087
    %1216 = vst [vmem:[%s2 + $0x24] sm:$0xf] %v1088
    %1217 = vst [vmem:[%s2 + $0x28] sm:$0xf] %v1089
    %1218 = vst [vmem:[%s2 + $0x2c] sm:$0xf] %v1090
    %1219 = vst [vmem:[%s2 + $0x30] sm:$0xf] %v1091
    %1220 = vst [vmem:[%s2 + $0x34] sm:$0xf] %v1092
    %1221 = vst [vmem:[%s2 + $0x38] sm:$0xf] %v1093
    %1222 = vst [vmem:[%s2 + $0x3c] sm:$0xf] %v1094
    %1223 = vst [vmem:[%s2 + $0x40] sm:$0xf] %v1095
    %1224 = vst [vmem:[%s2 + $0x44] sm:$0xf] %v1096
    %1225 = vst [vmem:[%s2 + $0x48] sm:$0xf] %v1097
    %1226 = vst [vmem:[%s2 + $0x4c] sm:$0xf] %v1098
    %1227 = vst [vmem:[%s2 + $0x50] sm:$0xf] %v1099
    %1228 = vst [vmem:[%s2 + $0x54] sm:$0xf] %v1100
    %1229 = vst [vmem:[%s2 + $0x58] sm:$0xf] %v1101
    %1230 = vst [vmem:[%s2 + $0x5c] sm:$0xf] %v1102
    %1231 = vst [vmem:[%s2 + $0x60] sm:$0xf] %v1103
    %1232 = vst [vmem:[%s2 + $0x64] sm:$0xf] %v1104
    %1233 = vst [vmem:[%s2 + $0x68] sm:$0xf] %v1105
    %1234 = vst [vmem:[%s2 + $0x6c] sm:$0xf] %v1106
    %1235 = vst [vmem:[%s2 + $0x70] sm:$0xf] %v1107
    %1236 = vst [vmem:[%s2 + $0x74] sm:$0xf] %v1108
    %1237 = vst [vmem:[%s2 + $0x78] sm:$0xf] %v1109
    %1238 = vst [vmem:[%s2 + $0x7c] sm:$0xf] %v1110
    %1239 = vst [vmem:[%s2 + $0x80] sm:$0xf] %v1111
    %1240 = vst [vmem:[%s2 + $0x84] sm:$0xf] %v1112
    %1241 = vst [vmem:[%s2 + $0x88] sm:$0xf] %v1113
    %1242 = vst [vmem:[%s2 + $0x8c] sm:$0xf] %v1114
    %1243 = vst [vmem:[%s2 + $0x90] sm:$0xf] %v1115
    %1244 = vst [vmem:[%s2 + $0x94] sm:$0xf] %v1116
    %1245 = vst [vmem:[%s2 + $0x98] sm:$0xf] %v1117
    %1246 = vst [vmem:[%s2 + $0x9c] sm:$0xf] %v1118
    %1247 = vst [vmem:[%s2 + $0xa0] sm:$0xf] %v1119
    %1248 = vst [vmem:[%s2 + $0xa4] sm:$0xf] %v1120
    %1249 = vst [vmem:[%s2 + $0xa8] sm:$0xf] %v1121
    %1250 = vst [vmem:[%s2 + $0xac] sm:$0xf] %v1122
    %1251 = vst [vmem:[%s2 + $0xb0] sm:$0xf] %v1123
    %1252 = vst [vmem:[%s2 + $0xb4] sm:$0xf] %v1124
    %1253 = vst [vmem:[%s2 + $0xb8] sm:$0xf] %v1125
    %1254 = vst [vmem:[%s2 + $0xbc] sm:$0xf] %v1126
    %1255 = vst [vmem:[%s2 + $0xc0] sm:$0xf] %v1127
    %1256 = vst [vmem:[%s2 + $0xc4] sm:$0xf] %v1128
    %1257 = vst [vmem:[%s2 + $0xc8] sm:$0xf] %v1129
    %1258 = vst [vmem:[%s2 + $0xcc] sm:$0xf] %v1130
    %1259 = vst [vmem:[%s2 + $0xd0] sm:$0xf] %v1131
    %1260 = vst [vmem:[%s2 + $0xd4] sm:$0xf] %v1132
    %1261 = vst [vmem:[%s2 + $0xd8] sm:$0xf] %v1133
    %1262 = vst [vmem:[%s2 + $0xdc] sm:$0xf] %v1134
    %1263 = vst [vmem:[%s2 + $0xe0] sm:$0xf] %v1135
    %1264 = vst [vmem:[%s2 + $0xe4] sm:$0xf] %v1136
    %1265 = vst [vmem:[%s2 + $0xe8] sm:$0xf] %v1137
    %1266 = vst [vmem:[%s2 + $0xec] sm:$0xf] %v1138
    %1267 = vst [vmem:[%s2 + $0xf0] sm:$0xf] %v1139
    %1268 = vst [vmem:[%s2 + $0xf4] sm:$0xf] %v1140
    %1269 = vst [vmem:[%s2 + $0xf8] sm:$0xf] %v1141
    %1270 = vst [vmem:[%s2 + $0xfc] sm:$0xf] %v1142
    %v1271 = vadd.f32 %v887, %v888
    %v1272 = vadd.f32 %v1271, %v889
    %v1273 = vadd.f32 %v1272, %v890
    %v1274 = vadd.f32 %v1273, %v891
    %v1275 = vadd.f32 %v1274, %v892
    %v1276 = vadd.f32 %v1275, %v893
    %v1277 = vadd.f32 %v1276, %v894
    %v1278 = vadd.f32 %v1277, %v895
    %v1279 = vadd.f32 %v1278, %v896
    %v1280 = vadd.f32 %v1279, %v897
    %v1281 = vadd.f32 %v1280, %v898
    %v1282 = vadd.f32 %v1281, %v899
    %v1283 = vadd.f32 %v1282, %v900
    %v1284 = vadd.f32 %v1283, %v901
    %v1285 = vadd.f32 %v1284, %v902
    %v1286 = vadd.f32 %v1285, %v903
    %v1287 = vadd.f32 %v1286, %v904
    %v1288 = vadd.f32 %v1287, %v905
    %v1289 = vadd.f32 %v1288, %v906
    %v1290 = vadd.f32 %v1289, %v907
    %v1291 = vadd.f32 %v1290, %v908
    %v1292 = vadd.f32 %v1291, %v909
    %v1293 = vadd.f32 %v1292, %v910
    %v1294 = vadd.f32 %v1293, %v911
    %v1295 = vadd.f32 %v1294, %v912
    %v1296 = vadd.f32 %v1295, %v913
    %v1297 = vadd.f32 %v1296, %v914
    %v1298 = vadd.f32 %v1297, %v915
    %v1299 = vadd.f32 %v1298, %v916
    %v1300 = vadd.f32 %v1299, %v917
    %v1301 = vadd.f32 %v1300, %v918
    %v1302 = vadd.f32 %v1301, %v919
    %v1303 = vadd.f32 %v1302, %v920
    %v1304 = vadd.f32 %v1303, %v921
    %v1305 = vadd.f32 %v1304, %v922
    %v1306 = vadd.f32 %v1305, %v923
    %v1307 = vadd.f32 %v1306, %v924
    %v1308 = vadd.f32 %v1307, %v925
    %v1309 = vadd.f32 %v1308, %v926
    %v1310 = vadd.f32 %v1309, %v927
    %v1311 = vadd.f32 %v1310, %v928
    %v1312 = vadd.f32 %v1311, %v929
    %v1313 = vadd.f32 %v1312, %v930
    %v1314 = vadd.f32 %v1313, %v931
    %v1315 = vadd.f32 %v1314, %v932
    %v1316 = vadd.f32 %v1315, %v933
    %v1317 = vadd.f32 %v1316, %v934
    %v1318 = vadd.f32 %v1317, %v935
    %v1319 = vadd.f32 %v1318, %v936
    %v1320 = vadd.f32 %v1319, %v937
    %v1321 = vadd.f32 %v1320, %v938
    %v1322 = vadd.f32 %v1321, %v939
    %v1323 = vadd.f32 %v1322, %v940
    %v1324 = vadd.f32 %v1323, %v941
    %v1325 = vadd.f32 %v1324, %v942
    %v1326 = vadd.f32 %v1325, %v943
    %v1327 = vadd.f32 %v1326, %v944
    %v1328 = vadd.f32 %v1327, %v945
    %v1329 = vadd.f32 %v1328, %v946
    %v1330 = vadd.f32 %v1329, %v947
    %v1331 = vadd.f32 %v1330, %v948
    %v1332 = vadd.f32 %v1331, %v949
    %v1333 = vadd.f32 %v1332, %v950
    %v1334 = vrot.slane %v1333, 4
    %v1335 = vadd.f32 %v1333, %v1334
    %v1336 = vrot.slane %v1335, 2
    %v1337 = vadd.f32 %v1335, %v1336
    %v1338 = vrot.slane %v1337, 1
    %v1339 = vadd.f32 %v1337, %v1338
    %1340 = vst [vmem:[%s3] sm:$0x1] %v1339
    %v1341 = vmul.f32 %v887, %v887
    %v1342 = vmul.f32 %v888, %v888
    %v1343 = vmul.f32 %v889, %v889
    %v1344 = vmul.f32 %v890, %v890
    %v1345 = vmul.f32 %v891, %v891
    %v1346 = vmul.f32 %v892, %v892
    %v1347 = vmul.f32 %v893, %v893
    %v1348 = vmul.f32 %v894, %v894
    %v1349 = vmul.f32 %v895, %v895
    %v1350 = vmul.f32 %v896, %v896
    %v1351 = vmul.f32 %v897, %v897
    %v1352 = vmul.f32 %v898, %v898
    %v1353 = vmul.f32 %v899, %v899
    %v1354 = vmul.f32 %v900, %v900
    %v1355 = vmul.f32 %v901, %v901
    %v1356 = vmul.f32 %v902, %v902
    %v1357 = vmul.f32 %v903, %v903
    %v1358 = vmul.f32 %v904, %v904
    %v1359 = vmul.f32 %v905, %v905
    %v1360 = vmul.f32 %v906, %v906
    %v1361 = vmul.f32 %v907, %v907
    %v1362 = vmul.f32 %v908, %v908
    %v1363 = vmul.f32 %v909, %v909
    %v1364 = vmul.f32 %v910, %v910
    %v1365 = vmul.f32 %v911, %v911
    %v1366 = vmul.f32 %v912, %v912
    %v1367 = vmul.f32 %v913, %v913
    %v1368 = vmul.f32 %v914, %v914
    %v1369 = vmul.f32 %v915, %v915
    %v1370 = vmul.f32 %v916, %v916
    %v1371 = vmul.f32 %v917, %v917
    %v1372 = vmul.f32 %v918, %v918
    %v1373 = vmul.f32 %v919, %v919
    %v1374 = vmul.f32 %v920, %v920
    %v1375 = vmul.f32 %v921, %v921
    %v1376 = vmul.f32 %v922, %v922
    %v1377 = vmul.f32 %v923, %v923
    %v1378 = vmul.f32 %v924, %v924
    %v1379 = vmul.f32 %v925, %v925
    %v1380 = vmul.f32 %v926, %v926
    %v1381 = vmul.f32 %v927, %v927
    %v1382 = vmul.f32 %v928, %v928
    %v1383 = vmul.f32 %v929, %v929
    %v1384 = vmul.f32 %v930, %v930
    %v1385 = vmul.f32 %v931, %v931
    %v1386 = vmul.f32 %v932, %v932
    %v1387 = vmul.f32 %v933, %v933
    %v1388 = vmul.f32 %v934, %v934
    %v1389 = vmul.f32 %v935, %v935
    %v1390 = vmul.f32 %v936, %v936
    %v1391 = vmul.f32 %v937, %v937
    %v1392 = vmul.f32 %v938, %v938
    %v1393 = vmul.f32 %v939, %v939
    %v1394 = vmul.f32 %v940, %v940
    %v1395 = vmul.f32 %v941, %v941
    %v1396 = vmul.f32 %v942, %v942
    %v1397 = vmul.f32 %v943, %v943
    %v1398 = vmul.f32 %v944, %v944
    %v1399 = vmul.f32 %v945, %v945
    %v1400 = vmul.f32 %v946, %v946
    %v1401 = vmul.f32 %v947, %v947
    %v1402 = vmul.f32 %v948, %v948
    %v1403 = vmul.f32 %v949, %v949
    %v1404 = vmul.f32 %v950, %v950
    %v1405 = vadd.f32 %v1341, %v1342
    %v1406 = vadd.f32 %v1405, %v1343
    %v1407 = vadd.f32 %v1406, %v1344
    %v1408 = vadd.f32 %v1407, %v1345
    %v1409 = vadd.f32 %v1408, %v1346
    %v1410 = vadd.f32 %v1409, %v1347
    %v1411 = vadd.f32 %v1410, %v1348
    %v1412 = vadd.f32 %v1411, %v1349
    %v1413 = vadd.f32 %v1412, %v1350
    %v1414 = vadd.f32 %v1413, %v1351
    %v1415 = vadd.f32 %v1414, %v1352
    %v1416 = vadd.f32 %v1415, %v1353
    %v1417 = vadd.f32 %v1416, %v1354
    %v1418 = vadd.f32 %v1417, %v1355
    %v1419 = vadd.f32 %v1418, %v1356
    %v1420 = vadd.f32 %v1419, %v1357
    %v1421 = vadd.f32 %v1420, %v1358
    %v1422 = vadd.f32 %v1421, %v1359
    %v1423 = vadd.f32 %v1422, %v1360
    %v1424 = vadd.f32 %v1423, %v1361
    %v1425 = vadd.f32 %v1424, %v1362
    %v1426 = vadd.f32 %v1425, %v1363
    %v1427 = vadd.f32 %v1426, %v1364
    %v1428 = vadd.f32 %v1427, %v1365
    %v1429 = vadd.f32 %v1428, %v1366
    %v1430 = vadd.f32 %v1429, %v1367
    %v1431 = vadd.f32 %v1430, %v1368
    %v1432 = vadd.f32 %v1431, %v1369
    %v1433 = vadd.f32 %v1432, %v1370
    %v1434 = vadd.f32 %v1433, %v1371
    %v1435 = vadd.f32 %v1434, %v1372
    %v1436 = vadd.f32 %v1435, %v1373
    %v1437 = vadd.f32 %v1436, %v1374
    %v1438 = vadd.f32 %v1437, %v1375
    %v1439 = vadd.f32 %v1438, %v1376
    %v1440 = vadd.f32 %v1439, %v1377
    %v1441 = vadd.f32 %v1440, %v1378
    %v1442 = vadd.f32 %v1441, %v1379
    %v1443 = vadd.f32 %v1442, %v1380
    %v1444 = vadd.f32 %v1443, %v1381
    %v1445 = vadd.f32 %v1444, %v1382
    %v1446 = vadd.f32 %v1445, %v1383
    %v1447 = vadd.f32 %v1446, %v1384
    %v1448 = vadd.f32 %v1447, %v1385
    %v1449 = vadd.f32 %v1448, %v1386
    %v1450 = vadd.f32 %v1449, %v1387
    %v1451 = vadd.f32 %v1450, %v1388
    %v1452 = vadd.f32 %v1451, %v1389
    %v1453 = vadd.f32 %v1452, %v1390
    %v1454 = vadd.f32 %v1453, %v1391
    %v1455 = vadd.f32 %v1454, %v1392
    %v1456 = vadd.f32 %v1455, %v1393
    %v1457 = vadd.f32 %v1456, %v1394
    %v1458 = vadd.f32 %v1457, %v1395
    %v1459 = vadd.f32 %v1458, %v1396
    %v1460 = vadd.f32 %v1459, %v1397
    %v1461 = vadd.f32 %v1460, %v1398
    %v1462 = vadd.f32 %v1461, %v1399
    %v1463 = vadd.f32 %v1462, %v1400
    %v1464 = vadd.f32 %v1463, %v1401
    %v1465 = vadd.f32 %v1464, %v1402
    %v1466 = vadd.f32 %v1465, %v1403
    %v1467 = vadd.f32 %v1466, %v1404
    %v1468 = vrot.slane %v1467, 4
    %v1469 = vadd.f32 %v1467, %v1468
    %v1470 = vrot.slane %v1469, 2
    %v1471 = vadd.f32 %v1469, %v1470
    %v1472 = vrot.slane %v1471, 1
    %v1473 = vadd.f32 %v1471, %v1472
    %1474 = vst [vmem:[%s4] sm:$0x1] %v1473
  $region17: #{bottleneck_forward.5} parent=0 // pred_fallthru
    _
  // Predicated region
  $region18: #{bottleneck_forward.5} parent=0 // pred_check
    _
  $region19: #{bottleneck_forward.5} parent=0 // pred_check_branch
    %1476 = sbr.rel (0) target = $region21
  $region20: #{bottleneck_forward.5} parent=0 // pred_region
    _
  $region21: #{bottleneck_forward.5} parent=0 // pred_fallthru
    _
  // Predicated region
  $region22: #{bottleneck_forward.5} parent=0 // pred_check
    _
  $region23: #{bottleneck_forward.5} parent=0 // pred_check_branch
    %1478 = sbr.rel (0) target = $region25
  $region24: #{bottleneck_forward.5} parent=0 // pred_region
    _
  $region25: #{bottleneck_forward.5} parent=0 // pred_fallthru
    _
  // Predicated region
  $region26: #{bottleneck_forward.5} parent=0 // pred_check
    _
  $region27: #{bottleneck_forward.5} parent=0 // pred_check_branch
    %1480 = sbr.rel (0) target = $region29
  $region28: #{bottleneck_forward.5} parent=0 // pred_region
    _
  $region29: #{bottleneck_forward.5} parent=0 // pred_fallthru
    _
  // Predicated region
  $region30: #{bottleneck_forward.5} parent=0 // pred_check
    _
  $region31: #{bottleneck_forward.5} parent=0 // pred_check_branch
    %1482 = sbr.rel (0) target = $region33
  $region32: #{bottleneck_forward.5} parent=0 // pred_region
    _
  $region33: #{bottleneck_forward.5} parent=0 // pred_fallthru
    _
  // Predicated region
  $region34: #{bottleneck_forward.5} parent=0 // pred_check
    _
  $region35: #{bottleneck_forward.5} parent=0 // pred_check_branch
    %1484 = sbr.rel (0) target = $region37
  $region36: #{bottleneck_forward.5} parent=0 // pred_region
    _
  $region37: #{bottleneck_forward.5} parent=0 // pred_fallthru
    _
  // Predicated region
  $region38: #{bottleneck_forward.5} parent=0 // pred_check
    _
  $region39: #{bottleneck_forward.5} parent=0 // pred_check_branch
    %1486 = sbr.rel (0) target = $region41
  $region40: #{bottleneck_forward.5} parent=0 // pred_region
    _
  $region41: #{bottleneck_forward.5} parent=0 // pred_fallthru
    _

// kernel: bottleneck_forward.7
$region0: #{bottleneck_forward.7}
  #allocation0 [shape = 'u32[]', space=smem, size = 0x4, offset = 0x4, fixed_abs, tag = 'smem constant byte address 0x4 - core index']
  #allocation1 [shape = 'u32[144,128]{1,0:T(1,128)}', space=vmem, size = 0x12000, scoped, tag = 'internal scratch']
  %s0 = inlined_call_operand.vmem [shape: bf16[8,90,128], index: 0, kind: input, shape index: {}]
  %s1 = inlined_call_operand.vmem [shape: bf16[3,3,128,128], index: 1, kind: input, shape index: {}]
  %s2 = inlined_call_operand.vmem [shape: f32[72,1], index: 2, kind: input, shape index: {}]
  %s3 = inlined_call_operand.vmem [shape: bf16[2,72,128], index: 3, kind: output, shape index: {0}]
  %s4 = inlined_call_operand.vmem [shape: f32[2,1,128], index: 4, kind: output, shape index: {1}]
  %s5 = inlined_call_operand.vmem [shape: f32[2,1,128], index: 5, kind: output, shape index: {2}]
  %6 = xla_tuple %s3, %s4, %s5
  %s7 = sld [smem:[#allocation0]]
  $region61: #{bottleneck_forward.7} parent=0
    _
  %s9 = ssub.s32 1, %s7
  %s10 = scalar_select 0, %s9, %s7
  loop: start=0, step=1, limit=4
  $region2: #{bottleneck_forward.7} parent=0 // loop_pre_header
    _
  $region3: #{bottleneck_forward.7} parent=0 // loop_header
    %s12 = sphi 0, %s16
    %p13 = scmp.ge.s32.totalorder %s12, 4
    %s22 = sphi 0, %s24
    %s25 = sphi 0, %s22
    %s26 = sphi 0, %s25
    %s42 = sphi 0, %s26
    %s46 = sphi 0, %s46
    %s48 = sphi 0, %s46
    %s49 = sphi 0, %s48
    %s63 = sphi 0, %s49
    %s67 = sphi 0, %s67
    %s69 = sphi 0, %s67
    %s70 = sphi 0, %s69
    %s84 = sphi 0, %s70
    %s90 = sphi 0, %s92
    %s93 = sphi 0, %s90
    %s94 = sphi 0, %s93
    %s110 = sphi 0, %s94
    %s116 = sphi 0, %s118
    %s119 = sphi 0, %s116
    %s120 = sphi 0, %s119
    %s136 = sphi 0, %s120
    %s142 = sphi 0, %s144
    %s145 = sphi 0, %s142
    %s146 = sphi 0, %s145
    %s162 = sphi 0, %s146
  $region4: #{bottleneck_forward.7} parent=0 // loop_header_branch
    %15 = sbr.rel (%p13) target = $region8
  $region5: #{bottleneck_forward.7} parent=0 // loop_body
    %s17 = ssub.s32 %s12, 1
    %s18 = ssub.s32 %s12, 2
    %s19 = sadd.s32 %s12, 1
    %s20 = ssub.s32 %s12, %s19
    %p21 = scmp.eq.s32.totalorder %s20, 0
    %s23 = sadd.s32 %s22, 1
    %s24 = scalar_select %p21, %s22, %s23
    %p27 = pneg %p21
    %p28 = scmp.eq.s32.totalorder %s12, 1
    %p29 = por %p27, %p28
    %p30 = scmp.ne.s32.totalorder %s22, %s25
    %p31 = scmp.eq.s32.totalorder %s12, 0
    %p32 = por %p30, %p31
    %p33 = scmp.ne.s32.totalorder %s22, %s25
    %p34 = scmp.eq.s32.totalorder %s17, 1
    %p35 = por %p33, %p34
    %p36 = scmp.ne.s32.totalorder %s25, %s26
    %p37 = scmp.eq.s32.totalorder %s17, 0
    %p38 = por %p36, %p37
    %p39 = scmp.ne.s32.totalorder %s25, %s26
    %p40 = scmp.eq.s32.totalorder %s18, 1
    %p41 = por %p39, %p40
    %p43 = scmp.ne.s32.totalorder %s26, %s42
    %p44 = scmp.eq.s32.totalorder %s18, 0
    %p45 = por %p43, %p44
    %s47 = sadd.s32 %s46, 1
    %p50 = scmp.eq.s32.totalorder %s12, 1
    %p51 = scmp.ne.s32.totalorder %s46, %s48
    %p52 = scmp.eq.s32.totalorder %s12, 0
    %p53 = por %p51, %p52
    %p54 = scmp.ne.s32.totalorder %s46, %s48
    %p55 = scmp.eq.s32.totalorder %s17, 1
    %p56 = por %p54, %p55
    %p57 = scmp.ne.s32.totalorder %s48, %s49
    %p58 = scmp.eq.s32.totalorder %s17, 0
    %p59 = por %p57, %p58
    %p60 = scmp.ne.s32.totalorder %s48, %s49
    %p61 = scmp.eq.s32.totalorder %s18, 1
    %p62 = por %p60, %p61
    %p64 = scmp.ne.s32.totalorder %s49, %s63
    %p65 = scmp.eq.s32.totalorder %s18, 0
    %p66 = por %p64, %p65
    %s68 = sadd.s32 %s67, 1
    %p71 = scmp.eq.s32.totalorder %s12, 1
    %p72 = scmp.ne.s32.totalorder %s67, %s69
    %p73 = scmp.eq.s32.totalorder %s12, 0
    %p74 = por %p72, %p73
    %p75 = scmp.ne.s32.totalorder %s67, %s69
    %p76 = scmp.eq.s32.totalorder %s17, 1
    %p77 = por %p75, %p76
    %p78 = scmp.ne.s32.totalorder %s69, %s70
    %p79 = scmp.eq.s32.totalorder %s17, 0
    %p80 = por %p78, %p79
    %p81 = scmp.ne.s32.totalorder %s69, %s70
    %p82 = scmp.eq.s32.totalorder %s18, 1
    %p83 = por %p81, %p82
    %p85 = scmp.ne.s32.totalorder %s70, %s84
    %p86 = scmp.eq.s32.totalorder %s18, 0
    %p87 = por %p85, %p86
    %s88 = ssub.s32 %s12, %s19
    %p89 = scmp.eq.s32.totalorder %s88, 0
    %s91 = sadd.s32 %s90, 1
    %s92 = scalar_select %p89, %s90, %s91
    %p95 = pneg %p89
    %p96 = scmp.eq.s32.totalorder %s12, 1
    %p97 = por %p95, %p96
    %p98 = scmp.ne.s32.totalorder %s90, %s93
    %p99 = scmp.eq.s32.totalorder %s12, 0
    %p100 = por %p98, %p99
    %p101 = scmp.ne.s32.totalorder %s90, %s93
    %p102 = scmp.eq.s32.totalorder %s17, 1
    %p103 = por %p101, %p102
    %p104 = scmp.ne.s32.totalorder %s93, %s94
    %p105 = scmp.eq.s32.totalorder %s17, 0
    %p106 = por %p104, %p105
    %p107 = scmp.ne.s32.totalorder %s93, %s94
    %p108 = scmp.eq.s32.totalorder %s18, 1
    %p109 = por %p107, %p108
    %p111 = scmp.ne.s32.totalorder %s94, %s110
    %p112 = scmp.eq.s32.totalorder %s18, 0
    %p113 = por %p111, %p112
    %s114 = ssub.s32 %s12, %s19
    %p115 = scmp.eq.s32.totalorder %s114, 0
    %s117 = sadd.s32 %s116, 1
    %s118 = scalar_select %p115, %s116, %s117
    %p121 = pneg %p115
    %p122 = scmp.eq.s32.totalorder %s12, 1
    %p123 = por %p121, %p122
    %p124 = scmp.ne.s32.totalorder %s116, %s119
    %p125 = scmp.eq.s32.totalorder %s12, 0
    %p126 = por %p124, %p125
    %p127 = scmp.ne.s32.totalorder %s116, %s119
    %p128 = scmp.eq.s32.totalorder %s17, 1
    %p129 = por %p127, %p128
    %p130 = scmp.ne.s32.totalorder %s119, %s120
    %p131 = scmp.eq.s32.totalorder %s17, 0
    %p132 = por %p130, %p131
    %p133 = scmp.ne.s32.totalorder %s119, %s120
    %p134 = scmp.eq.s32.totalorder %s18, 1
    %p135 = por %p133, %p134
    %p137 = scmp.ne.s32.totalorder %s120, %s136
    %p138 = scmp.eq.s32.totalorder %s18, 0
    %p139 = por %p137, %p138
    %s140 = ssub.s32 %s12, %s19
    %p141 = scmp.eq.s32.totalorder %s140, 0
    %s143 = sadd.s32 %s142, 1
    %s144 = scalar_select %p141, %s142, %s143
    %p147 = pneg %p141
    %p148 = scmp.eq.s32.totalorder %s12, 1
    %p149 = por %p147, %p148
    %p150 = scmp.ne.s32.totalorder %s142, %s145
    %p151 = scmp.eq.s32.totalorder %s12, 0
    %p152 = por %p150, %p151
    %p153 = scmp.ne.s32.totalorder %s142, %s145
    %p154 = scmp.eq.s32.totalorder %s17, 1
    %p155 = por %p153, %p154
    %p156 = scmp.ne.s32.totalorder %s145, %s146
    %p157 = scmp.eq.s32.totalorder %s17, 0
    %p158 = por %p156, %p157
    %p159 = scmp.ne.s32.totalorder %s145, %s146
    %p160 = scmp.eq.s32.totalorder %s18, 1
    %p161 = por %p159, %p160
    %p163 = scmp.ne.s32.totalorder %s146, %s162
    %p164 = scmp.eq.s32.totalorder %s18, 0
    %p165 = por %p163, %p164
    %p166 = scmp.le.s32.totalorder 1, %s12
    %p167 = scmp.lt.s32.totalorder %s12, 3
    %p168 = pnand %p166, %p167
    %p169 = pneg %p168
    // Predicated region
    $region9: #{bottleneck_forward.7} parent=5 // pred_check
      _
    $region10: #{bottleneck_forward.7} parent=5 // pred_check_branch
      %171 = sbr.rel (%p168) target = $region12
    $region11: #{bottleneck_forward.7} parent=5 // pred_region
      %s172 = ssub.s32 %s12, 1
      // Predicated region
      $region13: #{bottleneck_forward.7} parent=11 // pred_check
        %p173 = pneg %p59
      $region14: #{bottleneck_forward.7} parent=11 // pred_check_branch
        %175 = sbr.rel (%p173) target = $region16
      $region15: #{bottleneck_forward.7} parent=11 // pred_region
        _
      $region16: #{bottleneck_forward.7} parent=11 // pred_fallthru
        _
      // Predicated region
      $region17: #{bottleneck_forward.7} parent=11 // pred_check
        %p176 = pneg %p80
      $region18: #{bottleneck_forward.7} parent=11 // pred_check_branch
        %178 = sbr.rel (%p176) target = $region20
      $region19: #{bottleneck_forward.7} parent=11 // pred_region
        _
      $region20: #{bottleneck_forward.7} parent=11 // pred_fallthru
        _
    $region12: #{bottleneck_forward.7} parent=5 // pred_fallthru
      _
    %p179 = scmp.lt.s32.totalorder %s12, 2
    // Predicated region
    $region21: #{bottleneck_forward.7} parent=5 // pred_check
      %p180 = pneg %p179
    $region22: #{bottleneck_forward.7} parent=5 // pred_check_branch
      %182 = sbr.rel (%p180) target = $region24
    $region23: #{bottleneck_forward.7} parent=5 // pred_region
      // Predicated region
      $region25: #{bottleneck_forward.7} parent=23 // pred_check
        %p183 = pneg %p32
      $region26: #{bottleneck_forward.7} parent=23 // pred_check_branch
        %185 = sbr.rel (%p183) target = $region28
      $region27: #{bottleneck_forward.7} parent=23 // pred_region
        %s186 = smul.u32 4, %s12
        %p187 = scmp.lt.s32.totalorder %s186, 7
        %s188 = scalar_select %p187, %s186, 7
        %s189 = smul.addr %s188, 12
        %s190 = smul.addr %s189, 4
        %s191 = scalar_lea.vmem %s0, %s190
        %s192 = smul.u32 4, %s12
      $region28: #{bottleneck_forward.7} parent=23 // pred_fallthru
        _
    $region24: #{bottleneck_forward.7} parent=5 // pred_fallthru
      _
    %p193 = scmp.le.s32.totalorder 1, %s12
    %p194 = scmp.lt.s32.totalorder %s12, 3
    %p195 = pnand %p193, %p194
    %p196 = pneg %p195
    // Predicated region
    $region29: #{bottleneck_forward.7} parent=5 // pred_check
      _
    $region30: #{bottleneck_forward.7} parent=5 // pred_check_branch
      %198 = sbr.rel (%p195) target = $region32
    $region31: #{bottleneck_forward.7} parent=5 // pred_region
      %s199 = ssub.s32 %s12, 1
      %s200 = smul.u32 4, %s17
      %p201 = scmp.lt.s32.totalorder %s200, 7
      %s202 = scalar_select %p201, %s200, 7
      %s203 = smul.addr %s202, 12
      %s204 = smul.addr %s203, 4
      %s205 = scalar_lea.vmem %s0, %s204
      %p206 = pneg %p38
      %p207 = pneg %p35
      %p208 = pneg %p59
      %p209 = pneg %p56
      %p210 = pneg %p80
      %p211 = pneg %p77
      %p212 = pneg %p106
      %p213 = pneg %p103
      %p214 = scmp.lt.s32.totalorder %s17, 1
      %s215 = scalar_select %p214, %s17, 1
      %s216 = smul.addr %s215, 9
      %s217 = smul.addr %s216, 4
      %s218 = scalar_lea.vmem %s3, %s217
      %p219 = pneg %p132
      %p220 = pneg %p129
      %p221 = scmp.lt.s32.totalorder %s17, 1
      %s222 = scalar_select %p221, %s17, 1
      %s223 = scalar_lea.vmem %s4, %s222
      %p224 = pneg %p158
      %p225 = pneg %p155
      %p226 = scmp.lt.s32.totalorder %s17, 1
      %s227 = scalar_select %p226, %s17, 1
      %s228 = scalar_lea.vmem %s5, %s227
      %s229 = smul.u32 4, %s17
      %p230 = scmp.lt.s32.totalorder %s229, 7
      %s231 = scalar_select %p230, %s229, 7
      %s232 = smul.addr %s231, 12
      %s233 = smul.addr %s232, 4
      %s234 = scalar_lea.vmem %s0, %s233
      %s235 = smul.u32 4, %s17
      %p236 = scmp.lt.s32.totalorder %s17, 1
      %s237 = scalar_select %p236, %s17, 1
      %s238 = smul.addr %s237, 9
      %s239 = smul.addr %s238, 4
      %s240 = scalar_lea.vmem %s3, %s239
      %p241 = scmp.lt.s32.totalorder %s17, 1
      %s242 = scalar_select %p241, %s17, 1
      %s243 = scalar_lea.vmem %s4, %s242
      %p244 = scmp.lt.s32.totalorder %s17, 1
      %s245 = scalar_select %p244, %s17, 1
      %s246 = scalar_lea.vmem %s5, %s245
      %v248 = vld [vmem:[%s234] sm:$0xf]
      %v249 = vld [vmem:[%s234 + $0x4] sm:$0xf]
      %v250 = vld [vmem:[%s234 + $0x8] sm:$0xf]
      %v251 = vld [vmem:[%s234 + $0xc] sm:$0xf]
      %v252 = vld [vmem:[%s234 + $0x10] sm:$0xf]
      %v253 = vld [vmem:[%s234 + $0x14] sm:$0xf]
      %v254 = vld [vmem:[%s234 + $0x18] sm:$0xf]
      %v255 = vld [vmem:[%s234 + $0x1c] sm:$0xf]
      %v256 = vld [vmem:[%s234 + $0x20] sm:$0xf]
      %v257 = vld [vmem:[%s1] sm:$0xf]
      %v258 = vld [vmem:[%s1 + $0x4] sm:$0xf]
      %v259 = vld [vmem:[%s1 + $0x8] sm:$0xf]
      %v260 = vld [vmem:[%s1 + $0xc] sm:$0xf]
      %v261 = vld [vmem:[%s1 + $0x10] sm:$0xf]
      %v262 = vld [vmem:[%s1 + $0x14] sm:$0xf]
      %v263 = vld [vmem:[%s1 + $0x18] sm:$0xf]
      %v264 = vld [vmem:[%s1 + $0x1c] sm:$0xf]
      %v265 = vld [vmem:[%s1 + $0x20] sm:$0xf]
      %v266 = vld [vmem:[%s1 + $0x24] sm:$0xf]
      %v267 = vld [vmem:[%s1 + $0x28] sm:$0xf]
      %v268 = vld [vmem:[%s1 + $0x2c] sm:$0xf]
      %v269 = vld [vmem:[%s1 + $0x30] sm:$0xf]
      %v270 = vld [vmem:[%s1 + $0x34] sm:$0xf]
      %v271 = vld [vmem:[%s1 + $0x38] sm:$0xf]
      %v272 = vld [vmem:[%s1 + $0x3c] sm:$0xf]
      %s273 = scalar_lea.vmem %s234, 48
      %v274 = vld [vmem:[%s273] sm:$0xf]
      %v275 = vld [vmem:[%s273 + $0x4] sm:$0xf]
      %v276 = vld [vmem:[%s273 + $0x8] sm:$0xf]
      %v277 = vld [vmem:[%s273 + $0xc] sm:$0xf]
      %v278 = vld [vmem:[%s273 + $0x10] sm:$0xf]
      %v279 = vld [vmem:[%s273 + $0x14] sm:$0xf]
      %v280 = vld [vmem:[%s273 + $0x18] sm:$0xf]
      %v281 = vld [vmem:[%s273 + $0x1c] sm:$0xf]
      %v282 = vld [vmem:[%s273 + $0x20] sm:$0xf]
      %s283 = scalar_lea.vmem %s1, 64
      %v284 = vld [vmem:[%s283] sm:$0xf]
      %v285 = vld [vmem:[%s283 + $0x4] sm:$0xf]
      %v286 = vld [vmem:[%s283 + $0x8] sm:$0xf]
      %v287 = vld [vmem:[%s283 + $0xc] sm:$0xf]
      %v288 = vld [vmem:[%s283 + $0x10] sm:$0xf]
      %v289 = vld [vmem:[%s283 + $0x14] sm:$0xf]
      %v290 = vld [vmem:[%s283 + $0x18] sm:$0xf]
      %v291 = vld [vmem:[%s283 + $0x1c] sm:$0xf]
      %v292 = vld [vmem:[%s283 + $0x20] sm:$0xf]
      %v293 = vld [vmem:[%s283 + $0x24] sm:$0xf]
      %v294 = vld [vmem:[%s283 + $0x28] sm:$0xf]
      %v295 = vld [vmem:[%s283 + $0x2c] sm:$0xf]
      %v296 = vld [vmem:[%s283 + $0x30] sm:$0xf]
      %v297 = vld [vmem:[%s283 + $0x34] sm:$0xf]
      %v298 = vld [vmem:[%s283 + $0x38] sm:$0xf]
      %v299 = vld [vmem:[%s283 + $0x3c] sm:$0xf]
      %v309 = vunpack.c.l.b16 %v274
      %v310 = vunpack.c.l.b16 %v275
      %v311 = vunpack.c.l.b16 %v276
      %v312 = vunpack.c.l.b16 %v277
      %v313 = vunpack.c.l.b16 %v278
      %v314 = vunpack.c.l.b16 %v279
      %v315 = vunpack.c.l.b16 %v280
      %v316 = vunpack.c.l.b16 %v281
      %v317 = vunpack.c.l.b16 %v282
      %v318 = vpack.c.b16 %v310, %v309
      %v319 = vpack.c.b16 %v312, %v311
      %v320 = vpack.c.b16 %v314, %v313
      %v321 = vpack.c.b16 %v316, %v315
      %v322 = vpack.c.b16 %v317, %v317
      %v344 = vunpack.c.l.b16 %v284
      %v345 = vunpack.c.l.b16 %v285
      %v346 = vunpack.c.l.b16 %v286
      %v347 = vunpack.c.l.b16 %v287
      %v348 = vunpack.c.l.b16 %v288
      %v349 = vunpack.c.l.b16 %v289
      %v350 = vunpack.c.l.b16 %v290
      %v351 = vunpack.c.l.b16 %v291
      %v352 = vunpack.c.l.b16 %v292
      %v353 = vunpack.c.l.b16 %v293
      %v354 = vunpack.c.l.b16 %v294
      %v355 = vunpack.c.l.b16 %v295
      %v356 = vunpack.c.l.b16 %v296
      %v357 = vunpack.c.l.b16 %v297
      %v358 = vunpack.c.l.b16 %v298
      %v359 = vunpack.c.l.b16 %v299
      %v360 = vpack.c.b16 %v345, %v344
      %v361 = vpack.c.b16 %v347, %v346
      %v362 = vpack.c.b16 %v349, %v348
      %v363 = vpack.c.b16 %v351, %v350
      %v364 = vpack.c.b16 %v353, %v352
      %v365 = vpack.c.b16 %v355, %v354
      %v366 = vpack.c.b16 %v357, %v356
      %v367 = vpack.c.b16 %v359, %v358
      %376 = vmatprep.subr.bf16.mxu0 0
      %377 = vmatpush1.bf16.msra.mxu0 %v360
      %378 = vmatprep.subr.bf16.mxu0 0
      %379 = vmatpush1.bf16.msra.mxu0 %v361
      %380 = vmatprep.subr.bf16.mxu0 0
      %381 = vmatpush1.bf16.msra.mxu0 %v362
      %382 = vmatprep.subr.bf16.mxu0 0
      %383 = vmatpush1.bf16.msra.mxu0 %v363
      %384 = vmatprep.subr.bf16.mxu0 0
      %385 = vmatpush1.bf16.msra.mxu0 %v364
      %386 = vmatprep.subr.bf16.mxu0 0
      %387 = vmatpush1.bf16.msra.mxu0 %v365
      %388 = vmatprep.subr.bf16.mxu0 0
      %389 = vmatpush1.bf16.msra.mxu0 %v366
      %390 = vmatprep.subr.bf16.mxu0 0
      %391 = vmatpush1.bf16.msra.mxu0 %v367
      %392 = vmatprep.subr.bf16.mxu0 0
      %393 = vmatpush1.bf16.msra.mxu0 0
      %394 = vmatprep.subr.bf16.mxu0 0
      %395 = vmatpush1.bf16.msra.mxu0 0
      %396 = vmatprep.subr.bf16.mxu0 0
      %397 = vmatpush1.bf16.msra.mxu0 0
      %398 = vmatprep.subr.bf16.mxu0 0
      %399 = vmatpush1.bf16.msra.mxu0 0
      %400 = vmatprep.subr.bf16.mxu0 0
      %401 = vmatpush1.bf16.msra.mxu0 0
      %402 = vmatprep.subr.bf16.mxu0 0
      %403 = vmatpush1.bf16.msra.mxu0 0
      %404 = vmatprep.subr.bf16.mxu0 0
      %405 = vmatpush1.bf16.msra.mxu0 0
      %406 = vmatprep.subr.bf16.mxu0 0
      %407 = vmatpush1.bf16.msra.mxu0 0
      %408 = vmatprep.mubr.bf16.mxu0 0
      %409 = vmatmul.mubr.bf16.gmra.mrb[0].mxu0 %v318
      %v410 = vpop.f32.mrb[0].mxu0
      %v411 = vadd.f32 0.0, %v410
      %v412 = vpop.f32.mrb[0].mxu0
      %v413 = vpop.f32.mrb[0].mxu0
      %v414 = vadd.f32 0.0, %v413
      %v415 = vpop.f32.mrb[0].mxu0
      %416 = vmatprep.mubr.bf16.mxu0 0
      %417 = vmatmul.mubr.bf16.gmra.mrb[0].mxu0 %v319
      %v418 = vpop.f32.mrb[0].mxu0
      %v419 = vadd.f32 0.0, %v418
      %v420 = vpop.f32.mrb[0].mxu0
      %v421 = vpop.f32.mrb[0].mxu0
      %v422 = vadd.f32 0.0, %v421
      %v423 = vpop.f32.mrb[0].mxu0
      %424 = vmatprep.mubr.bf16.mxu0 0
      %425 = vmatmul.mubr.bf16.gmra.mrb[0].mxu0 %v320
      %v426 = vpop.f32.mrb[0].mxu0
      %v427 = vadd.f32 0.0, %v426
      %v428 = vpop.f32.mrb[0].mxu0
      %v429 = vpop.f32.mrb[0].mxu0
      %v430 = vadd.f32 0.0, %v429
      %v431 = vpop.f32.mrb[0].mxu0
      %432 = vmatprep.mubr.bf16.mxu0 0
      %433 = vmatmul.mubr.bf16.gmra.mrb[0].mxu0 %v321
      %v434 = vpop.f32.mrb[0].mxu0
      %v435 = vadd.f32 0.0, %v434
      %v436 = vpop.f32.mrb[0].mxu0
      %v437 = vpop.f32.mrb[0].mxu0
      %v438 = vadd.f32 0.0, %v437
      %v439 = vpop.f32.mrb[0].mxu0
      %440 = vmatprep.mubr.bf16.mxu0 0
      %441 = vmatmul.mubr.bf16.gmra.mrb[0].mxu0 %v322
      %v442 = vpop.f32.mrb[0].mxu0
      %v443 = vadd.f32 0.0, %v442
      %v444 = vpop.f32.mrb[0].mxu0
      %v445 = vpop.f32.mrb[0].mxu0
      %v446 = vpop.f32.mrb[0].mxu0
      %447 = vdwg.mxu0
      %v457 = vunpack.c.l.b16 %v248
      %v458 = vunpack.c.l.b16 %v249
      %v459 = vunpack.c.l.b16 %v250
      %v460 = vunpack.c.l.b16 %v251
      %v461 = vunpack.c.l.b16 %v252
      %v462 = vunpack.c.l.b16 %v253
      %v463 = vunpack.c.l.b16 %v254
      %v464 = vunpack.c.l.b16 %v255
      %v465 = vunpack.c.l.b16 %v256
      %v466 = vpack.c.b16 %v458, %v457
      %v467 = vpack.c.b16 %v460, %v459
      %v468 = vpack.c.b16 %v462, %v461
      %v469 = vpack.c.b16 %v464, %v463
      %v470 = vpack.c.b16 %v465, %v465
      %v492 = vunpack.c.l.b16 %v257
      %v493 = vunpack.c.l.b16 %v258
      %v494 = vunpack.c.l.b16 %v259
      %v495 = vunpack.c.l.b16 %v260
      %v496 = vunpack.c.l.b16 %v261
      %v497 = vunpack.c.l.b16 %v262
      %v498 = vunpack.c.l.b16 %v263
      %v499 = vunpack.c.l.b16 %v264
      %v500 = vunpack.c.l.b16 %v265
      %v501 = vunpack.c.l.b16 %v266
      %v502 = vunpack.c.l.b16 %v267
      %v503 = vunpack.c.l.b16 %v268
      %v504 = vunpack.c.l.b16 %v269
      %v505 = vunpack.c.l.b16 %v270
      %v506 = vunpack.c.l.b16 %v271
      %v507 = vunpack.c.l.b16 %v272
      %v508 = vpack.c.b16 %v493, %v492
      %v509 = vpack.c.b16 %v495, %v494
      %v510 = vpack.c.b16 %v497, %v496
      %v511 = vpack.c.b16 %v499, %v498
      %v512 = vpack.c.b16 %v501, %v500
      %v513 = vpack.c.b16 %v503, %v502
      %v514 = vpack.c.b16 %v505, %v504
      %v515 = vpack.c.b16 %v507, %v506
      %524 = vmatprep.subr.bf16.mxu0 0
      %525 = vmatpush1.bf16.msra.mxu0 %v508
      %526 = vmatprep.subr.bf16.mxu0 0
      %527 = vmatpush1.bf16.msra.mxu0 %v509
      %528 = vmatprep.subr.bf16.mxu0 0
      %529 = vmatpush1.bf16.msra.mxu0 %v510
      %530 = vmatprep.subr.bf16.mxu0 0
      %531 = vmatpush1.bf16.msra.mxu0 %v511
      %532 = vmatprep.subr.bf16.mxu0 0
      %533 = vmatpush1.bf16.msra.mxu0 %v512
      %534 = vmatprep.subr.bf16.mxu0 0
      %535 = vmatpush1.bf16.msra.mxu0 %v513
      %536 = vmatprep.subr.bf16.mxu0 0
      %537 = vmatpush1.bf16.msra.mxu0 %v514
      %538 = vmatprep.subr.bf16.mxu0 0
      %539 = vmatpush1.bf16.msra.mxu0 %v515
      %540 = vmatprep.subr.bf16.mxu0 0
      %541 = vmatpush1.bf16.msra.mxu0 0
      %542 = vmatprep.subr.bf16.mxu0 0
      %543 = vmatpush1.bf16.msra.mxu0 0
      %544 = vmatprep.subr.bf16.mxu0 0
      %545 = vmatpush1.bf16.msra.mxu0 0
      %546 = vmatprep.subr.bf16.mxu0 0
      %547 = vmatpush1.bf16.msra.mxu0 0
      %548 = vmatprep.subr.bf16.mxu0 0
      %549 = vmatpush1.bf16.msra.mxu0 0
      %550 = vmatprep.subr.bf16.mxu0 0
      %551 = vmatpush1.bf16.msra.mxu0 0
      %552 = vmatprep.subr.bf16.mxu0 0
      %553 = vmatpush1.bf16.msra.mxu0 0
      %554 = vmatprep.subr.bf16.mxu0 0
      %555 = vmatpush1.bf16.msra.mxu0 0
      %556 = vmatprep.mubr.bf16.mxu0 0
      %557 = vmatmul.mubr.bf16.gmra.mrb[0].mxu0 %v466
      %v558 = vpop.f32.mrb[0].mxu0
      %v559 = vadd.f32 %v411, %v558
      %v560 = vpop.f32.mrb[0].mxu0
      %v561 = vpop.f32.mrb[0].mxu0
      %v562 = vadd.f32 %v414, %v561
      %v563 = vpop.f32.mrb[0].mxu0
      %564 = vmatprep.mubr.bf16.mxu0 0
      %565 = vmatmul.mubr.bf16.gmra.mrb[0].mxu0 %v467
      %v566 = vpop.f32.mrb[0].mxu0
      %v567 = vadd.f32 %v419, %v566
      %v568 = vpop.f32.mrb[0].mxu0
      %v569 = vpop.f32.mrb[0].mxu0
      %v570 = vadd.f32 %v422, %v569
      %v571 = vpop.f32.mrb[0].mxu0
      %572 = vmatprep.mubr.bf16.mxu0 0
      %573 = vmatmul.mubr.bf16.gmra.mrb[0].mxu0 %v468
      %v574 = vpop.f32.mrb[0].mxu0
      %v575 = vadd.f32 %v427, %v574
      %v576 = vpop.f32.mrb[0].mxu0
      %v577 = vpop.f32.mrb[0].mxu0
      %v578 = vadd.f32 %v430, %v577
      %v579 = vpop.f32.mrb[0].mxu0
      %580 = vmatprep.mubr.bf16.mxu0 0
      %581 = vmatmul.mubr.bf16.gmra.mrb[0].mxu0 %v469
      %v582 = vpop.f32.mrb[0].mxu0
      %v583 = vadd.f32 %v435, %v582
      %v584 = vpop.f32.mrb[0].mxu0
      %v585 = vpop.f32.mrb[0].mxu0
      %v586 = vadd.f32 %v438, %v585
      %v587 = vpop.f32.mrb[0].mxu0
      %588 = vmatprep.mubr.bf16.mxu0 0
      %589 = vmatmul.mubr.bf16.gmra.mrb[0].mxu0 %v470
      %v590 = vpop.f32.mrb[0].mxu0
      %v591 = vadd.f32 %v443, %v590
      %v592 = vpop.f32.mrb[0].mxu0
      %v593 = vpop.f32.mrb[0].mxu0
      %v594 = vpop.f32.mrb[0].mxu0
      %595 = vdwg.mxu0
      %v596 = vld [vmem:[%s234] sm:$0xf]
      %v597 = vld [vmem:[%s234 + $0x4] sm:$0xf]
      %v598 = vld [vmem:[%s234 + $0x8] sm:$0xf]
      %v599 = vld [vmem:[%s234 + $0xc] sm:$0xf]
      %v600 = vld [vmem:[%s234 + $0x10] sm:$0xf]
      %v601 = vld [vmem:[%s234 + $0x14] sm:$0xf]
      %v602 = vld [vmem:[%s234 + $0x18] sm:$0xf]
      %v603 = vld [vmem:[%s234 + $0x1c] sm:$0xf]
      %v604 = vld [vmem:[%s234 + $0x20] sm:$0xf]
      %v605 = vld [vmem:[%s234 + $0x24] sm:$0x1]
      %s606 = scalar_lea.vmem %s1, 128
      %v607 = vld [vmem:[%s606] sm:$0xf]
      %v608 = vld [vmem:[%s606 + $0x4] sm:$0xf]
      %v609 = vld [vmem:[%s606 + $0x8] sm:$0xf]
      %v610 = vld [vmem:[%s606 + $0xc] sm:$0xf]
      %v611 = vld [vmem:[%s606 + $0x10] sm:$0xf]
      %v612 = vld [vmem:[%s606 + $0x14] sm:$0xf]
      %v613 = vld [vmem:[%s606 + $0x18] sm:$0xf]
      %v614 = vld [vmem:[%s606 + $0x1c] sm:$0xf]
      %v615 = vld [vmem:[%s606 + $0x20] sm:$0xf]
      %v616 = vld [vmem:[%s606 + $0x24] sm:$0xf]
      %v617 = vld [vmem:[%s606 + $0x28] sm:$0xf]
      %v618 = vld [vmem:[%s606 + $0x2c] sm:$0xf]
      %v619 = vld [vmem:[%s606 + $0x30] sm:$0xf]
      %v620 = vld [vmem:[%s606 + $0x34] sm:$0xf]
      %v621 = vld [vmem:[%s606 + $0x38] sm:$0xf]
      %v622 = vld [vmem:[%s606 + $0x3c] sm:$0xf]
      %v633 = vunpack.c.l.b16 %v596
      %v634 = vunpack.c.l.b16 %v597
      %v635 = vunpack.c.l.b16 %v598
      %v636 = vunpack.c.l.b16 %v599
      %v637 = vunpack.c.l.b16 %v600
      %v638 = vunpack.c.l.b16 %v601
      %v639 = vunpack.c.l.b16 %v602
      %v640 = vunpack.c.l.b16 %v603
      %v641 = vunpack.c.l.b16 %v604
      %v642 = vunpack.c.l.b16 %v605
      %v643 = vpack.c.b16 %v634, %v633
      %v644 = vpack.c.b16 %v636, %v635
      %v645 = vpack.c.b16 %v638, %v637
      %v646 = vpack.c.b16 %v640, %v639
      %v647 = vpack.c.b16 %v642, %v641
      %vm648 = vsmask.f32 7424
      %v650 = vshrl.u32 %v643, 16
      %v652 = vshll.u32 %v643, 16
      %v654 = vrot.slane %v652, 1
      %v655 = vor.u32 %v650, %v654
      %v657 = vshll.u32 %v644, 16
      %v659 = vrot.slane %v657, 1
      %v660 = vsel %vm648, %v655, %v659
      %v661 = vshrl.u32 %v644, 16
      %v663 = vor.u32 %v661, %v659
      %v665 = vshll.u32 %v645, 16
      %v667 = vrot.slane %v665, 1
      %v668 = vsel %vm648, %v663, %v667
      %v669 = vshrl.u32 %v645, 16
      %v671 = vor.u32 %v669, %v667
      %v673 = vshll.u32 %v646, 16
      %v675 = vrot.slane %v673, 1
      %v676 = vsel %vm648, %v671, %v675
      %v677 = vshrl.u32 %v646, 16
      %v679 = vor.u32 %v677, %v675
      %v681 = vshll.u32 %v647, 16
      %v683 = vrot.slane %v681, 1
      %v684 = vsel %vm648, %v679, %v683
      %v685 = vshrl.u32 %v647, 16
      %v687 = vor.u32 %v685, %v683
      %v709 = vunpack.c.l.b16 %v607
      %v710 = vunpack.c.l.b16 %v608
      %v711 = vunpack.c.l.b16 %v609
      %v712 = vunpack.c.l.b16 %v610
      %v713 = vunpack.c.l.b16 %v611
      %v714 = vunpack.c.l.b16 %v612
      %v715 = vunpack.c.l.b16 %v613
      %v716 = vunpack.c.l.b16 %v614
      %v717 = vunpack.c.l.b16 %v615
      %v718 = vunpack.c.l.b16 %v616
      %v719 = vunpack.c.l.b16 %v617
      %v720 = vunpack.c.l.b16 %v618
      %v721 = vunpack.c.l.b16 %v619
      %v722 = vunpack.c.l.b16 %v620
      %v723 = vunpack.c.l.b16 %v621
      %v724 = vunpack.c.l.b16 %v622
      %v725 = vpack.c.b16 %v710, %v709
      %v726 = vpack.c.b16 %v712, %v711
      %v727 = vpack.c.b16 %v714, %v713
      %v728 = vpack.c.b16 %v716, %v715
      %v729 = vpack.c.b16 %v718, %v717
      %v730 = vpack.c.b16 %v720, %v719
      %v731 = vpack.c.b16 %v722, %v721
      %v732 = vpack.c.b16 %v724, %v723
      %741 = vmatprep.subr.bf16.mxu0 0
      %742 = vmatpush1.bf16.msra.mxu0 %v725
      %743 = vmatprep.subr.bf16.mxu0 0
      %744 = vmatpush1.bf16.msra.mxu0 %v726
      %745 = vmatprep.subr.bf16.mxu0 0
      %746 = vmatpush1.bf16.msra.mxu0 %v727
      %747 = vmatprep.subr.bf16.mxu0 0
      %748 = vmatpush1.bf16.msra.mxu0 %v728
      %749 = vmatprep.subr.bf16.mxu0 0
      %750 = vmatpush1.bf16.msra.mxu0 %v729
      %751 = vmatprep.subr.bf16.mxu0 0
      %752 = vmatpush1.bf16.msra.mxu0 %v730
      %753 = vmatprep.subr.bf16.mxu0 0
      %754 = vmatpush1.bf16.msra.mxu0 %v731
      %755 = vmatprep.subr.bf16.mxu0 0
      %756 = vmatpush1.bf16.msra.mxu0 %v732
      %757 = vmatprep.subr.bf16.mxu0 0
      %758 = vmatpush1.bf16.msra.mxu0 0
      %759 = vmatprep.subr.bf16.mxu0 0
      %760 = vmatpush1.bf16.msra.mxu0 0
      %761 = vmatprep.subr.bf16.mxu0 0
      %762 = vmatpush1.bf16.msra.mxu0 0
      %763 = vmatprep.subr.bf16.mxu0 0
      %764 = vmatpush1.bf16.msra.mxu0 0
      %765 = vmatprep.subr.bf16.mxu0 0
      %766 = vmatpush1.bf16.msra.mxu0 0
      %767 = vmatprep.subr.bf16.mxu0 0
      %768 = vmatpush1.bf16.msra.mxu0 0
      %769 = vmatprep.subr.bf16.mxu0 0
      %770 = vmatpush1.bf16.msra.mxu0 0
      %771 = vmatprep.subr.bf16.mxu0 0
      %772 = vmatpush1.bf16.msra.mxu0 0
      %773 = vmatprep.mubr.bf16.mxu0 0
      %774 = vmatmul.mubr.bf16.gmra.mrb[0].mxu0 %v660
      %v775 = vpop.f32.mrb[0].mxu0
      %v776 = vadd.f32 0.0, %v775
      %v777 = vpop.f32.mrb[0].mxu0
      %v778 = vpop.f32.mrb[0].mxu0
      %v779 = vadd.f32 0.0, %v778
      %v780 = vpop.f32.mrb[0].mxu0
      %781 = vmatprep.mubr.bf16.mxu0 0
      %782 = vmatmul.mubr.bf16.gmra.mrb[0].mxu0 %v668
      %v783 = vpop.f32.mrb[0].mxu0
      %v784 = vadd.f32 0.0, %v783
      %v785 = vpop.f32.mrb[0].mxu0
      %v786 = vpop.f32.mrb[0].mxu0
      %v787 = vadd.f32 0.0, %v786
      %v788 = vpop.f32.mrb[0].mxu0
      %789 = vmatprep.mubr.bf16.mxu0 0
      %790 = vmatmul.mubr.bf16.gmra.mrb[0].mxu0 %v676
      %v791 = vpop.f32.mrb[0].mxu0
      %v792 = vadd.f32 0.0, %v791
      %v793 = vpop.f32.mrb[0].mxu0
      %v794 = vpop.f32.mrb[0].mxu0
      %v795 = vadd.f32 0.0, %v794
      %v796 = vpop.f32.mrb[0].mxu0
      %797 = vmatprep.mubr.bf16.mxu0 0
      %798 = vmatmul.mubr.bf16.gmra.mrb[0].mxu0 %v684
      %v799 = vpop.f32.mrb[0].mxu0
      %v800 = vadd.f32 0.0, %v799
      %v801 = vpop.f32.mrb[0].mxu0
      %v802 = vpop.f32.mrb[0].mxu0
      %v803 = vadd.f32 0.0, %v802
      %v804 = vpop.f32.mrb[0].mxu0
      %805 = vmatprep.mubr.bf16.mxu0 0
      %806 = vmatmul.mubr.bf16.gmra.mrb[0].mxu0 %v687
      %v807 = vpop.f32.mrb[0].mxu0
      %v808 = vadd.f32 0.0, %v807
      %v809 = vpop.f32.mrb[0].mxu0
      %v810 = vpop.f32.mrb[0].mxu0
      %v811 = vpop.f32.mrb[0].mxu0
      %812 = vdwg.mxu0
      %v813 = vadd.f32 %v559, %v776
      %v814 = vadd.f32 %v562, %v779
      %v815 = vadd.f32 %v567, %v784
      %v816 = vadd.f32 %v570, %v787
      %v817 = vadd.f32 %v575, %v792
      %v818 = vadd.f32 %v578, %v795
      %v819 = vadd.f32 %v583, %v800
      %v820 = vadd.f32 %v586, %v803
      %v821 = vadd.f32 %v591, %v808
      %s822 = scalar_lea.vmem %s234, 96
      %v823 = vld [vmem:[%s822] sm:$0xf]
      %v824 = vld [vmem:[%s822 + $0x4] sm:$0xf]
      %v825 = vld [vmem:[%s822 + $0x8] sm:$0xf]
      %v826 = vld [vmem:[%s822 + $0xc] sm:$0xf]
      %v827 = vld [vmem:[%s822 + $0x10] sm:$0xf]
      %v828 = vld [vmem:[%s822 + $0x14] sm:$0xf]
      %v829 = vld [vmem:[%s822 + $0x18] sm:$0xf]
      %v830 = vld [vmem:[%s822 + $0x1c] sm:$0xf]
      %v831 = vld [vmem:[%s822 + $0x20] sm:$0xf]
      %s832 = scalar_lea.vmem %s1, 192
      %v833 = vld [vmem:[%s832] sm:$0xf]
      %v834 = vld [vmem:[%s832 + $0x4] sm:$0xf]
      %v835 = vld [vmem:[%s832 + $0x8] sm:$0xf]
      %v836 = vld [vmem:[%s832 + $0xc] sm:$0xf]
      %v837 = vld [vmem:[%s832 + $0x10] sm:$0xf]
      %v838 = vld [vmem:[%s832 + $0x14] sm:$0xf]
      %v839 = vld [vmem:[%s832 + $0x18] sm:$0xf]
      %v840 = vld [vmem:[%s832 + $0x1c] sm:$0xf]
      %v841 = vld [vmem:[%s832 + $0x20] sm:$0xf]
      %v842 = vld [vmem:[%s832 + $0x24] sm:$0xf]
      %v843 = vld [vmem:[%s832 + $0x28] sm:$0xf]
      %v844 = vld [vmem:[%s832 + $0x2c] sm:$0xf]
      %v845 = vld [vmem:[%s832 + $0x30] sm:$0xf]
      %v846 = vld [vmem:[%s832 + $0x34] sm:$0xf]
      %v847 = vld [vmem:[%s832 + $0x38] sm:$0xf]
      %v848 = vld [vmem:[%s832 + $0x3c] sm:$0xf]
      %v858 = vunpack.c.l.b16 %v823
      %v859 = vunpack.c.l.b16 %v824
      %v860 = vunpack.c.l.b16 %v825
      %v861 = vunpack.c.l.b16 %v826
      %v862 = vunpack.c.l.b16 %v827
      %v863 = vunpack.c.l.b16 %v828
      %v864 = vunpack.c.l.b16 %v829
      %v865 = vunpack.c.l.b16 %v830
      %v866 = vunpack.c.l.b16 %v831
      %v867 = vpack.c.b16 %v859, %v858
      %v868 = vpack.c.b16 %v861, %v860
      %v869 = vpack.c.b16 %v863, %v862
      %v870 = vpack.c.b16 %v865, %v864
      %v871 = vpack.c.b16 %v866, %v866
      %v893 = vunpack.c.l.b16 %v833
      %v894 = vunpack.c.l.b16 %v834
      %v895 = vunpack.c.l.b16 %v835
      %v896 = vunpack.c.l.b16 %v836
      %v897 = vunpack.c.l.b16 %v837
      %v898 = vunpack.c.l.b16 %v838
      %v899 = vunpack.c.l.b16 %v839
      %v900 = vunpack.c.l.b16 %v840
      %v901 = vunpack.c.l.b16 %v841
      %v902 = vunpack.c.l.b16 %v842
      %v903 = vunpack.c.l.b16 %v843
      %v904 = vunpack.c.l.b16 %v844
      %v905 = vunpack.c.l.b16 %v845
      %v906 = vunpack.c.l.b16 %v846
      %v907 = vunpack.c.l.b16 %v847
      %v908 = vunpack.c.l.b16 %v848
      %v909 = vpack.c.b16 %v894, %v893
      %v910 = vpack.c.b16 %v896, %v895
      %v911 = vpack.c.b16 %v898, %v897
      %v912 = vpack.c.b16 %v900, %v899
      %v913 = vpack.c.b16 %v902, %v901
      %v914 = vpack.c.b16 %v904, %v903
      %v915 = vpack.c.b16 %v906, %v905
      %v916 = vpack.c.b16 %v908, %v907
      %925 = vmatprep.subr.bf16.mxu0 0
      %926 = vmatpush1.bf16.msra.mxu0 %v909
      %927 = vmatprep.subr.bf16.mxu0 0
      %928 = vmatpush1.bf16.msra.mxu0 %v910
      %929 = vmatprep.subr.bf16.mxu0 0
      %930 = vmatpush1.bf16.msra.mxu0 %v911
      %931 = vmatprep.subr.bf16.mxu0 0
      %932 = vmatpush1.bf16.msra.mxu0 %v912
      %933 = vmatprep.subr.bf16.mxu0 0
      %934 = vmatpush1.bf16.msra.mxu0 %v913
      %935 = vmatprep.subr.bf16.mxu0 0
      %936 = vmatpush1.bf16.msra.mxu0 %v914
      %937 = vmatprep.subr.bf16.mxu0 0
      %938 = vmatpush1.bf16.msra.mxu0 %v915
      %939 = vmatprep.subr.bf16.mxu0 0
      %940 = vmatpush1.bf16.msra.mxu0 %v916
      %941 = vmatprep.subr.bf16.mxu0 0
      %942 = vmatpush1.bf16.msra.mxu0 0
      %943 = vmatprep.subr.bf16.mxu0 0
      %944 = vmatpush1.bf16.msra.mxu0 0
      %945 = vmatprep.subr.bf16.mxu0 0
      %946 = vmatpush1.bf16.msra.mxu0 0
      %947 = vmatprep.subr.bf16.mxu0 0
      %948 = vmatpush1.bf16.msra.mxu0 0
      %949 = vmatprep.subr.bf16.mxu0 0
      %950 = vmatpush1.bf16.msra.mxu0 0
      %951 = vmatprep.subr.bf16.mxu0 0
      %952 = vmatpush1.bf16.msra.mxu0 0
      %953 = vmatprep.subr.bf16.mxu0 0
      %954 = vmatpush1.bf16.msra.mxu0 0
      %955 = vmatprep.subr.bf16.mxu0 0
      %956 = vmatpush1.bf16.msra.mxu0 0
      %957 = vmatprep.mubr.bf16.mxu0 0
      %958 = vmatmul.mubr.bf16.gmra.mrb[0].mxu0 %v867
      %v959 = vpop.f32.mrb[0].mxu0
      %v960 = vadd.f32 0.0, %v959
      %v961 = vpop.f32.mrb[0].mxu0
      %v962 = vpop.f32.mrb[0].mxu0
      %v963 = vadd.f32 0.0, %v962
      %v964 = vpop.f32.mrb[0].mxu0
      %965 = vmatprep.mubr.bf16.mxu0 0
      %966 = vmatmul.mubr.bf16.gmra.mrb[0].mxu0 %v868
      %v967 = vpop.f32.mrb[0].mxu0
      %v968 = vadd.f32 0.0, %v967
      %v969 = vpop.f32.mrb[0].mxu0
      %v970 = vpop.f32.mrb[0].mxu0
      %v971 = vadd.f32 0.0, %v970
      %v972 = vpop.f32.mrb[0].mxu0
      %973 = vmatprep.mubr.bf16.mxu0 0
      %974 = vmatmul.mubr.bf16.gmra.mrb[0].mxu0 %v869
      %v975 = vpop.f32.mrb[0].mxu0
      %v976 = vadd.f32 0.0, %v975
      %v977 = vpop.f32.mrb[0].mxu0
      %v978 = vpop.f32.mrb[0].mxu0
      %v979 = vadd.f32 0.0, %v978
      %v980 = vpop.f32.mrb[0].mxu0
      %981 = vmatprep.mubr.bf16.mxu0 0
      %982 = vmatmul.mubr.bf16.gmra.mrb[0].mxu0 %v870
      %v983 = vpop.f32.mrb[0].mxu0
      %v984 = vadd.f32 0.0, %v983
      %v985 = vpop.f32.mrb[0].mxu0
      %v986 = vpop.f32.mrb[0].mxu0
      %v987 = vadd.f32 0.0, %v986
      %v988 = vpop.f32.mrb[0].mxu0
      %989 = vmatprep.mubr.bf16.mxu0 0
      %990 = vmatmul.mubr.bf16.gmra.mrb[0].mxu0 %v871
      %v991 = vpop.f32.mrb[0].mxu0
      %v992 = vadd.f32 0.0, %v991
      %v993 = vpop.f32.mrb[0].mxu0
      %v994 = vpop.f32.mrb[0].mxu0
      %v995 = vpop.f32.mrb[0].mxu0
      %996 = vdwg.mxu0
      %v997 = vadd.f32 %v813, %v960
      %v998 = vadd.f32 %v814, %v963
      %v999 = vadd.f32 %v815, %v968
      %v1000 = vadd.f32 %v816, %v971
      %v1001 = vadd.f32 %v817, %v976
      %v1002 = vadd.f32 %v818, %v979
      %v1003 = vadd.f32 %v819, %v984
      %v1004 = vadd.f32 %v820, %v987
      %v1005 = vadd.f32 %v821, %v992
      %s1006 = scalar_lea.vmem %s234, 144
      %v1007 = vld [vmem:[%s1006] sm:$0xf]
      %v1008 = vld [vmem:[%s1006 + $0x4] sm:$0xf]
      %v1009 = vld [vmem:[%s1006 + $0x8] sm:$0xf]
      %v1010 = vld [vmem:[%s1006 + $0xc] sm:$0xf]
      %v1011 = vld [vmem:[%s1006 + $0x10] sm:$0xf]
      %v1012 = vld [vmem:[%s1006 + $0x14] sm:$0xf]
      %v1013 = vld [vmem:[%s1006 + $0x18] sm:$0xf]
      %v1014 = vld [vmem:[%s1006 + $0x1c] sm:$0xf]
      %v1015 = vld [vmem:[%s1006 + $0x20] sm:$0xf]
      %s1016 = scalar_lea.vmem %s1, 256
      %v1017 = vld [vmem:[%s1016] sm:$0xf]
      %v1018 = vld [vmem:[%s1016 + $0x4] sm:$0xf]
      %v1019 = vld [vmem:[%s1016 + $0x8] sm:$0xf]
      %v1020 = vld [vmem:[%s1016 + $0xc] sm:$0xf]
      %v1021 = vld [vmem:[%s1016 + $0x10] sm:$0xf]
      %v1022 = vld [vmem:[%s1016 + $0x14] sm:$0xf]
      %v1023 = vld [vmem:[%s1016 + $0x18] sm:$0xf]
      %v1024 = vld [vmem:[%s1016 + $0x1c] sm:$0xf]
      %v1025 = vld [vmem:[%s1016 + $0x20] sm:$0xf]
      %v1026 = vld [vmem:[%s1016 + $0x24] sm:$0xf]
      %v1027 = vld [vmem:[%s1016 + $0x28] sm:$0xf]
      %v1028 = vld [vmem:[%s1016 + $0x2c] sm:$0xf]
      %v1029 = vld [vmem:[%s1016 + $0x30] sm:$0xf]
      %v1030 = vld [vmem:[%s1016 + $0x34] sm:$0xf]
      %v1031 = vld [vmem:[%s1016 + $0x38] sm:$0xf]
      %v1032 = vld [vmem:[%s1016 + $0x3c] sm:$0xf]
      %v1042 = vunpack.c.l.b16 %v1007
      %v1043 = vunpack.c.l.b16 %v1008
      %v1044 = vunpack.c.l.b16 %v1009
      %v1045 = vunpack.c.l.b16 %v1010
      %v1046 = vunpack.c.l.b16 %v1011
      %v1047 = vunpack.c.l.b16 %v1012
      %v1048 = vunpack.c.l.b16 %v1013
      %v1049 = vunpack.c.l.b16 %v1014
      %v1050 = vunpack.c.l.b16 %v1015
      %v1051 = vpack.c.b16 %v1043, %v1042
      %v1052 = vpack.c.b16 %v1045, %v1044
      %v1053 = vpack.c.b16 %v1047, %v1046
      %v1054 = vpack.c.b16 %v1049, %v1048
      %v1055 = vpack.c.b16 %v1050, %v1050
      %v1077 = vunpack.c.l.b16 %v1017
      %v1078 = vunpack.c.l.b16 %v1018
      %v1079 = vunpack.c.l.b16 %v1019
      %v1080 = vunpack.c.l.b16 %v1020
      %v1081 = vunpack.c.l.b16 %v1021
      %v1082 = vunpack.c.l.b16 %v1022
      %v1083 = vunpack.c.l.b16 %v1023
      %v1084 = vunpack.c.l.b16 %v1024
      %v1085 = vunpack.c.l.b16 %v1025
      %v1086 = vunpack.c.l.b16 %v1026
      %v1087 = vunpack.c.l.b16 %v1027
      %v1088 = vunpack.c.l.b16 %v1028
      %v1089 = vunpack.c.l.b16 %v1029
      %v1090 = vunpack.c.l.b16 %v1030
      %v1091 = vunpack.c.l.b16 %v1031
      %v1092 = vunpack.c.l.b16 %v1032
      %v1093 = vpack.c.b16 %v1078, %v1077
      %v1094 = vpack.c.b16 %v1080, %v1079
      %v1095 = vpack.c.b16 %v1082, %v1081
      %v1096 = vpack.c.b16 %v1084, %v1083
      %v1097 = vpack.c.b16 %v1086, %v1085
      %v1098 = vpack.c.b16 %v1088, %v1087
      %v1099 = vpack.c.b16 %v1090, %v1089
      %v1100 = vpack.c.b16 %v1092, %v1091
      %1109 = vmatprep.subr.bf16.mxu0 0
      %1110 = vmatpush1.bf16.msra.mxu0 %v1093
      %1111 = vmatprep.subr.bf16.mxu0 0
      %1112 = vmatpush1.bf16.msra.mxu0 %v1094
      %1113 = vmatprep.subr.bf16.mxu0 0
      %1114 = vmatpush1.bf16.msra.mxu0 %v1095
      %1115 = vmatprep.subr.bf16.mxu0 0
      %1116 = vmatpush1.bf16.msra.mxu0 %v1096
      %1117 = vmatprep.subr.bf16.mxu0 0
      %1118 = vmatpush1.bf16.msra.mxu0 %v1097
      %1119 = vmatprep.subr.bf16.mxu0 0
      %1120 = vmatpush1.bf16.msra.mxu0 %v1098
      %1121 = vmatprep.subr.bf16.mxu0 0
      %1122 = vmatpush1.bf16.msra.mxu0 %v1099
      %1123 = vmatprep.subr.bf16.mxu0 0
      %1124 = vmatpush1.bf16.msra.mxu0 %v1100
      %1125 = vmatprep.subr.bf16.mxu0 0
      %1126 = vmatpush1.bf16.msra.mxu0 0
      %1127 = vmatprep.subr.bf16.mxu0 0
      %1128 = vmatpush1.bf16.msra.mxu0 0
      %1129 = vmatprep.subr.bf16.mxu0 0
      %1130 = vmatpush1.bf16.msra.mxu0 0
      %1131 = vmatprep.subr.bf16.mxu0 0
      %1132 = vmatpush1.bf16.msra.mxu0 0
      %1133 = vmatprep.subr.bf16.mxu0 0
      %1134 = vmatpush1.bf16.msra.mxu0 0
      %1135 = vmatprep.subr.bf16.mxu0 0
      %1136 = vmatpush1.bf16.msra.mxu0 0
      %1137 = vmatprep.subr.bf16.mxu0 0
      %1138 = vmatpush1.bf16.msra.mxu0 0
      %1139 = vmatprep.subr.bf16.mxu0 0
      %1140 = vmatpush1.bf16.msra.mxu0 0
      %1141 = vmatprep.mubr.bf16.mxu0 0
      %1142 = vmatmul.mubr.bf16.gmra.mrb[0].mxu0 %v1051
      %v1143 = vpop.f32.mrb[0].mxu0
      %v1144 = vadd.f32 0.0, %v1143
      %v1145 = vpop.f32.mrb[0].mxu0
      %v1146 = vpop.f32.mrb[0].mxu0
      %v1147 = vadd.f32 0.0, %v1146
      %v1148 = vpop.f32.mrb[0].mxu0
      %1149 = vmatprep.mubr.bf16.mxu0 0
      %1150 = vmatmul.mubr.bf16.gmra.mrb[0].mxu0 %v1052
      %v1151 = vpop.f32.mrb[0].mxu0
      %v1152 = vadd.f32 0.0, %v1151
      %v1153 = vpop.f32.mrb[0].mxu0
      %v1154 = vpop.f32.mrb[0].mxu0
      %v1155 = vadd.f32 0.0, %v1154
      %v1156 = vpop.f32.mrb[0].mxu0
      %1157 = vmatprep.mubr.bf16.mxu0 0
      %1158 = vmatmul.mubr.bf16.gmra.mrb[0].mxu0 %v1053
      %v1159 = vpop.f32.mrb[0].mxu0
      %v1160 = vadd.f32 0.0, %v1159
      %v1161 = vpop.f32.mrb[0].mxu0
      %v1162 = vpop.f32.mrb[0].mxu0
      %v1163 = vadd.f32 0.0, %v1162
      %v1164 = vpop.f32.mrb[0].mxu0
      %1165 = vmatprep.mubr.bf16.mxu0 0
      %1166 = vmatmul.mubr.bf16.gmra.mrb[0].mxu0 %v1054
      %v1167 = vpop.f32.mrb[0].mxu0
      %v1168 = vadd.f32 0.0, %v1167
      %v1169 = vpop.f32.mrb[0].mxu0
      %v1170 = vpop.f32.mrb[0].mxu0
      %v1171 = vadd.f32 0.0, %v1170
      %v1172 = vpop.f32.mrb[0].mxu0
      %1173 = vmatprep.mubr.bf16.mxu0 0
      %1174 = vmatmul.mubr.bf16.gmra.mrb[0].mxu0 %v1055
      %v1175 = vpop.f32.mrb[0].mxu0
      %v1176 = vadd.f32 0.0, %v1175
      %v1177 = vpop.f32.mrb[0].mxu0
      %v1178 = vpop.f32.mrb[0].mxu0
      %v1179 = vpop.f32.mrb[0].mxu0
      %1180 = vdwg.mxu0
      %v1181 = vadd.f32 %v997, %v1144
      %v1182 = vadd.f32 %v998, %v1147
      %v1183 = vadd.f32 %v999, %v1152
      %v1184 = vadd.f32 %v1000, %v1155
      %v1185 = vadd.f32 %v1001, %v1160
      %v1186 = vadd.f32 %v1002, %v1163
      %v1187 = vadd.f32 %v1003, %v1168
      %v1188 = vadd.f32 %v1004, %v1171
      %v1189 = vadd.f32 %v1005, %v1176
      %v1190 = vld [vmem:[%s822] sm:$0xf]
      %v1191 = vld [vmem:[%s822 + $0x4] sm:$0xf]
      %v1192 = vld [vmem:[%s822 + $0x8] sm:$0xf]
      %v1193 = vld [vmem:[%s822 + $0xc] sm:$0xf]
      %v1194 = vld [vmem:[%s822 + $0x10] sm:$0xf]
      %v1195 = vld [vmem:[%s822 + $0x14] sm:$0xf]
      %v1196 = vld [vmem:[%s822 + $0x18] sm:$0xf]
      %v1197 = vld [vmem:[%s822 + $0x1c] sm:$0xf]
      %v1198 = vld [vmem:[%s822 + $0x20] sm:$0xf]
      %v1199 = vld [vmem:[%s822 + $0x24] sm:$0x1]
      %s1200 = scalar_lea.vmem %s1, 320
      %v1201 = vld [vmem:[%s1200] sm:$0xf]
      %v1202 = vld [vmem:[%s1200 + $0x4] sm:$0xf]
      %v1203 = vld [vmem:[%s1200 + $0x8] sm:$0xf]
      %v1204 = vld [vmem:[%s1200 + $0xc] sm:$0xf]
      %v1205 = vld [vmem:[%s1200 + $0x10] sm:$0xf]
      %v1206 = vld [vmem:[%s1200 + $0x14] sm:$0xf]
      %v1207 = vld [vmem:[%s1200 + $0x18] sm:$0xf]
      %v1208 = vld [vmem:[%s1200 + $0x1c] sm:$0xf]
      %v1209 = vld [vmem:[%s1200 + $0x20] sm:$0xf]
      %v1210 = vld [vmem:[%s1200 + $0x24] sm:$0xf]
      %v1211 = vld [vmem:[%s1200 + $0x28] sm:$0xf]
      %v1212 = vld [vmem:[%s1200 + $0x2c] sm:$0xf]
      %v1213 = vld [vmem:[%s1200 + $0x30] sm:$0xf]
      %v1214 = vld [vmem:[%s1200 + $0x34] sm:$0xf]
      %v1215 = vld [vmem:[%s1200 + $0x38] sm:$0xf]
      %v1216 = vld [vmem:[%s1200 + $0x3c] sm:$0xf]
      %v1227 = vunpack.c.l.b16 %v1190
      %v1228 = vunpack.c.l.b16 %v1191
      %v1229 = vunpack.c.l.b16 %v1192
      %v1230 = vunpack.c.l.b16 %v1193
      %v1231 = vunpack.c.l.b16 %v1194
      %v1232 = vunpack.c.l.b16 %v1195
      %v1233 = vunpack.c.l.b16 %v1196
      %v1234 = vunpack.c.l.b16 %v1197
      %v1235 = vunpack.c.l.b16 %v1198
      %v1236 = vunpack.c.l.b16 %v1199
      %v1237 = vpack.c.b16 %v1228, %v1227
      %v1238 = vpack.c.b16 %v1230, %v1229
      %v1239 = vpack.c.b16 %v1232, %v1231
      %v1240 = vpack.c.b16 %v1234, %v1233
      %v1241 = vpack.c.b16 %v1236, %v1235
      %v1243 = vshrl.u32 %v1237, 16
      %v1245 = vshll.u32 %v1237, 16
      %v1247 = vrot.slane %v1245, 1
      %v1248 = vor.u32 %v1243, %v1247
      %v1250 = vshll.u32 %v1238, 16
      %v1252 = vrot.slane %v1250, 1
      %v1253 = vsel %vm648, %v1248, %v1252
      %v1254 = vshrl.u32 %v1238, 16
      %v1256 = vor.u32 %v1254, %v1252
      %v1258 = vshll.u32 %v1239, 16
      %v1260 = vrot.slane %v1258, 1
      %v1261 = vsel %vm648, %v1256, %v1260
      %v1262 = vshrl.u32 %v1239, 16
      %v1264 = vor.u32 %v1262, %v1260
      %v1266 = vshll.u32 %v1240, 16
      %v1268 = vrot.slane %v1266, 1
      %v1269 = vsel %vm648, %v1264, %v1268
      %v1270 = vshrl.u32 %v1240, 16
      %v1272 = vor.u32 %v1270, %v1268
      %v1274 = vshll.u32 %v1241, 16
      %v1276 = vrot.slane %v1274, 1
      %v1277 = vsel %vm648, %v1272, %v1276
      %v1278 = vshrl.u32 %v1241, 16
      %v1280 = vor.u32 %v1278, %v1276
      %v1302 = vunpack.c.l.b16 %v1201
      %v1303 = vunpack.c.l.b16 %v1202
      %v1304 = vunpack.c.l.b16 %v1203
      %v1305 = vunpack.c.l.b16 %v1204
      %v1306 = vunpack.c.l.b16 %v1205
      %v1307 = vunpack.c.l.b16 %v1206
      %v1308 = vunpack.c.l.b16 %v1207
      %v1309 = vunpack.c.l.b16 %v1208
      %v1310 = vunpack.c.l.b16 %v1209
      %v1311 = vunpack.c.l.b16 %v1210
      %v1312 = vunpack.c.l.b16 %v1211
      %v1313 = vunpack.c.l.b16 %v1212
      %v1314 = vunpack.c.l.b16 %v1213
      %v1315 = vunpack.c.l.b16 %v1214
      %v1316 = vunpack.c.l.b16 %v1215
      %v1317 = vunpack.c.l.b16 %v1216
      %v1318 = vpack.c.b16 %v1303, %v1302
      %v1319 = vpack.c.b16 %v1305, %v1304
      %v1320 = vpack.c.b16 %v1307, %v1306
      %v1321 = vpack.c.b16 %v1309, %v1308
      %v1322 = vpack.c.b16 %v1311, %v1310
      %v1323 = vpack.c.b16 %v1313, %v1312
      %v1324 = vpack.c.b16 %v1315, %v1314
      %v1325 = vpack.c.b16 %v1317, %v1316
      %1334 = vmatprep.subr.bf16.mxu0 0
      %1335 = vmatpush1.bf16.msra.mxu0 %v1318
      %1336 = vmatprep.subr.bf16.mxu0 0
      %1337 = vmatpush1.bf16.msra.mxu0 %v1319
      %1338 = vmatprep.subr.bf16.mxu0 0
      %1339 = vmatpush1.bf16.msra.mxu0 %v1320
      %1340 = vmatprep.subr.bf16.mxu0 0
      %1341 = vmatpush1.bf16.msra.mxu0 %v1321
      %1342 = vmatprep.subr.bf16.mxu0 0
      %1343 = vmatpush1.bf16.msra.mxu0 %v1322
      %1344 = vmatprep.subr.bf16.mxu0 0
      %1345 = vmatpush1.bf16.msra.mxu0 %v1323
      %1346 = vmatprep.subr.bf16.mxu0 0
      %1347 = vmatpush1.bf16.msra.mxu0 %v1324
      %1348 = vmatprep.subr.bf16.mxu0 0
      %1349 = vmatpush1.bf16.msra.mxu0 %v1325
      %1350 = vmatprep.subr.bf16.mxu0 0
      %1351 = vmatpush1.bf16.msra.mxu0 0
      %1352 = vmatprep.subr.bf16.mxu0 0
      %1353 = vmatpush1.bf16.msra.mxu0 0
      %1354 = vmatprep.subr.bf16.mxu0 0
      %1355 = vmatpush1.bf16.msra.mxu0 0
      %1356 = vmatprep.subr.bf16.mxu0 0
      %1357 = vmatpush1.bf16.msra.mxu0 0
      %1358 = vmatprep.subr.bf16.mxu0 0
      %1359 = vmatpush1.bf16.msra.mxu0 0
      %1360 = vmatprep.subr.bf16.mxu0 0
      %1361 = vmatpush1.bf16.msra.mxu0 0
      %1362 = vmatprep.subr.bf16.mxu0 0
      %1363 = vmatpush1.bf16.msra.mxu0 0
      %1364 = vmatprep.subr.bf16.mxu0 0
      %1365 = vmatpush1.bf16.msra.mxu0 0
      %1366 = vmatprep.mubr.bf16.mxu0 0
      %1367 = vmatmul.mubr.bf16.gmra.mrb[0].mxu0 %v1253
      %v1368 = vpop.f32.mrb[0].mxu0
      %v1369 = vadd.f32 0.0, %v1368
      %v1370 = vpop.f32.mrb[0].mxu0
      %v1371 = vpop.f32.mrb[0].mxu0
      %v1372 = vadd.f32 0.0, %v1371
      %v1373 = vpop.f32.mrb[0].mxu0
      %1374 = vmatprep.mubr.bf16.mxu0 0
      %1375 = vmatmul.mubr.bf16.gmra.mrb[0].mxu0 %v1261
      %v1376 = vpop.f32.mrb[0].mxu0
      %v1377 = vadd.f32 0.0, %v1376
      %v1378 = vpop.f32.mrb[0].mxu0
      %v1379 = vpop.f32.mrb[0].mxu0
      %v1380 = vadd.f32 0.0, %v1379
      %v1381 = vpop.f32.mrb[0].mxu0
      %1382 = vmatprep.mubr.bf16.mxu0 0
      %1383 = vmatmul.mubr.bf16.gmra.mrb[0].mxu0 %v1269
      %v1384 = vpop.f32.mrb[0].mxu0
      %v1385 = vadd.f32 0.0, %v1384
      %v1386 = vpop.f32.mrb[0].mxu0
      %v1387 = vpop.f32.mrb[0].mxu0
      %v1388 = vadd.f32 0.0, %v1387
      %v1389 = vpop.f32.mrb[0].mxu0
      %1390 = vmatprep.mubr.bf16.mxu0 0
      %1391 = vmatmul.mubr.bf16.gmra.mrb[0].mxu0 %v1277
      %v1392 = vpop.f32.mrb[0].mxu0
      %v1393 = vadd.f32 0.0, %v1392
      %v1394 = vpop.f32.mrb[0].mxu0
      %v1395 = vpop.f32.mrb[0].mxu0
      %v1396 = vadd.f32 0.0, %v1395
      %v1397 = vpop.f32.mrb[0].mxu0
      %1398 = vmatprep.mubr.bf16.mxu0 0
      %1399 = vmatmul.mubr.bf16.gmra.mrb[0].mxu0 %v1280
      %v1400 = vpop.f32.mrb[0].mxu0
      %v1401 = vadd.f32 0.0, %v1400
      %v1402 = vpop.f32.mrb[0].mxu0
      %v1403 = vpop.f32.mrb[0].mxu0
      %v1404 = vpop.f32.mrb[0].mxu0
      %1405 = vdwg.mxu0
      %v1406 = vadd.f32 %v1181, %v1369
      %v1407 = vadd.f32 %v1182, %v1372
      %v1408 = vadd.f32 %v1183, %v1377
      %v1409 = vadd.f32 %v1184, %v1380
      %v1410 = vadd.f32 %v1185, %v1385
      %v1411 = vadd.f32 %v1186, %v1388
      %v1412 = vadd.f32 %v1187, %v1393
      %v1413 = vadd.f32 %v1188, %v1396
      %v1414 = vadd.f32 %v1189, %v1401
      %v1415 = vld [vmem:[%s234 + $0x4] sm:$0xf]
      %v1416 = vld [vmem:[%s234 + $0x8] sm:$0xf]
      %v1417 = vld [vmem:[%s234 + $0xc] sm:$0xf]
      %v1418 = vld [vmem:[%s234 + $0x10] sm:$0xf]
      %v1419 = vld [vmem:[%s234 + $0x14] sm:$0xf]
      %v1420 = vld [vmem:[%s234 + $0x18] sm:$0xf]
      %v1421 = vld [vmem:[%s234 + $0x1c] sm:$0xf]
      %v1422 = vld [vmem:[%s234 + $0x20] sm:$0xf]
      %v1423 = vld [vmem:[%s234 + $0x24] sm:$0xf]
      %v1424 = vld [vmem:[%s234 + $0x28] sm:$0x1]
      %s1425 = scalar_lea.vmem %s1, 384
      %v1426 = vld [vmem:[%s1425] sm:$0xf]
      %v1427 = vld [vmem:[%s1425 + $0x4] sm:$0xf]
      %v1428 = vld [vmem:[%s1425 + $0x8] sm:$0xf]
      %v1429 = vld [vmem:[%s1425 + $0xc] sm:$0xf]
      %v1430 = vld [vmem:[%s1425 + $0x10] sm:$0xf]
      %v1431 = vld [vmem:[%s1425 + $0x14] sm:$0xf]
      %v1432 = vld [vmem:[%s1425 + $0x18] sm:$0xf]
      %v1433 = vld [vmem:[%s1425 + $0x1c] sm:$0xf]
      %v1434 = vld [vmem:[%s1425 + $0x20] sm:$0xf]
      %v1435 = vld [vmem:[%s1425 + $0x24] sm:$0xf]
      %v1436 = vld [vmem:[%s1425 + $0x28] sm:$0xf]
      %v1437 = vld [vmem:[%s1425 + $0x2c] sm:$0xf]
      %v1438 = vld [vmem:[%s1425 + $0x30] sm:$0xf]
      %v1439 = vld [vmem:[%s1425 + $0x34] sm:$0xf]
      %v1440 = vld [vmem:[%s1425 + $0x38] sm:$0xf]
      %v1441 = vld [vmem:[%s1425 + $0x3c] sm:$0xf]
      %v1452 = vunpack.c.l.b16 %v1415
      %v1453 = vunpack.c.l.b16 %v1416
      %v1454 = vunpack.c.l.b16 %v1417
      %v1455 = vunpack.c.l.b16 %v1418
      %v1456 = vunpack.c.l.b16 %v1419
      %v1457 = vunpack.c.l.b16 %v1420
      %v1458 = vunpack.c.l.b16 %v1421
      %v1459 = vunpack.c.l.b16 %v1422
      %v1460 = vunpack.c.l.b16 %v1423
      %v1461 = vunpack.c.l.b16 %v1424
      %v1462 = vpack.c.b16 %v1453, %v1452
      %v1463 = vpack.c.b16 %v1455, %v1454
      %v1464 = vpack.c.b16 %v1457, %v1456
      %v1465 = vpack.c.b16 %v1459, %v1458
      %v1466 = vpack.c.b16 %v1461, %v1460
      %v1468 = vshrl.u32 %v1462, 16
      %v1470 = vshll.u32 %v1462, 16
      %v1472 = vrot.slane %v1470, 1
      %v1473 = vor.u32 %v1468, %v1472
      %v1475 = vshll.u32 %v1463, 16
      %v1477 = vrot.slane %v1475, 1
      %v1478 = vsel %vm648, %v1473, %v1477
      %v1479 = vshrl.u32 %v1463, 16
      %v1481 = vor.u32 %v1479, %v1477
      %v1483 = vshll.u32 %v1464, 16
      %v1485 = vrot.slane %v1483, 1
      %v1486 = vsel %vm648, %v1481, %v1485
      %v1487 = vshrl.u32 %v1464, 16
      %v1489 = vor.u32 %v1487, %v1485
      %v1491 = vshll.u32 %v1465, 16
      %v1493 = vrot.slane %v1491, 1
      %v1494 = vsel %vm648, %v1489, %v1493
      %v1495 = vshrl.u32 %v1465, 16
      %v1497 = vor.u32 %v1495, %v1493
      %v1499 = vshll.u32 %v1466, 16
      %v1501 = vrot.slane %v1499, 1
      %v1502 = vsel %vm648, %v1497, %v1501
      %v1503 = vshrl.u32 %v1466, 16
      %v1505 = vor.u32 %v1503, %v1501
      %v1527 = vunpack.c.l.b16 %v1426
      %v1528 = vunpack.c.l.b16 %v1427
      %v1529 = vunpack.c.l.b16 %v1428
      %v1530 = vunpack.c.l.b16 %v1429
      %v1531 = vunpack.c.l.b16 %v1430
      %v1532 = vunpack.c.l.b16 %v1431
      %v1533 = vunpack.c.l.b16 %v1432
      %v1534 = vunpack.c.l.b16 %v1433
      %v1535 = vunpack.c.l.b16 %v1434
      %v1536 = vunpack.c.l.b16 %v1435
      %v1537 = vunpack.c.l.b16 %v1436
      %v1538 = vunpack.c.l.b16 %v1437
      %v1539 = vunpack.c.l.b16 %v1438
      %v1540 = vunpack.c.l.b16 %v1439
      %v1541 = vunpack.c.l.b16 %v1440
      %v1542 = vunpack.c.l.b16 %v1441
      %v1543 = vpack.c.b16 %v1528, %v1527
      %v1544 = vpack.c.b16 %v1530, %v1529
      %v1545 = vpack.c.b16 %v1532, %v1531
      %v1546 = vpack.c.b16 %v1534, %v1533
      %v1547 = vpack.c.b16 %v1536, %v1535
      %v1548 = vpack.c.b16 %v1538, %v1537
      %v1549 = vpack.c.b16 %v1540, %v1539
      %v1550 = vpack.c.b16 %v1542, %v1541
      %1559 = vmatprep.subr.bf16.mxu0 0
      %1560 = vmatpush1.bf16.msra.mxu0 %v1543
      %1561 = vmatprep.subr.bf16.mxu0 0
      %1562 = vmatpush1.bf16.msra.mxu0 %v1544
      %1563 = vmatprep.subr.bf16.mxu0 0
      %1564 = vmatpush1.bf16.msra.mxu0 %v1545
      %1565 = vmatprep.subr.bf16.mxu0 0
      %1566 = vmatpush1.bf16.msra.mxu0 %v1546
      %1567 = vmatprep.subr.bf16.mxu0 0
      %1568 = vmatpush1.bf16.msra.mxu0 %v1547
      %1569 = vmatprep.subr.bf16.mxu0 0
      %1570 = vmatpush1.bf16.msra.mxu0 %v1548
      %1571 = vmatprep.subr.bf16.mxu0 0
      %1572 = vmatpush1.bf16.msra.mxu0 %v1549
      %1573 = vmatprep.subr.bf16.mxu0 0
      %1574 = vmatpush1.bf16.msra.mxu0 %v1550
      %1575 = vmatprep.subr.bf16.mxu0 0
      %1576 = vmatpush1.bf16.msra.mxu0 0
      %1577 = vmatprep.subr.bf16.mxu0 0
      %1578 = vmatpush1.bf16.msra.mxu0 0
      %1579 = vmatprep.subr.bf16.mxu0 0
      %1580 = vmatpush1.bf16.msra.mxu0 0
      %1581 = vmatprep.subr.bf16.mxu0 0
      %1582 = vmatpush1.bf16.msra.mxu0 0
      %1583 = vmatprep.subr.bf16.mxu0 0
      %1584 = vmatpush1.bf16.msra.mxu0 0
      %1585 = vmatprep.subr.bf16.mxu0 0
      %1586 = vmatpush1.bf16.msra.mxu0 0
      %1587 = vmatprep.subr.bf16.mxu0 0
      %1588 = vmatpush1.bf16.msra.mxu0 0
      %1589 = vmatprep.subr.bf16.mxu0 0
      %1590 = vmatpush1.bf16.msra.mxu0 0
      %1591 = vmatprep.mubr.bf16.mxu0 0
      %1592 = vmatmul.mubr.bf16.gmra.mrb[0].mxu0 %v1478
      %v1593 = vpop.f32.mrb[0].mxu0
      %v1594 = vadd.f32 0.0, %v1593
      %v1595 = vpop.f32.mrb[0].mxu0
      %v1596 = vpop.f32.mrb[0].mxu0
      %v1597 = vadd.f32 0.0, %v1596
      %v1598 = vpop.f32.mrb[0].mxu0
      %1599 = vmatprep.mubr.bf16.mxu0 0
      %1600 = vmatmul.mubr.bf16.gmra.mrb[0].mxu0 %v1486
      %v1601 = vpop.f32.mrb[0].mxu0
      %v1602 = vadd.f32 0.0, %v1601
      %v1603 = vpop.f32.mrb[0].mxu0
      %v1604 = vpop.f32.mrb[0].mxu0
      %v1605 = vadd.f32 0.0, %v1604
      %v1606 = vpop.f32.mrb[0].mxu0
      %1607 = vmatprep.mubr.bf16.mxu0 0
      %1608 = vmatmul.mubr.bf16.gmra.mrb[0].mxu0 %v1494
      %v1609 = vpop.f32.mrb[0].mxu0
      %v1610 = vadd.f32 0.0, %v1609
      %v1611 = vpop.f32.mrb[0].mxu0
      %v1612 = vpop.f32.mrb[0].mxu0
      %v1613 = vadd.f32 0.0, %v1612
      %v1614 = vpop.f32.mrb[0].mxu0
      %1615 = vmatprep.mubr.bf16.mxu0 0
      %1616 = vmatmul.mubr.bf16.gmra.mrb[0].mxu0 %v1502
      %v1617 = vpop.f32.mrb[0].mxu0
      %v1618 = vadd.f32 0.0, %v1617
      %v1619 = vpop.f32.mrb[0].mxu0
      %v1620 = vpop.f32.mrb[0].mxu0
      %v1621 = vadd.f32 0.0, %v1620
      %v1622 = vpop.f32.mrb[0].mxu0
      %1623 = vmatprep.mubr.bf16.mxu0 0
      %1624 = vmatmul.mubr.bf16.gmra.mrb[0].mxu0 %v1505
      %v1625 = vpop.f32.mrb[0].mxu0
      %v1626 = vadd.f32 0.0, %v1625
      %v1627 = vpop.f32.mrb[0].mxu0
      %v1628 = vpop.f32.mrb[0].mxu0
      %v1629 = vpop.f32.mrb[0].mxu0
      %1630 = vdwg.mxu0
      %v1631 = vadd.f32 %v1406, %v1594
      %v1632 = vadd.f32 %v1407, %v1597
      %v1633 = vadd.f32 %v1408, %v1602
      %v1634 = vadd.f32 %v1409, %v1605
      %v1635 = vadd.f32 %v1410, %v1610
      %v1636 = vadd.f32 %v1411, %v1613
      %v1637 = vadd.f32 %v1412, %v1618
      %v1638 = vadd.f32 %v1413, %v1621
      %v1639 = vadd.f32 %v1414, %v1626
      %v1640 = vld [vmem:[%s273 + $0x4] sm:$0xf]
      %v1641 = vld [vmem:[%s273 + $0x8] sm:$0xf]
      %v1642 = vld [vmem:[%s273 + $0xc] sm:$0xf]
      %v1643 = vld [vmem:[%s273 + $0x10] sm:$0xf]
      %v1644 = vld [vmem:[%s273 + $0x14] sm:$0xf]
      %v1645 = vld [vmem:[%s273 + $0x18] sm:$0xf]
      %v1646 = vld [vmem:[%s273 + $0x1c] sm:$0xf]
      %v1647 = vld [vmem:[%s273 + $0x20] sm:$0xf]
      %v1648 = vld [vmem:[%s273 + $0x24] sm:$0xf]
      %v1649 = vld [vmem:[%s273 + $0x28] sm:$0x1]
      %s1650 = scalar_lea.vmem %s1, 448
      %v1651 = vld [vmem:[%s1650] sm:$0xf]
      %v1652 = vld [vmem:[%s1650 + $0x4] sm:$0xf]
      %v1653 = vld [vmem:[%s1650 + $0x8] sm:$0xf]
      %v1654 = vld [vmem:[%s1650 + $0xc] sm:$0xf]
      %v1655 = vld [vmem:[%s1650 + $0x10] sm:$0xf]
      %v1656 = vld [vmem:[%s1650 + $0x14] sm:$0xf]
      %v1657 = vld [vmem:[%s1650 + $0x18] sm:$0xf]
      %v1658 = vld [vmem:[%s1650 + $0x1c] sm:$0xf]
      %v1659 = vld [vmem:[%s1650 + $0x20] sm:$0xf]
      %v1660 = vld [vmem:[%s1650 + $0x24] sm:$0xf]
      %v1661 = vld [vmem:[%s1650 + $0x28] sm:$0xf]
      %v1662 = vld [vmem:[%s1650 + $0x2c] sm:$0xf]
      %v1663 = vld [vmem:[%s1650 + $0x30] sm:$0xf]
      %v1664 = vld [vmem:[%s1650 + $0x34] sm:$0xf]
      %v1665 = vld [vmem:[%s1650 + $0x38] sm:$0xf]
      %v1666 = vld [vmem:[%s1650 + $0x3c] sm:$0xf]
      %v1677 = vunpack.c.l.b16 %v1640
      %v1678 = vunpack.c.l.b16 %v1641
      %v1679 = vunpack.c.l.b16 %v1642
      %v1680 = vunpack.c.l.b16 %v1643
      %v1681 = vunpack.c.l.b16 %v1644
      %v1682 = vunpack.c.l.b16 %v1645
      %v1683 = vunpack.c.l.b16 %v1646
      %v1684 = vunpack.c.l.b16 %v1647
      %v1685 = vunpack.c.l.b16 %v1648
      %v1686 = vunpack.c.l.b16 %v1649
      %v1687 = vpack.c.b16 %v1678, %v1677
      %v1688 = vpack.c.b16 %v1680, %v1679
      %v1689 = vpack.c.b16 %v1682, %v1681
      %v1690 = vpack.c.b16 %v1684, %v1683
      %v1691 = vpack.c.b16 %v1686, %v1685
      %v1693 = vshrl.u32 %v1687, 16
      %v1695 = vshll.u32 %v1687, 16
      %v1697 = vrot.slane %v1695, 1
      %v1698 = vor.u32 %v1693, %v1697
      %v1700 = vshll.u32 %v1688, 16
      %v1702 = vrot.slane %v1700, 1
      %v1703 = vsel %vm648, %v1698, %v1702
      %v1704 = vshrl.u32 %v1688, 16
      %v1706 = vor.u32 %v1704, %v1702
      %v1708 = vshll.u32 %v1689, 16
      %v1710 = vrot.slane %v1708, 1
      %v1711 = vsel %vm648, %v1706, %v1710
      %v1712 = vshrl.u32 %v1689, 16
      %v1714 = vor.u32 %v1712, %v1710
      %v1716 = vshll.u32 %v1690, 16
      %v1718 = vrot.slane %v1716, 1
      %v1719 = vsel %vm648, %v1714, %v1718
      %v1720 = vshrl.u32 %v1690, 16
      %v1722 = vor.u32 %v1720, %v1718
      %v1724 = vshll.u32 %v1691, 16
      %v1726 = vrot.slane %v1724, 1
      %v1727 = vsel %vm648, %v1722, %v1726
      %v1728 = vshrl.u32 %v1691, 16
      %v1730 = vor.u32 %v1728, %v1726
      %v1752 = vunpack.c.l.b16 %v1651
      %v1753 = vunpack.c.l.b16 %v1652
      %v1754 = vunpack.c.l.b16 %v1653
      %v1755 = vunpack.c.l.b16 %v1654
      %v1756 = vunpack.c.l.b16 %v1655
      %v1757 = vunpack.c.l.b16 %v1656
      %v1758 = vunpack.c.l.b16 %v1657
      %v1759 = vunpack.c.l.b16 %v1658
      %v1760 = vunpack.c.l.b16 %v1659
      %v1761 = vunpack.c.l.b16 %v1660
      %v1762 = vunpack.c.l.b16 %v1661
      %v1763 = vunpack.c.l.b16 %v1662
      %v1764 = vunpack.c.l.b16 %v1663
      %v1765 = vunpack.c.l.b16 %v1664
      %v1766 = vunpack.c.l.b16 %v1665
      %v1767 = vunpack.c.l.b16 %v1666
      %v1768 = vpack.c.b16 %v1753, %v1752
      %v1769 = vpack.c.b16 %v1755, %v1754
      %v1770 = vpack.c.b16 %v1757, %v1756
      %v1771 = vpack.c.b16 %v1759, %v1758
      %v1772 = vpack.c.b16 %v1761, %v1760
      %v1773 = vpack.c.b16 %v1763, %v1762
      %v1774 = vpack.c.b16 %v1765, %v1764
      %v1775 = vpack.c.b16 %v1767, %v1766
      %1784 = vmatprep.subr.bf16.mxu0 0
      %1785 = vmatpush1.bf16.msra.mxu0 %v1768
      %1786 = vmatprep.subr.bf16.mxu0 0
      %1787 = vmatpush1.bf16.msra.mxu0 %v1769
      %1788 = vmatprep.subr.bf16.mxu0 0
      %1789 = vmatpush1.bf16.msra.mxu0 %v1770
      %1790 = vmatprep.subr.bf16.mxu0 0
      %1791 = vmatpush1.bf16.msra.mxu0 %v1771
      %1792 = vmatprep.subr.bf16.mxu0 0
      %1793 = vmatpush1.bf16.msra.mxu0 %v1772
      %1794 = vmatprep.subr.bf16.mxu0 0
      %1795 = vmatpush1.bf16.msra.mxu0 %v1773
      %1796 = vmatprep.subr.bf16.mxu0 0
      %1797 = vmatpush1.bf16.msra.mxu0 %v1774
      %1798 = vmatprep.subr.bf16.mxu0 0
      %1799 = vmatpush1.bf16.msra.mxu0 %v1775
      %1800 = vmatprep.subr.bf16.mxu0 0
      %1801 = vmatpush1.bf16.msra.mxu0 0
      %1802 = vmatprep.subr.bf16.mxu0 0
      %1803 = vmatpush1.bf16.msra.mxu0 0
      %1804 = vmatprep.subr.bf16.mxu0 0
      %1805 = vmatpush1.bf16.msra.mxu0 0
      %1806 = vmatprep.subr.bf16.mxu0 0
      %1807 = vmatpush1.bf16.msra.mxu0 0
      %1808 = vmatprep.subr.bf16.mxu0 0
      %1809 = vmatpush1.bf16.msra.mxu0 0
      %1810 = vmatprep.subr.bf16.mxu0 0
      %1811 = vmatpush1.bf16.msra.mxu0 0
      %1812 = vmatprep.subr.bf16.mxu0 0
      %1813 = vmatpush1.bf16.msra.mxu0 0
      %1814 = vmatprep.subr.bf16.mxu0 0
      %1815 = vmatpush1.bf16.msra.mxu0 0
      %1816 = vmatprep.mubr.bf16.mxu0 0
      %1817 = vmatmul.mubr.bf16.gmra.mrb[0].mxu0 %v1703
      %v1818 = vpop.f32.mrb[0].mxu0
      %v1819 = vadd.f32 0.0, %v1818
      %v1820 = vpop.f32.mrb[0].mxu0
      %v1821 = vpop.f32.mrb[0].mxu0
      %v1822 = vadd.f32 0.0, %v1821
      %v1823 = vpop.f32.mrb[0].mxu0
      %1824 = vmatprep.mubr.bf16.mxu0 0
      %1825 = vmatmul.mubr.bf16.gmra.mrb[0].mxu0 %v1711
      %v1826 = vpop.f32.mrb[0].mxu0
      %v1827 = vadd.f32 0.0, %v1826
      %v1828 = vpop.f32.mrb[0].mxu0
      %v1829 = vpop.f32.mrb[0].mxu0
      %v1830 = vadd.f32 0.0, %v1829
      %v1831 = vpop.f32.mrb[0].mxu0
      %1832 = vmatprep.mubr.bf16.mxu0 0
      %1833 = vmatmul.mubr.bf16.gmra.mrb[0].mxu0 %v1719
      %v1834 = vpop.f32.mrb[0].mxu0
      %v1835 = vadd.f32 0.0, %v1834
      %v1836 = vpop.f32.mrb[0].mxu0
      %v1837 = vpop.f32.mrb[0].mxu0
      %v1838 = vadd.f32 0.0, %v1837
      %v1839 = vpop.f32.mrb[0].mxu0
      %1840 = vmatprep.mubr.bf16.mxu0 0
      %1841 = vmatmul.mubr.bf16.gmra.mrb[0].mxu0 %v1727
      %v1842 = vpop.f32.mrb[0].mxu0
      %v1843 = vadd.f32 0.0, %v1842
      %v1844 = vpop.f32.mrb[0].mxu0
      %v1845 = vpop.f32.mrb[0].mxu0
      %v1846 = vadd.f32 0.0, %v1845
      %v1847 = vpop.f32.mrb[0].mxu0
      %1848 = vmatprep.mubr.bf16.mxu0 0
      %1849 = vmatmul.mubr.bf16.gmra.mrb[0].mxu0 %v1730
      %v1850 = vpop.f32.mrb[0].mxu0
      %v1851 = vadd.f32 0.0, %v1850
      %v1852 = vpop.f32.mrb[0].mxu0
      %v1853 = vpop.f32.mrb[0].mxu0
      %v1854 = vpop.f32.mrb[0].mxu0
      %1855 = vdwg.mxu0
      %v1856 = vadd.f32 %v1631, %v1819
      %v1857 = vadd.f32 %v1632, %v1822
      %v1858 = vadd.f32 %v1633, %v1827
      %v1859 = vadd.f32 %v1634, %v1830
      %v1860 = vadd.f32 %v1635, %v1835
      %v1861 = vadd.f32 %v1636, %v1838
      %v1862 = vadd.f32 %v1637, %v1843
      %v1863 = vadd.f32 %v1638, %v1846
      %v1864 = vadd.f32 %v1639, %v1851
      %v1865 = vld [vmem:[%s234 + $0x4] sm:$0xe]
      %s1866 = scalar_lea.vmem %s1, 512
      %v1867 = vld [vmem:[%s1866] sm:$0xf]
      %v1868 = vld [vmem:[%s1866 + $0x4] sm:$0xf]
      %v1869 = vld [vmem:[%s1866 + $0x8] sm:$0xf]
      %v1870 = vld [vmem:[%s1866 + $0xc] sm:$0xf]
      %v1871 = vld [vmem:[%s1866 + $0x10] sm:$0xf]
      %v1872 = vld [vmem:[%s1866 + $0x14] sm:$0xf]
      %v1873 = vld [vmem:[%s1866 + $0x18] sm:$0xf]
      %v1874 = vld [vmem:[%s1866 + $0x1c] sm:$0xf]
      %v1875 = vld [vmem:[%s1866 + $0x20] sm:$0xf]
      %v1876 = vld [vmem:[%s1866 + $0x24] sm:$0xf]
      %v1877 = vld [vmem:[%s1866 + $0x28] sm:$0xf]
      %v1878 = vld [vmem:[%s1866 + $0x2c] sm:$0xf]
      %v1879 = vld [vmem:[%s1866 + $0x30] sm:$0xf]
      %v1880 = vld [vmem:[%s1866 + $0x34] sm:$0xf]
      %v1881 = vld [vmem:[%s1866 + $0x38] sm:$0xf]
      %v1882 = vld [vmem:[%s1866 + $0x3c] sm:$0xf]
      %v1884 = vunpack.c.l.b16 %v1865
      %v1885 = vpack.c.b16 %v1453, %v1884
      %vm1886 = vcmask 1046528
      %v1887 = vrot.slane %v1885, 1
      %v1888 = vrot.slane %v1463, 1
      %v1889 = vsel %vm1886, %v1887, %v1888
      %v1890 = vrot.slane %v1464, 1
      %v1891 = vsel %vm1886, %v1888, %v1890
      %v1892 = vrot.slane %v1465, 1
      %v1893 = vsel %vm1886, %v1890, %v1892
      %v1894 = vrot.slane %v1466, 1
      %v1895 = vsel %vm1886, %v1892, %v1894
      %v1917 = vunpack.c.l.b16 %v1867
      %v1918 = vunpack.c.l.b16 %v1868
      %v1919 = vunpack.c.l.b16 %v1869
      %v1920 = vunpack.c.l.b16 %v1870
      %v1921 = vunpack.c.l.b16 %v1871
      %v1922 = vunpack.c.l.b16 %v1872
      %v1923 = vunpack.c.l.b16 %v1873
      %v1924 = vunpack.c.l.b16 %v1874
      %v1925 = vunpack.c.l.b16 %v1875
      %v1926 = vunpack.c.l.b16 %v1876
      %v1927 = vunpack.c.l.b16 %v1877
      %v1928 = vunpack.c.l.b16 %v1878
      %v1929 = vunpack.c.l.b16 %v1879
      %v1930 = vunpack.c.l.b16 %v1880
      %v1931 = vunpack.c.l.b16 %v1881
      %v1932 = vunpack.c.l.b16 %v1882
      %v1933 = vpack.c.b16 %v1918, %v1917
      %v1934 = vpack.c.b16 %v1920, %v1919
      %v1935 = vpack.c.b16 %v1922, %v1921
      %v1936 = vpack.c.b16 %v1924, %v1923
      %v1937 = vpack.c.b16 %v1926, %v1925
      %v1938 = vpack.c.b16 %v1928, %v1927
      %v1939 = vpack.c.b16 %v1930, %v1929
      %v1940 = vpack.c.b16 %v1932, %v1931
      %1949 = vmatprep.subr.bf16.mxu0 0
      %1950 = vmatpush1.bf16.msra.mxu0 %v1933
      %1951 = vmatprep.subr.bf16.mxu0 0
      %1952 = vmatpush1.bf16.msra.mxu0 %v1934
      %1953 = vmatprep.subr.bf16.mxu0 0
      %1954 = vmatpush1.bf16.msra.mxu0 %v1935
      %1955 = vmatprep.subr.bf16.mxu0 0
      %1956 = vmatpush1.bf16.msra.mxu0 %v1936
      %1957 = vmatprep.subr.bf16.mxu0 0
      %1958 = vmatpush1.bf16.msra.mxu0 %v1937
      %1959 = vmatprep.subr.bf16.mxu0 0
      %1960 = vmatpush1.bf16.msra.mxu0 %v1938
      %1961 = vmatprep.subr.bf16.mxu0 0
      %1962 = vmatpush1.bf16.msra.mxu0 %v1939
      %1963 = vmatprep.subr.bf16.mxu0 0
      %1964 = vmatpush1.bf16.msra.mxu0 %v1940
      %1965 = vmatprep.subr.bf16.mxu0 0
      %1966 = vmatpush1.bf16.msra.mxu0 0
      %1967 = vmatprep.subr.bf16.mxu0 0
      %1968 = vmatpush1.bf16.msra.mxu0 0
      %1969 = vmatprep.subr.bf16.mxu0 0
      %1970 = vmatpush1.bf16.msra.mxu0 0
      %1971 = vmatprep.subr.bf16.mxu0 0
      %1972 = vmatpush1.bf16.msra.mxu0 0
      %1973 = vmatprep.subr.bf16.mxu0 0
      %1974 = vmatpush1.bf16.msra.mxu0 0
      %1975 = vmatprep.subr.bf16.mxu0 0
      %1976 = vmatpush1.bf16.msra.mxu0 0
      %1977 = vmatprep.subr.bf16.mxu0 0
      %1978 = vmatpush1.bf16.msra.mxu0 0
      %1979 = vmatprep.subr.bf16.mxu0 0
      %1980 = vmatpush1.bf16.msra.mxu0 0
      %1981 = vmatprep.mubr.bf16.mxu0 0
      %1982 = vmatmul.mubr.bf16.gmra.mrb[0].mxu0 %v1889
      %v1983 = vpop.f32.mrb[0].mxu0
      %v1984 = vadd.f32 0.0, %v1983
      %v1985 = vpop.f32.mrb[0].mxu0
      %v1986 = vpop.f32.mrb[0].mxu0
      %v1987 = vadd.f32 0.0, %v1986
      %v1988 = vpop.f32.mrb[0].mxu0
      %1989 = vmatprep.mubr.bf16.mxu0 0
      %1990 = vmatmul.mubr.bf16.gmra.mrb[0].mxu0 %v1891
      %v1991 = vpop.f32.mrb[0].mxu0
      %v1992 = vadd.f32 0.0, %v1991
      %v1993 = vpop.f32.mrb[0].mxu0
      %v1994 = vpop.f32.mrb[0].mxu0
      %v1995 = vadd.f32 0.0, %v1994
      %v1996 = vpop.f32.mrb[0].mxu0
      %1997 = vmatprep.mubr.bf16.mxu0 0
      %1998 = vmatmul.mubr.bf16.gmra.mrb[0].mxu0 %v1893
      %v1999 = vpop.f32.mrb[0].mxu0
      %v2000 = vadd.f32 0.0, %v1999
      %v2001 = vpop.f32.mrb[0].mxu0
      %v2002 = vpop.f32.mrb[0].mxu0
      %v2003 = vadd.f32 0.0, %v2002
      %v2004 = vpop.f32.mrb[0].mxu0
      %2005 = vmatprep.mubr.bf16.mxu0 0
      %2006 = vmatmul.mubr.bf16.gmra.mrb[0].mxu0 %v1895
      %v2007 = vpop.f32.mrb[0].mxu0
      %v2008 = vadd.f32 0.0, %v2007
      %v2009 = vpop.f32.mrb[0].mxu0
      %v2010 = vpop.f32.mrb[0].mxu0
      %v2011 = vadd.f32 0.0, %v2010
      %v2012 = vpop.f32.mrb[0].mxu0
      %2013 = vmatprep.mubr.bf16.mxu0 0
      %2014 = vmatmul.mubr.bf16.gmra.mrb[0].mxu0 %v1894
      %v2015 = vpop.f32.mrb[0].mxu0
      %v2016 = vadd.f32 0.0, %v2015
      %v2017 = vpop.f32.mrb[0].mxu0
      %v2018 = vpop.f32.mrb[0].mxu0
      %v2019 = vpop.f32.mrb[0].mxu0
      %2020 = vdwg.mxu0
      %v2021 = vadd.f32 %v1856, %v1984
      %v2022 = vadd.f32 %v1857, %v1987
      %v2023 = vadd.f32 %v1858, %v1992
      %v2024 = vadd.f32 %v1859, %v1995
      %v2025 = vadd.f32 %v1860, %v2000
      %v2026 = vadd.f32 %v1861, %v2003
      %v2027 = vadd.f32 %v1862, %v2008
      %v2028 = vadd.f32 %v1863, %v2011
      %v2029 = vadd.f32 %v1864, %v2016
      %v2030 = vpack.c.bf16 %v2022, %v2021
      %v2031 = vpack.c.bf16 %v2024, %v2023
      %v2032 = vpack.c.bf16 %v2026, %v2025
      %v2033 = vpack.c.bf16 %v2028, %v2027
      %v2034 = vpack.c.bf16 %v2029, %v2029
      %v2040 = vunpack.c.l.b16 %v2030
      %v2041 = vunpack.c.h.b16 %v2030
      %v2042 = vunpack.c.l.b16 %v2031
      %v2043 = vunpack.c.h.b16 %v2031
      %v2044 = vunpack.c.l.b16 %v2032
      %v2045 = vunpack.c.h.b16 %v2032
      %v2046 = vunpack.c.l.b16 %v2033
      %v2047 = vunpack.c.h.b16 %v2033
      %v2048 = vunpack.c.l.b16 %v2034
      %v2049 = vpack.c.b16 %v2040, %v2040
      %v2050 = vpack.c.b16 %v2041, %v2041
      %v2051 = vpack.c.b16 %v2042, %v2042
      %v2052 = vpack.c.b16 %v2043, %v2043
      %v2053 = vpack.c.b16 %v2044, %v2044
      %v2054 = vpack.c.b16 %v2045, %v2045
      %v2055 = vpack.c.b16 %v2046, %v2046
      %v2056 = vpack.c.b16 %v2047, %v2047
      %v2057 = vpack.c.b16 %v2048, %v2048
      %2067 = vst [vmem:[%s240] sm:$0xf] %v2049
      %2068 = vst [vmem:[%s240 + $0x4] sm:$0xf] %v2050
      %2069 = vst [vmem:[%s240 + $0x8] sm:$0xf] %v2051
      %2070 = vst [vmem:[%s240 + $0xc] sm:$0xf] %v2052
      %2071 = vst [vmem:[%s240 + $0x10] sm:$0xf] %v2053
      %2072 = vst [vmem:[%s240 + $0x14] sm:$0xf] %v2054
      %2073 = vst [vmem:[%s240 + $0x18] sm:$0xf] %v2055
      %2074 = vst [vmem:[%s240 + $0x1c] sm:$0xf] %v2056
      %2075 = vst [vmem:[%s240 + $0x20] sm:$0xf] %v2057
      %v2076 = vld [vmem:[%s2] sm:$0xff]
      %v2077 = vld [vmem:[%s2 + $0x8] sm:$0xff]
      %v2078 = vld [vmem:[%s2 + $0x10] sm:$0xff]
      %v2079 = vld [vmem:[%s2 + $0x18] sm:$0xff]
      %v2080 = vld [vmem:[%s2 + $0x20] sm:$0xff]
      %v2081 = vld [vmem:[%s2 + $0x28] sm:$0xff]
      %v2082 = vld [vmem:[%s2 + $0x30] sm:$0xff]
      %v2083 = vld [vmem:[%s2 + $0x38] sm:$0xff]
      %v2084 = vld [vmem:[%s2 + $0x40] sm:$0xff]
      %2086 = vset.pattern.permute.xlu0 0
      %2087 = vperm.xlu0 %2086, %v2076
      %v2088 = vpop.permute.xlu0 %2087
      %2091 = vset.pattern.permute.xlu0 0
      %2092 = vperm.xlu0 %2091, %v2077
      %v2093 = vpop.permute.xlu0 %2092
      %2096 = vset.pattern.permute.xlu0 0
      %2097 = vperm.xlu0 %2096, %v2078
      %v2098 = vpop.permute.xlu0 %2097
      %2101 = vset.pattern.permute.xlu0 0
      %2102 = vperm.xlu0 %2101, %v2079
      %v2103 = vpop.permute.xlu0 %2102
      %2106 = vset.pattern.permute.xlu0 0
      %2107 = vperm.xlu0 %2106, %v2080
      %v2108 = vpop.permute.xlu0 %2107
      %2111 = vset.pattern.permute.xlu0 0
      %2112 = vperm.xlu0 %2111, %v2081
      %v2113 = vpop.permute.xlu0 %2112
      %2116 = vset.pattern.permute.xlu0 0
      %2117 = vperm.xlu0 %2116, %v2082
      %v2118 = vpop.permute.xlu0 %2117
      %2121 = vset.pattern.permute.xlu0 0
      %2122 = vperm.xlu0 %2121, %v2083
      %v2123 = vpop.permute.xlu0 %2122
      %2126 = vset.pattern.permute.xlu0 0
      %2127 = vperm.xlu0 %2126, %v2084
      %v2128 = vpop.permute.xlu0 %2127
      %v2130 = vmul.f32 %v2021, %v2088
      %v2131 = vmul.f32 %v2022, %v2093
      %v2132 = vmul.f32 %v2023, %v2098
      %v2133 = vmul.f32 %v2024, %v2103
      %v2134 = vmul.f32 %v2025, %v2108
      %v2135 = vmul.f32 %v2026, %v2113
      %v2136 = vmul.f32 %v2027, %v2118
      %v2137 = vmul.f32 %v2028, %v2123
      %v2138 = vmul.f32 %v2029, %v2128
      %v2139 = vadd.f32 %v2130, %v2131
      %v2140 = vadd.f32 %v2139, %v2132
      %v2141 = vadd.f32 %v2140, %v2133
      %v2142 = vadd.f32 %v2141, %v2134
      %v2143 = vadd.f32 %v2142, %v2135
      %v2144 = vadd.f32 %v2143, %v2136
      %v2145 = vadd.f32 %v2144, %v2137
      %v2146 = vadd.f32 %v2145, %v2138
      %v2147 = vrot.slane %v2146, 4
      %v2148 = vadd.f32 %v2146, %v2147
      %v2149 = vrot.slane %v2148, 2
      %v2150 = vadd.f32 %v2148, %v2149
      %v2151 = vrot.slane %v2150, 1
      %v2152 = vadd.f32 %v2150, %v2151
      %2153 = vst [vmem:[%s243] sm:$0x1] %v2152
      %v2154 = vmul.f32 %v2130, %v2021
      %v2155 = vmul.f32 %v2131, %v2022
      %v2156 = vmul.f32 %v2132, %v2023
      %v2157 = vmul.f32 %v2133, %v2024
      %v2158 = vmul.f32 %v2134, %v2025
      %v2159 = vmul.f32 %v2135, %v2026
      %v2160 = vmul.f32 %v2136, %v2027
      %v2161 = vmul.f32 %v2137, %v2028
      %v2162 = vmul.f32 %v2138, %v2029
      %v2163 = vadd.f32 %v2154, %v2155
      %v2164 = vadd.f32 %v2163, %v2156
      %v2165 = vadd.f32 %v2164, %v2157
      %v2166 = vadd.f32 %v2165, %v2158
      %v2167 = vadd.f32 %v2166, %v2159
      %v2168 = vadd.f32 %v2167, %v2160
      %v2169 = vadd.f32 %v2168, %v2161
      %v2170 = vadd.f32 %v2169, %v2162
      %v2171 = vrot.slane %v2170, 4
      %v2172 = vadd.f32 %v2170, %v2171
      %v2173 = vrot.slane %v2172, 2
      %v2174 = vadd.f32 %v2172, %v2173
      %v2175 = vrot.slane %v2174, 1
      %v2176 = vadd.f32 %v2174, %v2175
      %2177 = vst [vmem:[%s246] sm:$0x1] %v2176
      %p2178 = scmp.lt.s32.totalorder %s17, 1
      %s2179 = scalar_select %p2178, %s17, 1
      %s2180 = smul.addr %s2179, 9
      %s2181 = smul.addr %s2180, 4
      %s2182 = scalar_lea.vmem %s3, %s2181
      %p2183 = scmp.lt.s32.totalorder %s17, 1
      %s2184 = scalar_select %p2183, %s17, 1
      %s2185 = scalar_lea.vmem %s4, %s2184
      %p2186 = scmp.lt.s32.totalorder %s17, 1
      %s2187 = scalar_select %p2186, %s17, 1
      %s2188 = scalar_lea.vmem %s5, %s2187
      // Predicated region
      $region33: #{bottleneck_forward.7} parent=31 // pred_check
        %p2189 = pneg %p103
      $region34: #{bottleneck_forward.7} parent=31 // pred_check_branch
        %2191 = sbr.rel (%p2189) target = $region36
      $region35: #{bottleneck_forward.7} parent=31 // pred_region
        _
      $region36: #{bottleneck_forward.7} parent=31 // pred_fallthru
        _
      // Predicated region
      $region37: #{bottleneck_forward.7} parent=31 // pred_check
        %p2192 = pneg %p129
      $region38: #{bottleneck_forward.7} parent=31 // pred_check_branch
        %2194 = sbr.rel (%p2192) target = $region40
      $region39: #{bottleneck_forward.7} parent=31 // pred_region
        _
      $region40: #{bottleneck_forward.7} parent=31 // pred_fallthru
        _
      // Predicated region
      $region41: #{bottleneck_forward.7} parent=31 // pred_check
        %p2195 = pneg %p155
      $region42: #{bottleneck_forward.7} parent=31 // pred_check_branch
        %2197 = sbr.rel (%p2195) target = $region44
      $region43: #{bottleneck_forward.7} parent=31 // pred_region
        _
      $region44: #{bottleneck_forward.7} parent=31 // pred_fallthru
        _
    $region32: #{bottleneck_forward.7} parent=5 // pred_fallthru
      _
    %p2198 = scmp.le.s32.totalorder 2, %s12
    // Predicated region
    $region45: #{bottleneck_forward.7} parent=5 // pred_check
      %p2199 = pneg %p2198
    $region46: #{bottleneck_forward.7} parent=5 // pred_check_branch
      %2201 = sbr.rel (%p2199) target = $region48
    $region47: #{bottleneck_forward.7} parent=5 // pred_region
      %s2202 = ssub.s32 %s12, 2
      // Predicated region
      $region49: #{bottleneck_forward.7} parent=47 // pred_check
        %p2203 = pneg %p109
      $region50: #{bottleneck_forward.7} parent=47 // pred_check_branch
        %2205 = sbr.rel (%p2203) target = $region52
      $region51: #{bottleneck_forward.7} parent=47 // pred_region
        %p2206 = scmp.lt.s32.totalorder %s18, 1
        %s2207 = scalar_select %p2206, %s18, 1
        %s2208 = smul.addr %s2207, 9
        %s2209 = smul.addr %s2208, 4
        %s2210 = scalar_lea.vmem %s3, %s2209
      $region52: #{bottleneck_forward.7} parent=47 // pred_fallthru
        _
      // Predicated region
      $region53: #{bottleneck_forward.7} parent=47 // pred_check
        %p2211 = pneg %p135
      $region54: #{bottleneck_forward.7} parent=47 // pred_check_branch
        %2213 = sbr.rel (%p2211) target = $region56
      $region55: #{bottleneck_forward.7} parent=47 // pred_region
        %p2214 = scmp.lt.s32.totalorder %s18, 1
        %s2215 = scalar_select %p2214, %s18, 1
        %s2216 = scalar_lea.vmem %s4, %s2215
      $region56: #{bottleneck_forward.7} parent=47 // pred_fallthru
        _
      // Predicated region
      $region57: #{bottleneck_forward.7} parent=47 // pred_check
        %p2217 = pneg %p161
      $region58: #{bottleneck_forward.7} parent=47 // pred_check_branch
        %2219 = sbr.rel (%p2217) target = $region60
      $region59: #{bottleneck_forward.7} parent=47 // pred_region
        %p2220 = scmp.lt.s32.totalorder %s18, 1
        %s2221 = scalar_select %p2220, %s18, 1
        %s2222 = scalar_lea.vmem %s5, %s2221
      $region60: #{bottleneck_forward.7} parent=47 // pred_fallthru
        _
    $region48: #{bottleneck_forward.7} parent=5 // pred_fallthru
      _
  $region6: #{bottleneck_forward.7} parent=0 // loop_footer
    %s16 = sadd.s32 1, %s12
  $region7: #{bottleneck_forward.7} parent=0 // loop_footer_branch
    %11 = sbr.rel target = $region3
  $region8: #{bottleneck_forward.7} parent=0 // loop_exit
    _

// kernel: bottleneck_forward.9
$region0: #{bottleneck_forward.9}
  #allocation0 [shape = 'u32[]', space=smem, size = 0x4, offset = 0x4, fixed_abs, tag = 'smem constant byte address 0x4 - core index']
  #allocation1 [shape = 'u32[144,128]{1,0:T(1,128)}', space=vmem, size = 0x12000, scoped, tag = 'internal scratch']
  %s0 = inlined_call_operand.vmem [shape: bf16[2,72,128], index: 0, kind: input, shape index: {}]
  %s1 = inlined_call_operand.vmem [shape: f32[1,128], index: 1, kind: input, shape index: {}]
  %s2 = inlined_call_operand.vmem [shape: f32[1,128], index: 2, kind: input, shape index: {}]
  %s3 = inlined_call_operand.vmem [shape: bf16[2,72,128], index: 3, kind: input, shape index: {}]
  %s4 = inlined_call_operand.vmem [shape: f32[1,128], index: 4, kind: input, shape index: {}]
  %s5 = inlined_call_operand.vmem [shape: f32[1,128], index: 5, kind: input, shape index: {}]
  %s6 = inlined_call_operand.vmem [shape: bf16[2,72,128], index: 6, kind: output, shape index: {}]
  %s7 = sld [smem:[#allocation0]]
  $region57: #{bottleneck_forward.9} parent=0
    _
  %s9 = ssub.s32 1, %s7
  %s10 = scalar_select 0, %s9, %s7
  loop: start=0, step=1, limit=4
  $region2: #{bottleneck_forward.9} parent=0 // loop_pre_header
    _
  $region3: #{bottleneck_forward.9} parent=0 // loop_header
    %s12 = sphi 0, %s16
    %p13 = scmp.ge.s32.totalorder %s12, 4
    %s22 = sphi 0, %s24
    %s25 = sphi 0, %s22
    %s26 = sphi 0, %s25
    %s42 = sphi 0, %s26
    %s46 = sphi 0, %s46
    %s48 = sphi 0, %s46
    %s49 = sphi 0, %s48
    %s63 = sphi 0, %s49
    %s67 = sphi 0, %s67
    %s69 = sphi 0, %s67
    %s70 = sphi 0, %s69
    %s84 = sphi 0, %s70
    %s90 = sphi 0, %s92
    %s93 = sphi 0, %s90
    %s94 = sphi 0, %s93
    %s110 = sphi 0, %s94
    %s114 = sphi 0, %s114
    %s116 = sphi 0, %s114
    %s117 = sphi 0, %s116
    %s131 = sphi 0, %s117
    %s135 = sphi 0, %s135
    %s137 = sphi 0, %s135
    %s138 = sphi 0, %s137
    %s152 = sphi 0, %s138
    %s158 = sphi 0, %s160
    %s161 = sphi 0, %s158
    %s162 = sphi 0, %s161
    %s178 = sphi 0, %s162
  $region4: #{bottleneck_forward.9} parent=0 // loop_header_branch
    %15 = sbr.rel (%p13) target = $region8
  $region5: #{bottleneck_forward.9} parent=0 // loop_body
    %s17 = ssub.s32 %s12, 1
    %s18 = ssub.s32 %s12, 2
    %s19 = sadd.s32 %s12, 1
    %s20 = ssub.s32 %s12, %s19
    %p21 = scmp.eq.s32.totalorder %s20, 0
    %s23 = sadd.s32 %s22, 1
    %s24 = scalar_select %p21, %s22, %s23
    %p27 = pneg %p21
    %p28 = scmp.eq.s32.totalorder %s12, 1
    %p29 = por %p27, %p28
    %p30 = scmp.ne.s32.totalorder %s22, %s25
    %p31 = scmp.eq.s32.totalorder %s12, 0
    %p32 = por %p30, %p31
    %p33 = scmp.ne.s32.totalorder %s22, %s25
    %p34 = scmp.eq.s32.totalorder %s17, 1
    %p35 = por %p33, %p34
    %p36 = scmp.ne.s32.totalorder %s25, %s26
    %p37 = scmp.eq.s32.totalorder %s17, 0
    %p38 = por %p36, %p37
    %p39 = scmp.ne.s32.totalorder %s25, %s26
    %p40 = scmp.eq.s32.totalorder %s18, 1
    %p41 = por %p39, %p40
    %p43 = scmp.ne.s32.totalorder %s26, %s42
    %p44 = scmp.eq.s32.totalorder %s18, 0
    %p45 = por %p43, %p44
    %s47 = sadd.s32 %s46, 1
    %p50 = scmp.eq.s32.totalorder %s12, 1
    %p51 = scmp.ne.s32.totalorder %s46, %s48
    %p52 = scmp.eq.s32.totalorder %s12, 0
    %p53 = por %p51, %p52
    %p54 = scmp.ne.s32.totalorder %s46, %s48
    %p55 = scmp.eq.s32.totalorder %s17, 1
    %p56 = por %p54, %p55
    %p57 = scmp.ne.s32.totalorder %s48, %s49
    %p58 = scmp.eq.s32.totalorder %s17, 0
    %p59 = por %p57, %p58
    %p60 = scmp.ne.s32.totalorder %s48, %s49
    %p61 = scmp.eq.s32.totalorder %s18, 1
    %p62 = por %p60, %p61
    %p64 = scmp.ne.s32.totalorder %s49, %s63
    %p65 = scmp.eq.s32.totalorder %s18, 0
    %p66 = por %p64, %p65
    %s68 = sadd.s32 %s67, 1
    %p71 = scmp.eq.s32.totalorder %s12, 1
    %p72 = scmp.ne.s32.totalorder %s67, %s69
    %p73 = scmp.eq.s32.totalorder %s12, 0
    %p74 = por %p72, %p73
    %p75 = scmp.ne.s32.totalorder %s67, %s69
    %p76 = scmp.eq.s32.totalorder %s17, 1
    %p77 = por %p75, %p76
    %p78 = scmp.ne.s32.totalorder %s69, %s70
    %p79 = scmp.eq.s32.totalorder %s17, 0
    %p80 = por %p78, %p79
    %p81 = scmp.ne.s32.totalorder %s69, %s70
    %p82 = scmp.eq.s32.totalorder %s18, 1
    %p83 = por %p81, %p82
    %p85 = scmp.ne.s32.totalorder %s70, %s84
    %p86 = scmp.eq.s32.totalorder %s18, 0
    %p87 = por %p85, %p86
    %s88 = ssub.s32 %s12, %s19
    %p89 = scmp.eq.s32.totalorder %s88, 0
    %s91 = sadd.s32 %s90, 1
    %s92 = scalar_select %p89, %s90, %s91
    %p95 = pneg %p89
    %p96 = scmp.eq.s32.totalorder %s12, 1
    %p97 = por %p95, %p96
    %p98 = scmp.ne.s32.totalorder %s90, %s93
    %p99 = scmp.eq.s32.totalorder %s12, 0
    %p100 = por %p98, %p99
    %p101 = scmp.ne.s32.totalorder %s90, %s93
    %p102 = scmp.eq.s32.totalorder %s17, 1
    %p103 = por %p101, %p102
    %p104 = scmp.ne.s32.totalorder %s93, %s94
    %p105 = scmp.eq.s32.totalorder %s17, 0
    %p106 = por %p104, %p105
    %p107 = scmp.ne.s32.totalorder %s93, %s94
    %p108 = scmp.eq.s32.totalorder %s18, 1
    %p109 = por %p107, %p108
    %p111 = scmp.ne.s32.totalorder %s94, %s110
    %p112 = scmp.eq.s32.totalorder %s18, 0
    %p113 = por %p111, %p112
    %s115 = sadd.s32 %s114, 1
    %p118 = scmp.eq.s32.totalorder %s12, 1
    %p119 = scmp.ne.s32.totalorder %s114, %s116
    %p120 = scmp.eq.s32.totalorder %s12, 0
    %p121 = por %p119, %p120
    %p122 = scmp.ne.s32.totalorder %s114, %s116
    %p123 = scmp.eq.s32.totalorder %s17, 1
    %p124 = por %p122, %p123
    %p125 = scmp.ne.s32.totalorder %s116, %s117
    %p126 = scmp.eq.s32.totalorder %s17, 0
    %p127 = por %p125, %p126
    %p128 = scmp.ne.s32.totalorder %s116, %s117
    %p129 = scmp.eq.s32.totalorder %s18, 1
    %p130 = por %p128, %p129
    %p132 = scmp.ne.s32.totalorder %s117, %s131
    %p133 = scmp.eq.s32.totalorder %s18, 0
    %p134 = por %p132, %p133
    %s136 = sadd.s32 %s135, 1
    %p139 = scmp.eq.s32.totalorder %s12, 1
    %p140 = scmp.ne.s32.totalorder %s135, %s137
    %p141 = scmp.eq.s32.totalorder %s12, 0
    %p142 = por %p140, %p141
    %p143 = scmp.ne.s32.totalorder %s135, %s137
    %p144 = scmp.eq.s32.totalorder %s17, 1
    %p145 = por %p143, %p144
    %p146 = scmp.ne.s32.totalorder %s137, %s138
    %p147 = scmp.eq.s32.totalorder %s17, 0
    %p148 = por %p146, %p147
    %p149 = scmp.ne.s32.totalorder %s137, %s138
    %p150 = scmp.eq.s32.totalorder %s18, 1
    %p151 = por %p149, %p150
    %p153 = scmp.ne.s32.totalorder %s138, %s152
    %p154 = scmp.eq.s32.totalorder %s18, 0
    %p155 = por %p153, %p154
    %s156 = ssub.s32 %s12, %s19
    %p157 = scmp.eq.s32.totalorder %s156, 0
    %s159 = sadd.s32 %s158, 1
    %s160 = scalar_select %p157, %s158, %s159
    %p163 = pneg %p157
    %p164 = scmp.eq.s32.totalorder %s12, 1
    %p165 = por %p163, %p164
    %p166 = scmp.ne.s32.totalorder %s158, %s161
    %p167 = scmp.eq.s32.totalorder %s12, 0
    %p168 = por %p166, %p167
    %p169 = scmp.ne.s32.totalorder %s158, %s161
    %p170 = scmp.eq.s32.totalorder %s17, 1
    %p171 = por %p169, %p170
    %p172 = scmp.ne.s32.totalorder %s161, %s162
    %p173 = scmp.eq.s32.totalorder %s17, 0
    %p174 = por %p172, %p173
    %p175 = scmp.ne.s32.totalorder %s161, %s162
    %p176 = scmp.eq.s32.totalorder %s18, 1
    %p177 = por %p175, %p176
    %p179 = scmp.ne.s32.totalorder %s162, %s178
    %p180 = scmp.eq.s32.totalorder %s18, 0
    %p181 = por %p179, %p180
    %p182 = scmp.le.s32.totalorder 1, %s12
    %p183 = scmp.lt.s32.totalorder %s12, 3
    %p184 = pnand %p182, %p183
    %p185 = pneg %p184
    // Predicated region
    $region9: #{bottleneck_forward.9} parent=5 // pred_check
      _
    $region10: #{bottleneck_forward.9} parent=5 // pred_check_branch
      %187 = sbr.rel (%p184) target = $region12
    $region11: #{bottleneck_forward.9} parent=5 // pred_region
      %s188 = ssub.s32 %s12, 1
      // Predicated region
      $region13: #{bottleneck_forward.9} parent=11 // pred_check
        %p189 = pneg %p59
      $region14: #{bottleneck_forward.9} parent=11 // pred_check_branch
        %191 = sbr.rel (%p189) target = $region16
      $region15: #{bottleneck_forward.9} parent=11 // pred_region
        _
      $region16: #{bottleneck_forward.9} parent=11 // pred_fallthru
        _
      // Predicated region
      $region17: #{bottleneck_forward.9} parent=11 // pred_check
        %p192 = pneg %p80
      $region18: #{bottleneck_forward.9} parent=11 // pred_check_branch
        %194 = sbr.rel (%p192) target = $region20
      $region19: #{bottleneck_forward.9} parent=11 // pred_region
        _
      $region20: #{bottleneck_forward.9} parent=11 // pred_fallthru
        _
      // Predicated region
      $region21: #{bottleneck_forward.9} parent=11 // pred_check
        %p195 = pneg %p127
      $region22: #{bottleneck_forward.9} parent=11 // pred_check_branch
        %197 = sbr.rel (%p195) target = $region24
      $region23: #{bottleneck_forward.9} parent=11 // pred_region
        _
      $region24: #{bottleneck_forward.9} parent=11 // pred_fallthru
        _
      // Predicated region
      $region25: #{bottleneck_forward.9} parent=11 // pred_check
        %p198 = pneg %p148
      $region26: #{bottleneck_forward.9} parent=11 // pred_check_branch
        %200 = sbr.rel (%p198) target = $region28
      $region27: #{bottleneck_forward.9} parent=11 // pred_region
        _
      $region28: #{bottleneck_forward.9} parent=11 // pred_fallthru
        _
    $region12: #{bottleneck_forward.9} parent=5 // pred_fallthru
      _
    %p201 = scmp.lt.s32.totalorder %s12, 2
    // Predicated region
    $region29: #{bottleneck_forward.9} parent=5 // pred_check
      %p202 = pneg %p201
    $region30: #{bottleneck_forward.9} parent=5 // pred_check_branch
      %204 = sbr.rel (%p202) target = $region32
    $region31: #{bottleneck_forward.9} parent=5 // pred_region
      // Predicated region
      $region33: #{bottleneck_forward.9} parent=31 // pred_check
        %p205 = pneg %p32
      $region34: #{bottleneck_forward.9} parent=31 // pred_check_branch
        %207 = sbr.rel (%p205) target = $region36
      $region35: #{bottleneck_forward.9} parent=31 // pred_region
        %p208 = scmp.lt.s32.totalorder %s12, 1
        %s209 = scalar_select %p208, %s12, 1
        %s210 = smul.addr %s209, 9
        %s211 = smul.addr %s210, 4
        %s212 = scalar_lea.vmem %s0, %s211
      $region36: #{bottleneck_forward.9} parent=31 // pred_fallthru
        _
      // Predicated region
      $region37: #{bottleneck_forward.9} parent=31 // pred_check
        %p213 = pneg %p100
      $region38: #{bottleneck_forward.9} parent=31 // pred_check_branch
        %215 = sbr.rel (%p213) target = $region40
      $region39: #{bottleneck_forward.9} parent=31 // pred_region
        %p216 = scmp.lt.s32.totalorder %s12, 1
        %s217 = scalar_select %p216, %s12, 1
        %s218 = smul.addr %s217, 9
        %s219 = smul.addr %s218, 4
        %s220 = scalar_lea.vmem %s3, %s219
      $region40: #{bottleneck_forward.9} parent=31 // pred_fallthru
        _
    $region32: #{bottleneck_forward.9} parent=5 // pred_fallthru
      _
    %p221 = scmp.le.s32.totalorder 1, %s12
    %p222 = scmp.lt.s32.totalorder %s12, 3
    %p223 = pnand %p221, %p222
    %p224 = pneg %p223
    // Predicated region
    $region41: #{bottleneck_forward.9} parent=5 // pred_check
      _
    $region42: #{bottleneck_forward.9} parent=5 // pred_check_branch
      %226 = sbr.rel (%p223) target = $region44
    $region43: #{bottleneck_forward.9} parent=5 // pred_region
      %s227 = ssub.s32 %s12, 1
      %p228 = scmp.lt.s32.totalorder %s17, 1
      %s229 = scalar_select %p228, %s17, 1
      %s230 = smul.addr %s229, 9
      %s231 = smul.addr %s230, 4
      %s232 = scalar_lea.vmem %s0, %s231
      %p233 = pneg %p38
      %p234 = pneg %p35
      %p235 = pneg %p59
      %p236 = pneg %p56
      %p237 = pneg %p80
      %p238 = pneg %p77
      %p239 = scmp.lt.s32.totalorder %s17, 1
      %s240 = scalar_select %p239, %s17, 1
      %s241 = smul.addr %s240, 9
      %s242 = smul.addr %s241, 4
      %s243 = scalar_lea.vmem %s3, %s242
      %p244 = pneg %p106
      %p245 = pneg %p103
      %p246 = pneg %p127
      %p247 = pneg %p124
      %p248 = pneg %p148
      %p249 = pneg %p145
      %p250 = pneg %p174
      %p251 = pneg %p171
      %p252 = scmp.lt.s32.totalorder %s17, 1
      %s253 = scalar_select %p252, %s17, 1
      %s254 = smul.addr %s253, 9
      %s255 = smul.addr %s254, 4
      %s256 = scalar_lea.vmem %s6, %s255
      %p257 = scmp.lt.s32.totalorder %s17, 1
      %s258 = scalar_select %p257, %s17, 1
      %s259 = smul.addr %s258, 9
      %s260 = smul.addr %s259, 4
      %s261 = scalar_lea.vmem %s0, %s260
      %p262 = scmp.lt.s32.totalorder %s17, 1
      %s263 = scalar_select %p262, %s17, 1
      %s264 = smul.addr %s263, 9
      %s265 = smul.addr %s264, 4
      %s266 = scalar_lea.vmem %s3, %s265
      %p267 = scmp.lt.s32.totalorder %s17, 1
      %s268 = scalar_select %p267, %s17, 1
      %s269 = smul.addr %s268, 9
      %s270 = smul.addr %s269, 4
      %s271 = scalar_lea.vmem %s6, %s270
      %v272 = vld [vmem:[%s266] sm:$0xf]
      %v273 = vld [vmem:[%s266 + $0x4] sm:$0xf]
      %v274 = vld [vmem:[%s266 + $0x8] sm:$0xf]
      %v275 = vld [vmem:[%s266 + $0xc] sm:$0xf]
      %v276 = vld [vmem:[%s266 + $0x10] sm:$0xf]
      %v277 = vld [vmem:[%s266 + $0x14] sm:$0xf]
      %v278 = vld [vmem:[%s266 + $0x18] sm:$0xf]
      %v279 = vld [vmem:[%s266 + $0x1c] sm:$0xf]
      %v280 = vld [vmem:[%s266 + $0x20] sm:$0xf]
      %v281 = vunpack.c.l.bf16 %v272
      %v282 = vunpack.c.l.bf16 %v273
      %v283 = vunpack.c.l.bf16 %v274
      %v284 = vunpack.c.l.bf16 %v275
      %v285 = vunpack.c.l.bf16 %v276
      %v286 = vunpack.c.l.bf16 %v277
      %v287 = vunpack.c.l.bf16 %v278
      %v288 = vunpack.c.l.bf16 %v279
      %v289 = vunpack.c.l.bf16 %v280
      %v290 = vld [vmem:[%s4] sm:$0x1]
      %v292 = vlaneseq
      %v293 = vshrl.u32 %v292, 7
      %v294 = vsub.s32 0, %v293
      %v295 = vrot.slane %v290, %v294
      %v297 = vmul.f32 %v281, %v295
      %v298 = vmul.f32 %v282, %v295
      %v299 = vmul.f32 %v283, %v295
      %v300 = vmul.f32 %v284, %v295
      %v301 = vmul.f32 %v285, %v295
      %v302 = vmul.f32 %v286, %v295
      %v303 = vmul.f32 %v287, %v295
      %v304 = vmul.f32 %v288, %v295
      %v305 = vmul.f32 %v289, %v295
      %v306 = vld [vmem:[%s5] sm:$0x1]
      %v308 = vlaneseq
      %v309 = vshrl.u32 %v308, 7
      %v310 = vsub.s32 0, %v309
      %v311 = vrot.slane %v306, %v310
      %v313 = vadd.f32 %v297, %v311
      %v314 = vadd.f32 %v298, %v311
      %v315 = vadd.f32 %v299, %v311
      %v316 = vadd.f32 %v300, %v311
      %v317 = vadd.f32 %v301, %v311
      %v318 = vadd.f32 %v302, %v311
      %v319 = vadd.f32 %v303, %v311
      %v320 = vadd.f32 %v304, %v311
      %v321 = vadd.f32 %v305, %v311
      %v322 = vld [vmem:[%s261] sm:$0xf]
      %v323 = vld [vmem:[%s261 + $0x4] sm:$0xf]
      %v324 = vld [vmem:[%s261 + $0x8] sm:$0xf]
      %v325 = vld [vmem:[%s261 + $0xc] sm:$0xf]
      %v326 = vld [vmem:[%s261 + $0x10] sm:$0xf]
      %v327 = vld [vmem:[%s261 + $0x14] sm:$0xf]
      %v328 = vld [vmem:[%s261 + $0x18] sm:$0xf]
      %v329 = vld [vmem:[%s261 + $0x1c] sm:$0xf]
      %v330 = vld [vmem:[%s261 + $0x20] sm:$0xf]
      %v331 = vunpack.c.l.bf16 %v322
      %v332 = vunpack.c.l.bf16 %v323
      %v333 = vunpack.c.l.bf16 %v324
      %v334 = vunpack.c.l.bf16 %v325
      %v335 = vunpack.c.l.bf16 %v326
      %v336 = vunpack.c.l.bf16 %v327
      %v337 = vunpack.c.l.bf16 %v328
      %v338 = vunpack.c.l.bf16 %v329
      %v339 = vunpack.c.l.bf16 %v330
      %v340 = vld [vmem:[%s1] sm:$0x1]
      %v342 = vlaneseq
      %v343 = vshrl.u32 %v342, 7
      %v344 = vsub.s32 0, %v343
      %v345 = vrot.slane %v340, %v344
      %v347 = vmul.f32 %v331, %v345
      %v348 = vmul.f32 %v332, %v345
      %v349 = vmul.f32 %v333, %v345
      %v350 = vmul.f32 %v334, %v345
      %v351 = vmul.f32 %v335, %v345
      %v352 = vmul.f32 %v336, %v345
      %v353 = vmul.f32 %v337, %v345
      %v354 = vmul.f32 %v338, %v345
      %v355 = vmul.f32 %v339, %v345
      %v356 = vld [vmem:[%s2] sm:$0x1]
      %v358 = vlaneseq
      %v359 = vshrl.u32 %v358, 7
      %v360 = vsub.s32 0, %v359
      %v361 = vrot.slane %v356, %v360
      %v363 = vadd.f32 %v347, %v361
      %v364 = vadd.f32 %v348, %v361
      %v365 = vadd.f32 %v349, %v361
      %v366 = vadd.f32 %v350, %v361
      %v367 = vadd.f32 %v351, %v361
      %v368 = vadd.f32 %v352, %v361
      %v369 = vadd.f32 %v353, %v361
      %v370 = vadd.f32 %v354, %v361
      %v371 = vadd.f32 %v355, %v361
      %v372 = vadd.f32 %v363, %v313
      %v373 = vadd.f32 %v364, %v314
      %v374 = vadd.f32 %v365, %v315
      %v375 = vadd.f32 %v366, %v316
      %v376 = vadd.f32 %v367, %v317
      %v377 = vadd.f32 %v368, %v318
      %v378 = vadd.f32 %v369, %v319
      %v379 = vadd.f32 %v370, %v320
      %v380 = vadd.f32 %v371, %v321
      %v381 = vmax.f32 %v372, 0.0
      %v382 = vmax.f32 %v373, 0.0
      %v383 = vmax.f32 %v374, 0.0
      %v384 = vmax.f32 %v375, 0.0
      %v385 = vmax.f32 %v376, 0.0
      %v386 = vmax.f32 %v377, 0.0
      %v387 = vmax.f32 %v378, 0.0
      %v388 = vmax.f32 %v379, 0.0
      %v389 = vmax.f32 %v380, 0.0
      %v390 = vpack.c.bf16 %v382, %v381
      %v391 = vpack.c.bf16 %v384, %v383
      %v392 = vpack.c.bf16 %v386, %v385
      %v393 = vpack.c.bf16 %v388, %v387
      %v394 = vpack.c.bf16 %v389, %v389
      %v400 = vunpack.c.l.b16 %v390
      %v401 = vunpack.c.h.b16 %v390
      %v402 = vunpack.c.l.b16 %v391
      %v403 = vunpack.c.h.b16 %v391
      %v404 = vunpack.c.l.b16 %v392
      %v405 = vunpack.c.h.b16 %v392
      %v406 = vunpack.c.l.b16 %v393
      %v407 = vunpack.c.h.b16 %v393
      %v408 = vunpack.c.l.b16 %v394
      %v409 = vpack.c.b16 %v400, %v400
      %v410 = vpack.c.b16 %v401, %v401
      %v411 = vpack.c.b16 %v402, %v402
      %v412 = vpack.c.b16 %v403, %v403
      %v413 = vpack.c.b16 %v404, %v404
      %v414 = vpack.c.b16 %v405, %v405
      %v415 = vpack.c.b16 %v406, %v406
      %v416 = vpack.c.b16 %v407, %v407
      %v417 = vpack.c.b16 %v408, %v408
      %427 = vst [vmem:[%s271] sm:$0xf] %v409
      %428 = vst [vmem:[%s271 + $0x4] sm:$0xf] %v410
      %429 = vst [vmem:[%s271 + $0x8] sm:$0xf] %v411
      %430 = vst [vmem:[%s271 + $0xc] sm:$0xf] %v412
      %431 = vst [vmem:[%s271 + $0x10] sm:$0xf] %v413
      %432 = vst [vmem:[%s271 + $0x14] sm:$0xf] %v414
      %433 = vst [vmem:[%s271 + $0x18] sm:$0xf] %v415
      %434 = vst [vmem:[%s271 + $0x1c] sm:$0xf] %v416
      %435 = vst [vmem:[%s271 + $0x20] sm:$0xf] %v417
      %p436 = scmp.lt.s32.totalorder %s17, 1
      %s437 = scalar_select %p436, %s17, 1
      %s438 = smul.addr %s437, 9
      %s439 = smul.addr %s438, 4
      %s440 = scalar_lea.vmem %s6, %s439
      // Predicated region
      $region45: #{bottleneck_forward.9} parent=43 // pred_check
        %p441 = pneg %p171
      $region46: #{bottleneck_forward.9} parent=43 // pred_check_branch
        %443 = sbr.rel (%p441) target = $region48
      $region47: #{bottleneck_forward.9} parent=43 // pred_region
        _
      $region48: #{bottleneck_forward.9} parent=43 // pred_fallthru
        _
    $region44: #{bottleneck_forward.9} parent=5 // pred_fallthru
      _
    %p444 = scmp.le.s32.totalorder 2, %s12
    // Predicated region
    $region49: #{bottleneck_forward.9} parent=5 // pred_check
      %p445 = pneg %p444
    $region50: #{bottleneck_forward.9} parent=5 // pred_check_branch
      %447 = sbr.rel (%p445) target = $region52
    $region51: #{bottleneck_forward.9} parent=5 // pred_region
      %s448 = ssub.s32 %s12, 2
      // Predicated region
      $region53: #{bottleneck_forward.9} parent=51 // pred_check
        %p449 = pneg %p177
      $region54: #{bottleneck_forward.9} parent=51 // pred_check_branch
        %451 = sbr.rel (%p449) target = $region56
      $region55: #{bottleneck_forward.9} parent=51 // pred_region
        %p452 = scmp.lt.s32.totalorder %s18, 1
        %s453 = scalar_select %p452, %s18, 1
        %s454 = smul.addr %s453, 9
        %s455 = smul.addr %s454, 4
        %s456 = scalar_lea.vmem %s6, %s455
      $region56: #{bottleneck_forward.9} parent=51 // pred_fallthru
        _
    $region52: #{bottleneck_forward.9} parent=5 // pred_fallthru
      _
  $region6: #{bottleneck_forward.9} parent=0 // loop_footer
    %s16 = sadd.s32 1, %s12
  $region7: #{bottleneck_forward.9} parent=0 // loop_footer_branch
    %11 = sbr.rel target = $region3
  $region8: #{bottleneck_forward.9} parent=0 // loop_exit
    _

// kernel: bottleneck_forward.8
$region0: #{bottleneck_forward.8}
  #allocation0 [shape = 'u32[]', space=smem, size = 0x4, offset = 0x4, fixed_abs, tag = 'smem constant byte address 0x4 - core index']
  #allocation1 [shape = 'u32[144,128]{1,0:T(1,128)}', space=vmem, size = 0x12000, scoped, tag = 'internal scratch']
  %s0 = inlined_call_operand.vmem [shape: bf16[2,72,128], index: 0, kind: input, shape index: {}]
  %s1 = inlined_call_operand.vmem [shape: f32[1,128], index: 1, kind: input, shape index: {}]
  %s2 = inlined_call_operand.vmem [shape: f32[1,128], index: 2, kind: input, shape index: {}]
  %s3 = inlined_call_operand.vmem [shape: bf16[128,128], index: 3, kind: input, shape index: {}]
  %s4 = inlined_call_operand.vmem [shape: f32[72,1], index: 4, kind: input, shape index: {}]
  %s5 = inlined_call_operand.vmem [shape: bf16[2,72,128], index: 5, kind: input, shape index: {}]
  %s6 = inlined_call_operand.vmem [shape: bf16[128,128], index: 6, kind: input, shape index: {}]
  %s7 = inlined_call_operand.vmem [shape: bf16[2,72,128], index: 7, kind: output, shape index: {0}]
  %s8 = inlined_call_operand.vmem [shape: f32[2,1,128], index: 8, kind: output, shape index: {1}]
  %s9 = inlined_call_operand.vmem [shape: f32[2,1,128], index: 9, kind: output, shape index: {2}]
  %s10 = inlined_call_operand.vmem [shape: bf16[2,72,128], index: 10, kind: output, shape index: {3}]
  %s11 = inlined_call_operand.vmem [shape: f32[2,1,128], index: 11, kind: output, shape index: {4}]
  %s12 = inlined_call_operand.vmem [shape: f32[2,1,128], index: 12, kind: output, shape index: {5}]
  %13 = xla_tuple %s7, %s8, %s9, %s10, %s11, %s12
  %s14 = sld [smem:[#allocation0]]
  $region101: #{bottleneck_forward.8} parent=0
    _
  %s16 = ssub.s32 1, %s14
  %s17 = scalar_select 0, %s16, %s14
  loop: start=0, step=1, limit=4
  $region2: #{bottleneck_forward.8} parent=0 // loop_pre_header
    _
  $region3: #{bottleneck_forward.8} parent=0 // loop_header
    %s19 = sphi 0, %s23
    %p20 = scmp.ge.s32.totalorder %s19, 4
    %s29 = sphi 0, %s31
    %s32 = sphi 0, %s29
    %s33 = sphi 0, %s32
    %s49 = sphi 0, %s33
    %s53 = sphi 0, %s53
    %s55 = sphi 0, %s53
    %s56 = sphi 0, %s55
    %s70 = sphi 0, %s56
    %s74 = sphi 0, %s74
    %s76 = sphi 0, %s74
    %s77 = sphi 0, %s76
    %s91 = sphi 0, %s77
    %s95 = sphi 0, %s95
    %s97 = sphi 0, %s95
    %s98 = sphi 0, %s97
    %s112 = sphi 0, %s98
    %s116 = sphi 0, %s116
    %s118 = sphi 0, %s116
    %s119 = sphi 0, %s118
    %s133 = sphi 0, %s119
    %s139 = sphi 0, %s141
    %s142 = sphi 0, %s139
    %s143 = sphi 0, %s142
    %s159 = sphi 0, %s143
    %s163 = sphi 0, %s163
    %s165 = sphi 0, %s163
    %s166 = sphi 0, %s165
    %s180 = sphi 0, %s166
    %s186 = sphi 0, %s188
    %s189 = sphi 0, %s186
    %s190 = sphi 0, %s189
    %s206 = sphi 0, %s190
    %s212 = sphi 0, %s214
    %s215 = sphi 0, %s212
    %s216 = sphi 0, %s215
    %s232 = sphi 0, %s216
    %s238 = sphi 0, %s240
    %s241 = sphi 0, %s238
    %s242 = sphi 0, %s241
    %s258 = sphi 0, %s242
    %s264 = sphi 0, %s266
    %s267 = sphi 0, %s264
    %s268 = sphi 0, %s267
    %s284 = sphi 0, %s268
    %s290 = sphi 0, %s292
    %s293 = sphi 0, %s290
    %s294 = sphi 0, %s293
    %s310 = sphi 0, %s294
    %s316 = sphi 0, %s318
    %s319 = sphi 0, %s316
    %s320 = sphi 0, %s319
    %s336 = sphi 0, %s320
  $region4: #{bottleneck_forward.8} parent=0 // loop_header_branch
    %22 = sbr.rel (%p20) target = $region8
  $region5: #{bottleneck_forward.8} parent=0 // loop_body
    %s24 = ssub.s32 %s19, 1
    %s25 = ssub.s32 %s19, 2
    %s26 = sadd.s32 %s19, 1
    %s27 = ssub.s32 %s19, %s26
    %p28 = scmp.eq.s32.totalorder %s27, 0
    %s30 = sadd.s32 %s29, 1
    %s31 = scalar_select %p28, %s29, %s30
    %p34 = pneg %p28
    %p35 = scmp.eq.s32.totalorder %s19, 1
    %p36 = por %p34, %p35
    %p37 = scmp.ne.s32.totalorder %s29, %s32
    %p38 = scmp.eq.s32.totalorder %s19, 0
    %p39 = por %p37, %p38
    %p40 = scmp.ne.s32.totalorder %s29, %s32
    %p41 = scmp.eq.s32.totalorder %s24, 1
    %p42 = por %p40, %p41
    %p43 = scmp.ne.s32.totalorder %s32, %s33
    %p44 = scmp.eq.s32.totalorder %s24, 0
    %p45 = por %p43, %p44
    %p46 = scmp.ne.s32.totalorder %s32, %s33
    %p47 = scmp.eq.s32.totalorder %s25, 1
    %p48 = por %p46, %p47
    %p50 = scmp.ne.s32.totalorder %s33, %s49
    %p51 = scmp.eq.s32.totalorder %s25, 0
    %p52 = por %p50, %p51
    %s54 = sadd.s32 %s53, 1
    %p57 = scmp.eq.s32.totalorder %s19, 1
    %p58 = scmp.ne.s32.totalorder %s53, %s55
    %p59 = scmp.eq.s32.totalorder %s19, 0
    %p60 = por %p58, %p59
    %p61 = scmp.ne.s32.totalorder %s53, %s55
    %p62 = scmp.eq.s32.totalorder %s24, 1
    %p63 = por %p61, %p62
    %p64 = scmp.ne.s32.totalorder %s55, %s56
    %p65 = scmp.eq.s32.totalorder %s24, 0
    %p66 = por %p64, %p65
    %p67 = scmp.ne.s32.totalorder %s55, %s56
    %p68 = scmp.eq.s32.totalorder %s25, 1
    %p69 = por %p67, %p68
    %p71 = scmp.ne.s32.totalorder %s56, %s70
    %p72 = scmp.eq.s32.totalorder %s25, 0
    %p73 = por %p71, %p72
    %s75 = sadd.s32 %s74, 1
    %p78 = scmp.eq.s32.totalorder %s19, 1
    %p79 = scmp.ne.s32.totalorder %s74, %s76
    %p80 = scmp.eq.s32.totalorder %s19, 0
    %p81 = por %p79, %p80
    %p82 = scmp.ne.s32.totalorder %s74, %s76
    %p83 = scmp.eq.s32.totalorder %s24, 1
    %p84 = por %p82, %p83
    %p85 = scmp.ne.s32.totalorder %s76, %s77
    %p86 = scmp.eq.s32.totalorder %s24, 0
    %p87 = por %p85, %p86
    %p88 = scmp.ne.s32.totalorder %s76, %s77
    %p89 = scmp.eq.s32.totalorder %s25, 1
    %p90 = por %p88, %p89
    %p92 = scmp.ne.s32.totalorder %s77, %s91
    %p93 = scmp.eq.s32.totalorder %s25, 0
    %p94 = por %p92, %p93
    %s96 = sadd.s32 %s95, 1
    %p99 = scmp.eq.s32.totalorder %s19, 1
    %p100 = scmp.ne.s32.totalorder %s95, %s97
    %p101 = scmp.eq.s32.totalorder %s19, 0
    %p102 = por %p100, %p101
    %p103 = scmp.ne.s32.totalorder %s95, %s97
    %p104 = scmp.eq.s32.totalorder %s24, 1
    %p105 = por %p103, %p104
    %p106 = scmp.ne.s32.totalorder %s97, %s98
    %p107 = scmp.eq.s32.totalorder %s24, 0
    %p108 = por %p106, %p107
    %p109 = scmp.ne.s32.totalorder %s97, %s98
    %p110 = scmp.eq.s32.totalorder %s25, 1
    %p111 = por %p109, %p110
    %p113 = scmp.ne.s32.totalorder %s98, %s112
    %p114 = scmp.eq.s32.totalorder %s25, 0
    %p115 = por %p113, %p114
    %s117 = sadd.s32 %s116, 1
    %p120 = scmp.eq.s32.totalorder %s19, 1
    %p121 = scmp.ne.s32.totalorder %s116, %s118
    %p122 = scmp.eq.s32.totalorder %s19, 0
    %p123 = por %p121, %p122
    %p124 = scmp.ne.s32.totalorder %s116, %s118
    %p125 = scmp.eq.s32.totalorder %s24, 1
    %p126 = por %p124, %p125
    %p127 = scmp.ne.s32.totalorder %s118, %s119
    %p128 = scmp.eq.s32.totalorder %s24, 0
    %p129 = por %p127, %p128
    %p130 = scmp.ne.s32.totalorder %s118, %s119
    %p131 = scmp.eq.s32.totalorder %s25, 1
    %p132 = por %p130, %p131
    %p134 = scmp.ne.s32.totalorder %s119, %s133
    %p135 = scmp.eq.s32.totalorder %s25, 0
    %p136 = por %p134, %p135
    %s137 = ssub.s32 %s19, %s26
    %p138 = scmp.eq.s32.totalorder %s137, 0
    %s140 = sadd.s32 %s139, 1
    %s141 = scalar_select %p138, %s139, %s140
    %p144 = pneg %p138
    %p145 = scmp.eq.s32.totalorder %s19, 1
    %p146 = por %p144, %p145
    %p147 = scmp.ne.s32.totalorder %s139, %s142
    %p148 = scmp.eq.s32.totalorder %s19, 0
    %p149 = por %p147, %p148
    %p150 = scmp.ne.s32.totalorder %s139, %s142
    %p151 = scmp.eq.s32.totalorder %s24, 1
    %p152 = por %p150, %p151
    %p153 = scmp.ne.s32.totalorder %s142, %s143
    %p154 = scmp.eq.s32.totalorder %s24, 0
    %p155 = por %p153, %p154
    %p156 = scmp.ne.s32.totalorder %s142, %s143
    %p157 = scmp.eq.s32.totalorder %s25, 1
    %p158 = por %p156, %p157
    %p160 = scmp.ne.s32.totalorder %s143, %s159
    %p161 = scmp.eq.s32.totalorder %s25, 0
    %p162 = por %p160, %p161
    %s164 = sadd.s32 %s163, 1
    %p167 = scmp.eq.s32.totalorder %s19, 1
    %p168 = scmp.ne.s32.totalorder %s163, %s165
    %p169 = scmp.eq.s32.totalorder %s19, 0
    %p170 = por %p168, %p169
    %p171 = scmp.ne.s32.totalorder %s163, %s165
    %p172 = scmp.eq.s32.totalorder %s24, 1
    %p173 = por %p171, %p172
    %p174 = scmp.ne.s32.totalorder %s165, %s166
    %p175 = scmp.eq.s32.totalorder %s24, 0
    %p176 = por %p174, %p175
    %p177 = scmp.ne.s32.totalorder %s165, %s166
    %p178 = scmp.eq.s32.totalorder %s25, 1
    %p179 = por %p177, %p178
    %p181 = scmp.ne.s32.totalorder %s166, %s180
    %p182 = scmp.eq.s32.totalorder %s25, 0
    %p183 = por %p181, %p182
    %s184 = ssub.s32 %s19, %s26
    %p185 = scmp.eq.s32.totalorder %s184, 0
    %s187 = sadd.s32 %s186, 1
    %s188 = scalar_select %p185, %s186, %s187
    %p191 = pneg %p185
    %p192 = scmp.eq.s32.totalorder %s19, 1
    %p193 = por %p191, %p192
    %p194 = scmp.ne.s32.totalorder %s186, %s189
    %p195 = scmp.eq.s32.totalorder %s19, 0
    %p196 = por %p194, %p195
    %p197 = scmp.ne.s32.totalorder %s186, %s189
    %p198 = scmp.eq.s32.totalorder %s24, 1
    %p199 = por %p197, %p198
    %p200 = scmp.ne.s32.totalorder %s189, %s190
    %p201 = scmp.eq.s32.totalorder %s24, 0
    %p202 = por %p200, %p201
    %p203 = scmp.ne.s32.totalorder %s189, %s190
    %p204 = scmp.eq.s32.totalorder %s25, 1
    %p205 = por %p203, %p204
    %p207 = scmp.ne.s32.totalorder %s190, %s206
    %p208 = scmp.eq.s32.totalorder %s25, 0
    %p209 = por %p207, %p208
    %s210 = ssub.s32 %s19, %s26
    %p211 = scmp.eq.s32.totalorder %s210, 0
    %s213 = sadd.s32 %s212, 1
    %s214 = scalar_select %p211, %s212, %s213
    %p217 = pneg %p211
    %p218 = scmp.eq.s32.totalorder %s19, 1
    %p219 = por %p217, %p218
    %p220 = scmp.ne.s32.totalorder %s212, %s215
    %p221 = scmp.eq.s32.totalorder %s19, 0
    %p222 = por %p220, %p221
    %p223 = scmp.ne.s32.totalorder %s212, %s215
    %p224 = scmp.eq.s32.totalorder %s24, 1
    %p225 = por %p223, %p224
    %p226 = scmp.ne.s32.totalorder %s215, %s216
    %p227 = scmp.eq.s32.totalorder %s24, 0
    %p228 = por %p226, %p227
    %p229 = scmp.ne.s32.totalorder %s215, %s216
    %p230 = scmp.eq.s32.totalorder %s25, 1
    %p231 = por %p229, %p230
    %p233 = scmp.ne.s32.totalorder %s216, %s232
    %p234 = scmp.eq.s32.totalorder %s25, 0
    %p235 = por %p233, %p234
    %s236 = ssub.s32 %s19, %s26
    %p237 = scmp.eq.s32.totalorder %s236, 0
    %s239 = sadd.s32 %s238, 1
    %s240 = scalar_select %p237, %s238, %s239
    %p243 = pneg %p237
    %p244 = scmp.eq.s32.totalorder %s19, 1
    %p245 = por %p243, %p244
    %p246 = scmp.ne.s32.totalorder %s238, %s241
    %p247 = scmp.eq.s32.totalorder %s19, 0
    %p248 = por %p246, %p247
    %p249 = scmp.ne.s32.totalorder %s238, %s241
    %p250 = scmp.eq.s32.totalorder %s24, 1
    %p251 = por %p249, %p250
    %p252 = scmp.ne.s32.totalorder %s241, %s242
    %p253 = scmp.eq.s32.totalorder %s24, 0
    %p254 = por %p252, %p253
    %p255 = scmp.ne.s32.totalorder %s241, %s242
    %p256 = scmp.eq.s32.totalorder %s25, 1
    %p257 = por %p255, %p256
    %p259 = scmp.ne.s32.totalorder %s242, %s258
    %p260 = scmp.eq.s32.totalorder %s25, 0
    %p261 = por %p259, %p260
    %s262 = ssub.s32 %s19, %s26
    %p263 = scmp.eq.s32.totalorder %s262, 0
    %s265 = sadd.s32 %s264, 1
    %s266 = scalar_select %p263, %s264, %s265
    %p269 = pneg %p263
    %p270 = scmp.eq.s32.totalorder %s19, 1
    %p271 = por %p269, %p270
    %p272 = scmp.ne.s32.totalorder %s264, %s267
    %p273 = scmp.eq.s32.totalorder %s19, 0
    %p274 = por %p272, %p273
    %p275 = scmp.ne.s32.totalorder %s264, %s267
    %p276 = scmp.eq.s32.totalorder %s24, 1
    %p277 = por %p275, %p276
    %p278 = scmp.ne.s32.totalorder %s267, %s268
    %p279 = scmp.eq.s32.totalorder %s24, 0
    %p280 = por %p278, %p279
    %p281 = scmp.ne.s32.totalorder %s267, %s268
    %p282 = scmp.eq.s32.totalorder %s25, 1
    %p283 = por %p281, %p282
    %p285 = scmp.ne.s32.totalorder %s268, %s284
    %p286 = scmp.eq.s32.totalorder %s25, 0
    %p287 = por %p285, %p286
    %s288 = ssub.s32 %s19, %s26
    %p289 = scmp.eq.s32.totalorder %s288, 0
    %s291 = sadd.s32 %s290, 1
    %s292 = scalar_select %p289, %s290, %s291
    %p295 = pneg %p289
    %p296 = scmp.eq.s32.totalorder %s19, 1
    %p297 = por %p295, %p296
    %p298 = scmp.ne.s32.totalorder %s290, %s293
    %p299 = scmp.eq.s32.totalorder %s19, 0
    %p300 = por %p298, %p299
    %p301 = scmp.ne.s32.totalorder %s290, %s293
    %p302 = scmp.eq.s32.totalorder %s24, 1
    %p303 = por %p301, %p302
    %p304 = scmp.ne.s32.totalorder %s293, %s294
    %p305 = scmp.eq.s32.totalorder %s24, 0
    %p306 = por %p304, %p305
    %p307 = scmp.ne.s32.totalorder %s293, %s294
    %p308 = scmp.eq.s32.totalorder %s25, 1
    %p309 = por %p307, %p308
    %p311 = scmp.ne.s32.totalorder %s294, %s310
    %p312 = scmp.eq.s32.totalorder %s25, 0
    %p313 = por %p311, %p312
    %s314 = ssub.s32 %s19, %s26
    %p315 = scmp.eq.s32.totalorder %s314, 0
    %s317 = sadd.s32 %s316, 1
    %s318 = scalar_select %p315, %s316, %s317
    %p321 = pneg %p315
    %p322 = scmp.eq.s32.totalorder %s19, 1
    %p323 = por %p321, %p322
    %p324 = scmp.ne.s32.totalorder %s316, %s319
    %p325 = scmp.eq.s32.totalorder %s19, 0
    %p326 = por %p324, %p325
    %p327 = scmp.ne.s32.totalorder %s316, %s319
    %p328 = scmp.eq.s32.totalorder %s24, 1
    %p329 = por %p327, %p328
    %p330 = scmp.ne.s32.totalorder %s319, %s320
    %p331 = scmp.eq.s32.totalorder %s24, 0
    %p332 = por %p330, %p331
    %p333 = scmp.ne.s32.totalorder %s319, %s320
    %p334 = scmp.eq.s32.totalorder %s25, 1
    %p335 = por %p333, %p334
    %p337 = scmp.ne.s32.totalorder %s320, %s336
    %p338 = scmp.eq.s32.totalorder %s25, 0
    %p339 = por %p337, %p338
    %p340 = scmp.le.s32.totalorder 1, %s19
    %p341 = scmp.lt.s32.totalorder %s19, 3
    %p342 = pnand %p340, %p341
    %p343 = pneg %p342
    // Predicated region
    $region9: #{bottleneck_forward.8} parent=5 // pred_check
      _
    $region10: #{bottleneck_forward.8} parent=5 // pred_check_branch
      %345 = sbr.rel (%p342) target = $region12
    $region11: #{bottleneck_forward.8} parent=5 // pred_region
      %s346 = ssub.s32 %s19, 1
      // Predicated region
      $region13: #{bottleneck_forward.8} parent=11 // pred_check
        %p347 = pneg %p66
      $region14: #{bottleneck_forward.8} parent=11 // pred_check_branch
        %349 = sbr.rel (%p347) target = $region16
      $region15: #{bottleneck_forward.8} parent=11 // pred_region
        _
      $region16: #{bottleneck_forward.8} parent=11 // pred_fallthru
        _
      // Predicated region
      $region17: #{bottleneck_forward.8} parent=11 // pred_check
        %p350 = pneg %p87
      $region18: #{bottleneck_forward.8} parent=11 // pred_check_branch
        %352 = sbr.rel (%p350) target = $region20
      $region19: #{bottleneck_forward.8} parent=11 // pred_region
        _
      $region20: #{bottleneck_forward.8} parent=11 // pred_fallthru
        _
      // Predicated region
      $region21: #{bottleneck_forward.8} parent=11 // pred_check
        %p353 = pneg %p108
      $region22: #{bottleneck_forward.8} parent=11 // pred_check_branch
        %355 = sbr.rel (%p353) target = $region24
      $region23: #{bottleneck_forward.8} parent=11 // pred_region
        _
      $region24: #{bottleneck_forward.8} parent=11 // pred_fallthru
        _
      // Predicated region
      $region25: #{bottleneck_forward.8} parent=11 // pred_check
        %p356 = pneg %p129
      $region26: #{bottleneck_forward.8} parent=11 // pred_check_branch
        %358 = sbr.rel (%p356) target = $region28
      $region27: #{bottleneck_forward.8} parent=11 // pred_region
        _
      $region28: #{bottleneck_forward.8} parent=11 // pred_fallthru
        _
      // Predicated region
      $region29: #{bottleneck_forward.8} parent=11 // pred_check
        %p359 = pneg %p176
      $region30: #{bottleneck_forward.8} parent=11 // pred_check_branch
        %361 = sbr.rel (%p359) target = $region32
      $region31: #{bottleneck_forward.8} parent=11 // pred_region
        _
      $region32: #{bottleneck_forward.8} parent=11 // pred_fallthru
        _
    $region12: #{bottleneck_forward.8} parent=5 // pred_fallthru
      _
    %p362 = scmp.lt.s32.totalorder %s19, 2
    // Predicated region
    $region33: #{bottleneck_forward.8} parent=5 // pred_check
      %p363 = pneg %p362
    $region34: #{bottleneck_forward.8} parent=5 // pred_check_branch
      %365 = sbr.rel (%p363) target = $region36
    $region35: #{bottleneck_forward.8} parent=5 // pred_region
      // Predicated region
      $region37: #{bottleneck_forward.8} parent=35 // pred_check
        %p366 = pneg %p39
      $region38: #{bottleneck_forward.8} parent=35 // pred_check_branch
        %368 = sbr.rel (%p366) target = $region40
      $region39: #{bottleneck_forward.8} parent=35 // pred_region
        %p369 = scmp.lt.s32.totalorder %s19, 1
        %s370 = scalar_select %p369, %s19, 1
        %s371 = smul.addr %s370, 9
        %s372 = smul.addr %s371, 4
        %s373 = scalar_lea.vmem %s0, %s372
      $region40: #{bottleneck_forward.8} parent=35 // pred_fallthru
        _
      // Predicated region
      $region41: #{bottleneck_forward.8} parent=35 // pred_check
        %p374 = pneg %p149
      $region42: #{bottleneck_forward.8} parent=35 // pred_check_branch
        %376 = sbr.rel (%p374) target = $region44
      $region43: #{bottleneck_forward.8} parent=35 // pred_region
        %p377 = scmp.lt.s32.totalorder %s19, 1
        %s378 = scalar_select %p377, %s19, 1
        %s379 = smul.addr %s378, 9
        %s380 = smul.addr %s379, 4
        %s381 = scalar_lea.vmem %s5, %s380
      $region44: #{bottleneck_forward.8} parent=35 // pred_fallthru
        _
    $region36: #{bottleneck_forward.8} parent=5 // pred_fallthru
      _
    %p382 = scmp.le.s32.totalorder 1, %s19
    %p383 = scmp.lt.s32.totalorder %s19, 3
    %p384 = pnand %p382, %p383
    %p385 = pneg %p384
    // Predicated region
    $region45: #{bottleneck_forward.8} parent=5 // pred_check
      _
    $region46: #{bottleneck_forward.8} parent=5 // pred_check_branch
      %387 = sbr.rel (%p384) target = $region48
    $region47: #{bottleneck_forward.8} parent=5 // pred_region
      %s388 = ssub.s32 %s19, 1
      %p389 = scmp.lt.s32.totalorder %s24, 1
      %s390 = scalar_select %p389, %s24, 1
      %s391 = smul.addr %s390, 9
      %s392 = smul.addr %s391, 4
      %s393 = scalar_lea.vmem %s0, %s392
      %p394 = pneg %p45
      %p395 = pneg %p42
      %p396 = pneg %p66
      %p397 = pneg %p63
      %p398 = pneg %p87
      %p399 = pneg %p84
      %p400 = pneg %p108
      %p401 = pneg %p105
      %p402 = pneg %p129
      %p403 = pneg %p126
      %p404 = scmp.lt.s32.totalorder %s24, 1
      %s405 = scalar_select %p404, %s24, 1
      %s406 = smul.addr %s405, 9
      %s407 = smul.addr %s406, 4
      %s408 = scalar_lea.vmem %s5, %s407
      %p409 = pneg %p155
      %p410 = pneg %p152
      %p411 = pneg %p176
      %p412 = pneg %p173
      %p413 = pneg %p202
      %p414 = pneg %p199
      %p415 = scmp.lt.s32.totalorder %s24, 1
      %s416 = scalar_select %p415, %s24, 1
      %s417 = smul.addr %s416, 9
      %s418 = smul.addr %s417, 4
      %s419 = scalar_lea.vmem %s7, %s418
      %p420 = pneg %p228
      %p421 = pneg %p225
      %p422 = scmp.lt.s32.totalorder %s24, 1
      %s423 = scalar_select %p422, %s24, 1
      %s424 = scalar_lea.vmem %s8, %s423
      %p425 = pneg %p254
      %p426 = pneg %p251
      %p427 = scmp.lt.s32.totalorder %s24, 1
      %s428 = scalar_select %p427, %s24, 1
      %s429 = scalar_lea.vmem %s9, %s428
      %p430 = pneg %p280
      %p431 = pneg %p277
      %p432 = scmp.lt.s32.totalorder %s24, 1
      %s433 = scalar_select %p432, %s24, 1
      %s434 = smul.addr %s433, 9
      %s435 = smul.addr %s434, 4
      %s436 = scalar_lea.vmem %s10, %s435
      %p437 = pneg %p306
      %p438 = pneg %p303
      %p439 = scmp.lt.s32.totalorder %s24, 1
      %s440 = scalar_select %p439, %s24, 1
      %s441 = scalar_lea.vmem %s11, %s440
      %p442 = pneg %p332
      %p443 = pneg %p329
      %p444 = scmp.lt.s32.totalorder %s24, 1
      %s445 = scalar_select %p444, %s24, 1
      %s446 = scalar_lea.vmem %s12, %s445
      %p447 = scmp.lt.s32.totalorder %s24, 1
      %s448 = scalar_select %p447, %s24, 1
      %s449 = smul.addr %s448, 9
      %s450 = smul.addr %s449, 4
      %s451 = scalar_lea.vmem %s0, %s450
      %p452 = scmp.lt.s32.totalorder %s24, 1
      %s453 = scalar_select %p452, %s24, 1
      %s454 = smul.addr %s453, 9
      %s455 = smul.addr %s454, 4
      %s456 = scalar_lea.vmem %s5, %s455
      %p457 = scmp.lt.s32.totalorder %s24, 1
      %s458 = scalar_select %p457, %s24, 1
      %s459 = smul.addr %s458, 9
      %s460 = smul.addr %s459, 4
      %s461 = scalar_lea.vmem %s7, %s460
      %p462 = scmp.lt.s32.totalorder %s24, 1
      %s463 = scalar_select %p462, %s24, 1
      %s464 = scalar_lea.vmem %s8, %s463
      %p465 = scmp.lt.s32.totalorder %s24, 1
      %s466 = scalar_select %p465, %s24, 1
      %s467 = scalar_lea.vmem %s9, %s466
      %p468 = scmp.lt.s32.totalorder %s24, 1
      %s469 = scalar_select %p468, %s24, 1
      %s470 = smul.addr %s469, 9
      %s471 = smul.addr %s470, 4
      %s472 = scalar_lea.vmem %s10, %s471
      %p473 = scmp.lt.s32.totalorder %s24, 1
      %s474 = scalar_select %p473, %s24, 1
      %s475 = scalar_lea.vmem %s11, %s474
      %p476 = scmp.lt.s32.totalorder %s24, 1
      %s477 = scalar_select %p476, %s24, 1
      %s478 = scalar_lea.vmem %s12, %s477
      %v480 = vld [vmem:[%s4] sm:$0xff]
      %v481 = vld [vmem:[%s4 + $0x8] sm:$0xff]
      %v482 = vld [vmem:[%s4 + $0x10] sm:$0xff]
      %v483 = vld [vmem:[%s4 + $0x18] sm:$0xff]
      %v484 = vld [vmem:[%s4 + $0x20] sm:$0xff]
      %v485 = vld [vmem:[%s4 + $0x28] sm:$0xff]
      %v486 = vld [vmem:[%s4 + $0x30] sm:$0xff]
      %v487 = vld [vmem:[%s4 + $0x38] sm:$0xff]
      %v488 = vld [vmem:[%s4 + $0x40] sm:$0xff]
      %v489 = vld [vmem:[%s451] sm:$0xf]
      %v490 = vld [vmem:[%s451 + $0x4] sm:$0xf]
      %v491 = vld [vmem:[%s451 + $0x8] sm:$0xf]
      %v492 = vld [vmem:[%s451 + $0xc] sm:$0xf]
      %v493 = vld [vmem:[%s451 + $0x10] sm:$0xf]
      %v494 = vld [vmem:[%s451 + $0x14] sm:$0xf]
      %v495 = vld [vmem:[%s451 + $0x18] sm:$0xf]
      %v496 = vld [vmem:[%s451 + $0x1c] sm:$0xf]
      %v497 = vld [vmem:[%s451 + $0x20] sm:$0xf]
      %v498 = vunpack.c.l.bf16 %v489
      %v499 = vunpack.c.l.bf16 %v490
      %v500 = vunpack.c.l.bf16 %v491
      %v501 = vunpack.c.l.bf16 %v492
      %v502 = vunpack.c.l.bf16 %v493
      %v503 = vunpack.c.l.bf16 %v494
      %v504 = vunpack.c.l.bf16 %v495
      %v505 = vunpack.c.l.bf16 %v496
      %v506 = vunpack.c.l.bf16 %v497
      %v507 = vld [vmem:[%s1] sm:$0x1]
      %v509 = vlaneseq
      %v510 = vshrl.u32 %v509, 7
      %v511 = vsub.s32 0, %v510
      %v512 = vrot.slane %v507, %v511
      %v514 = vmul.f32 %v498, %v512
      %v515 = vmul.f32 %v499, %v512
      %v516 = vmul.f32 %v500, %v512
      %v517 = vmul.f32 %v501, %v512
      %v518 = vmul.f32 %v502, %v512
      %v519 = vmul.f32 %v503, %v512
      %v520 = vmul.f32 %v504, %v512
      %v521 = vmul.f32 %v505, %v512
      %v522 = vmul.f32 %v506, %v512
      %v523 = vld [vmem:[%s2] sm:$0x1]
      %v525 = vlaneseq
      %v526 = vshrl.u32 %v525, 7
      %v527 = vsub.s32 0, %v526
      %v528 = vrot.slane %v523, %v527
      %v530 = vadd.f32 %v514, %v528
      %v531 = vadd.f32 %v515, %v528
      %v532 = vadd.f32 %v516, %v528
      %v533 = vadd.f32 %v517, %v528
      %v534 = vadd.f32 %v518, %v528
      %v535 = vadd.f32 %v519, %v528
      %v536 = vadd.f32 %v520, %v528
      %v537 = vadd.f32 %v521, %v528
      %v538 = vadd.f32 %v522, %v528
      %v539 = vmax.f32 %v530, 0.0
      %v540 = vmax.f32 %v531, 0.0
      %v541 = vmax.f32 %v532, 0.0
      %v542 = vmax.f32 %v533, 0.0
      %v543 = vmax.f32 %v534, 0.0
      %v544 = vmax.f32 %v535, 0.0
      %v545 = vmax.f32 %v536, 0.0
      %v546 = vmax.f32 %v537, 0.0
      %v547 = vmax.f32 %v538, 0.0
      %v548 = vpack.c.bf16 %v540, %v539
      %v549 = vpack.c.bf16 %v542, %v541
      %v550 = vpack.c.bf16 %v544, %v543
      %v551 = vpack.c.bf16 %v546, %v545
      %v552 = vpack.c.bf16 %v547, %v547
      %v553 = vld [vmem:[%s3] sm:$0xf]
      %v554 = vld [vmem:[%s3 + $0x4] sm:$0xf]
      %v555 = vld [vmem:[%s3 + $0x8] sm:$0xf]
      %v556 = vld [vmem:[%s3 + $0xc] sm:$0xf]
      %v557 = vld [vmem:[%s3 + $0x10] sm:$0xf]
      %v558 = vld [vmem:[%s3 + $0x14] sm:$0xf]
      %v559 = vld [vmem:[%s3 + $0x18] sm:$0xf]
      %v560 = vld [vmem:[%s3 + $0x1c] sm:$0xf]
      %v561 = vld [vmem:[%s3 + $0x20] sm:$0xf]
      %v562 = vld [vmem:[%s3 + $0x24] sm:$0xf]
      %v563 = vld [vmem:[%s3 + $0x28] sm:$0xf]
      %v564 = vld [vmem:[%s3 + $0x2c] sm:$0xf]
      %v565 = vld [vmem:[%s3 + $0x30] sm:$0xf]
      %v566 = vld [vmem:[%s3 + $0x34] sm:$0xf]
      %v567 = vld [vmem:[%s3 + $0x38] sm:$0xf]
      %v568 = vld [vmem:[%s3 + $0x3c] sm:$0xf]
      %v585 = vunpack.c.l.b16 %v553
      %v586 = vunpack.c.l.b16 %v554
      %v587 = vunpack.c.l.b16 %v555
      %v588 = vunpack.c.l.b16 %v556
      %v589 = vunpack.c.l.b16 %v557
      %v590 = vunpack.c.l.b16 %v558
      %v591 = vunpack.c.l.b16 %v559
      %v592 = vunpack.c.l.b16 %v560
      %v593 = vunpack.c.l.b16 %v561
      %v594 = vunpack.c.l.b16 %v562
      %v595 = vunpack.c.l.b16 %v563
      %v596 = vunpack.c.l.b16 %v564
      %v597 = vunpack.c.l.b16 %v565
      %v598 = vunpack.c.l.b16 %v566
      %v599 = vunpack.c.l.b16 %v567
      %v600 = vunpack.c.l.b16 %v568
      %v601 = vpack.c.b16 %v586, %v585
      %v602 = vpack.c.b16 %v588, %v587
      %v603 = vpack.c.b16 %v590, %v589
      %v604 = vpack.c.b16 %v592, %v591
      %v605 = vpack.c.b16 %v594, %v593
      %v606 = vpack.c.b16 %v596, %v595
      %v607 = vpack.c.b16 %v598, %v597
      %v608 = vpack.c.b16 %v600, %v599
      %617 = vmatprep.subr.bf16.mxu0 0
      %618 = vmatpush1.bf16.msra.mxu0 %v601
      %619 = vmatprep.subr.bf16.mxu0 0
      %620 = vmatpush1.bf16.msra.mxu0 %v602
      %621 = vmatprep.subr.bf16.mxu0 0
      %622 = vmatpush1.bf16.msra.mxu0 %v603
      %623 = vmatprep.subr.bf16.mxu0 0
      %624 = vmatpush1.bf16.msra.mxu0 %v604
      %625 = vmatprep.subr.bf16.mxu0 0
      %626 = vmatpush1.bf16.msra.mxu0 %v605
      %627 = vmatprep.subr.bf16.mxu0 0
      %628 = vmatpush1.bf16.msra.mxu0 %v606
      %629 = vmatprep.subr.bf16.mxu0 0
      %630 = vmatpush1.bf16.msra.mxu0 %v607
      %631 = vmatprep.subr.bf16.mxu0 0
      %632 = vmatpush1.bf16.msra.mxu0 %v608
      %633 = vmatprep.subr.bf16.mxu0 0
      %634 = vmatpush1.bf16.msra.mxu0 0
      %635 = vmatprep.subr.bf16.mxu0 0
      %636 = vmatpush1.bf16.msra.mxu0 0
      %637 = vmatprep.subr.bf16.mxu0 0
      %638 = vmatpush1.bf16.msra.mxu0 0
      %639 = vmatprep.subr.bf16.mxu0 0
      %640 = vmatpush1.bf16.msra.mxu0 0
      %641 = vmatprep.subr.bf16.mxu0 0
      %642 = vmatpush1.bf16.msra.mxu0 0
      %643 = vmatprep.subr.bf16.mxu0 0
      %644 = vmatpush1.bf16.msra.mxu0 0
      %645 = vmatprep.subr.bf16.mxu0 0
      %646 = vmatpush1.bf16.msra.mxu0 0
      %647 = vmatprep.subr.bf16.mxu0 0
      %648 = vmatpush1.bf16.msra.mxu0 0
      %649 = vmatprep.mubr.bf16.mxu0 0
      %650 = vmatmul.mubr.bf16.gmra.mrb[0].mxu0 %v548
      %v651 = vpop.f32.mrb[0].mxu0
      %v652 = vadd.f32 0.0, %v651
      %v653 = vpop.f32.mrb[0].mxu0
      %v654 = vpop.f32.mrb[0].mxu0
      %v655 = vadd.f32 0.0, %v654
      %v656 = vpop.f32.mrb[0].mxu0
      %657 = vmatprep.mubr.bf16.mxu0 0
      %658 = vmatmul.mubr.bf16.gmra.mrb[0].mxu0 %v549
      %v659 = vpop.f32.mrb[0].mxu0
      %v660 = vadd.f32 0.0, %v659
      %v661 = vpop.f32.mrb[0].mxu0
      %v662 = vpop.f32.mrb[0].mxu0
      %v663 = vadd.f32 0.0, %v662
      %v664 = vpop.f32.mrb[0].mxu0
      %665 = vmatprep.mubr.bf16.mxu0 0
      %666 = vmatmul.mubr.bf16.gmra.mrb[0].mxu0 %v550
      %v667 = vpop.f32.mrb[0].mxu0
      %v668 = vadd.f32 0.0, %v667
      %v669 = vpop.f32.mrb[0].mxu0
      %v670 = vpop.f32.mrb[0].mxu0
      %v671 = vadd.f32 0.0, %v670
      %v672 = vpop.f32.mrb[0].mxu0
      %673 = vmatprep.mubr.bf16.mxu0 0
      %674 = vmatmul.mubr.bf16.gmra.mrb[0].mxu0 %v551
      %v675 = vpop.f32.mrb[0].mxu0
      %v676 = vadd.f32 0.0, %v675
      %v677 = vpop.f32.mrb[0].mxu0
      %v678 = vpop.f32.mrb[0].mxu0
      %v679 = vadd.f32 0.0, %v678
      %v680 = vpop.f32.mrb[0].mxu0
      %681 = vmatprep.mubr.bf16.mxu0 0
      %682 = vmatmul.mubr.bf16.gmra.mrb[0].mxu0 %v552
      %v683 = vpop.f32.mrb[0].mxu0
      %v684 = vadd.f32 0.0, %v683
      %v685 = vpop.f32.mrb[0].mxu0
      %v686 = vpop.f32.mrb[0].mxu0
      %v687 = vpop.f32.mrb[0].mxu0
      %688 = vdwg.mxu0
      %v689 = vpack.c.bf16 %v655, %v652
      %v690 = vpack.c.bf16 %v663, %v660
      %v691 = vpack.c.bf16 %v671, %v668
      %v692 = vpack.c.bf16 %v679, %v676
      %v693 = vpack.c.bf16 %v684, %v684
      %v699 = vunpack.c.l.b16 %v689
      %v700 = vunpack.c.h.b16 %v689
      %v701 = vunpack.c.l.b16 %v690
      %v702 = vunpack.c.h.b16 %v690
      %v703 = vunpack.c.l.b16 %v691
      %v704 = vunpack.c.h.b16 %v691
      %v705 = vunpack.c.l.b16 %v692
      %v706 = vunpack.c.h.b16 %v692
      %v707 = vunpack.c.l.b16 %v693
      %v708 = vpack.c.b16 %v699, %v699
      %v709 = vpack.c.b16 %v700, %v700
      %v710 = vpack.c.b16 %v701, %v701
      %v711 = vpack.c.b16 %v702, %v702
      %v712 = vpack.c.b16 %v703, %v703
      %v713 = vpack.c.b16 %v704, %v704
      %v714 = vpack.c.b16 %v705, %v705
      %v715 = vpack.c.b16 %v706, %v706
      %v716 = vpack.c.b16 %v707, %v707
      %726 = vst [vmem:[%s461] sm:$0xf] %v708
      %727 = vst [vmem:[%s461 + $0x4] sm:$0xf] %v709
      %728 = vst [vmem:[%s461 + $0x8] sm:$0xf] %v710
      %729 = vst [vmem:[%s461 + $0xc] sm:$0xf] %v711
      %730 = vst [vmem:[%s461 + $0x10] sm:$0xf] %v712
      %731 = vst [vmem:[%s461 + $0x14] sm:$0xf] %v713
      %732 = vst [vmem:[%s461 + $0x18] sm:$0xf] %v714
      %733 = vst [vmem:[%s461 + $0x1c] sm:$0xf] %v715
      %734 = vst [vmem:[%s461 + $0x20] sm:$0xf] %v716
      %736 = vset.pattern.permute.xlu0 0
      %737 = vperm.xlu0 %736, %v480
      %v738 = vpop.permute.xlu0 %737
      %741 = vset.pattern.permute.xlu0 0
      %742 = vperm.xlu0 %741, %v481
      %v743 = vpop.permute.xlu0 %742
      %746 = vset.pattern.permute.xlu0 0
      %747 = vperm.xlu0 %746, %v482
      %v748 = vpop.permute.xlu0 %747
      %751 = vset.pattern.permute.xlu0 0
      %752 = vperm.xlu0 %751, %v483
      %v753 = vpop.permute.xlu0 %752
      %756 = vset.pattern.permute.xlu0 0
      %757 = vperm.xlu0 %756, %v484
      %v758 = vpop.permute.xlu0 %757
      %761 = vset.pattern.permute.xlu0 0
      %762 = vperm.xlu0 %761, %v485
      %v763 = vpop.permute.xlu0 %762
      %766 = vset.pattern.permute.xlu0 0
      %767 = vperm.xlu0 %766, %v486
      %v768 = vpop.permute.xlu0 %767
      %771 = vset.pattern.permute.xlu0 0
      %772 = vperm.xlu0 %771, %v487
      %v773 = vpop.permute.xlu0 %772
      %776 = vset.pattern.permute.xlu0 0
      %777 = vperm.xlu0 %776, %v488
      %v778 = vpop.permute.xlu0 %777
      %v780 = vmul.f32 %v652, %v738
      %v781 = vmul.f32 %v655, %v743
      %v782 = vmul.f32 %v660, %v748
      %v783 = vmul.f32 %v663, %v753
      %v784 = vmul.f32 %v668, %v758
      %v785 = vmul.f32 %v671, %v763
      %v786 = vmul.f32 %v676, %v768
      %v787 = vmul.f32 %v679, %v773
      %v788 = vmul.f32 %v684, %v778
      %v789 = vadd.f32 %v780, %v781
      %v790 = vadd.f32 %v789, %v782
      %v791 = vadd.f32 %v790, %v783
      %v792 = vadd.f32 %v791, %v784
      %v793 = vadd.f32 %v792, %v785
      %v794 = vadd.f32 %v793, %v786
      %v795 = vadd.f32 %v794, %v787
      %v796 = vadd.f32 %v795, %v788
      %v797 = vrot.slane %v796, 4
      %v798 = vadd.f32 %v796, %v797
      %v799 = vrot.slane %v798, 2
      %v800 = vadd.f32 %v798, %v799
      %v801 = vrot.slane %v800, 1
      %v802 = vadd.f32 %v800, %v801
      %803 = vst [vmem:[%s464] sm:$0x1] %v802
      %v804 = vmul.f32 %v780, %v652
      %v805 = vmul.f32 %v781, %v655
      %v806 = vmul.f32 %v782, %v660
      %v807 = vmul.f32 %v783, %v663
      %v808 = vmul.f32 %v784, %v668
      %v809 = vmul.f32 %v785, %v671
      %v810 = vmul.f32 %v786, %v676
      %v811 = vmul.f32 %v787, %v679
      %v812 = vmul.f32 %v788, %v684
      %v813 = vadd.f32 %v804, %v805
      %v814 = vadd.f32 %v813, %v806
      %v815 = vadd.f32 %v814, %v807
      %v816 = vadd.f32 %v815, %v808
      %v817 = vadd.f32 %v816, %v809
      %v818 = vadd.f32 %v817, %v810
      %v819 = vadd.f32 %v818, %v811
      %v820 = vadd.f32 %v819, %v812
      %v821 = vrot.slane %v820, 4
      %v822 = vadd.f32 %v820, %v821
      %v823 = vrot.slane %v822, 2
      %v824 = vadd.f32 %v822, %v823
      %v825 = vrot.slane %v824, 1
      %v826 = vadd.f32 %v824, %v825
      %827 = vst [vmem:[%s467] sm:$0x1] %v826
      %v828 = vld [vmem:[%s456] sm:$0xf]
      %v829 = vld [vmem:[%s456 + $0x4] sm:$0xf]
      %v830 = vld [vmem:[%s456 + $0x8] sm:$0xf]
      %v831 = vld [vmem:[%s456 + $0xc] sm:$0xf]
      %v832 = vld [vmem:[%s456 + $0x10] sm:$0xf]
      %v833 = vld [vmem:[%s456 + $0x14] sm:$0xf]
      %v834 = vld [vmem:[%s456 + $0x18] sm:$0xf]
      %v835 = vld [vmem:[%s456 + $0x1c] sm:$0xf]
      %v836 = vld [vmem:[%s456 + $0x20] sm:$0xf]
      %v837 = vld [vmem:[%s6] sm:$0xf]
      %v838 = vld [vmem:[%s6 + $0x4] sm:$0xf]
      %v839 = vld [vmem:[%s6 + $0x8] sm:$0xf]
      %v840 = vld [vmem:[%s6 + $0xc] sm:$0xf]
      %v841 = vld [vmem:[%s6 + $0x10] sm:$0xf]
      %v842 = vld [vmem:[%s6 + $0x14] sm:$0xf]
      %v843 = vld [vmem:[%s6 + $0x18] sm:$0xf]
      %v844 = vld [vmem:[%s6 + $0x1c] sm:$0xf]
      %v845 = vld [vmem:[%s6 + $0x20] sm:$0xf]
      %v846 = vld [vmem:[%s6 + $0x24] sm:$0xf]
      %v847 = vld [vmem:[%s6 + $0x28] sm:$0xf]
      %v848 = vld [vmem:[%s6 + $0x2c] sm:$0xf]
      %v849 = vld [vmem:[%s6 + $0x30] sm:$0xf]
      %v850 = vld [vmem:[%s6 + $0x34] sm:$0xf]
      %v851 = vld [vmem:[%s6 + $0x38] sm:$0xf]
      %v852 = vld [vmem:[%s6 + $0x3c] sm:$0xf]
      %v862 = vunpack.c.l.b16 %v828
      %v863 = vunpack.c.l.b16 %v829
      %v864 = vunpack.c.l.b16 %v830
      %v865 = vunpack.c.l.b16 %v831
      %v866 = vunpack.c.l.b16 %v832
      %v867 = vunpack.c.l.b16 %v833
      %v868 = vunpack.c.l.b16 %v834
      %v869 = vunpack.c.l.b16 %v835
      %v870 = vunpack.c.l.b16 %v836
      %v871 = vpack.c.b16 %v863, %v862
      %v872 = vpack.c.b16 %v865, %v864
      %v873 = vpack.c.b16 %v867, %v866
      %v874 = vpack.c.b16 %v869, %v868
      %v875 = vpack.c.b16 %v870, %v870
      %v897 = vunpack.c.l.b16 %v837
      %v898 = vunpack.c.l.b16 %v838
      %v899 = vunpack.c.l.b16 %v839
      %v900 = vunpack.c.l.b16 %v840
      %v901 = vunpack.c.l.b16 %v841
      %v902 = vunpack.c.l.b16 %v842
      %v903 = vunpack.c.l.b16 %v843
      %v904 = vunpack.c.l.b16 %v844
      %v905 = vunpack.c.l.b16 %v845
      %v906 = vunpack.c.l.b16 %v846
      %v907 = vunpack.c.l.b16 %v847
      %v908 = vunpack.c.l.b16 %v848
      %v909 = vunpack.c.l.b16 %v849
      %v910 = vunpack.c.l.b16 %v850
      %v911 = vunpack.c.l.b16 %v851
      %v912 = vunpack.c.l.b16 %v852
      %v913 = vpack.c.b16 %v898, %v897
      %v914 = vpack.c.b16 %v900, %v899
      %v915 = vpack.c.b16 %v902, %v901
      %v916 = vpack.c.b16 %v904, %v903
      %v917 = vpack.c.b16 %v906, %v905
      %v918 = vpack.c.b16 %v908, %v907
      %v919 = vpack.c.b16 %v910, %v909
      %v920 = vpack.c.b16 %v912, %v911
      %929 = vmatprep.subr.bf16.mxu0 0
      %930 = vmatpush1.bf16.msra.mxu0 %v913
      %931 = vmatprep.subr.bf16.mxu0 0
      %932 = vmatpush1.bf16.msra.mxu0 %v914
      %933 = vmatprep.subr.bf16.mxu0 0
      %934 = vmatpush1.bf16.msra.mxu0 %v915
      %935 = vmatprep.subr.bf16.mxu0 0
      %936 = vmatpush1.bf16.msra.mxu0 %v916
      %937 = vmatprep.subr.bf16.mxu0 0
      %938 = vmatpush1.bf16.msra.mxu0 %v917
      %939 = vmatprep.subr.bf16.mxu0 0
      %940 = vmatpush1.bf16.msra.mxu0 %v918
      %941 = vmatprep.subr.bf16.mxu0 0
      %942 = vmatpush1.bf16.msra.mxu0 %v919
      %943 = vmatprep.subr.bf16.mxu0 0
      %944 = vmatpush1.bf16.msra.mxu0 %v920
      %945 = vmatprep.subr.bf16.mxu0 0
      %946 = vmatpush1.bf16.msra.mxu0 0
      %947 = vmatprep.subr.bf16.mxu0 0
      %948 = vmatpush1.bf16.msra.mxu0 0
      %949 = vmatprep.subr.bf16.mxu0 0
      %950 = vmatpush1.bf16.msra.mxu0 0
      %951 = vmatprep.subr.bf16.mxu0 0
      %952 = vmatpush1.bf16.msra.mxu0 0
      %953 = vmatprep.subr.bf16.mxu0 0
      %954 = vmatpush1.bf16.msra.mxu0 0
      %955 = vmatprep.subr.bf16.mxu0 0
      %956 = vmatpush1.bf16.msra.mxu0 0
      %957 = vmatprep.subr.bf16.mxu0 0
      %958 = vmatpush1.bf16.msra.mxu0 0
      %959 = vmatprep.subr.bf16.mxu0 0
      %960 = vmatpush1.bf16.msra.mxu0 0
      %961 = vmatprep.mubr.bf16.mxu0 0
      %962 = vmatmul.mubr.bf16.gmra.mrb[0].mxu0 %v871
      %v963 = vpop.f32.mrb[0].mxu0
      %v964 = vadd.f32 0.0, %v963
      %v965 = vpop.f32.mrb[0].mxu0
      %v966 = vpop.f32.mrb[0].mxu0
      %v967 = vadd.f32 0.0, %v966
      %v968 = vpop.f32.mrb[0].mxu0
      %969 = vmatprep.mubr.bf16.mxu0 0
      %970 = vmatmul.mubr.bf16.gmra.mrb[0].mxu0 %v872
      %v971 = vpop.f32.mrb[0].mxu0
      %v972 = vadd.f32 0.0, %v971
      %v973 = vpop.f32.mrb[0].mxu0
      %v974 = vpop.f32.mrb[0].mxu0
      %v975 = vadd.f32 0.0, %v974
      %v976 = vpop.f32.mrb[0].mxu0
      %977 = vmatprep.mubr.bf16.mxu0 0
      %978 = vmatmul.mubr.bf16.gmra.mrb[0].mxu0 %v873
      %v979 = vpop.f32.mrb[0].mxu0
      %v980 = vadd.f32 0.0, %v979
      %v981 = vpop.f32.mrb[0].mxu0
      %v982 = vpop.f32.mrb[0].mxu0
      %v983 = vadd.f32 0.0, %v982
      %v984 = vpop.f32.mrb[0].mxu0
      %985 = vmatprep.mubr.bf16.mxu0 0
      %986 = vmatmul.mubr.bf16.gmra.mrb[0].mxu0 %v874
      %v987 = vpop.f32.mrb[0].mxu0
      %v988 = vadd.f32 0.0, %v987
      %v989 = vpop.f32.mrb[0].mxu0
      %v990 = vpop.f32.mrb[0].mxu0
      %v991 = vadd.f32 0.0, %v990
      %v992 = vpop.f32.mrb[0].mxu0
      %993 = vmatprep.mubr.bf16.mxu0 0
      %994 = vmatmul.mubr.bf16.gmra.mrb[0].mxu0 %v875
      %v995 = vpop.f32.mrb[0].mxu0
      %v996 = vadd.f32 0.0, %v995
      %v997 = vpop.f32.mrb[0].mxu0
      %v998 = vpop.f32.mrb[0].mxu0
      %v999 = vpop.f32.mrb[0].mxu0
      %1000 = vdwg.mxu0
      %v1001 = vpack.c.bf16 %v967, %v964
      %v1002 = vpack.c.bf16 %v975, %v972
      %v1003 = vpack.c.bf16 %v983, %v980
      %v1004 = vpack.c.bf16 %v991, %v988
      %v1005 = vpack.c.bf16 %v996, %v996
      %v1011 = vunpack.c.l.b16 %v1001
      %v1012 = vunpack.c.h.b16 %v1001
      %v1013 = vunpack.c.l.b16 %v1002
      %v1014 = vunpack.c.h.b16 %v1002
      %v1015 = vunpack.c.l.b16 %v1003
      %v1016 = vunpack.c.h.b16 %v1003
      %v1017 = vunpack.c.l.b16 %v1004
      %v1018 = vunpack.c.h.b16 %v1004
      %v1019 = vunpack.c.l.b16 %v1005
      %v1020 = vpack.c.b16 %v1011, %v1011
      %v1021 = vpack.c.b16 %v1012, %v1012
      %v1022 = vpack.c.b16 %v1013, %v1013
      %v1023 = vpack.c.b16 %v1014, %v1014
      %v1024 = vpack.c.b16 %v1015, %v1015
      %v1025 = vpack.c.b16 %v1016, %v1016
      %v1026 = vpack.c.b16 %v1017, %v1017
      %v1027 = vpack.c.b16 %v1018, %v1018
      %v1028 = vpack.c.b16 %v1019, %v1019
      %1038 = vst [vmem:[%s472] sm:$0xf] %v1020
      %1039 = vst [vmem:[%s472 + $0x4] sm:$0xf] %v1021
      %1040 = vst [vmem:[%s472 + $0x8] sm:$0xf] %v1022
      %1041 = vst [vmem:[%s472 + $0xc] sm:$0xf] %v1023
      %1042 = vst [vmem:[%s472 + $0x10] sm:$0xf] %v1024
      %1043 = vst [vmem:[%s472 + $0x14] sm:$0xf] %v1025
      %1044 = vst [vmem:[%s472 + $0x18] sm:$0xf] %v1026
      %1045 = vst [vmem:[%s472 + $0x1c] sm:$0xf] %v1027
      %1046 = vst [vmem:[%s472 + $0x20] sm:$0xf] %v1028
      %v1047 = vmul.f32 %v964, %v738
      %v1048 = vmul.f32 %v967, %v743
      %v1049 = vmul.f32 %v972, %v748
      %v1050 = vmul.f32 %v975, %v753
      %v1051 = vmul.f32 %v980, %v758
      %v1052 = vmul.f32 %v983, %v763
      %v1053 = vmul.f32 %v988, %v768
      %v1054 = vmul.f32 %v991, %v773
      %v1055 = vmul.f32 %v996, %v778
      %v1056 = vadd.f32 %v1047, %v1048
      %v1057 = vadd.f32 %v1056, %v1049
      %v1058 = vadd.f32 %v1057, %v1050
      %v1059 = vadd.f32 %v1058, %v1051
      %v1060 = vadd.f32 %v1059, %v1052
      %v1061 = vadd.f32 %v1060, %v1053
      %v1062 = vadd.f32 %v1061, %v1054
      %v1063 = vadd.f32 %v1062, %v1055
      %v1064 = vrot.slane %v1063, 4
      %v1065 = vadd.f32 %v1063, %v1064
      %v1066 = vrot.slane %v1065, 2
      %v1067 = vadd.f32 %v1065, %v1066
      %v1068 = vrot.slane %v1067, 1
      %v1069 = vadd.f32 %v1067, %v1068
      %1070 = vst [vmem:[%s475] sm:$0x1] %v1069
      %v1071 = vmul.f32 %v1047, %v964
      %v1072 = vmul.f32 %v1048, %v967
      %v1073 = vmul.f32 %v1049, %v972
      %v1074 = vmul.f32 %v1050, %v975
      %v1075 = vmul.f32 %v1051, %v980
      %v1076 = vmul.f32 %v1052, %v983
      %v1077 = vmul.f32 %v1053, %v988
      %v1078 = vmul.f32 %v1054, %v991
      %v1079 = vmul.f32 %v1055, %v996
      %v1080 = vadd.f32 %v1071, %v1072
      %v1081 = vadd.f32 %v1080, %v1073
      %v1082 = vadd.f32 %v1081, %v1074
      %v1083 = vadd.f32 %v1082, %v1075
      %v1084 = vadd.f32 %v1083, %v1076
      %v1085 = vadd.f32 %v1084, %v1077
      %v1086 = vadd.f32 %v1085, %v1078
      %v1087 = vadd.f32 %v1086, %v1079
      %v1088 = vrot.slane %v1087, 4
      %v1089 = vadd.f32 %v1087, %v1088
      %v1090 = vrot.slane %v1089, 2
      %v1091 = vadd.f32 %v1089, %v1090
      %v1092 = vrot.slane %v1091, 1
      %v1093 = vadd.f32 %v1091, %v1092
      %1094 = vst [vmem:[%s478] sm:$0x1] %v1093
      %p1095 = scmp.lt.s32.totalorder %s24, 1
      %s1096 = scalar_select %p1095, %s24, 1
      %s1097 = smul.addr %s1096, 9
      %s1098 = smul.addr %s1097, 4
      %s1099 = scalar_lea.vmem %s7, %s1098
      %p1100 = scmp.lt.s32.totalorder %s24, 1
      %s1101 = scalar_select %p1100, %s24, 1
      %s1102 = scalar_lea.vmem %s8, %s1101
      %p1103 = scmp.lt.s32.totalorder %s24, 1
      %s1104 = scalar_select %p1103, %s24, 1
      %s1105 = scalar_lea.vmem %s9, %s1104
      %p1106 = scmp.lt.s32.totalorder %s24, 1
      %s1107 = scalar_select %p1106, %s24, 1
      %s1108 = smul.addr %s1107, 9
      %s1109 = smul.addr %s1108, 4
      %s1110 = scalar_lea.vmem %s10, %s1109
      %p1111 = scmp.lt.s32.totalorder %s24, 1
      %s1112 = scalar_select %p1111, %s24, 1
      %s1113 = scalar_lea.vmem %s11, %s1112
      %p1114 = scmp.lt.s32.totalorder %s24, 1
      %s1115 = scalar_select %p1114, %s24, 1
      %s1116 = scalar_lea.vmem %s12, %s1115
      // Predicated region
      $region49: #{bottleneck_forward.8} parent=47 // pred_check
        %p1117 = pneg %p199
      $region50: #{bottleneck_forward.8} parent=47 // pred_check_branch
        %1119 = sbr.rel (%p1117) target = $region52
      $region51: #{bottleneck_forward.8} parent=47 // pred_region
        _
      $region52: #{bottleneck_forward.8} parent=47 // pred_fallthru
        _
      // Predicated region
      $region53: #{bottleneck_forward.8} parent=47 // pred_check
        %p1120 = pneg %p225
      $region54: #{bottleneck_forward.8} parent=47 // pred_check_branch
        %1122 = sbr.rel (%p1120) target = $region56
      $region55: #{bottleneck_forward.8} parent=47 // pred_region
        _
      $region56: #{bottleneck_forward.8} parent=47 // pred_fallthru
        _
      // Predicated region
      $region57: #{bottleneck_forward.8} parent=47 // pred_check
        %p1123 = pneg %p251
      $region58: #{bottleneck_forward.8} parent=47 // pred_check_branch
        %1125 = sbr.rel (%p1123) target = $region60
      $region59: #{bottleneck_forward.8} parent=47 // pred_region
        _
      $region60: #{bottleneck_forward.8} parent=47 // pred_fallthru
        _
      // Predicated region
      $region61: #{bottleneck_forward.8} parent=47 // pred_check
        %p1126 = pneg %p277
      $region62: #{bottleneck_forward.8} parent=47 // pred_check_branch
        %1128 = sbr.rel (%p1126) target = $region64
      $region63: #{bottleneck_forward.8} parent=47 // pred_region
        _
      $region64: #{bottleneck_forward.8} parent=47 // pred_fallthru
        _
      // Predicated region
      $region65: #{bottleneck_forward.8} parent=47 // pred_check
        %p1129 = pneg %p303
      $region66: #{bottleneck_forward.8} parent=47 // pred_check_branch
        %1131 = sbr.rel (%p1129) target = $region68
      $region67: #{bottleneck_forward.8} parent=47 // pred_region
        _
      $region68: #{bottleneck_forward.8} parent=47 // pred_fallthru
        _
      // Predicated region
      $region69: #{bottleneck_forward.8} parent=47 // pred_check
        %p1132 = pneg %p329
      $region70: #{bottleneck_forward.8} parent=47 // pred_check_branch
        %1134 = sbr.rel (%p1132) target = $region72
      $region71: #{bottleneck_forward.8} parent=47 // pred_region
        _
      $region72: #{bottleneck_forward.8} parent=47 // pred_fallthru
        _
    $region48: #{bottleneck_forward.8} parent=5 // pred_fallthru
      _
    %p1135 = scmp.le.s32.totalorder 2, %s19
    // Predicated region
    $region73: #{bottleneck_forward.8} parent=5 // pred_check
      %p1136 = pneg %p1135
    $region74: #{bottleneck_forward.8} parent=5 // pred_check_branch
      %1138 = sbr.rel (%p1136) target = $region76
    $region75: #{bottleneck_forward.8} parent=5 // pred_region
      %s1139 = ssub.s32 %s19, 2
      // Predicated region
      $region77: #{bottleneck_forward.8} parent=75 // pred_check
        %p1140 = pneg %p205
      $region78: #{bottleneck_forward.8} parent=75 // pred_check_branch
        %1142 = sbr.rel (%p1140) target = $region80
      $region79: #{bottleneck_forward.8} parent=75 // pred_region
        %p1143 = scmp.lt.s32.totalorder %s25, 1
        %s1144 = scalar_select %p1143, %s25, 1
        %s1145 = smul.addr %s1144, 9
        %s1146 = smul.addr %s1145, 4
        %s1147 = scalar_lea.vmem %s7, %s1146
      $region80: #{bottleneck_forward.8} parent=75 // pred_fallthru
        _
      // Predicated region
      $region81: #{bottleneck_forward.8} parent=75 // pred_check
        %p1148 = pneg %p231
      $region82: #{bottleneck_forward.8} parent=75 // pred_check_branch
        %1150 = sbr.rel (%p1148) target = $region84
      $region83: #{bottleneck_forward.8} parent=75 // pred_region
        %p1151 = scmp.lt.s32.totalorder %s25, 1
        %s1152 = scalar_select %p1151, %s25, 1
        %s1153 = scalar_lea.vmem %s8, %s1152
      $region84: #{bottleneck_forward.8} parent=75 // pred_fallthru
        _
      // Predicated region
      $region85: #{bottleneck_forward.8} parent=75 // pred_check
        %p1154 = pneg %p257
      $region86: #{bottleneck_forward.8} parent=75 // pred_check_branch
        %1156 = sbr.rel (%p1154) target = $region88
      $region87: #{bottleneck_forward.8} parent=75 // pred_region
        %p1157 = scmp.lt.s32.totalorder %s25, 1
        %s1158 = scalar_select %p1157, %s25, 1
        %s1159 = scalar_lea.vmem %s9, %s1158
      $region88: #{bottleneck_forward.8} parent=75 // pred_fallthru
        _
      // Predicated region
      $region89: #{bottleneck_forward.8} parent=75 // pred_check
        %p1160 = pneg %p283
      $region90: #{bottleneck_forward.8} parent=75 // pred_check_branch
        %1162 = sbr.rel (%p1160) target = $region92
      $region91: #{bottleneck_forward.8} parent=75 // pred_region
        %p1163 = scmp.lt.s32.totalorder %s25, 1
        %s1164 = scalar_select %p1163, %s25, 1
        %s1165 = smul.addr %s1164, 9
        %s1166 = smul.addr %s1165, 4
        %s1167 = scalar_lea.vmem %s10, %s1166
      $region92: #{bottleneck_forward.8} parent=75 // pred_fallthru
        _
      // Predicated region
      $region93: #{bottleneck_forward.8} parent=75 // pred_check
        %p1168 = pneg %p309
      $region94: #{bottleneck_forward.8} parent=75 // pred_check_branch
        %1170 = sbr.rel (%p1168) target = $region96
      $region95: #{bottleneck_forward.8} parent=75 // pred_region
        %p1171 = scmp.lt.s32.totalorder %s25, 1
        %s1172 = scalar_select %p1171, %s25, 1
        %s1173 = scalar_lea.vmem %s11, %s1172
      $region96: #{bottleneck_forward.8} parent=75 // pred_fallthru
        _
      // Predicated region
      $region97: #{bottleneck_forward.8} parent=75 // pred_check
        %p1174 = pneg %p335
      $region98: #{bottleneck_forward.8} parent=75 // pred_check_branch
        %1176 = sbr.rel (%p1174) target = $region100
      $region99: #{bottleneck_forward.8} parent=75 // pred_region
        %p1177 = scmp.lt.s32.totalorder %s25, 1
        %s1178 = scalar_select %p1177, %s25, 1
        %s1179 = scalar_lea.vmem %s12, %s1178
      $region100: #{bottleneck_forward.8} parent=75 // pred_fallthru
        _
    $region76: #{bottleneck_forward.8} parent=5 // pred_fallthru
      _
  $region6: #{bottleneck_forward.8} parent=0 // loop_footer
    %s23 = sadd.s32 1, %s19
  $region7: #{bottleneck_forward.8} parent=0 // loop_footer_branch
    %18 = sbr.rel target = $region3
  $region8: #{bottleneck_forward.8} parent=0 // loop_exit
    _

</llo_original>
